<compile_context>
chip_gen: v7x
topology: tpu7x:2x2x1
jax: 0.10.0
libtpu: 0.0.40
codegen_flags: <defaults>
</compile_context>

<pallas_src>
import functools
import math

import jax
import jax.numpy as jnp
from jax.experimental import pallas as pl
from jax.experimental.pallas import tpu as pltpu


# ----------------------------- small helpers ------------------------------ #

def _ru(x, m):
    return ((x + m - 1) // m) * m


def _pad_to(a, shape):
    return jnp.pad(a, [(0, t - s) for s, t in zip(a.shape, shape)])


def _pad2(a, r, c):
    return jnp.pad(a, ((0, r - a.shape[0]), (0, c - a.shape[1])))


def _padrow(v, c):
    v = v.reshape(1, -1)
    return jnp.pad(v, ((0, 0), (0, c - v.shape[1])))


# ------------------------------ kernel bodies ------------------------------ #

def _encoder_kernel(q_ref, img_ref, ww_ref, bw_ref, wimg_ref, bimg_ref,
                    wpx_ref, wpl_ref, wpr_ref, bph_ref,
                    wf_out, ph_out, img_out, pad_sc):
    """Word level + phrase level (fused conv taps) + image encoder."""
    B, S, Qp = q_ref.shape
    R = img_ref.shape[1]
    Ep = ww_ref.shape[1]
    cdt = ww_ref.dtype

    # word level: Linear + tanh (dropout = identity, eval mode)
    q2 = q_ref[...].reshape(B * S, Qp)
    wf = jnp.tanh(jnp.dot(q2, ww_ref[...], preferred_element_type=jnp.float32)
                  + bw_ref[...])                                  # (B*S, Ep) f32
    wf_out[...] = wf.reshape(B, S, Ep).astype(wf_out.dtype)

    # image encoder: Linear + tanh
    i2 = img_ref[...].reshape(B * R, img_ref.shape[2])
    ie = jnp.tanh(jnp.dot(i2, wimg_ref[...], preferred_element_type=jnp.float32)
                  + bimg_ref[...])
    img_out[...] = ie.reshape(B, R, Ep).astype(img_out.dtype)

    # phrase level: the three Conv1d taps (k=1/2/3) as one grouped matmul on
    # x[t-1], x[t], x[t+1].  Shifted views come from a zero-padded VMEM scratch
    # (the zeros at the sequence boundaries implement the conv zero-padding).
    pad_sc[...] = jnp.zeros_like(pad_sc)
    pad_sc[:, 8:8 + S, :] = wf.reshape(B, S, Ep)
    xr = pad_sc[:, 7:7 + S, :].reshape(B * S, Ep).astype(cdt)     # x[t-1]
    xl = pad_sc[:, 9:9 + S, :].reshape(B * S, Ep).astype(cdt)     # x[t+1]
    xc = wf.astype(cdt)                                           # x[t]
    pf = (jnp.dot(xc, wpx_ref[...], preferred_element_type=jnp.float32)
          + jnp.dot(xl, wpl_ref[...], preferred_element_type=jnp.float32)
          + jnp.dot(xr, wpr_ref[...], preferred_element_type=jnp.float32)
          + bph_ref[...])                                         # (B*S, 3*Ep)
    pf1 = pf[:, 0:Ep]
    pf2 = pf[:, Ep:2 * Ep]
    pf3 = pf[:, 2 * Ep:3 * Ep]
    ph = jnp.tanh(jnp.maximum(jnp.maximum(pf1, pf2), pf3))
    ph_out[...] = ph.reshape(B, S, Ep).astype(ph_out.dtype)


def _lstm_kernel(x_ref, wi_ref, wh_ref, b_ref, o_ref, h_sc, c_sc):
    """nn.LSTM(E, E, batch_first) with zero init; sequence-major layout."""
    S, B, Ep = x_ref.shape
    cdt = wi_ref.dtype
    h_sc[...] = jnp.zeros_like(h_sc)
    c_sc[...] = jnp.zeros_like(c_sc)
    for t in range(S):                     # S is small & static: fully unrolled
        xt = x_ref[t].astype(cdt)                                  # (B, Ep)
        z = (jnp.dot(xt, wi_ref[...], preferred_element_type=jnp.float32)
             + jnp.dot(h_sc[...].astype(cdt), wh_ref[...],
                       preferred_element_type=jnp.float32)
             + b_ref[...])                 # (B, 4*Ep), PyTorch gate order i,f,g,o
        i = jax.nn.sigmoid(z[:, 0:Ep])
        f = jax.nn.sigmoid(z[:, Ep:2 * Ep])
        g = jnp.tanh(z[:, 2 * Ep:3 * Ep])
        o = jax.nn.sigmoid(z[:, 3 * Ep:4 * Ep])
        c = f * c_sc[...] + i * g
        h = o * jnp.tanh(c)
        c_sc[...] = c
        h_sc[...] = h
        o_ref[t] = h.astype(o_ref.dtype)


def _coattn_kernel(q_ref, v_ref, wfq_ref, waq_ref, bq0_ref, bqg_ref, wpq_ref,
                   wfi_ref, wai_ref, big_ref, wpi_ref, v_out, q_out, *, batch):
    """One alternating co-attention triple: s=attn(Q), v=attn(V,s), q=attn(Q,v)."""
    BS, Ep = q_ref.shape[1], q_ref.shape[2]
    BR = v_ref.shape[0]
    H = wfq_ref.shape[1]
    cdt = wfq_ref.dtype
    B = batch
    S = BS // B
    R = BR // B

    Q2 = q_ref[0]                                                  # (B*S, Ep)
    V2 = v_ref[...]                                                # (B*R, Ep)
    Q3 = Q2.astype(jnp.float32).reshape(B, S, Ep)
    V3 = V2.astype(jnp.float32).reshape(B, R, Ep)

    # feature-head projections, computed once (Q's is reused by passes 1 & 3)
    featQ = jnp.dot(Q2.astype(cdt), wfq_ref[...],
                    preferred_element_type=jnp.float32)            # (B*S, H)
    featV = jnp.dot(V2.astype(cdt), wfi_ref[...],
                    preferred_element_type=jnp.float32)            # (B*R, H)

    def pool(X3, feat3, wp_row):
        # predict Linear(H,1) as VPU multiply + lane reduce (bp dropped:
        # softmax is shift-invariant); softmax over the sequence; attention
        # pooling as VPU broadcast-multiply + sublane reduce (no M=1 matmul).
        logits = jnp.sum(feat3 * wp_row.reshape(1, 1, H), axis=-1)  # (B, s)
        m = jnp.max(logits, axis=-1, keepdims=True)
        e = jnp.exp(logits - m)
        w = e * pl.reciprocal(jnp.sum(e, axis=-1, keepdims=True))
        return jnp.sum(w[:, :, None] * X3, axis=1)                  # (B, Ep) f32

    # pass 1: s = question_attention(Q, g=None)
    f1 = jnp.tanh((featQ + bq0_ref[...]).reshape(B, S, H))
    s_att = pool(Q3, f1, wpq_ref[...])
    # pass 2: v = image_attention(V, g=s)
    gs = jnp.dot(s_att.astype(cdt), wai_ref[...],
                 preferred_element_type=jnp.float32)                # (B, H)
    f2 = jnp.tanh((featV + big_ref[...]).reshape(B, R, H) + gs.reshape(B, 1, H))
    v_att = pool(V3, f2, wpi_ref[...])
    # pass 3: q = question_attention(Q, g=v)
    gv = jnp.dot(v_att.astype(cdt), waq_ref[...],
                 preferred_element_type=jnp.float32)
    f3 = jnp.tanh((featQ + bqg_ref[...]).reshape(B, S, H) + gv.reshape(B, 1, H))
    q_att = pool(Q3, f3, wpq_ref[...])

    v_out[0] = v_att.astype(v_out.dtype)
    q_out[0] = q_att.astype(q_out.dtype)


def _tail_kernel(v_ref, q_ref, wwf_ref, bwf_ref, wpfa_ref, wpfb_ref, bpf_ref,
                 wqfa_ref, wqfb_ref, bqf_ref, wpred_ref, bpred_ref, o_ref):
    """word/phrase/ques fuse layers + classifier, fused (concats via weight split)."""
    cdt = wwf_ref.dtype
    x_w = (q_ref[0] + v_ref[0]).astype(cdt)
    x_p = (q_ref[1] + v_ref[1]).astype(cdt)
    x_s = (q_ref[2] + v_ref[2]).astype(cdt)

    word_att = jnp.tanh(
        jnp.dot(x_w, wwf_ref[...], preferred_element_type=jnp.float32)
        + bwf_ref[...])
    phrase_att = jnp.tanh(
        jnp.dot(x_p, wpfa_ref[...], preferred_element_type=jnp.float32)
        + jnp.dot(word_att.astype(cdt), wpfb_ref[...],
                  preferred_element_type=jnp.float32)
        + bpf_ref[...])
    ques_att = jnp.tanh(
        jnp.dot(x_s, wqfa_ref[...], preferred_element_type=jnp.float32)
        + jnp.dot(phrase_att.astype(cdt), wqfb_ref[...],
                  preferred_element_type=jnp.float32)
        + bqf_ref[...])
    out = jnp.dot(ques_att.astype(cdt), wpred_ref[...],
                  preferred_element_type=jnp.float32) + bpred_ref[...]
    o_ref[...] = out.astype(o_ref.dtype)


# ------------------------ padded / pre-cast parameters ---------------------- #

def prepare_params(p, *, compute_dtype=jnp.bfloat16):
    """Pad & cast all weights once into the lane-dense layout the kernels use."""
    f32 = jnp.float32
    cdt = compute_dtype
    E = p["word_b"].shape[0]
    Ep = _ru(E, 128)
    Qin = p["word_w"].shape[0]
    Qp = _ru(Qin, 128)
    Iin = p["img_w"].shape[0]
    Ip = _ru(Iin, 128)
    H = p["q_attn"]["wf"].shape[1]
    Hp = _ru(H, 128)
    E2p = _ru(2 * E, 128)
    Ap = _ru(p["pred_w"].shape[1], 128)

    pp = {}
    # word level + image encoder
    pp["ww"] = _pad2(p["word_w"], Qp, Ep).astype(cdt)
    pp["bw"] = _padrow(p["word_b"], Ep).astype(f32)
    pp["wimg"] = _pad2(p["img_w"], Ip, Ep).astype(cdt)
    pp["bimg"] = _padrow(p["img_b"], Ep).astype(f32)

    # phrase level: pack c1/c2/c3 into one weight per shifted operand
    #   pf[:, blk0] = Conv k=1, pf[:, blk1] = Conv k=2, pf[:, blk2] = Conv k=3
    c1, c2, c3 = p["c1_w"], p["c2_w"], p["c3_w"]
    zb = jnp.zeros((Ep, Ep), f32)
    pp["wpx"] = jnp.concatenate(                          # multiplies x[t]
        [_pad2(c1, Ep, Ep), _pad2(c2[:E], Ep, Ep), _pad2(c3[E:2 * E], Ep, Ep)],
        axis=1).astype(cdt)
    pp["wpl"] = jnp.concatenate(                          # multiplies x[t+1]
        [zb, _pad2(c2[E:], Ep, Ep), _pad2(c3[2 * E:], Ep, Ep)],
        axis=1).astype(cdt)
    pp["wpr"] = jnp.concatenate(                          # multiplies x[t-1]
        [zb, zb, _pad2(c3[:E], Ep, Ep)], axis=1).astype(cdt)
    pp["bph"] = jnp.concatenate(
        [_padrow(p["c1_b"], Ep), _padrow(p["c2_b"], Ep), _padrow(p["c3_b"], Ep)],
        axis=1).astype(f32)

    # LSTM (gate blocks padded to Ep each; bi+bh fused)
    L = p["lstm"]
    pp["lwi"] = jnp.concatenate(
        [_pad2(L["wi"][:, g * E:(g + 1) * E], Ep, Ep) for g in range(4)],
        axis=1).astype(cdt)
    pp["lwh"] = jnp.concatenate(
        [_pad2(L["wh"][:, g * E:(g + 1) * E], Ep, Ep) for g in range(4)],
        axis=1).astype(cdt)
    pp["lb"] = jnp.concatenate(
        [_padrow(L["bi"][g * E:(g + 1) * E] + L["bh"][g * E:(g + 1) * E], Ep)
         for g in range(4)], axis=1).astype(f32)

    # attention heads (bp dropped: softmax shift-invariance; bf/ba pre-fused)
    qa, ia = p["q_attn"], p["i_attn"]
    pp["wfq"] = _pad2(qa["wf"], Ep, Hp).astype(cdt)
    pp["waq"] = _pad2(qa["wa"], Ep, Hp).astype(cdt)
    pp["bq0"] = _padrow(qa["bf"], Hp).astype(f32)
    pp["bqg"] = _padrow(qa["bf"] + qa["ba"], Hp).astype(f32)
    pp["wpq"] = _padrow(qa["wp"][:, 0], Hp).astype(f32)
    pp["wfi"] = _pad2(ia["wf"], Ep, Hp).astype(cdt)
    pp["wai"] = _pad2(ia["wa"], Ep, Hp).astype(cdt)
    pp["big"] = _padrow(ia["bf"] + ia["ba"], Hp).astype(f32)
    pp["wpi"] = _padrow(ia["wp"][:, 0], Hp).astype(f32)

    # fuse layers + classifier (2E weights split into row blocks: no concats)
    pp["wwf"] = _pad2(p["wfuse_w"], Ep, Ep).astype(cdt)
    pp["bwf"] = _padrow(p["wfuse_b"], Ep).astype(f32)
    pp["wpfa"] = _pad2(p["pfuse_w"][:E], Ep, Ep).astype(cdt)
    pp["wpfb"] = _pad2(p["pfuse_w"][E:], Ep, Ep).astype(cdt)
    pp["bpf"] = _padrow(p["pfuse_b"], Ep).astype(f32)
    pp["wqfa"] = _pad2(p["qfuse_w"][:E], Ep, E2p).astype(cdt)
    pp["wqfb"] = _pad2(p["qfuse_w"][E:], Ep, E2p).astype(cdt)
    pp["bqf"] = _padrow(p["qfuse_b"], E2p).astype(f32)
    pp["wpred"] = _pad2(p["pred_w"], E2p, Ap).astype(cdt)
    pp["bpred"] = _padrow(p["pred_b"], Ap).astype(f32)
    return pp


# --------------------------- CoattentionNet forward ------------------------- #

@functools.partial(jax.jit, static_argnames=("n_ans",))
def coattention_forward(pp, image, question_encoding, *, n_ans):
    f32 = jnp.float32
    cdt = pp["ww"].dtype
    B, S, _ = question_encoding.shape
    R = image.shape[1]
    Qp, Ep = pp["ww"].shape
    Ip = pp["wimg"].shape[0]
    Hp = pp["wfq"].shape[1]
    E2p = pp["wqfa"].shape[1]
    Ap = pp["wpred"].shape[1]
    Sp8 = _ru(S, 8)

    qpad = _pad_to(question_encoding, (B, S, Qp)).astype(cdt)
    ipad = _pad_to(image, (B, R, Ip)).astype(cdt)

    # ---- 1. encoder: word level + phrase level + image encoder --------------
    word_feat, phase_feat, img_embed = pl.pallas_call(
        _encoder_kernel,
        out_shape=(jax.ShapeDtypeStruct((B, S, Ep), cdt),
                   jax.ShapeDtypeStruct((B, S, Ep), cdt),
                   jax.ShapeDtypeStruct((B, R, Ep), cdt)),
        grid=(1,),
        in_specs=[
            pl.BlockSpec((B, S, Qp), lambda i: (0, 0, 0)),
            pl.BlockSpec((B, R, Ip), lambda i: (0, 0, 0)),
            pl.BlockSpec((Qp, Ep), lambda i: (0, 0)),
            pl.BlockSpec((1, Ep), lambda i: (0, 0)),
            pl.BlockSpec((Ip, Ep), lambda i: (0, 0)),
            pl.BlockSpec((1, Ep), lambda i: (0, 0)),
            pl.BlockSpec((Ep, 3 * Ep), lambda i: (0, 0)),
            pl.BlockSpec((Ep, 3 * Ep), lambda i: (0, 0)),
            pl.BlockSpec((Ep, 3 * Ep), lambda i: (0, 0)),
            pl.BlockSpec((1, 3 * Ep), lambda i: (0, 0)),
        ],
        out_specs=(pl.BlockSpec((B, S, Ep), lambda i: (0, 0, 0)),
                   pl.BlockSpec((B, S, Ep), lambda i: (0, 0, 0)),
                   pl.BlockSpec((B, R, Ep), lambda i: (0, 0, 0))),
        scratch_shapes=[pltpu.VMEM((B, Sp8 + 16, Ep), jnp.float32)],
        compiler_params=pltpu.CompilerParams(dimension_semantics=("arbitrary",)),
    )(qpad, ipad, pp["ww"], pp["bw"], pp["wimg"], pp["bimg"],
      pp["wpx"], pp["wpl"], pp["wpr"], pp["bph"])

    # ---- 2. question level: LSTM (weights resident, h/c in VMEM scratch) ----
    x_seq = jnp.swapaxes(phase_feat, 0, 1)                       # (S, B, Ep)
    ques_seq = pl.pallas_call(
        _lstm_kernel,
        out_shape=jax.ShapeDtypeStruct((S, B, Ep), cdt),
        grid=(1,),
        in_specs=[
            pl.BlockSpec((S, B, Ep), lambda i: (0, 0, 0)),
            pl.BlockSpec((Ep, 4 * Ep), lambda i: (0, 0)),
            pl.BlockSpec((Ep, 4 * Ep), lambda i: (0, 0)),
            pl.BlockSpec((1, 4 * Ep), lambda i: (0, 0)),
        ],
        out_specs=pl.BlockSpec((S, B, Ep), lambda i: (0, 0, 0)),
        scratch_shapes=[pltpu.VMEM((B, Ep), jnp.float32),
                        pltpu.VMEM((B, Ep), jnp.float32)],
        compiler_params=pltpu.CompilerParams(dimension_semantics=("arbitrary",)),
    )(x_seq, pp["lwi"], pp["lwh"], pp["lb"])
    ques_feat = jnp.swapaxes(ques_seq, 0, 1)                     # (B, S, Ep)

    # ---- 3. alternating co-attention: 3 triples in one call (grid over src) --
    BS = B * S
    q_stack = jnp.stack([word_feat.reshape(BS, Ep),
                         phase_feat.reshape(BS, Ep),
                         ques_feat.reshape(BS, Ep)], axis=0)     # (3, B*S, Ep)
    v_flat = img_embed.reshape(B * R, Ep)

    v_att, q_att = pl.pallas_call(
        functools.partial(_coattn_kernel, batch=B),
        out_shape=(jax.ShapeDtypeStruct((3, B, Ep), f32),
                   jax.ShapeDtypeStruct((3, B, Ep), f32)),
        grid=(3,),
        in_specs=[
            pl.BlockSpec((1, BS, Ep), lambda i: (i, 0, 0)),
            pl.BlockSpec((B * R, Ep), lambda i: (0, 0)),
            pl.BlockSpec((Ep, Hp), lambda i: (0, 0)),   # wfq
            pl.BlockSpec((Ep, Hp), lambda i: (0, 0)),   # waq
            pl.BlockSpec((1, Hp), lambda i: (0, 0)),    # bq0 (= bf_q)
            pl.BlockSpec((1, Hp), lambda i: (0, 0)),    # bqg (= bf_q + ba_q)
            pl.BlockSpec((1, Hp), lambda i: (0, 0)),    # wpq
            pl.BlockSpec((Ep, Hp), lambda i: (0, 0)),   # wfi
            pl.BlockSpec((Ep, Hp), lambda i: (0, 0)),   # wai
            pl.BlockSpec((1, Hp), lambda i: (0, 0)),    # big (= bf_i + ba_i)
            pl.BlockSpec((1, Hp), lambda i: (0, 0)),    # wpi
        ],
        out_specs=(pl.BlockSpec((1, B, Ep), lambda i: (i, 0, 0)),
                   pl.BlockSpec((1, B, Ep), lambda i: (i, 0, 0))),
        compiler_params=pltpu.CompilerParams(dimension_semantics=("parallel",)),
    )(q_stack, v_flat, pp["wfq"], pp["waq"], pp["bq0"], pp["bqg"], pp["wpq"],
      pp["wfi"], pp["wai"], pp["big"], pp["wpi"])

    # ---- 4. fuse layers + classifier ----------------------------------------
    out_pad = pl.pallas_call(
        _tail_kernel,
        out_shape=jax.ShapeDtypeStruct((B, Ap), f32),
        grid=(1,),
        in_specs=[
            pl.BlockSpec((3, B, Ep), lambda i: (0, 0, 0)),
            pl.BlockSpec((3, B, Ep), lambda i: (0, 0, 0)),
            pl.BlockSpec((Ep, Ep), lambda i: (0, 0)),
            pl.BlockSpec((1, Ep), lambda i: (0, 0)),
            pl.BlockSpec((Ep, Ep), lambda i: (0, 0)),
            pl.BlockSpec((Ep, Ep), lambda i: (0, 0)),
            pl.BlockSpec((1, Ep), lambda i: (0, 0)),
            pl.BlockSpec((Ep, E2p), lambda i: (0, 0)),
            pl.BlockSpec((Ep, E2p), lambda i: (0, 0)),
            pl.BlockSpec((1, E2p), lambda i: (0, 0)),
            pl.BlockSpec((E2p, Ap), lambda i: (0, 0)),
            pl.BlockSpec((1, Ap), lambda i: (0, 0)),
        ],
        out_specs=pl.BlockSpec((B, Ap), lambda i: (0, 0)),
        compiler_params=pltpu.CompilerParams(dimension_semantics=("arbitrary",)),
    )(v_att, q_att, pp["wwf"], pp["bwf"], pp["wpfa"], pp["wpfb"], pp["bpf"],
      pp["wqfa"], pp["wqfb"], pp["bqf"], pp["wpred"], pp["bpred"])

    return out_pad[:, :n_ans]


# ------------------------------- references -------------------------------- #

def _attention_ref(X, ap, g=None):
    feat = X @ ap["wf"] + ap["bf"]
    if g is not None:
        feat = feat + g @ ap["wa"] + ap["ba"]
    feat = jnp.tanh(feat)
    logits = feat @ ap["wp"] + ap["bp"]
    w = jax.nn.softmax(logits, axis=1)
    return jnp.sum(w * X, axis=1, keepdims=True)


def _lstm_ref(x, lp):
    B, _, _ = x.shape
    H = lp["wh"].shape[0]

    def step(carry, xt):
        h, c = carry
        z = xt @ lp["wi"] + lp["bi"] + h @ lp["wh"] + lp["bh"]
        i, f, g, o = jnp.split(z, 4, axis=-1)
        i = jax.nn.sigmoid(i)
        f = jax.nn.sigmoid(f)
        g = jnp.tanh(g)
        o = jax.nn.sigmoid(o)
        c = f * c + i * g
        h = o * jnp.tanh(c)
        return (h, c), h

    init = (jnp.zeros((B, H), x.dtype), jnp.zeros((B, H), x.dtype))
    _, hs = jax.lax.scan(step, init, jnp.swapaxes(x, 0, 1))
    return jnp.swapaxes(hs, 0, 1)


def coattention_ref(p, image, question):
    E = p["word_b"].shape[0]
    word_feat = jnp.tanh(question @ p["word_w"] + p["word_b"])
    x = word_feat
    zero = jnp.zeros_like(x[:, :1])
    xl = jnp.concatenate([x[:, 1:], zero], axis=1)      # x[t+1] (0 past the end)
    xr = jnp.concatenate([zero, x[:, :-1]], axis=1)     # x[t-1] (0 before start)
    pf1 = x @ p["c1_w"] + p["c1_b"]
    pf2 = x @ p["c2_w"][:E] + xl @ p["c2_w"][E:] + p["c2_b"]
    pf3 = (xr @ p["c3_w"][:E] + x @ p["c3_w"][E:2 * E] + xl @ p["c3_w"][2 * E:]
           + p["c3_b"])
    phase_feat = jnp.tanh(jnp.maximum(jnp.maximum(pf1, pf2), pf3))
    ques_feat = _lstm_ref(phase_feat, p["lstm"])
    img_embed = jnp.tanh(image @ p["img_w"] + p["img_b"])

    def co(Q, V):
        s = _attention_ref(Q, p["q_attn"])
        v = _attention_ref(V, p["i_attn"], s)
        q = _attention_ref(Q, p["q_attn"], v)
        return v[:, 0], q[:, 0]

    v_w, q_w = co(word_feat, img_embed)
    v_p, q_p = co(phase_feat, img_embed)
    v_s, q_s = co(ques_feat, img_embed)
    word_att = jnp.tanh((q_w + v_w) @ p["wfuse_w"] + p["wfuse_b"])
    phrase_att = jnp.tanh(jnp.concatenate([q_p + v_p, word_att], axis=1)
                          @ p["pfuse_w"] + p["pfuse_b"])
    ques_att = jnp.tanh(jnp.concatenate([q_s + v_s, phrase_att], axis=1)
                        @ p["qfuse_w"] + p["qfuse_b"])
    return ques_att @ p["pred_w"] + p["pred_b"]


# --------------------------- parameter construction ------------------------- #

def _linear_init(kw, kb, fan_in, fan_out):
    bound = 1.0 / math.sqrt(fan_in)
    w = jax.random.uniform(kw, (fan_in, fan_out), jnp.float32, -bound, bound)
    b = jax.random.uniform(kb, (fan_out,), jnp.float32, -bound, bound)
    return w, b


def init_attention_params(key, n_feat, n_hidden):
    ks = jax.random.split(key, 6)
    wf, bf = _linear_init(ks[0], ks[1], n_feat, n_hidden)   # feature_head
    wa, ba = _linear_init(ks[2], ks[3], n_feat, n_hidden)   # attention_head
    wp, bp = _linear_init(ks[4], ks[5], n_hidden, 1)        # predict Linear(H,1)
    return dict(wf=wf, bf=bf, wa=wa, ba=ba, wp=wp, bp=bp)


def init_coattention_params(key, n_img, n_ques, n_ans, n_emb):
    E = n_emb
    keys = iter(jax.random.split(key, 32))
    nk = lambda: next(keys)
    p = {}
    p["word_w"], p["word_b"] = _linear_init(nk(), nk(), n_ques, E)
    p["c1_w"], p["c1_b"] = _linear_init(nk(), nk(), E, E)        # Conv1d k=1
    p["c2_w"], p["c2_b"] = _linear_init(nk(), nk(), 2 * E, E)    # Conv1d k=2
    p["c3_w"], p["c3_b"] = _linear_init(nk(), nk(), 3 * E, E)    # Conv1d k=3
    bound = 1.0 / math.sqrt(E)
    p["lstm"] = dict(
        wi=jax.random.uniform(nk(), (E, 4 * E), jnp.float32, -bound, bound),
        wh=jax.random.uniform(nk(), (E, 4 * E), jnp.float32, -bound, bound),
        bi=jax.random.uniform(nk(), (4 * E,), jnp.float32, -bound, bound),
        bh=jax.random.uniform(nk(), (4 * E,), jnp.float32, -bound, bound))
    p["img_w"], p["img_b"] = _linear_init(nk(), nk(), n_img, E)
    p["q_attn"] = init_attention_params(nk(), E, 512)
    p["i_attn"] = init_attention_params(nk(), E, 512)
    p["wfuse_w"], p["wfuse_b"] = _linear_init(nk(), nk(), E, E)
    p["pfuse_w"], p["pfuse_b"] = _linear_init(nk(), nk(), 2 * E, E)
    p["qfuse_w"], p["qfuse_b"] = _linear_init(nk(), nk(), 2 * E, 2 * E)
    p["pred_w"], p["pred_b"] = _linear_init(nk(), nk(), 2 * E, n_ans)
    return p


# ---------------------------------- main ------------------------------------ #

if __name__ == "__main__":
    key = jax.random.PRNGKey(0)
    B, S, R = 2, 8, 16                       # batch, question length, image regions
    n_ques, n_img, n_ans, n_emb = 32, 48, 10, 64

    k_img, k_q, k_p = jax.random.split(key, 3)
    image = jax.random.normal(k_img, (B, R, n_img), jnp.float32)
    question = jax.random.normal(k_q, (B, S, n_ques), jnp.float32)
    params = init_coattention_params(k_p, n_img, n_ques, n_ans, n_emb)

    ref = coattention_ref(params, image, question)

    # --- f32 MXU operands: tight correctness check ---
    pp_f32 = prepare_params(params, compute_dtype=jnp.float32)
    out_f32 = coattention_forward(pp_f32, image, question, n_ans=n_ans)
    jax.block_until_ready(out_f32)
    assert out_f32.shape == (B, n_ans)
    err = float(jnp.max(jnp.abs(out_f32 - ref)))
    assert jnp.allclose(out_f32, ref, atol=5e-3, rtol=5e-3), err

    # --- bf16 MXU operands (default on all generations); elementwise stays f32 ---
    pp_bf16 = prepare_params(params)         # compute_dtype=bfloat16 default
    out_bf16 = coattention_forward(pp_bf16, image, question, n_ans=n_ans)
    jax.block_until_ready(out_bf16)
    assert out_bf16.shape == (B, n_ans)
    err_bf = float(jnp.max(jnp.abs(out_bf16 - ref)))
    assert jnp.allclose(out_bf16, ref, atol=1e-1, rtol=1e-1), err_bf

    print("KERNEL_OK")
</pallas_src>

<mosaic_0001>
module attributes {stable_mosaic.version = 11 : i64} {
  func.func @_encoder_kernel(%arg0: i32, %arg1: memref<2x8x128xf32, #tpu.memory_space<vmem>>, %arg2: memref<2x16x128xf32, #tpu.memory_space<vmem>>, %arg3: memref<128x128xf32, #tpu.memory_space<vmem>>, %arg4: memref<1x128xf32, #tpu.memory_space<vmem>>, %arg5: memref<128x128xf32, #tpu.memory_space<vmem>>, %arg6: memref<1x128xf32, #tpu.memory_space<vmem>>, %arg7: memref<128x384xf32, #tpu.memory_space<vmem>>, %arg8: memref<128x384xf32, #tpu.memory_space<vmem>>, %arg9: memref<128x384xf32, #tpu.memory_space<vmem>>, %arg10: memref<1x384xf32, #tpu.memory_space<vmem>>, %arg11: memref<2x8x128xf32, #tpu.memory_space<vmem>>, %arg12: memref<2x8x128xf32, #tpu.memory_space<vmem>>, %arg13: memref<2x16x128xf32, #tpu.memory_space<vmem>>, %arg14: memref<2x24x128xf32, #tpu.memory_space<vmem>>) attributes {dimension_semantics = [#tpu.dimension_semantics<arbitrary>], iteration_bounds = array<i64: 1>, scalar_prefetch = 0 : i64, scratch_operands = 1 : i64, tpu.core_type = #tpu.core_type<tc>, window_params = [{pipeline_mode = #tpu.pipeline_mode<synchronous>, transform_indices = @transform_0, window_bounds = array<i64: 2, 8, 128>}, {pipeline_mode = #tpu.pipeline_mode<synchronous>, transform_indices = @transform_1, window_bounds = array<i64: 2, 16, 128>}, {pipeline_mode = #tpu.pipeline_mode<synchronous>, transform_indices = @transform_2, window_bounds = array<i64: 128, 128>}, {pipeline_mode = #tpu.pipeline_mode<synchronous>, transform_indices = @transform_3, window_bounds = array<i64: 1, 128>}, {pipeline_mode = #tpu.pipeline_mode<synchronous>, transform_indices = @transform_4, window_bounds = array<i64: 128, 128>}, {pipeline_mode = #tpu.pipeline_mode<synchronous>, transform_indices = @transform_5, window_bounds = array<i64: 1, 128>}, {pipeline_mode = #tpu.pipeline_mode<synchronous>, transform_indices = @transform_6, window_bounds = array<i64: 128, 384>}, {pipeline_mode = #tpu.pipeline_mode<synchronous>, transform_indices = @transform_7, window_bounds = array<i64: 128, 384>}, {pipeline_mode = #tpu.pipeline_mode<synchronous>, transform_indices = @transform_8, window_bounds = array<i64: 128, 384>}, {pipeline_mode = #tpu.pipeline_mode<synchronous>, transform_indices = @transform_9, window_bounds = array<i64: 1, 384>}, {pipeline_mode = #tpu.pipeline_mode<synchronous>, transform_indices = @transform_10, window_bounds = array<i64: 2, 8, 128>}, {pipeline_mode = #tpu.pipeline_mode<synchronous>, transform_indices = @transform_11, window_bounds = array<i64: 2, 8, 128>}, {pipeline_mode = #tpu.pipeline_mode<synchronous>, transform_indices = @transform_12, window_bounds = array<i64: 2, 16, 128>}]} {
    %c0 = arith.constant 0 : index
    %c0_0 = arith.constant 0 : index
    %c0_1 = arith.constant 0 : index
    %0 = vector.load %arg1[%c0, %c0_0, %c0_1] : memref<2x8x128xf32, #tpu.memory_space<vmem>>, vector<2x8x128xf32>
    %1 = vector.shape_cast %0 : vector<2x8x128xf32> to vector<16x128xf32>
    %c0_2 = arith.constant 0 : index
    %c0_3 = arith.constant 0 : index
    %2 = vector.load %arg3[%c0_2, %c0_3] : memref<128x128xf32, #tpu.memory_space<vmem>>, vector<128x128xf32>
    %cst = arith.constant dense<0.000000e+00> : vector<16x128xf32>
    %3 = tpu.matmul %1, %2, %cst {dimension_numbers = #tpu.dot_dimension_numbers<[1], [0], [0], [1], [0, 0, 1, 1], [], []>} : vector<16x128xf32>, vector<128x128xf32>, vector<16x128xf32> -> vector<16x128xf32>
    %c0_4 = arith.constant 0 : index
    %c0_5 = arith.constant 0 : index
    %4 = vector.load %arg4[%c0_4, %c0_5] : memref<1x128xf32, #tpu.memory_space<vmem>>, vector<1x128xf32>
    %5 = vector.broadcast %4 : vector<1x128xf32> to vector<16x128xf32>
    %6 = arith.addf %3, %5 : vector<16x128xf32>
    %7 = math.tanh %6 : vector<16x128xf32>
    %8 = vector.shape_cast %7 : vector<16x128xf32> to vector<2x8x128xf32>
    %c0_6 = arith.constant 0 : index
    %c0_7 = arith.constant 0 : index
    %c0_8 = arith.constant 0 : index
    %9 = vector.load %arg11[%c0_6, %c0_7, %c0_8] : memref<2x8x128xf32, #tpu.memory_space<vmem>>, vector<2x8x128xf32>
    tpu.vector_store %arg11[%c0_6, %c0_7, %c0_8], %8 {strides = array<i32>} : memref<2x8x128xf32, #tpu.memory_space<vmem>>, vector<2x8x128xf32>,
    %c0_9 = arith.constant 0 : index
    %c0_10 = arith.constant 0 : index
    %c0_11 = arith.constant 0 : index
    %10 = vector.load %arg2[%c0_9, %c0_10, %c0_11] : memref<2x16x128xf32, #tpu.memory_space<vmem>>, vector<2x16x128xf32>
    %11 = vector.shape_cast %10 : vector<2x16x128xf32> to vector<32x128xf32>
    %c0_12 = arith.constant 0 : index
    %c0_13 = arith.constant 0 : index
    %12 = vector.load %arg5[%c0_12, %c0_13] : memref<128x128xf32, #tpu.memory_space<vmem>>, vector<128x128xf32>
    %cst_14 = arith.constant dense<0.000000e+00> : vector<32x128xf32>
    %13 = tpu.matmul %11, %12, %cst_14 {dimension_numbers = #tpu.dot_dimension_numbers<[1], [0], [0], [1], [0, 0, 1, 1], [], []>} : vector<32x128xf32>, vector<128x128xf32>, vector<32x128xf32> -> vector<32x128xf32>
    %c0_15 = arith.constant 0 : index
    %c0_16 = arith.constant 0 : index
    %14 = vector.load %arg6[%c0_15, %c0_16] : memref<1x128xf32, #tpu.memory_space<vmem>>, vector<1x128xf32>
    %15 = vector.broadcast %14 : vector<1x128xf32> to vector<32x128xf32>
    %16 = arith.addf %13, %15 : vector<32x128xf32>
    %17 = math.tanh %16 : vector<32x128xf32>
    %18 = vector.shape_cast %17 : vector<32x128xf32> to vector<2x16x128xf32>
    %c0_17 = arith.constant 0 : index
    %c0_18 = arith.constant 0 : index
    %c0_19 = arith.constant 0 : index
    %19 = vector.load %arg13[%c0_17, %c0_18, %c0_19] : memref<2x16x128xf32, #tpu.memory_space<vmem>>, vector<2x16x128xf32>
    tpu.vector_store %arg13[%c0_17, %c0_18, %c0_19], %18 {strides = array<i32>} : memref<2x16x128xf32, #tpu.memory_space<vmem>>, vector<2x16x128xf32>,
    %cst_20 = arith.constant 0.000000e+00 : f32
    %20 = vector.broadcast %cst_20 : f32 to vector<2x24x128xf32>
    %c0_21 = arith.constant 0 : index
    %c0_22 = arith.constant 0 : index
    %c0_23 = arith.constant 0 : index
    %21 = vector.load %arg14[%c0_21, %c0_22, %c0_23] : memref<2x24x128xf32, #tpu.memory_space<vmem>>, vector<2x24x128xf32>
    tpu.vector_store %arg14[%c0_21, %c0_22, %c0_23], %20 {strides = array<i32>} : memref<2x24x128xf32, #tpu.memory_space<vmem>>, vector<2x24x128xf32>,
    %22 = vector.shape_cast %7 : vector<16x128xf32> to vector<2x8x128xf32>
    %c0_24 = arith.constant 0 : index
    %c8 = arith.constant 8 : index
    %c0_25 = arith.constant 0 : index
    %23 = vector.load %arg14[%c0_24, %c8, %c0_25] : memref<2x24x128xf32, #tpu.memory_space<vmem>>, vector<2x8x128xf32>
    tpu.vector_store %arg14[%c0_24, %c8, %c0_25], %22 {strides = array<i32>} : memref<2x24x128xf32, #tpu.memory_space<vmem>>, vector<2x8x128xf32>,
    %c0_26 = arith.constant 0 : index
    %c7 = arith.constant 7 : index
    %c0_27 = arith.constant 0 : index
    %24 = vector.load %arg14[%c0_26, %c7, %c0_27] : memref<2x24x128xf32, #tpu.memory_space<vmem>>, vector<2x8x128xf32>
    %25 = vector.shape_cast %24 : vector<2x8x128xf32> to vector<16x128xf32>
    %c0_28 = arith.constant 0 : index
    %c9 = arith.constant 9 : index
    %c0_29 = arith.constant 0 : index
    %26 = vector.load %arg14[%c0_28, %c9, %c0_29] : memref<2x24x128xf32, #tpu.memory_space<vmem>>, vector<2x8x128xf32>
    %27 = vector.shape_cast %26 : vector<2x8x128xf32> to vector<16x128xf32>
    %c0_30 = arith.constant 0 : index
    %c0_31 = arith.constant 0 : index
    %28 = vector.load %arg7[%c0_30, %c0_31] : memref<128x384xf32, #tpu.memory_space<vmem>>, vector<128x384xf32>
    %cst_32 = arith.constant dense<0.000000e+00> : vector<16x384xf32>
    %29 = tpu.matmul %7, %28, %cst_32 {dimension_numbers = #tpu.dot_dimension_numbers<[1], [0], [0], [1], [0, 0, 1, 1], [], []>} : vector<16x128xf32>, vector<128x384xf32>, vector<16x384xf32> -> vector<16x384xf32>
    %c0_33 = arith.constant 0 : index
    %c0_34 = arith.constant 0 : index
    %30 = vector.load %arg8[%c0_33, %c0_34] : memref<128x384xf32, #tpu.memory_space<vmem>>, vector<128x384xf32>
    %cst_35 = arith.constant dense<0.000000e+00> : vector<16x384xf32>
    %31 = tpu.matmul %27, %30, %cst_35 {dimension_numbers = #tpu.dot_dimension_numbers<[1], [0], [0], [1], [0, 0, 1, 1], [], []>} : vector<16x128xf32>, vector<128x384xf32>, vector<16x384xf32> -> vector<16x384xf32>
    %32 = arith.addf %29, %31 : vector<16x384xf32>
    %c0_36 = arith.constant 0 : index
    %c0_37 = arith.constant 0 : index
    %33 = vector.load %arg9[%c0_36, %c0_37] : memref<128x384xf32, #tpu.memory_space<vmem>>, vector<128x384xf32>
    %cst_38 = arith.constant dense<0.000000e+00> : vector<16x384xf32>
    %34 = tpu.matmul %25, %33, %cst_38 {dimension_numbers = #tpu.dot_dimension_numbers<[1], [0], [0], [1], [0, 0, 1, 1], [], []>} : vector<16x128xf32>, vector<128x384xf32>, vector<16x384xf32> -> vector<16x384xf32>
    %35 = arith.addf %32, %34 : vector<16x384xf32>
    %c0_39 = arith.constant 0 : index
    %c0_40 = arith.constant 0 : index
    %36 = vector.load %arg10[%c0_39, %c0_40] : memref<1x384xf32, #tpu.memory_space<vmem>>, vector<1x384xf32>
    %37 = vector.broadcast %36 : vector<1x384xf32> to vector<16x384xf32>
    %38 = arith.addf %35, %37 : vector<16x384xf32>
    %39 = vector.extract_strided_slice %38 {offsets = [0, 0], sizes = [16, 128], strides = [1, 1]} : vector<16x384xf32> to vector<16x128xf32>
    %40 = vector.extract_strided_slice %38 {offsets = [0, 128], sizes = [16, 128], strides = [1, 1]} : vector<16x384xf32> to vector<16x128xf32>
    %41 = vector.extract_strided_slice %38 {offsets = [0, 256], sizes = [16, 128], strides = [1, 1]} : vector<16x384xf32> to vector<16x128xf32>
    %42 = arith.maximumf %39, %40 : vector<16x128xf32>
    %43 = arith.maximumf %42, %41 : vector<16x128xf32>
    %44 = math.tanh %43 : vector<16x128xf32>
    %45 = vector.shape_cast %44 : vector<16x128xf32> to vector<2x8x128xf32>
    %c0_41 = arith.constant 0 : index
    %c0_42 = arith.constant 0 : index
    %c0_43 = arith.constant 0 : index
    %46 = vector.load %arg12[%c0_41, %c0_42, %c0_43] : memref<2x8x128xf32, #tpu.memory_space<vmem>>, vector<2x8x128xf32>
    tpu.vector_store %arg12[%c0_41, %c0_42, %c0_43], %45 {strides = array<i32>} : memref<2x8x128xf32, #tpu.memory_space<vmem>>, vector<2x8x128xf32>,
    return
  }
  func.func @transform_0(%arg0: i32) -> (i32, i32, i32) {
    %c0_i32 = arith.constant 0 : i32
    %c0_i32_0 = arith.constant 0 : i32
    %c0_i32_1 = arith.constant 0 : i32
    %c0_i32_2 = arith.constant 0 : i32
    return %c0_i32, %c0_i32_0, %c0_i32_1 : i32, i32, i32
  }
  func.func @transform_1(%arg0: i32) -> (i32, i32, i32) {
    %c0_i32 = arith.constant 0 : i32
    %c0_i32_0 = arith.constant 0 : i32
    %c0_i32_1 = arith.constant 0 : i32
    %c0_i32_2 = arith.constant 0 : i32
    return %c0_i32, %c0_i32_0, %c0_i32_1 : i32, i32, i32
  }
  func.func @transform_2(%arg0: i32) -> (i32, i32) {
    %c0_i32 = arith.constant 0 : i32
    %c0_i32_0 = arith.constant 0 : i32
    %c0_i32_1 = arith.constant 0 : i32
    return %c0_i32, %c0_i32_0 : i32, i32
  }
  func.func @transform_3(%arg0: i32) -> (i32, i32) {
    %c0_i32 = arith.constant 0 : i32
    %c0_i32_0 = arith.constant 0 : i32
    %c0_i32_1 = arith.constant 0 : i32
    return %c0_i32, %c0_i32_0 : i32, i32
  }
  func.func @transform_4(%arg0: i32) -> (i32, i32) {
    %c0_i32 = arith.constant 0 : i32
    %c0_i32_0 = arith.constant 0 : i32
    %c0_i32_1 = arith.constant 0 : i32
    return %c0_i32, %c0_i32_0 : i32, i32
  }
  func.func @transform_5(%arg0: i32) -> (i32, i32) {
    %c0_i32 = arith.constant 0 : i32
    %c0_i32_0 = arith.constant 0 : i32
    %c0_i32_1 = arith.constant 0 : i32
    return %c0_i32, %c0_i32_0 : i32, i32
  }
  func.func @transform_6(%arg0: i32) -> (i32, i32) {
    %c0_i32 = arith.constant 0 : i32
    %c0_i32_0 = arith.constant 0 : i32
    %c0_i32_1 = arith.constant 0 : i32
    return %c0_i32, %c0_i32_0 : i32, i32
  }
  func.func @transform_7(%arg0: i32) -> (i32, i32) {
    %c0_i32 = arith.constant 0 : i32
    %c0_i32_0 = arith.constant 0 : i32
    %c0_i32_1 = arith.constant 0 : i32
    return %c0_i32, %c0_i32_0 : i32, i32
  }
  func.func @transform_8(%arg0: i32) -> (i32, i32) {
    %c0_i32 = arith.constant 0 : i32
    %c0_i32_0 = arith.constant 0 : i32
    %c0_i32_1 = arith.constant 0 : i32
    return %c0_i32, %c0_i32_0 : i32, i32
  }
  func.func @transform_9(%arg0: i32) -> (i32, i32) {
    %c0_i32 = arith.constant 0 : i32
    %c0_i32_0 = arith.constant 0 : i32
    %c0_i32_1 = arith.constant 0 : i32
    return %c0_i32, %c0_i32_0 : i32, i32
  }
  func.func @transform_10(%arg0: i32) -> (i32, i32, i32) {
    %c0_i32 = arith.constant 0 : i32
    %c0_i32_0 = arith.constant 0 : i32
    %c0_i32_1 = arith.constant 0 : i32
    %c0_i32_2 = arith.constant 0 : i32
    return %c0_i32, %c0_i32_0, %c0_i32_1 : i32, i32, i32
  }
  func.func @transform_11(%arg0: i32) -> (i32, i32, i32) {
    %c0_i32 = arith.constant 0 : i32
    %c0_i32_0 = arith.constant 0 : i32
    %c0_i32_1 = arith.constant 0 : i32
    %c0_i32_2 = arith.constant 0 : i32
    return %c0_i32, %c0_i32_0, %c0_i32_1 : i32, i32, i32
  }
  func.func @transform_12(%arg0: i32) -> (i32, i32, i32) {
    %c0_i32 = arith.constant 0 : i32
    %c0_i32_0 = arith.constant 0 : i32
    %c0_i32_1 = arith.constant 0 : i32
    %c0_i32_2 = arith.constant 0 : i32
    return %c0_i32, %c0_i32_0, %c0_i32_1 : i32, i32, i32
  }
}

module attributes {stable_mosaic.version = 11 : i64} {
  func.func @_coattn_kernel(%arg0: i32, %arg1: memref<1x16x128xf32, #tpu.memory_space<vmem>>, %arg2: memref<32x128xf32, #tpu.memory_space<vmem>>, %arg3: memref<128x512xf32, #tpu.memory_space<vmem>>, %arg4: memref<128x512xf32, #tpu.memory_space<vmem>>, %arg5: memref<1x512xf32, #tpu.memory_space<vmem>>, %arg6: memref<1x512xf32, #tpu.memory_space<vmem>>, %arg7: memref<1x512xf32, #tpu.memory_space<vmem>>, %arg8: memref<128x512xf32, #tpu.memory_space<vmem>>, %arg9: memref<128x512xf32, #tpu.memory_space<vmem>>, %arg10: memref<1x512xf32, #tpu.memory_space<vmem>>, %arg11: memref<1x512xf32, #tpu.memory_space<vmem>>, %arg12: memref<1x2x128xf32, #tpu.memory_space<vmem>>, %arg13: memref<1x2x128xf32, #tpu.memory_space<vmem>>) attributes {dimension_semantics = [#tpu.dimension_semantics<parallel>], iteration_bounds = array<i64: 3>, scalar_prefetch = 0 : i64, scratch_operands = 0 : i64, tpu.core_type = #tpu.core_type<tc>, window_params = [{transform_indices = @transform_0, window_bounds = array<i64: 1, 16, 128>}, {pipeline_mode = #tpu.pipeline_mode<synchronous>, transform_indices = @transform_1, window_bounds = array<i64: 32, 128>}, {pipeline_mode = #tpu.pipeline_mode<synchronous>, transform_indices = @transform_2, window_bounds = array<i64: 128, 512>}, {pipeline_mode = #tpu.pipeline_mode<synchronous>, transform_indices = @transform_3, window_bounds = array<i64: 128, 512>}, {pipeline_mode = #tpu.pipeline_mode<synchronous>, transform_indices = @transform_4, window_bounds = array<i64: 1, 512>}, {pipeline_mode = #tpu.pipeline_mode<synchronous>, transform_indices = @transform_5, window_bounds = array<i64: 1, 512>}, {pipeline_mode = #tpu.pipeline_mode<synchronous>, transform_indices = @transform_6, window_bounds = array<i64: 1, 512>}, {pipeline_mode = #tpu.pipeline_mode<synchronous>, transform_indices = @transform_7, window_bounds = array<i64: 128, 512>}, {pipeline_mode = #tpu.pipeline_mode<synchronous>, transform_indices = @transform_8, window_bounds = array<i64: 128, 512>}, {pipeline_mode = #tpu.pipeline_mode<synchronous>, transform_indices = @transform_9, window_bounds = array<i64: 1, 512>}, {pipeline_mode = #tpu.pipeline_mode<synchronous>, transform_indices = @transform_10, window_bounds = array<i64: 1, 512>}, {transform_indices = @transform_11, window_bounds = array<i64: 1, 2, 128>}, {transform_indices = @transform_12, window_bounds = array<i64: 1, 2, 128>}]} {
    %c0 = arith.constant 0 : index
    %c0_0 = arith.constant 0 : index
    %c0_1 = arith.constant 0 : index
    %0 = vector.load %arg1[%c0, %c0_0, %c0_1] : memref<1x16x128xf32, #tpu.memory_space<vmem>>, vector<1x16x128xf32>
    %1 = vector.shape_cast %0 : vector<1x16x128xf32> to vector<16x128xf32>
    %c0_2 = arith.constant 0 : index
    %c0_3 = arith.constant 0 : index
    %2 = vector.load %arg2[%c0_2, %c0_3] : memref<32x128xf32, #tpu.memory_space<vmem>>, vector<32x128xf32>
    %3 = vector.shape_cast %1 : vector<16x128xf32> to vector<2x8x128xf32>
    %4 = vector.shape_cast %2 : vector<32x128xf32> to vector<2x16x128xf32>
    %c0_4 = arith.constant 0 : index
    %c0_5 = arith.constant 0 : index
    %5 = vector.load %arg3[%c0_4, %c0_5] : memref<128x512xf32, #tpu.memory_space<vmem>>, vector<128x512xf32>
    %cst = arith.constant dense<0.000000e+00> : vector<16x512xf32>
    %6 = tpu.matmul %1, %5, %cst {dimension_numbers = #tpu.dot_dimension_numbers<[1], [0], [0], [1], [0, 0, 1, 1], [], []>} : vector<16x128xf32>, vector<128x512xf32>, vector<16x512xf32> -> vector<16x512xf32>
    %c0_6 = arith.constant 0 : index
    %c0_7 = arith.constant 0 : index
    %7 = vector.load %arg8[%c0_6, %c0_7] : memref<128x512xf32, #tpu.memory_space<vmem>>, vector<128x512xf32>
    %cst_8 = arith.constant dense<0.000000e+00> : vector<32x512xf32>
    %8 = tpu.matmul %2, %7, %cst_8 {dimension_numbers = #tpu.dot_dimension_numbers<[1], [0], [0], [1], [0, 0, 1, 1], [], []>} : vector<32x128xf32>, vector<128x512xf32>, vector<32x512xf32> -> vector<32x512xf32>
    %c0_9 = arith.constant 0 : index
    %c0_10 = arith.constant 0 : index
    %9 = vector.load %arg5[%c0_9, %c0_10] : memref<1x512xf32, #tpu.memory_space<vmem>>, vector<1x512xf32>
    %10 = vector.broadcast %9 : vector<1x512xf32> to vector<16x512xf32>
    %11 = arith.addf %6, %10 : vector<16x512xf32>
    %12 = vector.shape_cast %11 : vector<16x512xf32> to vector<2x8x512xf32>
    %13 = math.tanh %12 : vector<2x8x512xf32>
    %c0_11 = arith.constant 0 : index
    %c0_12 = arith.constant 0 : index
    %14 = vector.load %arg7[%c0_11, %c0_12] : memref<1x512xf32, #tpu.memory_space<vmem>>, vector<1x512xf32>
    %15 = vector.shape_cast %14 : vector<1x512xf32> to vector<1x1x512xf32>
    %16 = vector.broadcast %15 : vector<1x1x512xf32> to vector<2x8x512xf32>
    %17 = arith.mulf %13, %16 : vector<2x8x512xf32>
    %cst_13 = arith.constant dense<0.000000e+00> : vector<2x8xf32>
    %18 = vector.multi_reduction <add>, %17, %cst_13 [2] : vector<2x8x512xf32> to vector<2x8xf32>
    %cst_14 = arith.constant dense<0xFF800000> : vector<2xf32>
    %19 = vector.multi_reduction <maximumf>, %18, %cst_14 [1] : vector<2x8xf32> to vector<2xf32>
    %20 = vector.shape_cast %19 : vector<2xf32> to vector<2x1xf32>
    %21 = vector.broadcast %20 : vector<2x1xf32> to vector<2x8xf32>
    %22 = arith.subf %18, %21 : vector<2x8xf32>
    %23 = math.exp %22 : vector<2x8xf32>
    %cst_15 = arith.constant dense<0.000000e+00> : vector<2xf32>
    %24 = vector.multi_reduction <add>, %23, %cst_15 [1] : vector<2x8xf32> to vector<2xf32>
    %25 = vector.shape_cast %24 : vector<2xf32> to vector<2x1xf32>
    %26 = tpu.reciprocal %25 : vector<2x1xf32> -> vector<2x1xf32>
    %27 = vector.broadcast %26 : vector<2x1xf32> to vector<2x8xf32>
    %28 = arith.mulf %23, %27 : vector<2x8xf32>
    %29 = vector.shape_cast %28 : vector<2x8xf32> to vector<2x8x1xf32>
    %30 = vector.broadcast %29 : vector<2x8x1xf32> to vector<2x8x128xf32>
    %31 = arith.mulf %30, %3 : vector<2x8x128xf32>
    %cst_16 = arith.constant dense<0.000000e+00> : vector<2x128xf32>
    %32 = vector.multi_reduction <add>, %31, %cst_16 [1] : vector<2x8x128xf32> to vector<2x128xf32>
    %c0_17 = arith.constant 0 : index
    %c0_18 = arith.constant 0 : index
    %33 = vector.load %arg9[%c0_17, %c0_18] : memref<128x512xf32, #tpu.memory_space<vmem>>, vector<128x512xf32>
    %cst_19 = arith.constant dense<0.000000e+00> : vector<2x512xf32>
    %34 = tpu.matmul %32, %33, %cst_19 {dimension_numbers = #tpu.dot_dimension_numbers<[1], [0], [0], [1], [0, 0, 1, 1], [], []>} : vector<2x128xf32>, vector<128x512xf32>, vector<2x512xf32> -> vector<2x512xf32>
    %c0_20 = arith.constant 0 : index
    %c0_21 = arith.constant 0 : index
    %35 = vector.load %arg10[%c0_20, %c0_21] : memref<1x512xf32, #tpu.memory_space<vmem>>, vector<1x512xf32>
    %36 = vector.broadcast %35 : vector<1x512xf32> to vector<32x512xf32>
    %37 = arith.addf %8, %36 : vector<32x512xf32>
    %38 = vector.shape_cast %37 : vector<32x512xf32> to vector<2x16x512xf32>
    %39 = vector.shape_cast %34 : vector<2x512xf32> to vector<2x1x512xf32>
    %40 = vector.broadcast %39 : vector<2x1x512xf32> to vector<2x16x512xf32>
    %41 = arith.addf %38, %40 : vector<2x16x512xf32>
    %42 = math.tanh %41 : vector<2x16x512xf32>
    %c0_22 = arith.constant 0 : index
    %c0_23 = arith.constant 0 : index
    %43 = vector.load %arg11[%c0_22, %c0_23] : memref<1x512xf32, #tpu.memory_space<vmem>>, vector<1x512xf32>
    %44 = vector.shape_cast %43 : vector<1x512xf32> to vector<1x1x512xf32>
    %45 = vector.broadcast %44 : vector<1x1x512xf32> to vector<2x16x512xf32>
    %46 = arith.mulf %42, %45 : vector<2x16x512xf32>
    %cst_24 = arith.constant dense<0.000000e+00> : vector<2x16xf32>
    %47 = vector.multi_reduction <add>, %46, %cst_24 [2] : vector<2x16x512xf32> to vector<2x16xf32>
    %cst_25 = arith.constant dense<0xFF800000> : vector<2xf32>
    %48 = vector.multi_reduction <maximumf>, %47, %cst_25 [1] : vector<2x16xf32> to vector<2xf32>
    %49 = vector.shape_cast %48 : vector<2xf32> to vector<2x1xf32>
    %50 = vector.broadcast %49 : vector<2x1xf32> to vector<2x16xf32>
    %51 = arith.subf %47, %50 : vector<2x16xf32>
    %52 = math.exp %51 : vector<2x16xf32>
    %cst_26 = arith.constant dense<0.000000e+00> : vector<2xf32>
    %53 = vector.multi_reduction <add>, %52, %cst_26 [1] : vector<2x16xf32> to vector<2xf32>
    %54 = vector.shape_cast %53 : vector<2xf32> to vector<2x1xf32>
    %55 = tpu.reciprocal %54 : vector<2x1xf32> -> vector<2x1xf32>
    %56 = vector.broadcast %55 : vector<2x1xf32> to vector<2x16xf32>
    %57 = arith.mulf %52, %56 : vector<2x16xf32>
    %58 = vector.shape_cast %57 : vector<2x16xf32> to vector<2x16x1xf32>
    %59 = vector.broadcast %58 : vector<2x16x1xf32> to vector<2x16x128xf32>
    %60 = arith.mulf %59, %4 : vector<2x16x128xf32>
    %cst_27 = arith.constant dense<0.000000e+00> : vector<2x128xf32>
    %61 = vector.multi_reduction <add>, %60, %cst_27 [1] : vector<2x16x128xf32> to vector<2x128xf32>
    %c0_28 = arith.constant 0 : index
    %c0_29 = arith.constant 0 : index
    %62 = vector.load %arg4[%c0_28, %c0_29] : memref<128x512xf32, #tpu.memory_space<vmem>>, vector<128x512xf32>
    %cst_30 = arith.constant dense<0.000000e+00> : vector<2x512xf32>
    %63 = tpu.matmul %61, %62, %cst_30 {dimension_numbers = #tpu.dot_dimension_numbers<[1], [0], [0], [1], [0, 0, 1, 1], [], []>} : vector<2x128xf32>, vector<128x512xf32>, vector<2x512xf32> -> vector<2x512xf32>
    %c0_31 = arith.constant 0 : index
    %c0_32 = arith.constant 0 : index
    %64 = vector.load %arg6[%c0_31, %c0_32] : memref<1x512xf32, #tpu.memory_space<vmem>>, vector<1x512xf32>
    %65 = vector.broadcast %64 : vector<1x512xf32> to vector<16x512xf32>
    %66 = arith.addf %6, %65 : vector<16x512xf32>
    %67 = vector.shape_cast %66 : vector<16x512xf32> to vector<2x8x512xf32>
    %68 = vector.shape_cast %63 : vector<2x512xf32> to vector<2x1x512xf32>
    %69 = vector.broadcast %68 : vector<2x1x512xf32> to vector<2x8x512xf32>
    %70 = arith.addf %67, %69 : vector<2x8x512xf32>
    %71 = math.tanh %70 : vector<2x8x512xf32>
    %c0_33 = arith.constant 0 : index
    %c0_34 = arith.constant 0 : index
    %72 = vector.load %arg7[%c0_33, %c0_34] : memref<1x512xf32, #tpu.memory_space<vmem>>, vector<1x512xf32>
    %73 = vector.shape_cast %72 : vector<1x512xf32> to vector<1x1x512xf32>
    %74 = vector.broadcast %73 : vector<1x1x512xf32> to vector<2x8x512xf32>
    %75 = arith.mulf %71, %74 : vector<2x8x512xf32>
    %cst_35 = arith.constant dense<0.000000e+00> : vector<2x8xf32>
    %76 = vector.multi_reduction <add>, %75, %cst_35 [2] : vector<2x8x512xf32> to vector<2x8xf32>
    %cst_36 = arith.constant dense<0xFF800000> : vector<2xf32>
    %77 = vector.multi_reduction <maximumf>, %76, %cst_36 [1] : vector<2x8xf32> to vector<2xf32>
    %78 = vector.shape_cast %77 : vector<2xf32> to vector<2x1xf32>
    %79 = vector.broadcast %78 : vector<2x1xf32> to vector<2x8xf32>
    %80 = arith.subf %76, %79 : vector<2x8xf32>
    %81 = math.exp %80 : vector<2x8xf32>
    %cst_37 = arith.constant dense<0.000000e+00> : vector<2xf32>
    %82 = vector.multi_reduction <add>, %81, %cst_37 [1] : vector<2x8xf32> to vector<2xf32>
    %83 = vector.shape_cast %82 : vector<2xf32> to vector<2x1xf32>
    %84 = tpu.reciprocal %83 : vector<2x1xf32> -> vector<2x1xf32>
    %85 = vector.broadcast %84 : vector<2x1xf32> to vector<2x8xf32>
    %86 = arith.mulf %81, %85 : vector<2x8xf32>
    %87 = vector.shape_cast %86 : vector<2x8xf32> to vector<2x8x1xf32>
    %88 = vector.broadcast %87 : vector<2x8x1xf32> to vector<2x8x128xf32>
    %89 = arith.mulf %88, %3 : vector<2x8x128xf32>
    %cst_38 = arith.constant dense<0.000000e+00> : vector<2x128xf32>
    %90 = vector.multi_reduction <add>, %89, %cst_38 [1] : vector<2x8x128xf32> to vector<2x128xf32>
    %c0_39 = arith.constant 0 : index
    %c0_40 = arith.constant 0 : index
    %c0_41 = arith.constant 0 : index
    %91 = vector.load %arg12[%c0_39, %c0_40, %c0_41] : memref<1x2x128xf32, #tpu.memory_space<vmem>>, vector<1x2x128xf32>
    %92 = vector.shape_cast %91 : vector<1x2x128xf32> to vector<2x128xf32>
    %93 = vector.shape_cast %61 : vector<2x128xf32> to vector<1x2x128xf32>
    tpu.vector_store %arg12[%c0_39, %c0_40, %c0_41], %93 {strides = array<i32>} : memref<1x2x128xf32, #tpu.memory_space<vmem>>, vector<1x2x128xf32>,
    %c0_42 = arith.constant 0 : index
    %c0_43 = arith.constant 0 : index
    %c0_44 = arith.constant 0 : index
    %94 = vector.load %arg13[%c0_42, %c0_43, %c0_44] : memref<1x2x128xf32, #tpu.memory_space<vmem>>, vector<1x2x128xf32>
    %95 = vector.shape_cast %94 : vector<1x2x128xf32> to vector<2x128xf32>
    %96 = vector.shape_cast %90 : vector<2x128xf32> to vector<1x2x128xf32>
    tpu.vector_store %arg13[%c0_42, %c0_43, %c0_44], %96 {strides = array<i32>} : memref<1x2x128xf32, #tpu.memory_space<vmem>>, vector<1x2x128xf32>,
    return
  }
  func.func @transform_0(%arg0: i32) -> (i32, i32, i32) {
    %c0_i32 = arith.constant 0 : i32
    %c0_i32_0 = arith.constant 0 : i32
    %c0_i32_1 = arith.constant 0 : i32
    return %arg0, %c0_i32, %c0_i32_0 : i32, i32, i32
  }
  func.func @transform_1(%arg0: i32) -> (i32, i32) {
    %c0_i32 = arith.constant 0 : i32
    %c0_i32_0 = arith.constant 0 : i32
    %c0_i32_1 = arith.constant 0 : i32
    return %c0_i32, %c0_i32_0 : i32, i32
  }
  func.func @transform_2(%arg0: i32) -> (i32, i32) {
    %c0_i32 = arith.constant 0 : i32
    %c0_i32_0 = arith.constant 0 : i32
    %c0_i32_1 = arith.constant 0 : i32
    return %c0_i32, %c0_i32_0 : i32, i32
  }
  func.func @transform_3(%arg0: i32) -> (i32, i32) {
    %c0_i32 = arith.constant 0 : i32
    %c0_i32_0 = arith.constant 0 : i32
    %c0_i32_1 = arith.constant 0 : i32
    return %c0_i32, %c0_i32_0 : i32, i32
  }
  func.func @transform_4(%arg0: i32) -> (i32, i32) {
    %c0_i32 = arith.constant 0 : i32
    %c0_i32_0 = arith.constant 0 : i32
    %c0_i32_1 = arith.constant 0 : i32
    return %c0_i32, %c0_i32_0 : i32, i32
  }
  func.func @transform_5(%arg0: i32) -> (i32, i32) {
    %c0_i32 = arith.constant 0 : i32
    %c0_i32_0 = arith.constant 0 : i32
    %c0_i32_1 = arith.constant 0 : i32
    return %c0_i32, %c0_i32_0 : i32, i32
  }
  func.func @transform_6(%arg0: i32) -> (i32, i32) {
    %c0_i32 = arith.constant 0 : i32
    %c0_i32_0 = arith.constant 0 : i32
    %c0_i32_1 = arith.constant 0 : i32
    return %c0_i32, %c0_i32_0 : i32, i32
  }
  func.func @transform_7(%arg0: i32) -> (i32, i32) {
    %c0_i32 = arith.constant 0 : i32
    %c0_i32_0 = arith.constant 0 : i32
    %c0_i32_1 = arith.constant 0 : i32
    return %c0_i32, %c0_i32_0 : i32, i32
  }
  func.func @transform_8(%arg0: i32) -> (i32, i32) {
    %c0_i32 = arith.constant 0 : i32
    %c0_i32_0 = arith.constant 0 : i32
    %c0_i32_1 = arith.constant 0 : i32
    return %c0_i32, %c0_i32_0 : i32, i32
  }
  func.func @transform_9(%arg0: i32) -> (i32, i32) {
    %c0_i32 = arith.constant 0 : i32
    %c0_i32_0 = arith.constant 0 : i32
    %c0_i32_1 = arith.constant 0 : i32
    return %c0_i32, %c0_i32_0 : i32, i32
  }
  func.func @transform_10(%arg0: i32) -> (i32, i32) {
    %c0_i32 = arith.constant 0 : i32
    %c0_i32_0 = arith.constant 0 : i32
    %c0_i32_1 = arith.constant 0 : i32
    return %c0_i32, %c0_i32_0 : i32, i32
  }
  func.func @transform_11(%arg0: i32) -> (i32, i32, i32) {
    %c0_i32 = arith.constant 0 : i32
    %c0_i32_0 = arith.constant 0 : i32
    %c0_i32_1 = arith.constant 0 : i32
    return %arg0, %c0_i32, %c0_i32_0 : i32, i32, i32
  }
  func.func @transform_12(%arg0: i32) -> (i32, i32, i32) {
    %c0_i32 = arith.constant 0 : i32
    %c0_i32_0 = arith.constant 0 : i32
    %c0_i32_1 = arith.constant 0 : i32
    return %arg0, %c0_i32, %c0_i32_0 : i32, i32, i32
  }
}

module attributes {stable_mosaic.version = 11 : i64} {
  func.func @_lstm_kernel(%arg0: i32, %arg1: memref<8x2x128xf32, #tpu.memory_space<vmem>>, %arg2: memref<128x512xf32, #tpu.memory_space<vmem>>, %arg3: memref<128x512xf32, #tpu.memory_space<vmem>>, %arg4: memref<1x512xf32, #tpu.memory_space<vmem>>, %arg5: memref<8x2x128xf32, #tpu.memory_space<vmem>>, %arg6: memref<2x128xf32, #tpu.memory_space<vmem>>, %arg7: memref<2x128xf32, #tpu.memory_space<vmem>>) attributes {dimension_semantics = [#tpu.dimension_semantics<arbitrary>], iteration_bounds = array<i64: 1>, scalar_prefetch = 0 : i64, scratch_operands = 2 : i64, tpu.core_type = #tpu.core_type<tc>, window_params = [{pipeline_mode = #tpu.pipeline_mode<synchronous>, transform_indices = @transform_0, window_bounds = array<i64: 8, 2, 128>}, {pipeline_mode = #tpu.pipeline_mode<synchronous>, transform_indices = @transform_1, window_bounds = array<i64: 128, 512>}, {pipeline_mode = #tpu.pipeline_mode<synchronous>, transform_indices = @transform_2, window_bounds = array<i64: 128, 512>}, {pipeline_mode = #tpu.pipeline_mode<synchronous>, transform_indices = @transform_3, window_bounds = array<i64: 1, 512>}, {pipeline_mode = #tpu.pipeline_mode<synchronous>, transform_indices = @transform_4, window_bounds = array<i64: 8, 2, 128>}]} {
    %cst = arith.constant 0.000000e+00 : f32
    %0 = vector.broadcast %cst : f32 to vector<2x128xf32>
    %c0 = arith.constant 0 : index
    %c0_0 = arith.constant 0 : index
    %1 = vector.load %arg6[%c0, %c0_0] : memref<2x128xf32, #tpu.memory_space<vmem>>, vector<2x128xf32>
    tpu.vector_store %arg6[%c0, %c0_0], %0 {strides = array<i32>} : memref<2x128xf32, #tpu.memory_space<vmem>>, vector<2x128xf32>,
    %cst_1 = arith.constant 0.000000e+00 : f32
    %2 = vector.broadcast %cst_1 : f32 to vector<2x128xf32>
    %c0_2 = arith.constant 0 : index
    %c0_3 = arith.constant 0 : index
    %3 = vector.load %arg7[%c0_2, %c0_3] : memref<2x128xf32, #tpu.memory_space<vmem>>, vector<2x128xf32>
    tpu.vector_store %arg7[%c0_2, %c0_3], %2 {strides = array<i32>} : memref<2x128xf32, #tpu.memory_space<vmem>>, vector<2x128xf32>,
    %c0_4 = arith.constant 0 : index
    %c0_5 = arith.constant 0 : index
    %c0_6 = arith.constant 0 : index
    %4 = vector.load %arg1[%c0_4, %c0_5, %c0_6] : memref<8x2x128xf32, #tpu.memory_space<vmem>>, vector<1x2x128xf32>
    %5 = vector.shape_cast %4 : vector<1x2x128xf32> to vector<2x128xf32>
    %c0_7 = arith.constant 0 : index
    %c0_8 = arith.constant 0 : index
    %6 = vector.load %arg2[%c0_7, %c0_8] : memref<128x512xf32, #tpu.memory_space<vmem>>, vector<128x512xf32>
    %cst_9 = arith.constant dense<0.000000e+00> : vector<2x512xf32>
    %7 = tpu.matmul %5, %6, %cst_9 {dimension_numbers = #tpu.dot_dimension_numbers<[1], [0], [0], [1], [0, 0, 1, 1], [], []>} : vector<2x128xf32>, vector<128x512xf32>, vector<2x512xf32> -> vector<2x512xf32>
    %c0_10 = arith.constant 0 : index
    %c0_11 = arith.constant 0 : index
    %8 = vector.load %arg6[%c0_10, %c0_11] : memref<2x128xf32, #tpu.memory_space<vmem>>, vector<2x128xf32>
    %c0_12 = arith.constant 0 : index
    %c0_13 = arith.constant 0 : index
    %9 = vector.load %arg3[%c0_12, %c0_13] : memref<128x512xf32, #tpu.memory_space<vmem>>, vector<128x512xf32>
    %cst_14 = arith.constant dense<0.000000e+00> : vector<2x512xf32>
    %10 = tpu.matmul %8, %9, %cst_14 {dimension_numbers = #tpu.dot_dimension_numbers<[1], [0], [0], [1], [0, 0, 1, 1], [], []>} : vector<2x128xf32>, vector<128x512xf32>, vector<2x512xf32> -> vector<2x512xf32>
    %11 = arith.addf %7, %10 : vector<2x512xf32>
    %c0_15 = arith.constant 0 : index
    %c0_16 = arith.constant 0 : index
    %12 = vector.load %arg4[%c0_15, %c0_16] : memref<1x512xf32, #tpu.memory_space<vmem>>, vector<1x512xf32>
    %13 = vector.broadcast %12 : vector<1x512xf32> to vector<2x512xf32>
    %14 = arith.addf %11, %13 : vector<2x512xf32>
    %15 = vector.extract_strided_slice %14 {offsets = [0, 0], sizes = [2, 128], strides = [1, 1]} : vector<2x512xf32> to vector<2x128xf32>
    %16 = arith.negf %15 : vector<2x128xf32>
    %17 = math.exp %16 : vector<2x128xf32>
    %cst_17 = arith.constant 1.000000e+00 : f32
    %18 = vector.broadcast %cst_17 : f32 to vector<2x128xf32>
    %19 = arith.addf %18, %17 : vector<2x128xf32>
    %20 = arith.divf %18, %19 : vector<2x128xf32>
    %21 = vector.extract_strided_slice %14 {offsets = [0, 128], sizes = [2, 128], strides = [1, 1]} : vector<2x512xf32> to vector<2x128xf32>
    %22 = arith.negf %21 : vector<2x128xf32>
    %23 = math.exp %22 : vector<2x128xf32>
    %cst_18 = arith.constant 1.000000e+00 : f32
    %24 = vector.broadcast %cst_18 : f32 to vector<2x128xf32>
    %25 = arith.addf %24, %23 : vector<2x128xf32>
    %26 = arith.divf %24, %25 : vector<2x128xf32>
    %27 = vector.extract_strided_slice %14 {offsets = [0, 256], sizes = [2, 128], strides = [1, 1]} : vector<2x512xf32> to vector<2x128xf32>
    %28 = math.tanh %27 : vector<2x128xf32>
    %29 = vector.extract_strided_slice %14 {offsets = [0, 384], sizes = [2, 128], strides = [1, 1]} : vector<2x512xf32> to vector<2x128xf32>
    %30 = arith.negf %29 : vector<2x128xf32>
    %31 = math.exp %30 : vector<2x128xf32>
    %cst_19 = arith.constant 1.000000e+00 : f32
    %32 = vector.broadcast %cst_19 : f32 to vector<2x128xf32>
    %33 = arith.addf %32, %31 : vector<2x128xf32>
    %34 = arith.divf %32, %33 : vector<2x128xf32>
    %c0_20 = arith.constant 0 : index
    %c0_21 = arith.constant 0 : index
    %35 = vector.load %arg7[%c0_20, %c0_21] : memref<2x128xf32, #tpu.memory_space<vmem>>, vector<2x128xf32>
    %36 = arith.mulf %26, %35 : vector<2x128xf32>
    %37 = arith.mulf %20, %28 : vector<2x128xf32>
    %38 = arith.addf %36, %37 : vector<2x128xf32>
    %39 = math.tanh %38 : vector<2x128xf32>
    %40 = arith.mulf %34, %39 : vector<2x128xf32>
    %c0_22 = arith.constant 0 : index
    %c0_23 = arith.constant 0 : index
    %41 = vector.load %arg7[%c0_22, %c0_23] : memref<2x128xf32, #tpu.memory_space<vmem>>, vector<2x128xf32>
    tpu.vector_store %arg7[%c0_22, %c0_23], %38 {strides = array<i32>} : memref<2x128xf32, #tpu.memory_space<vmem>>, vector<2x128xf32>,
    %c0_24 = arith.constant 0 : index
    %c0_25 = arith.constant 0 : index
    %42 = vector.load %arg6[%c0_24, %c0_25] : memref<2x128xf32, #tpu.memory_space<vmem>>, vector<2x128xf32>
    tpu.vector_store %arg6[%c0_24, %c0_25], %40 {strides = array<i32>} : memref<2x128xf32, #tpu.memory_space<vmem>>, vector<2x128xf32>,
    %c0_26 = arith.constant 0 : index
    %c0_27 = arith.constant 0 : index
    %c0_28 = arith.constant 0 : index
    %43 = vector.load %arg5[%c0_26, %c0_27, %c0_28] : memref<8x2x128xf32, #tpu.memory_space<vmem>>, vector<1x2x128xf32>
    %44 = vector.shape_cast %43 : vector<1x2x128xf32> to vector<2x128xf32>
    %45 = vector.shape_cast %40 : vector<2x128xf32> to vector<1x2x128xf32>
    tpu.vector_store %arg5[%c0_26, %c0_27, %c0_28], %45 {strides = array<i32>} : memref<8x2x128xf32, #tpu.memory_space<vmem>>, vector<1x2x128xf32>,
    %c1 = arith.constant 1 : index
    %c0_29 = arith.constant 0 : index
    %c0_30 = arith.constant 0 : index
    %46 = vector.load %arg1[%c1, %c0_29, %c0_30] : memref<8x2x128xf32, #tpu.memory_space<vmem>>, vector<1x2x128xf32>
    %47 = vector.shape_cast %46 : vector<1x2x128xf32> to vector<2x128xf32>
    %c0_31 = arith.constant 0 : index
    %c0_32 = arith.constant 0 : index
    %48 = vector.load %arg2[%c0_31, %c0_32] : memref<128x512xf32, #tpu.memory_space<vmem>>, vector<128x512xf32>
    %cst_33 = arith.constant dense<0.000000e+00> : vector<2x512xf32>
    %49 = tpu.matmul %47, %48, %cst_33 {dimension_numbers = #tpu.dot_dimension_numbers<[1], [0], [0], [1], [0, 0, 1, 1], [], []>} : vector<2x128xf32>, vector<128x512xf32>, vector<2x512xf32> -> vector<2x512xf32>
    %c0_34 = arith.constant 0 : index
    %c0_35 = arith.constant 0 : index
    %50 = vector.load %arg6[%c0_34, %c0_35] : memref<2x128xf32, #tpu.memory_space<vmem>>, vector<2x128xf32>
    %c0_36 = arith.constant 0 : index
    %c0_37 = arith.constant 0 : index
    %51 = vector.load %arg3[%c0_36, %c0_37] : memref<128x512xf32, #tpu.memory_space<vmem>>, vector<128x512xf32>
    %cst_38 = arith.constant dense<0.000000e+00> : vector<2x512xf32>
    %52 = tpu.matmul %50, %51, %cst_38 {dimension_numbers = #tpu.dot_dimension_numbers<[1], [0], [0], [1], [0, 0, 1, 1], [], []>} : vector<2x128xf32>, vector<128x512xf32>, vector<2x512xf32> -> vector<2x512xf32>
    %53 = arith.addf %49, %52 : vector<2x512xf32>
    %c0_39 = arith.constant 0 : index
    %c0_40 = arith.constant 0 : index
    %54 = vector.load %arg4[%c0_39, %c0_40] : memref<1x512xf32, #tpu.memory_space<vmem>>, vector<1x512xf32>
    %55 = vector.broadcast %54 : vector<1x512xf32> to vector<2x512xf32>
    %56 = arith.addf %53, %55 : vector<2x512xf32>
    %57 = vector.extract_strided_slice %56 {offsets = [0, 0], sizes = [2, 128], strides = [1, 1]} : vector<2x512xf32> to vector<2x128xf32>
    %58 = arith.negf %57 : vector<2x128xf32>
    %59 = math.exp %58 : vector<2x128xf32>
    %cst_41 = arith.constant 1.000000e+00 : f32
    %60 = vector.broadcast %cst_41 : f32 to vector<2x128xf32>
    %61 = arith.addf %60, %59 : vector<2x128xf32>
    %62 = arith.divf %60, %61 : vector<2x128xf32>
    %63 = vector.extract_strided_slice %56 {offsets = [0, 128], sizes = [2, 128], strides = [1, 1]} : vector<2x512xf32> to vector<2x128xf32>
    %64 = arith.negf %63 : vector<2x128xf32>
    %65 = math.exp %64 : vector<2x128xf32>
    %cst_42 = arith.constant 1.000000e+00 : f32
    %66 = vector.broadcast %cst_42 : f32 to vector<2x128xf32>
    %67 = arith.addf %66, %65 : vector<2x128xf32>
    %68 = arith.divf %66, %67 : vector<2x128xf32>
    %69 = vector.extract_strided_slice %56 {offsets = [0, 256], sizes = [2, 128], strides = [1, 1]} : vector<2x512xf32> to vector<2x128xf32>
    %70 = math.tanh %69 : vector<2x128xf32>
    %71 = vector.extract_strided_slice %56 {offsets = [0, 384], sizes = [2, 128], strides = [1, 1]} : vector<2x512xf32> to vector<2x128xf32>
    %72 = arith.negf %71 : vector<2x128xf32>
    %73 = math.exp %72 : vector<2x128xf32>
    %cst_43 = arith.constant 1.000000e+00 : f32
    %74 = vector.broadcast %cst_43 : f32 to vector<2x128xf32>
    %75 = arith.addf %74, %73 : vector<2x128xf32>
    %76 = arith.divf %74, %75 : vector<2x128xf32>
    %c0_44 = arith.constant 0 : index
    %c0_45 = arith.constant 0 : index
    %77 = vector.load %arg7[%c0_44, %c0_45] : memref<2x128xf32, #tpu.memory_space<vmem>>, vector<2x128xf32>
    %78 = arith.mulf %68, %77 : vector<2x128xf32>
    %79 = arith.mulf %62, %70 : vector<2x128xf32>
    %80 = arith.addf %78, %79 : vector<2x128xf32>
    %81 = math.tanh %80 : vector<2x128xf32>
    %82 = arith.mulf %76, %81 : vector<2x128xf32>
    %c0_46 = arith.constant 0 : index
    %c0_47 = arith.constant 0 : index
    %83 = vector.load %arg7[%c0_46, %c0_47] : memref<2x128xf32, #tpu.memory_space<vmem>>, vector<2x128xf32>
    tpu.vector_store %arg7[%c0_46, %c0_47], %80 {strides = array<i32>} : memref<2x128xf32, #tpu.memory_space<vmem>>, vector<2x128xf32>,
    %c0_48 = arith.constant 0 : index
    %c0_49 = arith.constant 0 : index
    %84 = vector.load %arg6[%c0_48, %c0_49] : memref<2x128xf32, #tpu.memory_space<vmem>>, vector<2x128xf32>
    tpu.vector_store %arg6[%c0_48, %c0_49], %82 {strides = array<i32>} : memref<2x128xf32, #tpu.memory_space<vmem>>, vector<2x128xf32>,
    %c1_50 = arith.constant 1 : index
    %c0_51 = arith.constant 0 : index
    %c0_52 = arith.constant 0 : index
    %85 = vector.load %arg5[%c1_50, %c0_51, %c0_52] : memref<8x2x128xf32, #tpu.memory_space<vmem>>, vector<1x2x128xf32>
    %86 = vector.shape_cast %85 : vector<1x2x128xf32> to vector<2x128xf32>
    %87 = vector.shape_cast %82 : vector<2x128xf32> to vector<1x2x128xf32>
    tpu.vector_store %arg5[%c1_50, %c0_51, %c0_52], %87 {strides = array<i32>} : memref<8x2x128xf32, #tpu.memory_space<vmem>>, vector<1x2x128xf32>,
    %c2 = arith.constant 2 : index
    %c0_53 = arith.constant 0 : index
    %c0_54 = arith.constant 0 : index
    %88 = vector.load %arg1[%c2, %c0_53, %c0_54] : memref<8x2x128xf32, #tpu.memory_space<vmem>>, vector<1x2x128xf32>
    %89 = vector.shape_cast %88 : vector<1x2x128xf32> to vector<2x128xf32>
    %c0_55 = arith.constant 0 : index
    %c0_56 = arith.constant 0 : index
    %90 = vector.load %arg2[%c0_55, %c0_56] : memref<128x512xf32, #tpu.memory_space<vmem>>, vector<128x512xf32>
    %cst_57 = arith.constant dense<0.000000e+00> : vector<2x512xf32>
    %91 = tpu.matmul %89, %90, %cst_57 {dimension_numbers = #tpu.dot_dimension_numbers<[1], [0], [0], [1], [0, 0, 1, 1], [], []>} : vector<2x128xf32>, vector<128x512xf32>, vector<2x512xf32> -> vector<2x512xf32>
    %c0_58 = arith.constant 0 : index
    %c0_59 = arith.constant 0 : index
    %92 = vector.load %arg6[%c0_58, %c0_59] : memref<2x128xf32, #tpu.memory_space<vmem>>, vector<2x128xf32>
    %c0_60 = arith.constant 0 : index
    %c0_61 = arith.constant 0 : index
    %93 = vector.load %arg3[%c0_60, %c0_61] : memref<128x512xf32, #tpu.memory_space<vmem>>, vector<128x512xf32>
    %cst_62 = arith.constant dense<0.000000e+00> : vector<2x512xf32>
    %94 = tpu.matmul %92, %93, %cst_62 {dimension_numbers = #tpu.dot_dimension_numbers<[1], [0], [0], [1], [0, 0, 1, 1], [], []>} : vector<2x128xf32>, vector<128x512xf32>, vector<2x512xf32> -> vector<2x512xf32>
    %95 = arith.addf %91, %94 : vector<2x512xf32>
    %c0_63 = arith.constant 0 : index
    %c0_64 = arith.constant 0 : index
    %96 = vector.load %arg4[%c0_63, %c0_64] : memref<1x512xf32, #tpu.memory_space<vmem>>, vector<1x512xf32>
    %97 = vector.broadcast %96 : vector<1x512xf32> to vector<2x512xf32>
    %98 = arith.addf %95, %97 : vector<2x512xf32>
    %99 = vector.extract_strided_slice %98 {offsets = [0, 0], sizes = [2, 128], strides = [1, 1]} : vector<2x512xf32> to vector<2x128xf32>
    %100 = arith.negf %99 : vector<2x128xf32>
    %101 = math.exp %100 : vector<2x128xf32>
    %cst_65 = arith.constant 1.000000e+00 : f32
    %102 = vector.broadcast %cst_65 : f32 to vector<2x128xf32>
    %103 = arith.addf %102, %101 : vector<2x128xf32>
    %104 = arith.divf %102, %103 : vector<2x128xf32>
    %105 = vector.extract_strided_slice %98 {offsets = [0, 128], sizes = [2, 128], strides = [1, 1]} : vector<2x512xf32> to vector<2x128xf32>
    %106 = arith.negf %105 : vector<2x128xf32>
    %107 = math.exp %106 : vector<2x128xf32>
    %cst_66 = arith.constant 1.000000e+00 : f32
    %108 = vector.broadcast %cst_66 : f32 to vector<2x128xf32>
    %109 = arith.addf %108, %107 : vector<2x128xf32>
    %110 = arith.divf %108, %109 : vector<2x128xf32>
    %111 = vector.extract_strided_slice %98 {offsets = [0, 256], sizes = [2, 128], strides = [1, 1]} : vector<2x512xf32> to vector<2x128xf32>
    %112 = math.tanh %111 : vector<2x128xf32>
    %113 = vector.extract_strided_slice %98 {offsets = [0, 384], sizes = [2, 128], strides = [1, 1]} : vector<2x512xf32> to vector<2x128xf32>
    %114 = arith.negf %113 : vector<2x128xf32>
    %115 = math.exp %114 : vector<2x128xf32>
    %cst_67 = arith.constant 1.000000e+00 : f32
    %116 = vector.broadcast %cst_67 : f32 to vector<2x128xf32>
    %117 = arith.addf %116, %115 : vector<2x128xf32>
    %118 = arith.divf %116, %117 : vector<2x128xf32>
    %c0_68 = arith.constant 0 : index
    %c0_69 = arith.constant 0 : index
    %119 = vector.load %arg7[%c0_68, %c0_69] : memref<2x128xf32, #tpu.memory_space<vmem>>, vector<2x128xf32>
    %120 = arith.mulf %110, %119 : vector<2x128xf32>
    %121 = arith.mulf %104, %112 : vector<2x128xf32>
    %122 = arith.addf %120, %121 : vector<2x128xf32>
    %123 = math.tanh %122 : vector<2x128xf32>
    %124 = arith.mulf %118, %123 : vector<2x128xf32>
    %c0_70 = arith.constant 0 : index
    %c0_71 = arith.constant 0 : index
    %125 = vector.load %arg7[%c0_70, %c0_71] : memref<2x128xf32, #tpu.memory_space<vmem>>, vector<2x128xf32>
    tpu.vector_store %arg7[%c0_70, %c0_71], %122 {strides = array<i32>} : memref<2x128xf32, #tpu.memory_space<vmem>>, vector<2x128xf32>,
    %c0_72 = arith.constant 0 : index
    %c0_73 = arith.constant 0 : index
    %126 = vector.load %arg6[%c0_72, %c0_73] : memref<2x128xf32, #tpu.memory_space<vmem>>, vector<2x128xf32>
    tpu.vector_store %arg6[%c0_72, %c0_73], %124 {strides = array<i32>} : memref<2x128xf32, #tpu.memory_space<vmem>>, vector<2x128xf32>,
    %c2_74 = arith.constant 2 : index
    %c0_75 = arith.constant 0 : index
    %c0_76 = arith.constant 0 : index
    %127 = vector.load %arg5[%c2_74, %c0_75, %c0_76] : memref<8x2x128xf32, #tpu.memory_space<vmem>>, vector<1x2x128xf32>
    %128 = vector.shape_cast %127 : vector<1x2x128xf32> to vector<2x128xf32>
    %129 = vector.shape_cast %124 : vector<2x128xf32> to vector<1x2x128xf32>
    tpu.vector_store %arg5[%c2_74, %c0_75, %c0_76], %129 {strides = array<i32>} : memref<8x2x128xf32, #tpu.memory_space<vmem>>, vector<1x2x128xf32>,
    %c3 = arith.constant 3 : index
    %c0_77 = arith.constant 0 : index
    %c0_78 = arith.constant 0 : index
    %130 = vector.load %arg1[%c3, %c0_77, %c0_78] : memref<8x2x128xf32, #tpu.memory_space<vmem>>, vector<1x2x128xf32>
    %131 = vector.shape_cast %130 : vector<1x2x128xf32> to vector<2x128xf32>
    %c0_79 = arith.constant 0 : index
    %c0_80 = arith.constant 0 : index
    %132 = vector.load %arg2[%c0_79, %c0_80] : memref<128x512xf32, #tpu.memory_space<vmem>>, vector<128x512xf32>
    %cst_81 = arith.constant dense<0.000000e+00> : vector<2x512xf32>
    %133 = tpu.matmul %131, %132, %cst_81 {dimension_numbers = #tpu.dot_dimension_numbers<[1], [0], [0], [1], [0, 0, 1, 1], [], []>} : vector<2x128xf32>, vector<128x512xf32>, vector<2x512xf32> -> vector<2x512xf32>
    %c0_82 = arith.constant 0 : index
    %c0_83 = arith.constant 0 : index
    %134 = vector.load %arg6[%c0_82, %c0_83] : memref<2x128xf32, #tpu.memory_space<vmem>>, vector<2x128xf32>
    %c0_84 = arith.constant 0 : index
    %c0_85 = arith.constant 0 : index
    %135 = vector.load %arg3[%c0_84, %c0_85] : memref<128x512xf32, #tpu.memory_space<vmem>>, vector<128x512xf32>
    %cst_86 = arith.constant dense<0.000000e+00> : vector<2x512xf32>
    %136 = tpu.matmul %134, %135, %cst_86 {dimension_numbers = #tpu.dot_dimension_numbers<[1], [0], [0], [1], [0, 0, 1, 1], [], []>} : vector<2x128xf32>, vector<128x512xf32>, vector<2x512xf32> -> vector<2x512xf32>
    %137 = arith.addf %133, %136 : vector<2x512xf32>
    %c0_87 = arith.constant 0 : index
    %c0_88 = arith.constant 0 : index
    %138 = vector.load %arg4[%c0_87, %c0_88] : memref<1x512xf32, #tpu.memory_space<vmem>>, vector<1x512xf32>
    %139 = vector.broadcast %138 : vector<1x512xf32> to vector<2x512xf32>
    %140 = arith.addf %137, %139 : vector<2x512xf32>
    %141 = vector.extract_strided_slice %140 {offsets = [0, 0], sizes = [2, 128], strides = [1, 1]} : vector<2x512xf32> to vector<2x128xf32>
    %142 = arith.negf %141 : vector<2x128xf32>
    %143 = math.exp %142 : vector<2x128xf32>
    %cst_89 = arith.constant 1.000000e+00 : f32
    %144 = vector.broadcast %cst_89 : f32 to vector<2x128xf32>
    %145 = arith.addf %144, %143 : vector<2x128xf32>
    %146 = arith.divf %144, %145 : vector<2x128xf32>
    %147 = vector.extract_strided_slice %140 {offsets = [0, 128], sizes = [2, 128], strides = [1, 1]} : vector<2x512xf32> to vector<2x128xf32>
    %148 = arith.negf %147 : vector<2x128xf32>
    %149 = math.exp %148 : vector<2x128xf32>
    %cst_90 = arith.constant 1.000000e+00 : f32
    %150 = vector.broadcast %cst_90 : f32 to vector<2x128xf32>
    %151 = arith.addf %150, %149 : vector<2x128xf32>
    %152 = arith.divf %150, %151 : vector<2x128xf32>
    %153 = vector.extract_strided_slice %140 {offsets = [0, 256], sizes = [2, 128], strides = [1, 1]} : vector<2x512xf32> to vector<2x128xf32>
    %154 = math.tanh %153 : vector<2x128xf32>
    %155 = vector.extract_strided_slice %140 {offsets = [0, 384], sizes = [2, 128], strides = [1, 1]} : vector<2x512xf32> to vector<2x128xf32>
    %156 = arith.negf %155 : vector<2x128xf32>
    %157 = math.exp %156 : vector<2x128xf32>
    %cst_91 = arith.constant 1.000000e+00 : f32
    %158 = vector.broadcast %cst_91 : f32 to vector<2x128xf32>
    %159 = arith.addf %158, %157 : vector<2x128xf32>
    %160 = arith.divf %158, %159 : vector<2x128xf32>
    %c0_92 = arith.constant 0 : index
    %c0_93 = arith.constant 0 : index
    %161 = vector.load %arg7[%c0_92, %c0_93] : memref<2x128xf32, #tpu.memory_space<vmem>>, vector<2x128xf32>
    %162 = arith.mulf %152, %161 : vector<2x128xf32>
    %163 = arith.mulf %146, %154 : vector<2x128xf32>
    %164 = arith.addf %162, %163 : vector<2x128xf32>
    %165 = math.tanh %164 : vector<2x128xf32>
    %166 = arith.mulf %160, %165 : vector<2x128xf32>
    %c0_94 = arith.constant 0 : index
    %c0_95 = arith.constant 0 : index
    %167 = vector.load %arg7[%c0_94, %c0_95] : memref<2x128xf32, #tpu.memory_space<vmem>>, vector<2x128xf32>
    tpu.vector_store %arg7[%c0_94, %c0_95], %164 {strides = array<i32>} : memref<2x128xf32, #tpu.memory_space<vmem>>, vector<2x128xf32>,
    %c0_96 = arith.constant 0 : index
    %c0_97 = arith.constant 0 : index
    %168 = vector.load %arg6[%c0_96, %c0_97] : memref<2x128xf32, #tpu.memory_space<vmem>>, vector<2x128xf32>
    tpu.vector_store %arg6[%c0_96, %c0_97], %166 {strides = array<i32>} : memref<2x128xf32, #tpu.memory_space<vmem>>, vector<2x128xf32>,
    %c3_98 = arith.constant 3 : index
    %c0_99 = arith.constant 0 : index
    %c0_100 = arith.constant 0 : index
    %169 = vector.load %arg5[%c3_98, %c0_99, %c0_100] : memref<8x2x128xf32, #tpu.memory_space<vmem>>, vector<1x2x128xf32>
    %170 = vector.shape_cast %169 : vector<1x2x128xf32> to vector<2x128xf32>
    %171 = vector.shape_cast %166 : vector<2x128xf32> to vector<1x2x128xf32>
    tpu.vector_store %arg5[%c3_98, %c0_99, %c0_100], %171 {strides = array<i32>} : memref<8x2x128xf32, #tpu.memory_space<vmem>>, vector<1x2x128xf32>,
    %c4 = arith.constant 4 : index
    %c0_101 = arith.constant 0 : index
    %c0_102 = arith.constant 0 : index
    %172 = vector.load %arg1[%c4, %c0_101, %c0_102] : memref<8x2x128xf32, #tpu.memory_space<vmem>>, vector<1x2x128xf32>
    %173 = vector.shape_cast %172 : vector<1x2x128xf32> to vector<2x128xf32>
    %c0_103 = arith.constant 0 : index
    %c0_104 = arith.constant 0 : index
    %174 = vector.load %arg2[%c0_103, %c0_104] : memref<128x512xf32, #tpu.memory_space<vmem>>, vector<128x512xf32>
    %cst_105 = arith.constant dense<0.000000e+00> : vector<2x512xf32>
    %175 = tpu.matmul %173, %174, %cst_105 {dimension_numbers = #tpu.dot_dimension_numbers<[1], [0], [0], [1], [0, 0, 1, 1], [], []>} : vector<2x128xf32>, vector<128x512xf32>, vector<2x512xf32> -> vector<2x512xf32>
    %c0_106 = arith.constant 0 : index
    %c0_107 = arith.constant 0 : index
    %176 = vector.load %arg6[%c0_106, %c0_107] : memref<2x128xf32, #tpu.memory_space<vmem>>, vector<2x128xf32>
    %c0_108 = arith.constant 0 : index
    %c0_109 = arith.constant 0 : index
    %177 = vector.load %arg3[%c0_108, %c0_109] : memref<128x512xf32, #tpu.memory_space<vmem>>, vector<128x512xf32>
    %cst_110 = arith.constant dense<0.000000e+00> : vector<2x512xf32>
    %178 = tpu.matmul %176, %177, %cst_110 {dimension_numbers = #tpu.dot_dimension_numbers<[1], [0], [0], [1], [0, 0, 1, 1], [], []>} : vector<2x128xf32>, vector<128x512xf32>, vector<2x512xf32> -> vector<2x512xf32>
    %179 = arith.addf %175, %178 : vector<2x512xf32>
    %c0_111 = arith.constant 0 : index
    %c0_112 = arith.constant 0 : index
    %180 = vector.load %arg4[%c0_111, %c0_112] : memref<1x512xf32, #tpu.memory_space<vmem>>, vector<1x512xf32>
    %181 = vector.broadcast %180 : vector<1x512xf32> to vector<2x512xf32>
    %182 = arith.addf %179, %181 : vector<2x512xf32>
    %183 = vector.extract_strided_slice %182 {offsets = [0, 0], sizes = [2, 128], strides = [1, 1]} : vector<2x512xf32> to vector<2x128xf32>
    %184 = arith.negf %183 : vector<2x128xf32>
    %185 = math.exp %184 : vector<2x128xf32>
    %cst_113 = arith.constant 1.000000e+00 : f32
    %186 = vector.broadcast %cst_113 : f32 to vector<2x128xf32>
    %187 = arith.addf %186, %185 : vector<2x128xf32>
    %188 = arith.divf %186, %187 : vector<2x128xf32>
    %189 = vector.extract_strided_slice %182 {offsets = [0, 128], sizes = [2, 128], strides = [1, 1]} : vector<2x512xf32> to vector<2x128xf32>
    %190 = arith.negf %189 : vector<2x128xf32>
    %191 = math.exp %190 : vector<2x128xf32>
    %cst_114 = arith.constant 1.000000e+00 : f32
    %192 = vector.broadcast %cst_114 : f32 to vector<2x128xf32>
    %193 = arith.addf %192, %191 : vector<2x128xf32>
    %194 = arith.divf %192, %193 : vector<2x128xf32>
    %195 = vector.extract_strided_slice %182 {offsets = [0, 256], sizes = [2, 128], strides = [1, 1]} : vector<2x512xf32> to vector<2x128xf32>
    %196 = math.tanh %195 : vector<2x128xf32>
    %197 = vector.extract_strided_slice %182 {offsets = [0, 384], sizes = [2, 128], strides = [1, 1]} : vector<2x512xf32> to vector<2x128xf32>
    %198 = arith.negf %197 : vector<2x128xf32>
    %199 = math.exp %198 : vector<2x128xf32>
    %cst_115 = arith.constant 1.000000e+00 : f32
    %200 = vector.broadcast %cst_115 : f32 to vector<2x128xf32>
    %201 = arith.addf %200, %199 : vector<2x128xf32>
    %202 = arith.divf %200, %201 : vector<2x128xf32>
    %c0_116 = arith.constant 0 : index
    %c0_117 = arith.constant 0 : index
    %203 = vector.load %arg7[%c0_116, %c0_117] : memref<2x128xf32, #tpu.memory_space<vmem>>, vector<2x128xf32>
    %204 = arith.mulf %194, %203 : vector<2x128xf32>
    %205 = arith.mulf %188, %196 : vector<2x128xf32>
    %206 = arith.addf %204, %205 : vector<2x128xf32>
    %207 = math.tanh %206 : vector<2x128xf32>
    %208 = arith.mulf %202, %207 : vector<2x128xf32>
    %c0_118 = arith.constant 0 : index
    %c0_119 = arith.constant 0 : index
    %209 = vector.load %arg7[%c0_118, %c0_119] : memref<2x128xf32, #tpu.memory_space<vmem>>, vector<2x128xf32>
    tpu.vector_store %arg7[%c0_118, %c0_119], %206 {strides = array<i32>} : memref<2x128xf32, #tpu.memory_space<vmem>>, vector<2x128xf32>,
    %c0_120 = arith.constant 0 : index
    %c0_121 = arith.constant 0 : index
    %210 = vector.load %arg6[%c0_120, %c0_121] : memref<2x128xf32, #tpu.memory_space<vmem>>, vector<2x128xf32>
    tpu.vector_store %arg6[%c0_120, %c0_121], %208 {strides = array<i32>} : memref<2x128xf32, #tpu.memory_space<vmem>>, vector<2x128xf32>,
    %c4_122 = arith.constant 4 : index
    %c0_123 = arith.constant 0 : index
    %c0_124 = arith.constant 0 : index
    %211 = vector.load %arg5[%c4_122, %c0_123, %c0_124] : memref<8x2x128xf32, #tpu.memory_space<vmem>>, vector<1x2x128xf32>
    %212 = vector.shape_cast %211 : vector<1x2x128xf32> to vector<2x128xf32>
    %213 = vector.shape_cast %208 : vector<2x128xf32> to vector<1x2x128xf32>
    tpu.vector_store %arg5[%c4_122, %c0_123, %c0_124], %213 {strides = array<i32>} : memref<8x2x128xf32, #tpu.memory_space<vmem>>, vector<1x2x128xf32>,
    %c5 = arith.constant 5 : index
    %c0_125 = arith.constant 0 : index
    %c0_126 = arith.constant 0 : index
    %214 = vector.load %arg1[%c5, %c0_125, %c0_126] : memref<8x2x128xf32, #tpu.memory_space<vmem>>, vector<1x2x128xf32>
    %215 = vector.shape_cast %214 : vector<1x2x128xf32> to vector<2x128xf32>
    %c0_127 = arith.constant 0 : index
    %c0_128 = arith.constant 0 : index
    %216 = vector.load %arg2[%c0_127, %c0_128] : memref<128x512xf32, #tpu.memory_space<vmem>>, vector<128x512xf32>
    %cst_129 = arith.constant dense<0.000000e+00> : vector<2x512xf32>
    %217 = tpu.matmul %215, %216, %cst_129 {dimension_numbers = #tpu.dot_dimension_numbers<[1], [0], [0], [1], [0, 0, 1, 1], [], []>} : vector<2x128xf32>, vector<128x512xf32>, vector<2x512xf32> -> vector<2x512xf32>
    %c0_130 = arith.constant 0 : index
    %c0_131 = arith.constant 0 : index
    %218 = vector.load %arg6[%c0_130, %c0_131] : memref<2x128xf32, #tpu.memory_space<vmem>>, vector<2x128xf32>
    %c0_132 = arith.constant 0 : index
    %c0_133 = arith.constant 0 : index
    %219 = vector.load %arg3[%c0_132, %c0_133] : memref<128x512xf32, #tpu.memory_space<vmem>>, vector<128x512xf32>
    %cst_134 = arith.constant dense<0.000000e+00> : vector<2x512xf32>
    %220 = tpu.matmul %218, %219, %cst_134 {dimension_numbers = #tpu.dot_dimension_numbers<[1], [0], [0], [1], [0, 0, 1, 1], [], []>} : vector<2x128xf32>, vector<128x512xf32>, vector<2x512xf32> -> vector<2x512xf32>
    %221 = arith.addf %217, %220 : vector<2x512xf32>
    %c0_135 = arith.constant 0 : index
    %c0_136 = arith.constant 0 : index
    %222 = vector.load %arg4[%c0_135, %c0_136] : memref<1x512xf32, #tpu.memory_space<vmem>>, vector<1x512xf32>
    %223 = vector.broadcast %222 : vector<1x512xf32> to vector<2x512xf32>
    %224 = arith.addf %221, %223 : vector<2x512xf32>
    %225 = vector.extract_strided_slice %224 {offsets = [0, 0], sizes = [2, 128], strides = [1, 1]} : vector<2x512xf32> to vector<2x128xf32>
    %226 = arith.negf %225 : vector<2x128xf32>
    %227 = math.exp %226 : vector<2x128xf32>
    %cst_137 = arith.constant 1.000000e+00 : f32
    %228 = vector.broadcast %cst_137 : f32 to vector<2x128xf32>
    %229 = arith.addf %228, %227 : vector<2x128xf32>
    %230 = arith.divf %228, %229 : vector<2x128xf32>
    %231 = vector.extract_strided_slice %224 {offsets = [0, 128], sizes = [2, 128], strides = [1, 1]} : vector<2x512xf32> to vector<2x128xf32>
    %232 = arith.negf %231 : vector<2x128xf32>
    %233 = math.exp %232 : vector<2x128xf32>
    %cst_138 = arith.constant 1.000000e+00 : f32
    %234 = vector.broadcast %cst_138 : f32 to vector<2x128xf32>
    %235 = arith.addf %234, %233 : vector<2x128xf32>
    %236 = arith.divf %234, %235 : vector<2x128xf32>
    %237 = vector.extract_strided_slice %224 {offsets = [0, 256], sizes = [2, 128], strides = [1, 1]} : vector<2x512xf32> to vector<2x128xf32>
    %238 = math.tanh %237 : vector<2x128xf32>
    %239 = vector.extract_strided_slice %224 {offsets = [0, 384], sizes = [2, 128], strides = [1, 1]} : vector<2x512xf32> to vector<2x128xf32>
    %240 = arith.negf %239 : vector<2x128xf32>
    %241 = math.exp %240 : vector<2x128xf32>
    %cst_139 = arith.constant 1.000000e+00 : f32
    %242 = vector.broadcast %cst_139 : f32 to vector<2x128xf32>
    %243 = arith.addf %242, %241 : vector<2x128xf32>
    %244 = arith.divf %242, %243 : vector<2x128xf32>
    %c0_140 = arith.constant 0 : index
    %c0_141 = arith.constant 0 : index
    %245 = vector.load %arg7[%c0_140, %c0_141] : memref<2x128xf32, #tpu.memory_space<vmem>>, vector<2x128xf32>
    %246 = arith.mulf %236, %245 : vector<2x128xf32>
    %247 = arith.mulf %230, %238 : vector<2x128xf32>
    %248 = arith.addf %246, %247 : vector<2x128xf32>
    %249 = math.tanh %248 : vector<2x128xf32>
    %250 = arith.mulf %244, %249 : vector<2x128xf32>
    %c0_142 = arith.constant 0 : index
    %c0_143 = arith.constant 0 : index
    %251 = vector.load %arg7[%c0_142, %c0_143] : memref<2x128xf32, #tpu.memory_space<vmem>>, vector<2x128xf32>
    tpu.vector_store %arg7[%c0_142, %c0_143], %248 {strides = array<i32>} : memref<2x128xf32, #tpu.memory_space<vmem>>, vector<2x128xf32>,
    %c0_144 = arith.constant 0 : index
    %c0_145 = arith.constant 0 : index
    %252 = vector.load %arg6[%c0_144, %c0_145] : memref<2x128xf32, #tpu.memory_space<vmem>>, vector<2x128xf32>
    tpu.vector_store %arg6[%c0_144, %c0_145], %250 {strides = array<i32>} : memref<2x128xf32, #tpu.memory_space<vmem>>, vector<2x128xf32>,
    %c5_146 = arith.constant 5 : index
    %c0_147 = arith.constant 0 : index
    %c0_148 = arith.constant 0 : index
    %253 = vector.load %arg5[%c5_146, %c0_147, %c0_148] : memref<8x2x128xf32, #tpu.memory_space<vmem>>, vector<1x2x128xf32>
    %254 = vector.shape_cast %253 : vector<1x2x128xf32> to vector<2x128xf32>
    %255 = vector.shape_cast %250 : vector<2x128xf32> to vector<1x2x128xf32>
    tpu.vector_store %arg5[%c5_146, %c0_147, %c0_148], %255 {strides = array<i32>} : memref<8x2x128xf32, #tpu.memory_space<vmem>>, vector<1x2x128xf32>,
    %c6 = arith.constant 6 : index
    %c0_149 = arith.constant 0 : index
    %c0_150 = arith.constant 0 : index
    %256 = vector.load %arg1[%c6, %c0_149, %c0_150] : memref<8x2x128xf32, #tpu.memory_space<vmem>>, vector<1x2x128xf32>
    %257 = vector.shape_cast %256 : vector<1x2x128xf32> to vector<2x128xf32>
    %c0_151 = arith.constant 0 : index
    %c0_152 = arith.constant 0 : index
    %258 = vector.load %arg2[%c0_151, %c0_152] : memref<128x512xf32, #tpu.memory_space<vmem>>, vector<128x512xf32>
    %cst_153 = arith.constant dense<0.000000e+00> : vector<2x512xf32>
    %259 = tpu.matmul %257, %258, %cst_153 {dimension_numbers = #tpu.dot_dimension_numbers<[1], [0], [0], [1], [0, 0, 1, 1], [], []>} : vector<2x128xf32>, vector<128x512xf32>, vector<2x512xf32> -> vector<2x512xf32>
    %c0_154 = arith.constant 0 : index
    %c0_155 = arith.constant 0 : index
    %260 = vector.load %arg6[%c0_154, %c0_155] : memref<2x128xf32, #tpu.memory_space<vmem>>, vector<2x128xf32>
    %c0_156 = arith.constant 0 : index
    %c0_157 = arith.constant 0 : index
    %261 = vector.load %arg3[%c0_156, %c0_157] : memref<128x512xf32, #tpu.memory_space<vmem>>, vector<128x512xf32>
    %cst_158 = arith.constant dense<0.000000e+00> : vector<2x512xf32>
    %262 = tpu.matmul %260, %261, %cst_158 {dimension_numbers = #tpu.dot_dimension_numbers<[1], [0], [0], [1], [0, 0, 1, 1], [], []>} : vector<2x128xf32>, vector<128x512xf32>, vector<2x512xf32> -> vector<2x512xf32>
    %263 = arith.addf %259, %262 : vector<2x512xf32>
    %c0_159 = arith.constant 0 : index
    %c0_160 = arith.constant 0 : index
    %264 = vector.load %arg4[%c0_159, %c0_160] : memref<1x512xf32, #tpu.memory_space<vmem>>, vector<1x512xf32>
    %265 = vector.broadcast %264 : vector<1x512xf32> to vector<2x512xf32>
    %266 = arith.addf %263, %265 : vector<2x512xf32>
    %267 = vector.extract_strided_slice %266 {offsets = [0, 0], sizes = [2, 128], strides = [1, 1]} : vector<2x512xf32> to vector<2x128xf32>
    %268 = arith.negf %267 : vector<2x128xf32>
    %269 = math.exp %268 : vector<2x128xf32>
    %cst_161 = arith.constant 1.000000e+00 : f32
    %270 = vector.broadcast %cst_161 : f32 to vector<2x128xf32>
    %271 = arith.addf %270, %269 : vector<2x128xf32>
    %272 = arith.divf %270, %271 : vector<2x128xf32>
    %273 = vector.extract_strided_slice %266 {offsets = [0, 128], sizes = [2, 128], strides = [1, 1]} : vector<2x512xf32> to vector<2x128xf32>
    %274 = arith.negf %273 : vector<2x128xf32>
    %275 = math.exp %274 : vector<2x128xf32>
    %cst_162 = arith.constant 1.000000e+00 : f32
    %276 = vector.broadcast %cst_162 : f32 to vector<2x128xf32>
    %277 = arith.addf %276, %275 : vector<2x128xf32>
    %278 = arith.divf %276, %277 : vector<2x128xf32>
    %279 = vector.extract_strided_slice %266 {offsets = [0, 256], sizes = [2, 128], strides = [1, 1]} : vector<2x512xf32> to vector<2x128xf32>
    %280 = math.tanh %279 : vector<2x128xf32>
    %281 = vector.extract_strided_slice %266 {offsets = [0, 384], sizes = [2, 128], strides = [1, 1]} : vector<2x512xf32> to vector<2x128xf32>
    %282 = arith.negf %281 : vector<2x128xf32>
    %283 = math.exp %282 : vector<2x128xf32>
    %cst_163 = arith.constant 1.000000e+00 : f32
    %284 = vector.broadcast %cst_163 : f32 to vector<2x128xf32>
    %285 = arith.addf %284, %283 : vector<2x128xf32>
    %286 = arith.divf %284, %285 : vector<2x128xf32>
    %c0_164 = arith.constant 0 : index
    %c0_165 = arith.constant 0 : index
    %287 = vector.load %arg7[%c0_164, %c0_165] : memref<2x128xf32, #tpu.memory_space<vmem>>, vector<2x128xf32>
    %288 = arith.mulf %278, %287 : vector<2x128xf32>
    %289 = arith.mulf %272, %280 : vector<2x128xf32>
    %290 = arith.addf %288, %289 : vector<2x128xf32>
    %291 = math.tanh %290 : vector<2x128xf32>
    %292 = arith.mulf %286, %291 : vector<2x128xf32>
    %c0_166 = arith.constant 0 : index
    %c0_167 = arith.constant 0 : index
    %293 = vector.load %arg7[%c0_166, %c0_167] : memref<2x128xf32, #tpu.memory_space<vmem>>, vector<2x128xf32>
    tpu.vector_store %arg7[%c0_166, %c0_167], %290 {strides = array<i32>} : memref<2x128xf32, #tpu.memory_space<vmem>>, vector<2x128xf32>,
    %c0_168 = arith.constant 0 : index
    %c0_169 = arith.constant 0 : index
    %294 = vector.load %arg6[%c0_168, %c0_169] : memref<2x128xf32, #tpu.memory_space<vmem>>, vector<2x128xf32>
    tpu.vector_store %arg6[%c0_168, %c0_169], %292 {strides = array<i32>} : memref<2x128xf32, #tpu.memory_space<vmem>>, vector<2x128xf32>,
    %c6_170 = arith.constant 6 : index
    %c0_171 = arith.constant 0 : index
    %c0_172 = arith.constant 0 : index
    %295 = vector.load %arg5[%c6_170, %c0_171, %c0_172] : memref<8x2x128xf32, #tpu.memory_space<vmem>>, vector<1x2x128xf32>
    %296 = vector.shape_cast %295 : vector<1x2x128xf32> to vector<2x128xf32>
    %297 = vector.shape_cast %292 : vector<2x128xf32> to vector<1x2x128xf32>
    tpu.vector_store %arg5[%c6_170, %c0_171, %c0_172], %297 {strides = array<i32>} : memref<8x2x128xf32, #tpu.memory_space<vmem>>, vector<1x2x128xf32>,
    %c7 = arith.constant 7 : index
    %c0_173 = arith.constant 0 : index
    %c0_174 = arith.constant 0 : index
    %298 = vector.load %arg1[%c7, %c0_173, %c0_174] : memref<8x2x128xf32, #tpu.memory_space<vmem>>, vector<1x2x128xf32>
    %299 = vector.shape_cast %298 : vector<1x2x128xf32> to vector<2x128xf32>
    %c0_175 = arith.constant 0 : index
    %c0_176 = arith.constant 0 : index
    %300 = vector.load %arg2[%c0_175, %c0_176] : memref<128x512xf32, #tpu.memory_space<vmem>>, vector<128x512xf32>
    %cst_177 = arith.constant dense<0.000000e+00> : vector<2x512xf32>
    %301 = tpu.matmul %299, %300, %cst_177 {dimension_numbers = #tpu.dot_dimension_numbers<[1], [0], [0], [1], [0, 0, 1, 1], [], []>} : vector<2x128xf32>, vector<128x512xf32>, vector<2x512xf32> -> vector<2x512xf32>
    %c0_178 = arith.constant 0 : index
    %c0_179 = arith.constant 0 : index
    %302 = vector.load %arg6[%c0_178, %c0_179] : memref<2x128xf32, #tpu.memory_space<vmem>>, vector<2x128xf32>
    %c0_180 = arith.constant 0 : index
    %c0_181 = arith.constant 0 : index
    %303 = vector.load %arg3[%c0_180, %c0_181] : memref<128x512xf32, #tpu.memory_space<vmem>>, vector<128x512xf32>
    %cst_182 = arith.constant dense<0.000000e+00> : vector<2x512xf32>
    %304 = tpu.matmul %302, %303, %cst_182 {dimension_numbers = #tpu.dot_dimension_numbers<[1], [0], [0], [1], [0, 0, 1, 1], [], []>} : vector<2x128xf32>, vector<128x512xf32>, vector<2x512xf32> -> vector<2x512xf32>
    %305 = arith.addf %301, %304 : vector<2x512xf32>
    %c0_183 = arith.constant 0 : index
    %c0_184 = arith.constant 0 : index
    %306 = vector.load %arg4[%c0_183, %c0_184] : memref<1x512xf32, #tpu.memory_space<vmem>>, vector<1x512xf32>
    %307 = vector.broadcast %306 : vector<1x512xf32> to vector<2x512xf32>
    %308 = arith.addf %305, %307 : vector<2x512xf32>
    %309 = vector.extract_strided_slice %308 {offsets = [0, 0], sizes = [2, 128], strides = [1, 1]} : vector<2x512xf32> to vector<2x128xf32>
    %310 = arith.negf %309 : vector<2x128xf32>
    %311 = math.exp %310 : vector<2x128xf32>
    %cst_185 = arith.constant 1.000000e+00 : f32
    %312 = vector.broadcast %cst_185 : f32 to vector<2x128xf32>
    %313 = arith.addf %312, %311 : vector<2x128xf32>
    %314 = arith.divf %312, %313 : vector<2x128xf32>
    %315 = vector.extract_strided_slice %308 {offsets = [0, 128], sizes = [2, 128], strides = [1, 1]} : vector<2x512xf32> to vector<2x128xf32>
    %316 = arith.negf %315 : vector<2x128xf32>
    %317 = math.exp %316 : vector<2x128xf32>
    %cst_186 = arith.constant 1.000000e+00 : f32
    %318 = vector.broadcast %cst_186 : f32 to vector<2x128xf32>
    %319 = arith.addf %318, %317 : vector<2x128xf32>
    %320 = arith.divf %318, %319 : vector<2x128xf32>
    %321 = vector.extract_strided_slice %308 {offsets = [0, 256], sizes = [2, 128], strides = [1, 1]} : vector<2x512xf32> to vector<2x128xf32>
    %322 = math.tanh %321 : vector<2x128xf32>
    %323 = vector.extract_strided_slice %308 {offsets = [0, 384], sizes = [2, 128], strides = [1, 1]} : vector<2x512xf32> to vector<2x128xf32>
    %324 = arith.negf %323 : vector<2x128xf32>
    %325 = math.exp %324 : vector<2x128xf32>
    %cst_187 = arith.constant 1.000000e+00 : f32
    %326 = vector.broadcast %cst_187 : f32 to vector<2x128xf32>
    %327 = arith.addf %326, %325 : vector<2x128xf32>
    %328 = arith.divf %326, %327 : vector<2x128xf32>
    %c0_188 = arith.constant 0 : index
    %c0_189 = arith.constant 0 : index
    %329 = vector.load %arg7[%c0_188, %c0_189] : memref<2x128xf32, #tpu.memory_space<vmem>>, vector<2x128xf32>
    %330 = arith.mulf %320, %329 : vector<2x128xf32>
    %331 = arith.mulf %314, %322 : vector<2x128xf32>
    %332 = arith.addf %330, %331 : vector<2x128xf32>
    %333 = math.tanh %332 : vector<2x128xf32>
    %334 = arith.mulf %328, %333 : vector<2x128xf32>
    %c0_190 = arith.constant 0 : index
    %c0_191 = arith.constant 0 : index
    %335 = vector.load %arg7[%c0_190, %c0_191] : memref<2x128xf32, #tpu.memory_space<vmem>>, vector<2x128xf32>
    tpu.vector_store %arg7[%c0_190, %c0_191], %332 {strides = array<i32>} : memref<2x128xf32, #tpu.memory_space<vmem>>, vector<2x128xf32>,
    %c0_192 = arith.constant 0 : index
    %c0_193 = arith.constant 0 : index
    %336 = vector.load %arg6[%c0_192, %c0_193] : memref<2x128xf32, #tpu.memory_space<vmem>>, vector<2x128xf32>
    tpu.vector_store %arg6[%c0_192, %c0_193], %334 {strides = array<i32>} : memref<2x128xf32, #tpu.memory_space<vmem>>, vector<2x128xf32>,
    %c7_194 = arith.constant 7 : index
    %c0_195 = arith.constant 0 : index
    %c0_196 = arith.constant 0 : index
    %337 = vector.load %arg5[%c7_194, %c0_195, %c0_196] : memref<8x2x128xf32, #tpu.memory_space<vmem>>, vector<1x2x128xf32>
    %338 = vector.shape_cast %337 : vector<1x2x128xf32> to vector<2x128xf32>
    %339 = vector.shape_cast %334 : vector<2x128xf32> to vector<1x2x128xf32>
    tpu.vector_store %arg5[%c7_194, %c0_195, %c0_196], %339 {strides = array<i32>} : memref<8x2x128xf32, #tpu.memory_space<vmem>>, vector<1x2x128xf32>,
    return
  }
  func.func @transform_0(%arg0: i32) -> (i32, i32, i32) {
    %c0_i32 = arith.constant 0 : i32
    %c0_i32_0 = arith.constant 0 : i32
    %c0_i32_1 = arith.constant 0 : i32
    %c0_i32_2 = arith.constant 0 : i32
    return %c0_i32, %c0_i32_0, %c0_i32_1 : i32, i32, i32
  }
  func.func @transform_1(%arg0: i32) -> (i32, i32) {
    %c0_i32 = arith.constant 0 : i32
    %c0_i32_0 = arith.constant 0 : i32
    %c0_i32_1 = arith.constant 0 : i32
    return %c0_i32, %c0_i32_0 : i32, i32
  }
  func.func @transform_2(%arg0: i32) -> (i32, i32) {
    %c0_i32 = arith.constant 0 : i32
    %c0_i32_0 = arith.constant 0 : i32
    %c0_i32_1 = arith.constant 0 : i32
    return %c0_i32, %c0_i32_0 : i32, i32
  }
  func.func @transform_3(%arg0: i32) -> (i32, i32) {
    %c0_i32 = arith.constant 0 : i32
    %c0_i32_0 = arith.constant 0 : i32
    %c0_i32_1 = arith.constant 0 : i32
    return %c0_i32, %c0_i32_0 : i32, i32
  }
  func.func @transform_4(%arg0: i32) -> (i32, i32, i32) {
    %c0_i32 = arith.constant 0 : i32
    %c0_i32_0 = arith.constant 0 : i32
    %c0_i32_1 = arith.constant 0 : i32
    %c0_i32_2 = arith.constant 0 : i32
    return %c0_i32, %c0_i32_0, %c0_i32_1 : i32, i32, i32
  }
}

module attributes {stable_mosaic.version = 11 : i64} {
  func.func @_tail_kernel(%arg0: i32, %arg1: memref<3x2x128xf32, #tpu.memory_space<vmem>>, %arg2: memref<3x2x128xf32, #tpu.memory_space<vmem>>, %arg3: memref<128x128xf32, #tpu.memory_space<vmem>>, %arg4: memref<1x128xf32, #tpu.memory_space<vmem>>, %arg5: memref<128x128xf32, #tpu.memory_space<vmem>>, %arg6: memref<128x128xf32, #tpu.memory_space<vmem>>, %arg7: memref<1x128xf32, #tpu.memory_space<vmem>>, %arg8: memref<128x128xf32, #tpu.memory_space<vmem>>, %arg9: memref<128x128xf32, #tpu.memory_space<vmem>>, %arg10: memref<1x128xf32, #tpu.memory_space<vmem>>, %arg11: memref<128x128xf32, #tpu.memory_space<vmem>>, %arg12: memref<1x128xf32, #tpu.memory_space<vmem>>, %arg13: memref<2x128xf32, #tpu.memory_space<vmem>>) attributes {dimension_semantics = [#tpu.dimension_semantics<arbitrary>], iteration_bounds = array<i64: 1>, scalar_prefetch = 0 : i64, scratch_operands = 0 : i64, tpu.core_type = #tpu.core_type<tc>, window_params = [{pipeline_mode = #tpu.pipeline_mode<synchronous>, transform_indices = @transform_0, window_bounds = array<i64: 3, 2, 128>}, {pipeline_mode = #tpu.pipeline_mode<synchronous>, transform_indices = @transform_1, window_bounds = array<i64: 3, 2, 128>}, {pipeline_mode = #tpu.pipeline_mode<synchronous>, transform_indices = @transform_2, window_bounds = array<i64: 128, 128>}, {pipeline_mode = #tpu.pipeline_mode<synchronous>, transform_indices = @transform_3, window_bounds = array<i64: 1, 128>}, {pipeline_mode = #tpu.pipeline_mode<synchronous>, transform_indices = @transform_4, window_bounds = array<i64: 128, 128>}, {pipeline_mode = #tpu.pipeline_mode<synchronous>, transform_indices = @transform_5, window_bounds = array<i64: 128, 128>}, {pipeline_mode = #tpu.pipeline_mode<synchronous>, transform_indices = @transform_6, window_bounds = array<i64: 1, 128>}, {pipeline_mode = #tpu.pipeline_mode<synchronous>, transform_indices = @transform_7, window_bounds = array<i64: 128, 128>}, {pipeline_mode = #tpu.pipeline_mode<synchronous>, transform_indices = @transform_8, window_bounds = array<i64: 128, 128>}, {pipeline_mode = #tpu.pipeline_mode<synchronous>, transform_indices = @transform_9, window_bounds = array<i64: 1, 128>}, {pipeline_mode = #tpu.pipeline_mode<synchronous>, transform_indices = @transform_10, window_bounds = array<i64: 128, 128>}, {pipeline_mode = #tpu.pipeline_mode<synchronous>, transform_indices = @transform_11, window_bounds = array<i64: 1, 128>}, {pipeline_mode = #tpu.pipeline_mode<synchronous>, transform_indices = @transform_12, window_bounds = array<i64: 2, 128>}]} {
    %c0 = arith.constant 0 : index
    %c0_0 = arith.constant 0 : index
    %c0_1 = arith.constant 0 : index
    %0 = vector.load %arg2[%c0, %c0_0, %c0_1] : memref<3x2x128xf32, #tpu.memory_space<vmem>>, vector<1x2x128xf32>
    %1 = vector.shape_cast %0 : vector<1x2x128xf32> to vector<2x128xf32>
    %c0_2 = arith.constant 0 : index
    %c0_3 = arith.constant 0 : index
    %c0_4 = arith.constant 0 : index
    %2 = vector.load %arg1[%c0_2, %c0_3, %c0_4] : memref<3x2x128xf32, #tpu.memory_space<vmem>>, vector<1x2x128xf32>
    %3 = vector.shape_cast %2 : vector<1x2x128xf32> to vector<2x128xf32>
    %4 = arith.addf %1, %3 : vector<2x128xf32>
    %c1 = arith.constant 1 : index
    %c0_5 = arith.constant 0 : index
    %c0_6 = arith.constant 0 : index
    %5 = vector.load %arg2[%c1, %c0_5, %c0_6] : memref<3x2x128xf32, #tpu.memory_space<vmem>>, vector<1x2x128xf32>
    %6 = vector.shape_cast %5 : vector<1x2x128xf32> to vector<2x128xf32>
    %c1_7 = arith.constant 1 : index
    %c0_8 = arith.constant 0 : index
    %c0_9 = arith.constant 0 : index
    %7 = vector.load %arg1[%c1_7, %c0_8, %c0_9] : memref<3x2x128xf32, #tpu.memory_space<vmem>>, vector<1x2x128xf32>
    %8 = vector.shape_cast %7 : vector<1x2x128xf32> to vector<2x128xf32>
    %9 = arith.addf %6, %8 : vector<2x128xf32>
    %c2 = arith.constant 2 : index
    %c0_10 = arith.constant 0 : index
    %c0_11 = arith.constant 0 : index
    %10 = vector.load %arg2[%c2, %c0_10, %c0_11] : memref<3x2x128xf32, #tpu.memory_space<vmem>>, vector<1x2x128xf32>
    %11 = vector.shape_cast %10 : vector<1x2x128xf32> to vector<2x128xf32>
    %c2_12 = arith.constant 2 : index
    %c0_13 = arith.constant 0 : index
    %c0_14 = arith.constant 0 : index
    %12 = vector.load %arg1[%c2_12, %c0_13, %c0_14] : memref<3x2x128xf32, #tpu.memory_space<vmem>>, vector<1x2x128xf32>
    %13 = vector.shape_cast %12 : vector<1x2x128xf32> to vector<2x128xf32>
    %14 = arith.addf %11, %13 : vector<2x128xf32>
    %c0_15 = arith.constant 0 : index
    %c0_16 = arith.constant 0 : index
    %15 = vector.load %arg3[%c0_15, %c0_16] : memref<128x128xf32, #tpu.memory_space<vmem>>, vector<128x128xf32>
    %cst = arith.constant dense<0.000000e+00> : vector<2x128xf32>
    %16 = tpu.matmul %4, %15, %cst {dimension_numbers = #tpu.dot_dimension_numbers<[1], [0], [0], [1], [0, 0, 1, 1], [], []>} : vector<2x128xf32>, vector<128x128xf32>, vector<2x128xf32> -> vector<2x128xf32>
    %c0_17 = arith.constant 0 : index
    %c0_18 = arith.constant 0 : index
    %17 = vector.load %arg4[%c0_17, %c0_18] : memref<1x128xf32, #tpu.memory_space<vmem>>, vector<1x128xf32>
    %18 = vector.broadcast %17 : vector<1x128xf32> to vector<2x128xf32>
    %19 = arith.addf %16, %18 : vector<2x128xf32>
    %20 = math.tanh %19 : vector<2x128xf32>
    %c0_19 = arith.constant 0 : index
    %c0_20 = arith.constant 0 : index
    %21 = vector.load %arg5[%c0_19, %c0_20] : memref<128x128xf32, #tpu.memory_space<vmem>>, vector<128x128xf32>
    %cst_21 = arith.constant dense<0.000000e+00> : vector<2x128xf32>
    %22 = tpu.matmul %9, %21, %cst_21 {dimension_numbers = #tpu.dot_dimension_numbers<[1], [0], [0], [1], [0, 0, 1, 1], [], []>} : vector<2x128xf32>, vector<128x128xf32>, vector<2x128xf32> -> vector<2x128xf32>
    %c0_22 = arith.constant 0 : index
    %c0_23 = arith.constant 0 : index
    %23 = vector.load %arg6[%c0_22, %c0_23] : memref<128x128xf32, #tpu.memory_space<vmem>>, vector<128x128xf32>
    %cst_24 = arith.constant dense<0.000000e+00> : vector<2x128xf32>
    %24 = tpu.matmul %20, %23, %cst_24 {dimension_numbers = #tpu.dot_dimension_numbers<[1], [0], [0], [1], [0, 0, 1, 1], [], []>} : vector<2x128xf32>, vector<128x128xf32>, vector<2x128xf32> -> vector<2x128xf32>
    %25 = arith.addf %22, %24 : vector<2x128xf32>
    %c0_25 = arith.constant 0 : index
    %c0_26 = arith.constant 0 : index
    %26 = vector.load %arg7[%c0_25, %c0_26] : memref<1x128xf32, #tpu.memory_space<vmem>>, vector<1x128xf32>
    %27 = vector.broadcast %26 : vector<1x128xf32> to vector<2x128xf32>
    %28 = arith.addf %25, %27 : vector<2x128xf32>
    %29 = math.tanh %28 : vector<2x128xf32>
    %c0_27 = arith.constant 0 : index
    %c0_28 = arith.constant 0 : index
    %30 = vector.load %arg8[%c0_27, %c0_28] : memref<128x128xf32, #tpu.memory_space<vmem>>, vector<128x128xf32>
    %cst_29 = arith.constant dense<0.000000e+00> : vector<2x128xf32>
    %31 = tpu.matmul %14, %30, %cst_29 {dimension_numbers = #tpu.dot_dimension_numbers<[1], [0], [0], [1], [0, 0, 1, 1], [], []>} : vector<2x128xf32>, vector<128x128xf32>, vector<2x128xf32> -> vector<2x128xf32>
    %c0_30 = arith.constant 0 : index
    %c0_31 = arith.constant 0 : index
    %32 = vector.load %arg9[%c0_30, %c0_31] : memref<128x128xf32, #tpu.memory_space<vmem>>, vector<128x128xf32>
    %cst_32 = arith.constant dense<0.000000e+00> : vector<2x128xf32>
    %33 = tpu.matmul %29, %32, %cst_32 {dimension_numbers = #tpu.dot_dimension_numbers<[1], [0], [0], [1], [0, 0, 1, 1], [], []>} : vector<2x128xf32>, vector<128x128xf32>, vector<2x128xf32> -> vector<2x128xf32>
    %34 = arith.addf %31, %33 : vector<2x128xf32>
    %c0_33 = arith.constant 0 : index
    %c0_34 = arith.constant 0 : index
    %35 = vector.load %arg10[%c0_33, %c0_34] : memref<1x128xf32, #tpu.memory_space<vmem>>, vector<1x128xf32>
    %36 = vector.broadcast %35 : vector<1x128xf32> to vector<2x128xf32>
    %37 = arith.addf %34, %36 : vector<2x128xf32>
    %38 = math.tanh %37 : vector<2x128xf32>
    %c0_35 = arith.constant 0 : index
    %c0_36 = arith.constant 0 : index
    %39 = vector.load %arg11[%c0_35, %c0_36] : memref<128x128xf32, #tpu.memory_space<vmem>>, vector<128x128xf32>
    %cst_37 = arith.constant dense<0.000000e+00> : vector<2x128xf32>
    %40 = tpu.matmul %38, %39, %cst_37 {dimension_numbers = #tpu.dot_dimension_numbers<[1], [0], [0], [1], [0, 0, 1, 1], [], []>} : vector<2x128xf32>, vector<128x128xf32>, vector<2x128xf32> -> vector<2x128xf32>
    %c0_38 = arith.constant 0 : index
    %c0_39 = arith.constant 0 : index
    %41 = vector.load %arg12[%c0_38, %c0_39] : memref<1x128xf32, #tpu.memory_space<vmem>>, vector<1x128xf32>
    %42 = vector.broadcast %41 : vector<1x128xf32> to vector<2x128xf32>
    %43 = arith.addf %40, %42 : vector<2x128xf32>
    %c0_40 = arith.constant 0 : index
    %c0_41 = arith.constant 0 : index
    %44 = vector.load %arg13[%c0_40, %c0_41] : memref<2x128xf32, #tpu.memory_space<vmem>>, vector<2x128xf32>
    tpu.vector_store %arg13[%c0_40, %c0_41], %43 {strides = array<i32>} : memref<2x128xf32, #tpu.memory_space<vmem>>, vector<2x128xf32>,
    return
  }
  func.func @transform_0(%arg0: i32) -> (i32, i32, i32) {
    %c0_i32 = arith.constant 0 : i32
    %c0_i32_0 = arith.constant 0 : i32
    %c0_i32_1 = arith.constant 0 : i32
    %c0_i32_2 = arith.constant 0 : i32
    return %c0_i32, %c0_i32_0, %c0_i32_1 : i32, i32, i32
  }
  func.func @transform_1(%arg0: i32) -> (i32, i32, i32) {
    %c0_i32 = arith.constant 0 : i32
    %c0_i32_0 = arith.constant 0 : i32
    %c0_i32_1 = arith.constant 0 : i32
    %c0_i32_2 = arith.constant 0 : i32
    return %c0_i32, %c0_i32_0, %c0_i32_1 : i32, i32, i32
  }
  func.func @transform_2(%arg0: i32) -> (i32, i32) {
    %c0_i32 = arith.constant 0 : i32
    %c0_i32_0 = arith.constant 0 : i32
    %c0_i32_1 = arith.constant 0 : i32
    return %c0_i32, %c0_i32_0 : i32, i32
  }
  func.func @transform_3(%arg0: i32) -> (i32, i32) {
    %c0_i32 = arith.constant 0 : i32
    %c0_i32_0 = arith.constant 0 : i32
    %c0_i32_1 = arith.constant 0 : i32
    return %c0_i32, %c0_i32_0 : i32, i32
  }
  func.func @transform_4(%arg0: i32) -> (i32, i32) {
    %c0_i32 = arith.constant 0 : i32
    %c0_i32_0 = arith.constant 0 : i32
    %c0_i32_1 = arith.constant 0 : i32
    return %c0_i32, %c0_i32_0 : i32, i32
  }
  func.func @transform_5(%arg0: i32) -> (i32, i32) {
    %c0_i32 = arith.constant 0 : i32
    %c0_i32_0 = arith.constant 0 : i32
    %c0_i32_1 = arith.constant 0 : i32
    return %c0_i32, %c0_i32_0 : i32, i32
  }
  func.func @transform_6(%arg0: i32) -> (i32, i32) {
    %c0_i32 = arith.constant 0 : i32
    %c0_i32_0 = arith.constant 0 : i32
    %c0_i32_1 = arith.constant 0 : i32
    return %c0_i32, %c0_i32_0 : i32, i32
  }
  func.func @transform_7(%arg0: i32) -> (i32, i32) {
    %c0_i32 = arith.constant 0 : i32
    %c0_i32_0 = arith.constant 0 : i32
    %c0_i32_1 = arith.constant 0 : i32
    return %c0_i32, %c0_i32_0 : i32, i32
  }
  func.func @transform_8(%arg0: i32) -> (i32, i32) {
    %c0_i32 = arith.constant 0 : i32
    %c0_i32_0 = arith.constant 0 : i32
    %c0_i32_1 = arith.constant 0 : i32
    return %c0_i32, %c0_i32_0 : i32, i32
  }
  func.func @transform_9(%arg0: i32) -> (i32, i32) {
    %c0_i32 = arith.constant 0 : i32
    %c0_i32_0 = arith.constant 0 : i32
    %c0_i32_1 = arith.constant 0 : i32
    return %c0_i32, %c0_i32_0 : i32, i32
  }
  func.func @transform_10(%arg0: i32) -> (i32, i32) {
    %c0_i32 = arith.constant 0 : i32
    %c0_i32_0 = arith.constant 0 : i32
    %c0_i32_1 = arith.constant 0 : i32
    return %c0_i32, %c0_i32_0 : i32, i32
  }
  func.func @transform_11(%arg0: i32) -> (i32, i32) {
    %c0_i32 = arith.constant 0 : i32
    %c0_i32_0 = arith.constant 0 : i32
    %c0_i32_1 = arith.constant 0 : i32
    return %c0_i32, %c0_i32_0 : i32, i32
  }
  func.func @transform_12(%arg0: i32) -> (i32, i32) {
    %c0_i32 = arith.constant 0 : i32
    %c0_i32_0 = arith.constant 0 : i32
    %c0_i32_1 = arith.constant 0 : i32
    return %c0_i32, %c0_i32_0 : i32, i32
  }
}

</mosaic_0001>

<llo_original>
// kernel: coattention_forward.4
$region0: #{coattention_forward.4}
  #allocation0 [shape = 'u32[]', space=smem, size = 0x4, offset = 0x4, fixed_abs, tag = 'smem constant byte address 0x4 - core index']
  #allocation1 [shape = 'u32[144,128]{1,0:T(1,128)}', space=vmem, size = 0x12000, scoped, tag = 'internal scratch']
  #allocation2 [shape = 'f32[2,24,128]{2,1,0:T(8,128)}', space=vmem, size = 0x6000, scoped, tag = 'scratch operand']
  %s0 = inlined_call_operand.vmem [shape: f32[2,8,128], index: 0, kind: input, shape index: {}]
  %s1 = inlined_call_operand.vmem [shape: f32[2,16,128], index: 1, kind: input, shape index: {}]
  %s2 = inlined_call_operand.vmem [shape: f32[128,128], index: 2, kind: input, shape index: {}]
  %s3 = inlined_call_operand.vmem [shape: f32[1,128], index: 3, kind: input, shape index: {}]
  %s4 = inlined_call_operand.hbm [shape: f32[128,128], index: 4, kind: input, shape index: {}]
  %s5 = inlined_call_operand.vmem [shape: f32[1,128], index: 5, kind: input, shape index: {}]
  %s6 = inlined_call_operand.hbm [shape: f32[128,384], index: 6, kind: input, shape index: {}]
  %s7 = inlined_call_operand.hbm [shape: f32[128,384], index: 7, kind: input, shape index: {}]
  %s8 = inlined_call_operand.hbm [shape: f32[128,384], index: 8, kind: input, shape index: {}]
  %s9 = inlined_call_operand.vmem [shape: f32[1,384], index: 9, kind: input, shape index: {}]
  %s10 = inlined_call_operand.vmem [shape: f32[2,8,128], index: 10, kind: output, shape index: {0}]
  %s11 = inlined_call_operand.vmem [shape: f32[2,8,128], index: 11, kind: output, shape index: {1}]
  %s12 = inlined_call_operand.vmem [shape: f32[2,16,128], index: 12, kind: output, shape index: {2}]
  %13 = xla_tuple %s10, %s11, %s12
  %s14 = sld [smem:[#allocation0]]
  $region82: #{coattention_forward.4} parent=0
    _
  %s16 = ssub.s32 1, %s14
  %s17 = scalar_select 0, %s16, %s14
  $region1: #{coattention_forward.4} parent=0
    #allocation3 [shape = 'u8[65536]{0}', space=vmem, size = 0x10000, scoped, tag = 'input window, operand 4, single buffered']
    #allocation4 [shape = 's32[1]{0}', space=sflag, size = 0x4, scoped, tag = 'scoped memory for coattention_forward.4']
    #allocation5 [shape = 'u8[196608]{0}', space=vmem, size = 0x30000, scoped, tag = 'input window, operand 6, single buffered']
    #allocation6 [shape = 's32[1]{0}', space=sflag, size = 0x4, scoped, tag = 'scoped memory for coattention_forward.4']
    #allocation7 [shape = 'u8[196608]{0}', space=vmem, size = 0x30000, scoped, tag = 'input window, operand 7, single buffered']
    #allocation8 [shape = 'u8[196608]{0}', space=vmem, size = 0x30000, scoped, tag = 'input window, operand 8, single buffered']
    #allocation9 [shape = 's32[1]{0}', space=sflag, size = 0x4, scoped, tag = 'scoped memory for coattention_forward.4']
    %18 = vsyncpa [#allocation4], 0
    %19 = vsyncpa [#allocation6], 0
    %20 = vsyncpa [#allocation9], 0
    // Predicated region
    $region2: #{coattention_forward.4} parent=1 // pred_check
      _
    $region3: #{coattention_forward.4} parent=1 // pred_check_branch
      %22 = sbr.rel (0) target = $region5
    $region4: #{coattention_forward.4} parent=1 // pred_region
      _
    $region5: #{coattention_forward.4} parent=1 // pred_fallthru
      _
    // Predicated region
    $region6: #{coattention_forward.4} parent=1 // pred_check
      _
    $region7: #{coattention_forward.4} parent=1 // pred_check_branch
      %24 = sbr.rel (0) target = $region9
    $region8: #{coattention_forward.4} parent=1 // pred_region
      _
    $region9: #{coattention_forward.4} parent=1 // pred_fallthru
      _
    // Predicated region
    $region10: #{coattention_forward.4} parent=1 // pred_check
      _
    $region11: #{coattention_forward.4} parent=1 // pred_check_branch
      %26 = sbr.rel (0) target = $region13
    $region12: #{coattention_forward.4} parent=1 // pred_region
      _
    $region13: #{coattention_forward.4} parent=1 // pred_fallthru
      _
    // Predicated region
    $region14: #{coattention_forward.4} parent=1 // pred_check
      _
    $region15: #{coattention_forward.4} parent=1 // pred_check_branch
      %28 = sbr.rel (0) target = $region17
    $region16: #{coattention_forward.4} parent=1 // pred_region
      _
    $region17: #{coattention_forward.4} parent=1 // pred_fallthru
      _
    // Predicated region
    $region18: #{coattention_forward.4} parent=1 // pred_check
      _
    $region19: #{coattention_forward.4} parent=1 // pred_check_branch
      %30 = sbr.rel (0) target = $region21
    $region20: #{coattention_forward.4} parent=1 // pred_region
      %s32 = ssub.s32 2048, 2048
      %33 = vsyncadd [#allocation4], %s32
      %s34 = sshll.u32 [#allocation3], 4
      %s35 = int_to_ptr.vmem [resolvable:$true] %s34
      %40 = dma.hbm_to_vmem [thread:$0]  %s4, 2048, %s35, [#allocation4], 128, 128, 8
    $region21: #{coattention_forward.4} parent=1 // pred_fallthru
      _
    // Predicated region
    $region22: #{coattention_forward.4} parent=1 // pred_check
      _
    $region23: #{coattention_forward.4} parent=1 // pred_check_branch
      %42 = sbr.rel (0) target = $region25
    $region24: #{coattention_forward.4} parent=1 // pred_region
      _
    $region25: #{coattention_forward.4} parent=1 // pred_fallthru
      _
    // Predicated region
    $region26: #{coattention_forward.4} parent=1 // pred_check
      _
    $region27: #{coattention_forward.4} parent=1 // pred_check_branch
      %44 = sbr.rel (0) target = $region29
    $region28: #{coattention_forward.4} parent=1 // pred_region
      %s46 = ssub.s32 6144, 6144
      %47 = vsyncadd [#allocation6], %s46
      %s48 = sshll.u32 [#allocation5], 4
      %s49 = int_to_ptr.vmem [resolvable:$true] %s48
      %54 = dma.hbm_to_vmem [thread:$0]  %s6, 6144, %s49, [#allocation6], 384, 384, 24
    $region29: #{coattention_forward.4} parent=1 // pred_fallthru
      _
    // Predicated region
    $region30: #{coattention_forward.4} parent=1 // pred_check
      _
    $region31: #{coattention_forward.4} parent=1 // pred_check_branch
      %56 = sbr.rel (0) target = $region33
    $region32: #{coattention_forward.4} parent=1 // pred_region
      %s58 = ssub.s32 6144, 6144
      %59 = vsyncadd [#allocation6], %s58
      %s60 = sshll.u32 [#allocation7], 4
      %s61 = int_to_ptr.vmem [resolvable:$true] %s60
      %66 = dma.hbm_to_vmem [thread:$0]  %s7, 6144, %s61, [#allocation6], 384, 384, 24
    $region33: #{coattention_forward.4} parent=1 // pred_fallthru
      _
    // Predicated region
    $region34: #{coattention_forward.4} parent=1 // pred_check
      _
    $region35: #{coattention_forward.4} parent=1 // pred_check_branch
      %68 = sbr.rel (0) target = $region37
    $region36: #{coattention_forward.4} parent=1 // pred_region
      %s70 = ssub.s32 6144, 6144
      %71 = vsyncadd [#allocation9], %s70
      %s72 = sshll.u32 [#allocation8], 4
      %s73 = int_to_ptr.vmem [resolvable:$true] %s72
      %78 = dma.hbm_to_vmem [thread:$0]  %s8, 6144, %s73, [#allocation9], 384, 384, 24
    $region37: #{coattention_forward.4} parent=1 // pred_fallthru
      _
    // Predicated region
    $region38: #{coattention_forward.4} parent=1 // pred_check
      _
    $region39: #{coattention_forward.4} parent=1 // pred_check_branch
      %80 = sbr.rel (0) target = $region41
    $region40: #{coattention_forward.4} parent=1 // pred_region
      _
    $region41: #{coattention_forward.4} parent=1 // pred_fallthru
      _
    // Predicated region
    $region42: #{coattention_forward.4} parent=1 // pred_check
      _
    $region43: #{coattention_forward.4} parent=1 // pred_check_branch
      %82 = sbr.rel (0) target = $region45
    $region44: #{coattention_forward.4} parent=1 // pred_region
      %83 = dma.done [#allocation4], 2048
    $region45: #{coattention_forward.4} parent=1 // pred_fallthru
      _
    // Predicated region
    $region46: #{coattention_forward.4} parent=1 // pred_check
      _
    $region47: #{coattention_forward.4} parent=1 // pred_check_branch
      %85 = sbr.rel (0) target = $region49
    $region48: #{coattention_forward.4} parent=1 // pred_region
      %86 = dma.done [#allocation6], 6144
    $region49: #{coattention_forward.4} parent=1 // pred_fallthru
      _
    // Predicated region
    $region50: #{coattention_forward.4} parent=1 // pred_check
      _
    $region51: #{coattention_forward.4} parent=1 // pred_check_branch
      %88 = sbr.rel (0) target = $region53
    $region52: #{coattention_forward.4} parent=1 // pred_region
      %89 = dma.done [#allocation6], 6144
    $region53: #{coattention_forward.4} parent=1 // pred_fallthru
      _
    // Predicated region
    $region54: #{coattention_forward.4} parent=1 // pred_check
      _
    $region55: #{coattention_forward.4} parent=1 // pred_check_branch
      %91 = sbr.rel (0) target = $region57
    $region56: #{coattention_forward.4} parent=1 // pred_region
      %92 = dma.done [#allocation9], 6144
    $region57: #{coattention_forward.4} parent=1 // pred_fallthru
      _
    %v93 = vld [vmem:[%s0] sm:$0xff]
    %v94 = vld [vmem:[%s0 + $0x8] sm:$0xff]
    %v95 = vld [vmem:[%s2] sm:$0xff]
    %v96 = vld [vmem:[%s2 + $0x8] sm:$0xff]
    %v97 = vld [vmem:[%s2 + $0x10] sm:$0xff]
    %v98 = vld [vmem:[%s2 + $0x18] sm:$0xff]
    %v99 = vld [vmem:[%s2 + $0x20] sm:$0xff]
    %v100 = vld [vmem:[%s2 + $0x28] sm:$0xff]
    %v101 = vld [vmem:[%s2 + $0x30] sm:$0xff]
    %v102 = vld [vmem:[%s2 + $0x38] sm:$0xff]
    %v103 = vld [vmem:[%s2 + $0x40] sm:$0xff]
    %v104 = vld [vmem:[%s2 + $0x48] sm:$0xff]
    %v105 = vld [vmem:[%s2 + $0x50] sm:$0xff]
    %v106 = vld [vmem:[%s2 + $0x58] sm:$0xff]
    %v107 = vld [vmem:[%s2 + $0x60] sm:$0xff]
    %v108 = vld [vmem:[%s2 + $0x68] sm:$0xff]
    %v109 = vld [vmem:[%s2 + $0x70] sm:$0xff]
    %v110 = vld [vmem:[%s2 + $0x78] sm:$0xff]
    %v111 = vld [vmem:[%s3] sm:$0x1]
    %v113 = vlaneseq
    %v114 = vshrl.u32 %v113, 7
    %v115 = vsub.s32 0, %v114
    %v116 = vrot.slane %v111, %v115
    %118 = vmatprep.subr.mxu0 0.0
    %119 = vmatpush1.msra.mxu0 %v95
    %120 = vmatprep.subr.mxu0 0.0
    %121 = vmatpush1.msra.mxu0 %v96
    %122 = vmatprep.subr.mxu0 0.0
    %123 = vmatpush1.msra.mxu0 %v97
    %124 = vmatprep.subr.mxu0 0.0
    %125 = vmatpush1.msra.mxu0 %v98
    %126 = vmatprep.subr.mxu0 0.0
    %127 = vmatpush1.msra.mxu0 %v99
    %128 = vmatprep.subr.mxu0 0.0
    %129 = vmatpush1.msra.mxu0 %v100
    %130 = vmatprep.subr.mxu0 0.0
    %131 = vmatpush1.msra.mxu0 %v101
    %132 = vmatprep.subr.mxu0 0.0
    %133 = vmatpush1.msra.mxu0 %v102
    %134 = vmatprep.subr.mxu0 0.0
    %135 = vmatpush1.msra.mxu0 %v103
    %136 = vmatprep.subr.mxu0 0.0
    %137 = vmatpush1.msra.mxu0 %v104
    %138 = vmatprep.subr.mxu0 0.0
    %139 = vmatpush1.msra.mxu0 %v105
    %140 = vmatprep.subr.mxu0 0.0
    %141 = vmatpush1.msra.mxu0 %v106
    %142 = vmatprep.subr.mxu0 0.0
    %143 = vmatpush1.msra.mxu0 %v107
    %144 = vmatprep.subr.mxu0 0.0
    %145 = vmatpush1.msra.mxu0 %v108
    %146 = vmatprep.subr.mxu0 0.0
    %147 = vmatpush1.msra.mxu0 %v109
    %148 = vmatprep.subr.mxu0 0.0
    %149 = vmatpush1.msra.mxu0 %v110
    %150 = vmatprep.subr.mxu0 0.0
    %151 = vmatpush1.msra.mxu0 0.0
    %152 = vmatprep.subr.mxu0 0.0
    %153 = vmatpush1.msra.mxu0 0.0
    %154 = vmatprep.subr.mxu0 0.0
    %155 = vmatpush1.msra.mxu0 0.0
    %156 = vmatprep.subr.mxu0 0.0
    %157 = vmatpush1.msra.mxu0 0.0
    %158 = vmatprep.subr.mxu0 0.0
    %159 = vmatpush1.msra.mxu0 0.0
    %160 = vmatprep.subr.mxu0 0.0
    %161 = vmatpush1.msra.mxu0 0.0
    %162 = vmatprep.subr.mxu0 0.0
    %163 = vmatpush1.msra.mxu0 0.0
    %164 = vmatprep.subr.mxu0 0.0
    %165 = vmatpush1.msra.mxu0 0.0
    %166 = vmatprep.subr.mxu0 0.0
    %167 = vmatpush1.msra.mxu0 0.0
    %168 = vmatprep.subr.mxu0 0.0
    %169 = vmatpush1.msra.mxu0 0.0
    %170 = vmatprep.subr.mxu0 0.0
    %171 = vmatpush1.msra.mxu0 0.0
    %172 = vmatprep.subr.mxu0 0.0
    %173 = vmatpush1.msra.mxu0 0.0
    %174 = vmatprep.subr.mxu0 0.0
    %175 = vmatpush1.msra.mxu0 0.0
    %176 = vmatprep.subr.mxu0 0.0
    %177 = vmatpush1.msra.mxu0 0.0
    %178 = vmatprep.subr.mxu0 0.0
    %179 = vmatpush1.msra.mxu0 0.0
    %180 = vmatprep.subr.mxu0 0.0
    %181 = vmatpush1.msra.mxu0 0.0
    %182 = vmatprep.mubr.f32.mxu0 0.0
    %183 = vmatmul.mubr.f32.gmra.mrb[0].mxu0 %v93
    %v184 = vpop.f32.mrb[0].mxu0
    %v185 = vadd.f32 %v116, %v184
    %v186 = vpop.f32.mrb[0].mxu0
    %187 = vmatprep.mubr.f32.mxu0 0.0
    %188 = vmatmul.mubr.f32.gmra.mrb[0].mxu0 %v94
    %v189 = vpop.f32.mrb[0].mxu0
    %v190 = vadd.f32 %v116, %v189
    %v191 = vpop.f32.mrb[0].mxu0
    %192 = vdwg.mxu0
    %v193 = vtanh.pop %v185
    %v194 = vtanh.pop %v190
    %195 = vst [vmem:[%s10] sm:$0xff] %v193
    %196 = vst [vmem:[%s10 + $0x8] sm:$0xff] %v194
    %v197 = vld [vmem:[%s1] sm:$0xff]
    %v198 = vld [vmem:[%s1 + $0x8] sm:$0xff]
    %v199 = vld [vmem:[%s1 + $0x10] sm:$0xff]
    %v200 = vld [vmem:[%s1 + $0x18] sm:$0xff]
    %v201 = vld [vmem:[#allocation3] sm:$0xff]
    %v202 = vld [vmem:[#allocation3 + $0x8] sm:$0xff]
    %v203 = vld [vmem:[#allocation3 + $0x10] sm:$0xff]
    %v204 = vld [vmem:[#allocation3 + $0x18] sm:$0xff]
    %v205 = vld [vmem:[#allocation3 + $0x20] sm:$0xff]
    %v206 = vld [vmem:[#allocation3 + $0x28] sm:$0xff]
    %v207 = vld [vmem:[#allocation3 + $0x30] sm:$0xff]
    %v208 = vld [vmem:[#allocation3 + $0x38] sm:$0xff]
    %v209 = vld [vmem:[#allocation3 + $0x40] sm:$0xff]
    %v210 = vld [vmem:[#allocation3 + $0x48] sm:$0xff]
    %v211 = vld [vmem:[#allocation3 + $0x50] sm:$0xff]
    %v212 = vld [vmem:[#allocation3 + $0x58] sm:$0xff]
    %v213 = vld [vmem:[#allocation3 + $0x60] sm:$0xff]
    %v214 = vld [vmem:[#allocation3 + $0x68] sm:$0xff]
    %v215 = vld [vmem:[#allocation3 + $0x70] sm:$0xff]
    %v216 = vld [vmem:[#allocation3 + $0x78] sm:$0xff]
    %v217 = vld [vmem:[%s5] sm:$0x1]
    %v219 = vlaneseq
    %v220 = vshrl.u32 %v219, 7
    %v221 = vsub.s32 0, %v220
    %v222 = vrot.slane %v217, %v221
    %224 = vmatprep.subr.mxu0 0.0
    %225 = vmatpush1.msra.mxu0 %v201
    %226 = vmatprep.subr.mxu0 0.0
    %227 = vmatpush1.msra.mxu0 %v202
    %228 = vmatprep.subr.mxu0 0.0
    %229 = vmatpush1.msra.mxu0 %v203
    %230 = vmatprep.subr.mxu0 0.0
    %231 = vmatpush1.msra.mxu0 %v204
    %232 = vmatprep.subr.mxu0 0.0
    %233 = vmatpush1.msra.mxu0 %v205
    %234 = vmatprep.subr.mxu0 0.0
    %235 = vmatpush1.msra.mxu0 %v206
    %236 = vmatprep.subr.mxu0 0.0
    %237 = vmatpush1.msra.mxu0 %v207
    %238 = vmatprep.subr.mxu0 0.0
    %239 = vmatpush1.msra.mxu0 %v208
    %240 = vmatprep.subr.mxu0 0.0
    %241 = vmatpush1.msra.mxu0 %v209
    %242 = vmatprep.subr.mxu0 0.0
    %243 = vmatpush1.msra.mxu0 %v210
    %244 = vmatprep.subr.mxu0 0.0
    %245 = vmatpush1.msra.mxu0 %v211
    %246 = vmatprep.subr.mxu0 0.0
    %247 = vmatpush1.msra.mxu0 %v212
    %248 = vmatprep.subr.mxu0 0.0
    %249 = vmatpush1.msra.mxu0 %v213
    %250 = vmatprep.subr.mxu0 0.0
    %251 = vmatpush1.msra.mxu0 %v214
    %252 = vmatprep.subr.mxu0 0.0
    %253 = vmatpush1.msra.mxu0 %v215
    %254 = vmatprep.subr.mxu0 0.0
    %255 = vmatpush1.msra.mxu0 %v216
    %256 = vmatprep.subr.mxu0 0.0
    %257 = vmatpush1.msra.mxu0 0.0
    %258 = vmatprep.subr.mxu0 0.0
    %259 = vmatpush1.msra.mxu0 0.0
    %260 = vmatprep.subr.mxu0 0.0
    %261 = vmatpush1.msra.mxu0 0.0
    %262 = vmatprep.subr.mxu0 0.0
    %263 = vmatpush1.msra.mxu0 0.0
    %264 = vmatprep.subr.mxu0 0.0
    %265 = vmatpush1.msra.mxu0 0.0
    %266 = vmatprep.subr.mxu0 0.0
    %267 = vmatpush1.msra.mxu0 0.0
    %268 = vmatprep.subr.mxu0 0.0
    %269 = vmatpush1.msra.mxu0 0.0
    %270 = vmatprep.subr.mxu0 0.0
    %271 = vmatpush1.msra.mxu0 0.0
    %272 = vmatprep.subr.mxu0 0.0
    %273 = vmatpush1.msra.mxu0 0.0
    %274 = vmatprep.subr.mxu0 0.0
    %275 = vmatpush1.msra.mxu0 0.0
    %276 = vmatprep.subr.mxu0 0.0
    %277 = vmatpush1.msra.mxu0 0.0
    %278 = vmatprep.subr.mxu0 0.0
    %279 = vmatpush1.msra.mxu0 0.0
    %280 = vmatprep.subr.mxu0 0.0
    %281 = vmatpush1.msra.mxu0 0.0
    %282 = vmatprep.subr.mxu0 0.0
    %283 = vmatpush1.msra.mxu0 0.0
    %284 = vmatprep.subr.mxu0 0.0
    %285 = vmatpush1.msra.mxu0 0.0
    %286 = vmatprep.subr.mxu0 0.0
    %287 = vmatpush1.msra.mxu0 0.0
    %288 = vmatprep.mubr.f32.mxu0 0.0
    %289 = vmatmul.mubr.f32.gmra.mrb[0].mxu0 %v197
    %v290 = vpop.f32.mrb[0].mxu0
    %v291 = vadd.f32 %v222, %v290
    %v292 = vpop.f32.mrb[0].mxu0
    %293 = vmatprep.mubr.f32.mxu0 0.0
    %294 = vmatmul.mubr.f32.gmra.mrb[0].mxu0 %v198
    %v295 = vpop.f32.mrb[0].mxu0
    %v296 = vadd.f32 %v222, %v295
    %v297 = vpop.f32.mrb[0].mxu0
    %298 = vmatprep.mubr.f32.mxu0 0.0
    %299 = vmatmul.mubr.f32.gmra.mrb[0].mxu0 %v199
    %v300 = vpop.f32.mrb[0].mxu0
    %v301 = vadd.f32 %v222, %v300
    %v302 = vpop.f32.mrb[0].mxu0
    %303 = vmatprep.mubr.f32.mxu0 0.0
    %304 = vmatmul.mubr.f32.gmra.mrb[0].mxu0 %v200
    %v305 = vpop.f32.mrb[0].mxu0
    %v306 = vadd.f32 %v222, %v305
    %v307 = vpop.f32.mrb[0].mxu0
    %308 = vdwg.mxu0
    %v309 = vtanh.pop %v291
    %v310 = vtanh.pop %v296
    %v311 = vtanh.pop %v301
    %v312 = vtanh.pop %v306
    %313 = vst [vmem:[%s12] sm:$0xff] %v309
    %314 = vst [vmem:[%s12 + $0x8] sm:$0xff] %v310
    %315 = vst [vmem:[%s12 + $0x10] sm:$0xff] %v311
    %316 = vst [vmem:[%s12 + $0x18] sm:$0xff] %v312
    %317 = vst [vmem:[#allocation2] sm:$0xff] 0.0
    %318 = vst [vmem:[#allocation2 + $0x8] sm:$0xff] 0.0
    %319 = vst [vmem:[#allocation2 + $0x10] sm:$0xff] 0.0
    %320 = vst [vmem:[#allocation2 + $0x18] sm:$0xff] 0.0
    %321 = vst [vmem:[#allocation2 + $0x20] sm:$0xff] 0.0
    %322 = vst [vmem:[#allocation2 + $0x28] sm:$0xff] 0.0
    %323 = vst [vmem:[#allocation2 + $0x8] sm:$0xff] %v193
    %324 = vst [vmem:[#allocation2 + $0x20] sm:$0xff] %v194
    %v325 = vld [vmem:[#allocation2 + $0x7] sm:$0xff]
    %v326 = vld [vmem:[#allocation2 + $0x1f] sm:$0xff]
    %v327 = vld [vmem:[#allocation2 + $0x9] sm:$0xff]
    %v328 = vld [vmem:[#allocation2 + $0x21] sm:$0xff]
    %v329 = vld [vmem:[#allocation5] sm:$0xff]
    %v330 = vld [vmem:[#allocation5 + $0x8] sm:$0xff]
    %v331 = vld [vmem:[#allocation5 + $0x10] sm:$0xff]
    %v332 = vld [vmem:[#allocation5 + $0x18] sm:$0xff]
    %v333 = vld [vmem:[#allocation5 + $0x20] sm:$0xff]
    %v334 = vld [vmem:[#allocation5 + $0x28] sm:$0xff]
    %v335 = vld [vmem:[#allocation5 + $0x30] sm:$0xff]
    %v336 = vld [vmem:[#allocation5 + $0x38] sm:$0xff]
    %v337 = vld [vmem:[#allocation5 + $0x40] sm:$0xff]
    %v338 = vld [vmem:[#allocation5 + $0x48] sm:$0xff]
    %v339 = vld [vmem:[#allocation5 + $0x50] sm:$0xff]
    %v340 = vld [vmem:[#allocation5 + $0x58] sm:$0xff]
    %v341 = vld [vmem:[#allocation5 + $0x60] sm:$0xff]
    %v342 = vld [vmem:[#allocation5 + $0x68] sm:$0xff]
    %v343 = vld [vmem:[#allocation5 + $0x70] sm:$0xff]
    %v344 = vld [vmem:[#allocation5 + $0x78] sm:$0xff]
    %v345 = vld [vmem:[#allocation5 + $0x80] sm:$0xff]
    %v346 = vld [vmem:[#allocation5 + $0x88] sm:$0xff]
    %v347 = vld [vmem:[#allocation5 + $0x90] sm:$0xff]
    %v348 = vld [vmem:[#allocation5 + $0x98] sm:$0xff]
    %v349 = vld [vmem:[#allocation5 + $0xa0] sm:$0xff]
    %v350 = vld [vmem:[#allocation5 + $0xa8] sm:$0xff]
    %v351 = vld [vmem:[#allocation5 + $0xb0] sm:$0xff]
    %v352 = vld [vmem:[#allocation5 + $0xb8] sm:$0xff]
    %v353 = vld [vmem:[#allocation5 + $0xc0] sm:$0xff]
    %v354 = vld [vmem:[#allocation5 + $0xc8] sm:$0xff]
    %v355 = vld [vmem:[#allocation5 + $0xd0] sm:$0xff]
    %v356 = vld [vmem:[#allocation5 + $0xd8] sm:$0xff]
    %v357 = vld [vmem:[#allocation5 + $0xe0] sm:$0xff]
    %v358 = vld [vmem:[#allocation5 + $0xe8] sm:$0xff]
    %v359 = vld [vmem:[#allocation5 + $0xf0] sm:$0xff]
    %v360 = vld [vmem:[#allocation5 + $0xf8] sm:$0xff]
    %v361 = vld [vmem:[#allocation5 + $0x100] sm:$0xff]
    %v362 = vld [vmem:[#allocation5 + $0x108] sm:$0xff]
    %v363 = vld [vmem:[#allocation5 + $0x110] sm:$0xff]
    %v364 = vld [vmem:[#allocation5 + $0x118] sm:$0xff]
    %v365 = vld [vmem:[#allocation5 + $0x120] sm:$0xff]
    %v366 = vld [vmem:[#allocation5 + $0x128] sm:$0xff]
    %v367 = vld [vmem:[#allocation5 + $0x130] sm:$0xff]
    %v368 = vld [vmem:[#allocation5 + $0x138] sm:$0xff]
    %v369 = vld [vmem:[#allocation5 + $0x140] sm:$0xff]
    %v370 = vld [vmem:[#allocation5 + $0x148] sm:$0xff]
    %v371 = vld [vmem:[#allocation5 + $0x150] sm:$0xff]
    %v372 = vld [vmem:[#allocation5 + $0x158] sm:$0xff]
    %v373 = vld [vmem:[#allocation5 + $0x160] sm:$0xff]
    %v374 = vld [vmem:[#allocation5 + $0x168] sm:$0xff]
    %v375 = vld [vmem:[#allocation5 + $0x170] sm:$0xff]
    %v376 = vld [vmem:[#allocation5 + $0x178] sm:$0xff]
    %v377 = vld [vmem:[#allocation7] sm:$0xff]
    %v378 = vld [vmem:[#allocation7 + $0x8] sm:$0xff]
    %v379 = vld [vmem:[#allocation7 + $0x10] sm:$0xff]
    %v380 = vld [vmem:[#allocation7 + $0x18] sm:$0xff]
    %v381 = vld [vmem:[#allocation7 + $0x20] sm:$0xff]
    %v382 = vld [vmem:[#allocation7 + $0x28] sm:$0xff]
    %v383 = vld [vmem:[#allocation7 + $0x30] sm:$0xff]
    %v384 = vld [vmem:[#allocation7 + $0x38] sm:$0xff]
    %v385 = vld [vmem:[#allocation7 + $0x40] sm:$0xff]
    %v386 = vld [vmem:[#allocation7 + $0x48] sm:$0xff]
    %v387 = vld [vmem:[#allocation7 + $0x50] sm:$0xff]
    %v388 = vld [vmem:[#allocation7 + $0x58] sm:$0xff]
    %v389 = vld [vmem:[#allocation7 + $0x60] sm:$0xff]
    %v390 = vld [vmem:[#allocation7 + $0x68] sm:$0xff]
    %v391 = vld [vmem:[#allocation7 + $0x70] sm:$0xff]
    %v392 = vld [vmem:[#allocation7 + $0x78] sm:$0xff]
    %v393 = vld [vmem:[#allocation7 + $0x80] sm:$0xff]
    %v394 = vld [vmem:[#allocation7 + $0x88] sm:$0xff]
    %v395 = vld [vmem:[#allocation7 + $0x90] sm:$0xff]
    %v396 = vld [vmem:[#allocation7 + $0x98] sm:$0xff]
    %v397 = vld [vmem:[#allocation7 + $0xa0] sm:$0xff]
    %v398 = vld [vmem:[#allocation7 + $0xa8] sm:$0xff]
    %v399 = vld [vmem:[#allocation7 + $0xb0] sm:$0xff]
    %v400 = vld [vmem:[#allocation7 + $0xb8] sm:$0xff]
    %v401 = vld [vmem:[#allocation7 + $0xc0] sm:$0xff]
    %v402 = vld [vmem:[#allocation7 + $0xc8] sm:$0xff]
    %v403 = vld [vmem:[#allocation7 + $0xd0] sm:$0xff]
    %v404 = vld [vmem:[#allocation7 + $0xd8] sm:$0xff]
    %v405 = vld [vmem:[#allocation7 + $0xe0] sm:$0xff]
    %v406 = vld [vmem:[#allocation7 + $0xe8] sm:$0xff]
    %v407 = vld [vmem:[#allocation7 + $0xf0] sm:$0xff]
    %v408 = vld [vmem:[#allocation7 + $0xf8] sm:$0xff]
    %v409 = vld [vmem:[#allocation7 + $0x100] sm:$0xff]
    %v410 = vld [vmem:[#allocation7 + $0x108] sm:$0xff]
    %v411 = vld [vmem:[#allocation7 + $0x110] sm:$0xff]
    %v412 = vld [vmem:[#allocation7 + $0x118] sm:$0xff]
    %v413 = vld [vmem:[#allocation7 + $0x120] sm:$0xff]
    %v414 = vld [vmem:[#allocation7 + $0x128] sm:$0xff]
    %v415 = vld [vmem:[#allocation7 + $0x130] sm:$0xff]
    %v416 = vld [vmem:[#allocation7 + $0x138] sm:$0xff]
    %v417 = vld [vmem:[#allocation7 + $0x140] sm:$0xff]
    %v418 = vld [vmem:[#allocation7 + $0x148] sm:$0xff]
    %v419 = vld [vmem:[#allocation7 + $0x150] sm:$0xff]
    %v420 = vld [vmem:[#allocation7 + $0x158] sm:$0xff]
    %v421 = vld [vmem:[#allocation7 + $0x160] sm:$0xff]
    %v422 = vld [vmem:[#allocation7 + $0x168] sm:$0xff]
    %v423 = vld [vmem:[#allocation7 + $0x170] sm:$0xff]
    %v424 = vld [vmem:[#allocation7 + $0x178] sm:$0xff]
    %425 = vmatprep.subr.mxu0 %v378
    %426 = vmatpush1.msra.mxu0 %v377
    %427 = vmatprep.subr.mxu0 %v381
    %428 = vmatpush1.msra.mxu0 %v380
    %429 = vmatprep.subr.mxu0 %v384
    %430 = vmatpush1.msra.mxu0 %v383
    %431 = vmatprep.subr.mxu0 %v387
    %432 = vmatpush1.msra.mxu0 %v386
    %433 = vmatprep.subr.mxu0 %v390
    %434 = vmatpush1.msra.mxu0 %v389
    %435 = vmatprep.subr.mxu0 %v393
    %436 = vmatpush1.msra.mxu0 %v392
    %437 = vmatprep.subr.mxu0 %v396
    %438 = vmatpush1.msra.mxu0 %v395
    %439 = vmatprep.subr.mxu0 %v399
    %440 = vmatpush1.msra.mxu0 %v398
    %441 = vmatprep.subr.mxu0 %v402
    %442 = vmatpush1.msra.mxu0 %v401
    %443 = vmatprep.subr.mxu0 %v405
    %444 = vmatpush1.msra.mxu0 %v404
    %445 = vmatprep.subr.mxu0 %v408
    %446 = vmatpush1.msra.mxu0 %v407
    %447 = vmatprep.subr.mxu0 %v411
    %448 = vmatpush1.msra.mxu0 %v410
    %449 = vmatprep.subr.mxu0 %v414
    %450 = vmatpush1.msra.mxu0 %v413
    %451 = vmatprep.subr.mxu0 %v417
    %452 = vmatpush1.msra.mxu0 %v416
    %453 = vmatprep.subr.mxu0 %v420
    %454 = vmatpush1.msra.mxu0 %v419
    %455 = vmatprep.subr.mxu0 %v423
    %456 = vmatpush1.msra.mxu0 %v422
    %457 = vmatprep.subr.mxu0 0.0
    %458 = vmatpush1.msra.mxu0 0.0
    %459 = vmatprep.subr.mxu0 0.0
    %460 = vmatpush1.msra.mxu0 0.0
    %461 = vmatprep.subr.mxu0 0.0
    %462 = vmatpush1.msra.mxu0 0.0
    %463 = vmatprep.subr.mxu0 0.0
    %464 = vmatpush1.msra.mxu0 0.0
    %465 = vmatprep.subr.mxu0 0.0
    %466 = vmatpush1.msra.mxu0 0.0
    %467 = vmatprep.subr.mxu0 0.0
    %468 = vmatpush1.msra.mxu0 0.0
    %469 = vmatprep.subr.mxu0 0.0
    %470 = vmatpush1.msra.mxu0 0.0
    %471 = vmatprep.subr.mxu0 0.0
    %472 = vmatpush1.msra.mxu0 0.0
    %473 = vmatprep.subr.mxu0 0.0
    %474 = vmatpush1.msra.mxu0 0.0
    %475 = vmatprep.subr.mxu0 0.0
    %476 = vmatpush1.msra.mxu0 0.0
    %477 = vmatprep.subr.mxu0 0.0
    %478 = vmatpush1.msra.mxu0 0.0
    %479 = vmatprep.subr.mxu0 0.0
    %480 = vmatpush1.msra.mxu0 0.0
    %481 = vmatprep.subr.mxu0 0.0
    %482 = vmatpush1.msra.mxu0 0.0
    %483 = vmatprep.subr.mxu0 0.0
    %484 = vmatpush1.msra.mxu0 0.0
    %485 = vmatprep.subr.mxu0 0.0
    %486 = vmatpush1.msra.mxu0 0.0
    %487 = vmatprep.subr.mxu0 0.0
    %488 = vmatpush1.msra.mxu0 0.0
    %489 = vmatprep.mubr.f32.mxu0 0.0
    %490 = vmatmul.mubr.f32.gmra.mrb[0].mxu0 %v327
    %v491 = vpop.f32.mrb[0].mxu0
    %v492 = vadd.f32 0.0, %v491
    %v493 = vpop.f32.mrb[0].mxu0
    %v494 = vadd.f32 0.0, %v493
    %495 = vmatprep.mubr.f32.mxu0 0.0
    %496 = vmatmul.mubr.f32.gmra.mrb[0].mxu0 %v328
    %v497 = vpop.f32.mrb[0].mxu0
    %v498 = vadd.f32 0.0, %v497
    %v499 = vpop.f32.mrb[0].mxu0
    %v500 = vadd.f32 0.0, %v499
    %501 = vdwg.mxu0
    %502 = vmatprep.subr.mxu0 0.0
    %503 = vmatpush1.msra.mxu0 %v379
    %504 = vmatprep.subr.mxu0 0.0
    %505 = vmatpush1.msra.mxu0 %v382
    %506 = vmatprep.subr.mxu0 0.0
    %507 = vmatpush1.msra.mxu0 %v385
    %508 = vmatprep.subr.mxu0 0.0
    %509 = vmatpush1.msra.mxu0 %v388
    %510 = vmatprep.subr.mxu0 0.0
    %511 = vmatpush1.msra.mxu0 %v391
    %512 = vmatprep.subr.mxu0 0.0
    %513 = vmatpush1.msra.mxu0 %v394
    %514 = vmatprep.subr.mxu0 0.0
    %515 = vmatpush1.msra.mxu0 %v397
    %516 = vmatprep.subr.mxu0 0.0
    %517 = vmatpush1.msra.mxu0 %v400
    %518 = vmatprep.subr.mxu0 0.0
    %519 = vmatpush1.msra.mxu0 %v403
    %520 = vmatprep.subr.mxu0 0.0
    %521 = vmatpush1.msra.mxu0 %v406
    %522 = vmatprep.subr.mxu0 0.0
    %523 = vmatpush1.msra.mxu0 %v409
    %524 = vmatprep.subr.mxu0 0.0
    %525 = vmatpush1.msra.mxu0 %v412
    %526 = vmatprep.subr.mxu0 0.0
    %527 = vmatpush1.msra.mxu0 %v415
    %528 = vmatprep.subr.mxu0 0.0
    %529 = vmatpush1.msra.mxu0 %v418
    %530 = vmatprep.subr.mxu0 0.0
    %531 = vmatpush1.msra.mxu0 %v421
    %532 = vmatprep.subr.mxu0 0.0
    %533 = vmatpush1.msra.mxu0 %v424
    %534 = vmatprep.subr.mxu0 0.0
    %535 = vmatpush1.msra.mxu0 0.0
    %536 = vmatprep.subr.mxu0 0.0
    %537 = vmatpush1.msra.mxu0 0.0
    %538 = vmatprep.subr.mxu0 0.0
    %539 = vmatpush1.msra.mxu0 0.0
    %540 = vmatprep.subr.mxu0 0.0
    %541 = vmatpush1.msra.mxu0 0.0
    %542 = vmatprep.subr.mxu0 0.0
    %543 = vmatpush1.msra.mxu0 0.0
    %544 = vmatprep.subr.mxu0 0.0
    %545 = vmatpush1.msra.mxu0 0.0
    %546 = vmatprep.subr.mxu0 0.0
    %547 = vmatpush1.msra.mxu0 0.0
    %548 = vmatprep.subr.mxu0 0.0
    %549 = vmatpush1.msra.mxu0 0.0
    %550 = vmatprep.subr.mxu0 0.0
    %551 = vmatpush1.msra.mxu0 0.0
    %552 = vmatprep.subr.mxu0 0.0
    %553 = vmatpush1.msra.mxu0 0.0
    %554 = vmatprep.subr.mxu0 0.0
    %555 = vmatpush1.msra.mxu0 0.0
    %556 = vmatprep.subr.mxu0 0.0
    %557 = vmatpush1.msra.mxu0 0.0
    %558 = vmatprep.subr.mxu0 0.0
    %559 = vmatpush1.msra.mxu0 0.0
    %560 = vmatprep.subr.mxu0 0.0
    %561 = vmatpush1.msra.mxu0 0.0
    %562 = vmatprep.subr.mxu0 0.0
    %563 = vmatpush1.msra.mxu0 0.0
    %564 = vmatprep.subr.mxu0 0.0
    %565 = vmatpush1.msra.mxu0 0.0
    %566 = vmatprep.mubr.f32.mxu0 0.0
    %567 = vmatmul.mubr.f32.gmra.mrb[0].mxu0 %v327
    %v568 = vpop.f32.mrb[0].mxu0
    %v569 = vadd.f32 0.0, %v568
    %v570 = vpop.f32.mrb[0].mxu0
    %571 = vmatprep.mubr.f32.mxu0 0.0
    %572 = vmatmul.mubr.f32.gmra.mrb[0].mxu0 %v328
    %v573 = vpop.f32.mrb[0].mxu0
    %v574 = vadd.f32 0.0, %v573
    %v575 = vpop.f32.mrb[0].mxu0
    %576 = vdwg.mxu0
    %577 = vmatprep.subr.mxu0 %v330
    %578 = vmatpush1.msra.mxu0 %v329
    %579 = vmatprep.subr.mxu0 %v333
    %580 = vmatpush1.msra.mxu0 %v332
    %581 = vmatprep.subr.mxu0 %v336
    %582 = vmatpush1.msra.mxu0 %v335
    %583 = vmatprep.subr.mxu0 %v339
    %584 = vmatpush1.msra.mxu0 %v338
    %585 = vmatprep.subr.mxu0 %v342
    %586 = vmatpush1.msra.mxu0 %v341
    %587 = vmatprep.subr.mxu0 %v345
    %588 = vmatpush1.msra.mxu0 %v344
    %589 = vmatprep.subr.mxu0 %v348
    %590 = vmatpush1.msra.mxu0 %v347
    %591 = vmatprep.subr.mxu0 %v351
    %592 = vmatpush1.msra.mxu0 %v350
    %593 = vmatprep.subr.mxu0 %v354
    %594 = vmatpush1.msra.mxu0 %v353
    %595 = vmatprep.subr.mxu0 %v357
    %596 = vmatpush1.msra.mxu0 %v356
    %597 = vmatprep.subr.mxu0 %v360
    %598 = vmatpush1.msra.mxu0 %v359
    %599 = vmatprep.subr.mxu0 %v363
    %600 = vmatpush1.msra.mxu0 %v362
    %601 = vmatprep.subr.mxu0 %v366
    %602 = vmatpush1.msra.mxu0 %v365
    %603 = vmatprep.subr.mxu0 %v369
    %604 = vmatpush1.msra.mxu0 %v368
    %605 = vmatprep.subr.mxu0 %v372
    %606 = vmatpush1.msra.mxu0 %v371
    %607 = vmatprep.subr.mxu0 %v375
    %608 = vmatpush1.msra.mxu0 %v374
    %609 = vmatprep.subr.mxu0 0.0
    %610 = vmatpush1.msra.mxu0 0.0
    %611 = vmatprep.subr.mxu0 0.0
    %612 = vmatpush1.msra.mxu0 0.0
    %613 = vmatprep.subr.mxu0 0.0
    %614 = vmatpush1.msra.mxu0 0.0
    %615 = vmatprep.subr.mxu0 0.0
    %616 = vmatpush1.msra.mxu0 0.0
    %617 = vmatprep.subr.mxu0 0.0
    %618 = vmatpush1.msra.mxu0 0.0
    %619 = vmatprep.subr.mxu0 0.0
    %620 = vmatpush1.msra.mxu0 0.0
    %621 = vmatprep.subr.mxu0 0.0
    %622 = vmatpush1.msra.mxu0 0.0
    %623 = vmatprep.subr.mxu0 0.0
    %624 = vmatpush1.msra.mxu0 0.0
    %625 = vmatprep.subr.mxu0 0.0
    %626 = vmatpush1.msra.mxu0 0.0
    %627 = vmatprep.subr.mxu0 0.0
    %628 = vmatpush1.msra.mxu0 0.0
    %629 = vmatprep.subr.mxu0 0.0
    %630 = vmatpush1.msra.mxu0 0.0
    %631 = vmatprep.subr.mxu0 0.0
    %632 = vmatpush1.msra.mxu0 0.0
    %633 = vmatprep.subr.mxu0 0.0
    %634 = vmatpush1.msra.mxu0 0.0
    %635 = vmatprep.subr.mxu0 0.0
    %636 = vmatpush1.msra.mxu0 0.0
    %637 = vmatprep.subr.mxu0 0.0
    %638 = vmatpush1.msra.mxu0 0.0
    %639 = vmatprep.subr.mxu0 0.0
    %640 = vmatpush1.msra.mxu0 0.0
    %641 = vmatprep.mubr.f32.mxu0 0.0
    %642 = vmatmul.mubr.f32.gmra.mrb[0].mxu0 %v193
    %v643 = vpop.f32.mrb[0].mxu0
    %v644 = vadd.f32 %v492, %v643
    %v645 = vpop.f32.mrb[0].mxu0
    %v646 = vadd.f32 %v494, %v645
    %647 = vmatprep.mubr.f32.mxu0 0.0
    %648 = vmatmul.mubr.f32.gmra.mrb[0].mxu0 %v194
    %v649 = vpop.f32.mrb[0].mxu0
    %v650 = vadd.f32 %v498, %v649
    %v651 = vpop.f32.mrb[0].mxu0
    %v652 = vadd.f32 %v500, %v651
    %653 = vdwg.mxu0
    %654 = vmatprep.subr.mxu0 0.0
    %655 = vmatpush1.msra.mxu0 %v331
    %656 = vmatprep.subr.mxu0 0.0
    %657 = vmatpush1.msra.mxu0 %v334
    %658 = vmatprep.subr.mxu0 0.0
    %659 = vmatpush1.msra.mxu0 %v337
    %660 = vmatprep.subr.mxu0 0.0
    %661 = vmatpush1.msra.mxu0 %v340
    %662 = vmatprep.subr.mxu0 0.0
    %663 = vmatpush1.msra.mxu0 %v343
    %664 = vmatprep.subr.mxu0 0.0
    %665 = vmatpush1.msra.mxu0 %v346
    %666 = vmatprep.subr.mxu0 0.0
    %667 = vmatpush1.msra.mxu0 %v349
    %668 = vmatprep.subr.mxu0 0.0
    %669 = vmatpush1.msra.mxu0 %v352
    %670 = vmatprep.subr.mxu0 0.0
    %671 = vmatpush1.msra.mxu0 %v355
    %672 = vmatprep.subr.mxu0 0.0
    %673 = vmatpush1.msra.mxu0 %v358
    %674 = vmatprep.subr.mxu0 0.0
    %675 = vmatpush1.msra.mxu0 %v361
    %676 = vmatprep.subr.mxu0 0.0
    %677 = vmatpush1.msra.mxu0 %v364
    %678 = vmatprep.subr.mxu0 0.0
    %679 = vmatpush1.msra.mxu0 %v367
    %680 = vmatprep.subr.mxu0 0.0
    %681 = vmatpush1.msra.mxu0 %v370
    %682 = vmatprep.subr.mxu0 0.0
    %683 = vmatpush1.msra.mxu0 %v373
    %684 = vmatprep.subr.mxu0 0.0
    %685 = vmatpush1.msra.mxu0 %v376
    %686 = vmatprep.subr.mxu0 0.0
    %687 = vmatpush1.msra.mxu0 0.0
    %688 = vmatprep.subr.mxu0 0.0
    %689 = vmatpush1.msra.mxu0 0.0
    %690 = vmatprep.subr.mxu0 0.0
    %691 = vmatpush1.msra.mxu0 0.0
    %692 = vmatprep.subr.mxu0 0.0
    %693 = vmatpush1.msra.mxu0 0.0
    %694 = vmatprep.subr.mxu0 0.0
    %695 = vmatpush1.msra.mxu0 0.0
    %696 = vmatprep.subr.mxu0 0.0
    %697 = vmatpush1.msra.mxu0 0.0
    %698 = vmatprep.subr.mxu0 0.0
    %699 = vmatpush1.msra.mxu0 0.0
    %700 = vmatprep.subr.mxu0 0.0
    %701 = vmatpush1.msra.mxu0 0.0
    %702 = vmatprep.subr.mxu0 0.0
    %703 = vmatpush1.msra.mxu0 0.0
    %704 = vmatprep.subr.mxu0 0.0
    %705 = vmatpush1.msra.mxu0 0.0
    %706 = vmatprep.subr.mxu0 0.0
    %707 = vmatpush1.msra.mxu0 0.0
    %708 = vmatprep.subr.mxu0 0.0
    %709 = vmatpush1.msra.mxu0 0.0
    %710 = vmatprep.subr.mxu0 0.0
    %711 = vmatpush1.msra.mxu0 0.0
    %712 = vmatprep.subr.mxu0 0.0
    %713 = vmatpush1.msra.mxu0 0.0
    %714 = vmatprep.subr.mxu0 0.0
    %715 = vmatpush1.msra.mxu0 0.0
    %716 = vmatprep.subr.mxu0 0.0
    %717 = vmatpush1.msra.mxu0 0.0
    %718 = vmatprep.mubr.f32.mxu0 0.0
    %719 = vmatmul.mubr.f32.gmra.mrb[0].mxu0 %v193
    %v720 = vpop.f32.mrb[0].mxu0
    %v721 = vadd.f32 %v569, %v720
    %v722 = vpop.f32.mrb[0].mxu0
    %723 = vmatprep.mubr.f32.mxu0 0.0
    %724 = vmatmul.mubr.f32.gmra.mrb[0].mxu0 %v194
    %v725 = vpop.f32.mrb[0].mxu0
    %v726 = vadd.f32 %v574, %v725
    %v727 = vpop.f32.mrb[0].mxu0
    %728 = vdwg.mxu0
    %v729 = vld [vmem:[#allocation8] sm:$0xff]
    %v730 = vld [vmem:[#allocation8 + $0x8] sm:$0xff]
    %v731 = vld [vmem:[#allocation8 + $0x10] sm:$0xff]
    %v732 = vld [vmem:[#allocation8 + $0x18] sm:$0xff]
    %v733 = vld [vmem:[#allocation8 + $0x20] sm:$0xff]
    %v734 = vld [vmem:[#allocation8 + $0x28] sm:$0xff]
    %v735 = vld [vmem:[#allocation8 + $0x30] sm:$0xff]
    %v736 = vld [vmem:[#allocation8 + $0x38] sm:$0xff]
    %v737 = vld [vmem:[#allocation8 + $0x40] sm:$0xff]
    %v738 = vld [vmem:[#allocation8 + $0x48] sm:$0xff]
    %v739 = vld [vmem:[#allocation8 + $0x50] sm:$0xff]
    %v740 = vld [vmem:[#allocation8 + $0x58] sm:$0xff]
    %v741 = vld [vmem:[#allocation8 + $0x60] sm:$0xff]
    %v742 = vld [vmem:[#allocation8 + $0x68] sm:$0xff]
    %v743 = vld [vmem:[#allocation8 + $0x70] sm:$0xff]
    %v744 = vld [vmem:[#allocation8 + $0x78] sm:$0xff]
    %v745 = vld [vmem:[#allocation8 + $0x80] sm:$0xff]
    %v746 = vld [vmem:[#allocation8 + $0x88] sm:$0xff]
    %v747 = vld [vmem:[#allocation8 + $0x90] sm:$0xff]
    %v748 = vld [vmem:[#allocation8 + $0x98] sm:$0xff]
    %v749 = vld [vmem:[#allocation8 + $0xa0] sm:$0xff]
    %v750 = vld [vmem:[#allocation8 + $0xa8] sm:$0xff]
    %v751 = vld [vmem:[#allocation8 + $0xb0] sm:$0xff]
    %v752 = vld [vmem:[#allocation8 + $0xb8] sm:$0xff]
    %v753 = vld [vmem:[#allocation8 + $0xc0] sm:$0xff]
    %v754 = vld [vmem:[#allocation8 + $0xc8] sm:$0xff]
    %v755 = vld [vmem:[#allocation8 + $0xd0] sm:$0xff]
    %v756 = vld [vmem:[#allocation8 + $0xd8] sm:$0xff]
    %v757 = vld [vmem:[#allocation8 + $0xe0] sm:$0xff]
    %v758 = vld [vmem:[#allocation8 + $0xe8] sm:$0xff]
    %v759 = vld [vmem:[#allocation8 + $0xf0] sm:$0xff]
    %v760 = vld [vmem:[#allocation8 + $0xf8] sm:$0xff]
    %v761 = vld [vmem:[#allocation8 + $0x100] sm:$0xff]
    %v762 = vld [vmem:[#allocation8 + $0x108] sm:$0xff]
    %v763 = vld [vmem:[#allocation8 + $0x110] sm:$0xff]
    %v764 = vld [vmem:[#allocation8 + $0x118] sm:$0xff]
    %v765 = vld [vmem:[#allocation8 + $0x120] sm:$0xff]
    %v766 = vld [vmem:[#allocation8 + $0x128] sm:$0xff]
    %v767 = vld [vmem:[#allocation8 + $0x130] sm:$0xff]
    %v768 = vld [vmem:[#allocation8 + $0x138] sm:$0xff]
    %v769 = vld [vmem:[#allocation8 + $0x140] sm:$0xff]
    %v770 = vld [vmem:[#allocation8 + $0x148] sm:$0xff]
    %v771 = vld [vmem:[#allocation8 + $0x150] sm:$0xff]
    %v772 = vld [vmem:[#allocation8 + $0x158] sm:$0xff]
    %v773 = vld [vmem:[#allocation8 + $0x160] sm:$0xff]
    %v774 = vld [vmem:[#allocation8 + $0x168] sm:$0xff]
    %v775 = vld [vmem:[#allocation8 + $0x170] sm:$0xff]
    %v776 = vld [vmem:[#allocation8 + $0x178] sm:$0xff]
    %777 = vmatprep.subr.mxu0 %v730
    %778 = vmatpush1.msra.mxu0 %v729
    %779 = vmatprep.subr.mxu0 %v733
    %780 = vmatpush1.msra.mxu0 %v732
    %781 = vmatprep.subr.mxu0 %v736
    %782 = vmatpush1.msra.mxu0 %v735
    %783 = vmatprep.subr.mxu0 %v739
    %784 = vmatpush1.msra.mxu0 %v738
    %785 = vmatprep.subr.mxu0 %v742
    %786 = vmatpush1.msra.mxu0 %v741
    %787 = vmatprep.subr.mxu0 %v745
    %788 = vmatpush1.msra.mxu0 %v744
    %789 = vmatprep.subr.mxu0 %v748
    %790 = vmatpush1.msra.mxu0 %v747
    %791 = vmatprep.subr.mxu0 %v751
    %792 = vmatpush1.msra.mxu0 %v750
    %793 = vmatprep.subr.mxu0 %v754
    %794 = vmatpush1.msra.mxu0 %v753
    %795 = vmatprep.subr.mxu0 %v757
    %796 = vmatpush1.msra.mxu0 %v756
    %797 = vmatprep.subr.mxu0 %v760
    %798 = vmatpush1.msra.mxu0 %v759
    %799 = vmatprep.subr.mxu0 %v763
    %800 = vmatpush1.msra.mxu0 %v762
    %801 = vmatprep.subr.mxu0 %v766
    %802 = vmatpush1.msra.mxu0 %v765
    %803 = vmatprep.subr.mxu0 %v769
    %804 = vmatpush1.msra.mxu0 %v768
    %805 = vmatprep.subr.mxu0 %v772
    %806 = vmatpush1.msra.mxu0 %v771
    %807 = vmatprep.subr.mxu0 %v775
    %808 = vmatpush1.msra.mxu0 %v774
    %809 = vmatprep.subr.mxu0 0.0
    %810 = vmatpush1.msra.mxu0 0.0
    %811 = vmatprep.subr.mxu0 0.0
    %812 = vmatpush1.msra.mxu0 0.0
    %813 = vmatprep.subr.mxu0 0.0
    %814 = vmatpush1.msra.mxu0 0.0
    %815 = vmatprep.subr.mxu0 0.0
    %816 = vmatpush1.msra.mxu0 0.0
    %817 = vmatprep.subr.mxu0 0.0
    %818 = vmatpush1.msra.mxu0 0.0
    %819 = vmatprep.subr.mxu0 0.0
    %820 = vmatpush1.msra.mxu0 0.0
    %821 = vmatprep.subr.mxu0 0.0
    %822 = vmatpush1.msra.mxu0 0.0
    %823 = vmatprep.subr.mxu0 0.0
    %824 = vmatpush1.msra.mxu0 0.0
    %825 = vmatprep.subr.mxu0 0.0
    %826 = vmatpush1.msra.mxu0 0.0
    %827 = vmatprep.subr.mxu0 0.0
    %828 = vmatpush1.msra.mxu0 0.0
    %829 = vmatprep.subr.mxu0 0.0
    %830 = vmatpush1.msra.mxu0 0.0
    %831 = vmatprep.subr.mxu0 0.0
    %832 = vmatpush1.msra.mxu0 0.0
    %833 = vmatprep.subr.mxu0 0.0
    %834 = vmatpush1.msra.mxu0 0.0
    %835 = vmatprep.subr.mxu0 0.0
    %836 = vmatpush1.msra.mxu0 0.0
    %837 = vmatprep.subr.mxu0 0.0
    %838 = vmatpush1.msra.mxu0 0.0
    %839 = vmatprep.subr.mxu0 0.0
    %840 = vmatpush1.msra.mxu0 0.0
    %841 = vmatprep.mubr.f32.mxu0 0.0
    %842 = vmatmul.mubr.f32.gmra.mrb[0].mxu0 %v325
    %v843 = vpop.f32.mrb[0].mxu0
    %v844 = vadd.f32 0.0, %v843
    %v845 = vpop.f32.mrb[0].mxu0
    %v846 = vadd.f32 0.0, %v845
    %847 = vmatprep.mubr.f32.mxu0 0.0
    %848 = vmatmul.mubr.f32.gmra.mrb[0].mxu0 %v326
    %v849 = vpop.f32.mrb[0].mxu0
    %v850 = vadd.f32 0.0, %v849
    %v851 = vpop.f32.mrb[0].mxu0
    %v852 = vadd.f32 0.0, %v851
    %853 = vdwg.mxu0
    %854 = vmatprep.subr.mxu0 0.0
    %855 = vmatpush1.msra.mxu0 %v731
    %856 = vmatprep.subr.mxu0 0.0
    %857 = vmatpush1.msra.mxu0 %v734
    %858 = vmatprep.subr.mxu0 0.0
    %859 = vmatpush1.msra.mxu0 %v737
    %860 = vmatprep.subr.mxu0 0.0
    %861 = vmatpush1.msra.mxu0 %v740
    %862 = vmatprep.subr.mxu0 0.0
    %863 = vmatpush1.msra.mxu0 %v743
    %864 = vmatprep.subr.mxu0 0.0
    %865 = vmatpush1.msra.mxu0 %v746
    %866 = vmatprep.subr.mxu0 0.0
    %867 = vmatpush1.msra.mxu0 %v749
    %868 = vmatprep.subr.mxu0 0.0
    %869 = vmatpush1.msra.mxu0 %v752
    %870 = vmatprep.subr.mxu0 0.0
    %871 = vmatpush1.msra.mxu0 %v755
    %872 = vmatprep.subr.mxu0 0.0
    %873 = vmatpush1.msra.mxu0 %v758
    %874 = vmatprep.subr.mxu0 0.0
    %875 = vmatpush1.msra.mxu0 %v761
    %876 = vmatprep.subr.mxu0 0.0
    %877 = vmatpush1.msra.mxu0 %v764
    %878 = vmatprep.subr.mxu0 0.0
    %879 = vmatpush1.msra.mxu0 %v767
    %880 = vmatprep.subr.mxu0 0.0
    %881 = vmatpush1.msra.mxu0 %v770
    %882 = vmatprep.subr.mxu0 0.0
    %883 = vmatpush1.msra.mxu0 %v773
    %884 = vmatprep.subr.mxu0 0.0
    %885 = vmatpush1.msra.mxu0 %v776
    %886 = vmatprep.subr.mxu0 0.0
    %887 = vmatpush1.msra.mxu0 0.0
    %888 = vmatprep.subr.mxu0 0.0
    %889 = vmatpush1.msra.mxu0 0.0
    %890 = vmatprep.subr.mxu0 0.0
    %891 = vmatpush1.msra.mxu0 0.0
    %892 = vmatprep.subr.mxu0 0.0
    %893 = vmatpush1.msra.mxu0 0.0
    %894 = vmatprep.subr.mxu0 0.0
    %895 = vmatpush1.msra.mxu0 0.0
    %896 = vmatprep.subr.mxu0 0.0
    %897 = vmatpush1.msra.mxu0 0.0
    %898 = vmatprep.subr.mxu0 0.0
    %899 = vmatpush1.msra.mxu0 0.0
    %900 = vmatprep.subr.mxu0 0.0
    %901 = vmatpush1.msra.mxu0 0.0
    %902 = vmatprep.subr.mxu0 0.0
    %903 = vmatpush1.msra.mxu0 0.0
    %904 = vmatprep.subr.mxu0 0.0
    %905 = vmatpush1.msra.mxu0 0.0
    %906 = vmatprep.subr.mxu0 0.0
    %907 = vmatpush1.msra.mxu0 0.0
    %908 = vmatprep.subr.mxu0 0.0
    %909 = vmatpush1.msra.mxu0 0.0
    %910 = vmatprep.subr.mxu0 0.0
    %911 = vmatpush1.msra.mxu0 0.0
    %912 = vmatprep.subr.mxu0 0.0
    %913 = vmatpush1.msra.mxu0 0.0
    %914 = vmatprep.subr.mxu0 0.0
    %915 = vmatpush1.msra.mxu0 0.0
    %916 = vmatprep.subr.mxu0 0.0
    %917 = vmatpush1.msra.mxu0 0.0
    %918 = vmatprep.mubr.f32.mxu0 0.0
    %919 = vmatmul.mubr.f32.gmra.mrb[0].mxu0 %v325
    %v920 = vpop.f32.mrb[0].mxu0
    %v921 = vadd.f32 0.0, %v920
    %v922 = vpop.f32.mrb[0].mxu0
    %923 = vmatprep.mubr.f32.mxu0 0.0
    %924 = vmatmul.mubr.f32.gmra.mrb[0].mxu0 %v326
    %v925 = vpop.f32.mrb[0].mxu0
    %v926 = vadd.f32 0.0, %v925
    %v927 = vpop.f32.mrb[0].mxu0
    %928 = vdwg.mxu0
    %v929 = vadd.f32 %v644, %v844
    %v930 = vadd.f32 %v646, %v846
    %v931 = vadd.f32 %v721, %v921
    %v932 = vadd.f32 %v650, %v850
    %v933 = vadd.f32 %v652, %v852
    %v934 = vadd.f32 %v726, %v926
    %v935 = vld [vmem:[%s9] sm:$0x7]
    %v937 = vlaneseq
    %v938 = vshrl.u32 %v937, 7
    %v939 = vsub.s32 0, %v938
    %v940 = vrot.slane %v935, %v939
    %v941 = vlaneseq
    %v942 = vshrl.u32 %v941, 7
    %v943 = vsub.s32 1, %v942
    %v944 = vrot.slane %v935, %v943
    %v945 = vlaneseq
    %v946 = vshrl.u32 %v945, 7
    %v947 = vsub.s32 2, %v946
    %v948 = vrot.slane %v935, %v947
    %v952 = vadd.f32 %v929, %v940
    %v953 = vadd.f32 %v930, %v944
    %v954 = vadd.f32 %v931, %v948
    %v955 = vadd.f32 %v932, %v940
    %v956 = vadd.f32 %v933, %v944
    %v957 = vadd.f32 %v934, %v948
    %v958 = vmax.f32 %v952, %v953
    %v959 = vmax.f32 %v955, %v956
    %v960 = vmax.f32 %v958, %v954
    %v961 = vmax.f32 %v959, %v957
    %v962 = vtanh.pop %v960
    %v963 = vtanh.pop %v961
    %964 = vst [vmem:[%s11] sm:$0xff] %v962
    %965 = vst [vmem:[%s11 + $0x8] sm:$0xff] %v963
    // Predicated region
    $region58: #{coattention_forward.4} parent=1 // pred_check
      _
    $region59: #{coattention_forward.4} parent=1 // pred_check_branch
      %967 = sbr.rel (0) target = $region61
    $region60: #{coattention_forward.4} parent=1 // pred_region
      _
    $region61: #{coattention_forward.4} parent=1 // pred_fallthru
      _
    // Predicated region
    $region62: #{coattention_forward.4} parent=1 // pred_check
      _
    $region63: #{coattention_forward.4} parent=1 // pred_check_branch
      %969 = sbr.rel (0) target = $region65
    $region64: #{coattention_forward.4} parent=1 // pred_region
      _
    $region65: #{coattention_forward.4} parent=1 // pred_fallthru
      _
    // Predicated region
    $region66: #{coattention_forward.4} parent=1 // pred_check
      _
    $region67: #{coattention_forward.4} parent=1 // pred_check_branch
      %971 = sbr.rel (0) target = $region69
    $region68: #{coattention_forward.4} parent=1 // pred_region
      _
    $region69: #{coattention_forward.4} parent=1 // pred_fallthru
      _
    // Predicated region
    $region70: #{coattention_forward.4} parent=1 // pred_check
      _
    $region71: #{coattention_forward.4} parent=1 // pred_check_branch
      %973 = sbr.rel (0) target = $region73
    $region72: #{coattention_forward.4} parent=1 // pred_region
      _
    $region73: #{coattention_forward.4} parent=1 // pred_fallthru
      _
    // Predicated region
    $region74: #{coattention_forward.4} parent=1 // pred_check
      _
    $region75: #{coattention_forward.4} parent=1 // pred_check_branch
      %975 = sbr.rel (0) target = $region77
    $region76: #{coattention_forward.4} parent=1 // pred_region
      _
    $region77: #{coattention_forward.4} parent=1 // pred_fallthru
      _
    // Predicated region
    $region78: #{coattention_forward.4} parent=1 // pred_check
      _
    $region79: #{coattention_forward.4} parent=1 // pred_check_branch
      %977 = sbr.rel (0) target = $region81
    $region80: #{coattention_forward.4} parent=1 // pred_region
      _
    $region81: #{coattention_forward.4} parent=1 // pred_fallthru
      _
    %978 = vsyncpa [#allocation4], 1
    %979 = vsyncpa [#allocation6], 1
    %980 = vsyncpa [#allocation9], 1

// kernel: coattention_forward.7
$region0: #{coattention_forward.7}
  #allocation0 [shape = 'u32[]', space=smem, size = 0x4, offset = 0x4, fixed_abs, tag = 'smem constant byte address 0x4 - core index']
  #allocation1 [shape = 'u32[144,128]{1,0:T(1,128)}', space=vmem, size = 0x12000, scoped, tag = 'internal scratch']
  %s0 = inlined_call_operand.vmem [shape: f32[3,2,128], index: 0, kind: input, shape index: {}]
  %s1 = inlined_call_operand.vmem [shape: f32[3,2,128], index: 1, kind: input, shape index: {}]
  %s2 = inlined_call_operand.vmem [shape: f32[128,128], index: 2, kind: input, shape index: {}]
  %s3 = inlined_call_operand.vmem [shape: f32[1,128], index: 3, kind: input, shape index: {}]
  %s4 = inlined_call_operand.vmem [shape: f32[128,128], index: 4, kind: input, shape index: {}]
  %s5 = inlined_call_operand.vmem [shape: f32[128,128], index: 5, kind: input, shape index: {}]
  %s6 = inlined_call_operand.vmem [shape: f32[1,128], index: 6, kind: input, shape index: {}]
  %s7 = inlined_call_operand.vmem [shape: f32[128,128], index: 7, kind: input, shape index: {}]
  %s8 = inlined_call_operand.vmem [shape: f32[128,128], index: 8, kind: input, shape index: {}]
  %s9 = inlined_call_operand.vmem [shape: f32[1,128], index: 9, kind: input, shape index: {}]
  %s10 = inlined_call_operand.vmem [shape: f32[128,128], index: 10, kind: input, shape index: {}]
  %s11 = inlined_call_operand.vmem [shape: f32[1,128], index: 11, kind: input, shape index: {}]
  %s12 = inlined_call_operand.hbm [shape: f32[2,128], index: 12, kind: output, shape index: {}]
  %s13 = sld [smem:[#allocation0]]
  $region58: #{coattention_forward.7} parent=0
    _
  %s15 = ssub.s32 1, %s13
  %s16 = scalar_select 0, %s15, %s13
  $region1: #{coattention_forward.7} parent=0
    #allocation2 [shape = 'u8[1024]{0}', space=vmem, size = 0x400, scoped, tag = 'output window, operand 0, single buffered']
    #allocation3 [shape = 's32[1]{0}', space=sflag, size = 0x4, scoped, tag = 'scoped memory for coattention_forward.7']
    %17 = vsyncpa [#allocation3], 0
    // Predicated region
    $region2: #{coattention_forward.7} parent=1 // pred_check
      _
    $region3: #{coattention_forward.7} parent=1 // pred_check_branch
      %19 = sbr.rel (0) target = $region5
    $region4: #{coattention_forward.7} parent=1 // pred_region
      _
    $region5: #{coattention_forward.7} parent=1 // pred_fallthru
      _
    // Predicated region
    $region6: #{coattention_forward.7} parent=1 // pred_check
      _
    $region7: #{coattention_forward.7} parent=1 // pred_check_branch
      %21 = sbr.rel (0) target = $region9
    $region8: #{coattention_forward.7} parent=1 // pred_region
      _
    $region9: #{coattention_forward.7} parent=1 // pred_fallthru
      _
    // Predicated region
    $region10: #{coattention_forward.7} parent=1 // pred_check
      _
    $region11: #{coattention_forward.7} parent=1 // pred_check_branch
      %23 = sbr.rel (0) target = $region13
    $region12: #{coattention_forward.7} parent=1 // pred_region
      _
    $region13: #{coattention_forward.7} parent=1 // pred_fallthru
      _
    // Predicated region
    $region14: #{coattention_forward.7} parent=1 // pred_check
      _
    $region15: #{coattention_forward.7} parent=1 // pred_check_branch
      %25 = sbr.rel (0) target = $region17
    $region16: #{coattention_forward.7} parent=1 // pred_region
      _
    $region17: #{coattention_forward.7} parent=1 // pred_fallthru
      _
    // Predicated region
    $region18: #{coattention_forward.7} parent=1 // pred_check
      _
    $region19: #{coattention_forward.7} parent=1 // pred_check_branch
      %27 = sbr.rel (0) target = $region21
    $region20: #{coattention_forward.7} parent=1 // pred_region
      _
    $region21: #{coattention_forward.7} parent=1 // pred_fallthru
      _
    // Predicated region
    $region22: #{coattention_forward.7} parent=1 // pred_check
      _
    $region23: #{coattention_forward.7} parent=1 // pred_check_branch
      %29 = sbr.rel (0) target = $region25
    $region24: #{coattention_forward.7} parent=1 // pred_region
      _
    $region25: #{coattention_forward.7} parent=1 // pred_fallthru
      _
    // Predicated region
    $region26: #{coattention_forward.7} parent=1 // pred_check
      _
    $region27: #{coattention_forward.7} parent=1 // pred_check_branch
      %31 = sbr.rel (0) target = $region29
    $region28: #{coattention_forward.7} parent=1 // pred_region
      _
    $region29: #{coattention_forward.7} parent=1 // pred_fallthru
      _
    // Predicated region
    $region30: #{coattention_forward.7} parent=1 // pred_check
      _
    $region31: #{coattention_forward.7} parent=1 // pred_check_branch
      %33 = sbr.rel (0) target = $region33
    $region32: #{coattention_forward.7} parent=1 // pred_region
      _
    $region33: #{coattention_forward.7} parent=1 // pred_fallthru
      _
    // Predicated region
    $region34: #{coattention_forward.7} parent=1 // pred_check
      _
    $region35: #{coattention_forward.7} parent=1 // pred_check_branch
      %35 = sbr.rel (0) target = $region37
    $region36: #{coattention_forward.7} parent=1 // pred_region
      _
    $region37: #{coattention_forward.7} parent=1 // pred_fallthru
      _
    // Predicated region
    $region38: #{coattention_forward.7} parent=1 // pred_check
      _
    $region39: #{coattention_forward.7} parent=1 // pred_check_branch
      %37 = sbr.rel (0) target = $region41
    $region40: #{coattention_forward.7} parent=1 // pred_region
      _
    $region41: #{coattention_forward.7} parent=1 // pred_fallthru
      _
    // Predicated region
    $region42: #{coattention_forward.7} parent=1 // pred_check
      _
    $region43: #{coattention_forward.7} parent=1 // pred_check_branch
      %39 = sbr.rel (0) target = $region45
    $region44: #{coattention_forward.7} parent=1 // pred_region
      _
    $region45: #{coattention_forward.7} parent=1 // pred_fallthru
      _
    // Predicated region
    $region46: #{coattention_forward.7} parent=1 // pred_check
      _
    $region47: #{coattention_forward.7} parent=1 // pred_check_branch
      %41 = sbr.rel (0) target = $region49
    $region48: #{coattention_forward.7} parent=1 // pred_region
      _
    $region49: #{coattention_forward.7} parent=1 // pred_fallthru
      _
    %v42 = vld [vmem:[%s1] sm:$0x3]
    %v43 = vld [vmem:[%s0] sm:$0x3]
    %v44 = vadd.f32 %v42, %v43
    %s45 = scalar_lea.vmem %s1, 2
    %v46 = vld [vmem:[%s45] sm:$0x3]
    %s47 = scalar_lea.vmem %s0, 2
    %v48 = vld [vmem:[%s47] sm:$0x3]
    %v49 = vadd.f32 %v46, %v48
    %s50 = scalar_lea.vmem %s1, 4
    %v51 = vld [vmem:[%s50] sm:$0x3]
    %s52 = scalar_lea.vmem %s0, 4
    %v53 = vld [vmem:[%s52] sm:$0x3]
    %v54 = vadd.f32 %v51, %v53
    %v55 = vld [vmem:[%s2] sm:$0xff]
    %v56 = vld [vmem:[%s2 + $0x8] sm:$0xff]
    %v57 = vld [vmem:[%s2 + $0x10] sm:$0xff]
    %v58 = vld [vmem:[%s2 + $0x18] sm:$0xff]
    %v59 = vld [vmem:[%s2 + $0x20] sm:$0xff]
    %v60 = vld [vmem:[%s2 + $0x28] sm:$0xff]
    %v61 = vld [vmem:[%s2 + $0x30] sm:$0xff]
    %v62 = vld [vmem:[%s2 + $0x38] sm:$0xff]
    %v63 = vld [vmem:[%s2 + $0x40] sm:$0xff]
    %v64 = vld [vmem:[%s2 + $0x48] sm:$0xff]
    %v65 = vld [vmem:[%s2 + $0x50] sm:$0xff]
    %v66 = vld [vmem:[%s2 + $0x58] sm:$0xff]
    %v67 = vld [vmem:[%s2 + $0x60] sm:$0xff]
    %v68 = vld [vmem:[%s2 + $0x68] sm:$0xff]
    %v69 = vld [vmem:[%s2 + $0x70] sm:$0xff]
    %v70 = vld [vmem:[%s2 + $0x78] sm:$0xff]
    %v71 = vld [vmem:[%s3] sm:$0x1]
    %v73 = vlaneseq
    %v74 = vshrl.u32 %v73, 7
    %v75 = vsub.s32 0, %v74
    %v76 = vrot.slane %v71, %v75
    %78 = vmatprep.subr.mxu0 0.0
    %79 = vmatpush1.msra.mxu0 %v55
    %80 = vmatprep.subr.mxu0 0.0
    %81 = vmatpush1.msra.mxu0 %v56
    %82 = vmatprep.subr.mxu0 0.0
    %83 = vmatpush1.msra.mxu0 %v57
    %84 = vmatprep.subr.mxu0 0.0
    %85 = vmatpush1.msra.mxu0 %v58
    %86 = vmatprep.subr.mxu0 0.0
    %87 = vmatpush1.msra.mxu0 %v59
    %88 = vmatprep.subr.mxu0 0.0
    %89 = vmatpush1.msra.mxu0 %v60
    %90 = vmatprep.subr.mxu0 0.0
    %91 = vmatpush1.msra.mxu0 %v61
    %92 = vmatprep.subr.mxu0 0.0
    %93 = vmatpush1.msra.mxu0 %v62
    %94 = vmatprep.subr.mxu0 0.0
    %95 = vmatpush1.msra.mxu0 %v63
    %96 = vmatprep.subr.mxu0 0.0
    %97 = vmatpush1.msra.mxu0 %v64
    %98 = vmatprep.subr.mxu0 0.0
    %99 = vmatpush1.msra.mxu0 %v65
    %100 = vmatprep.subr.mxu0 0.0
    %101 = vmatpush1.msra.mxu0 %v66
    %102 = vmatprep.subr.mxu0 0.0
    %103 = vmatpush1.msra.mxu0 %v67
    %104 = vmatprep.subr.mxu0 0.0
    %105 = vmatpush1.msra.mxu0 %v68
    %106 = vmatprep.subr.mxu0 0.0
    %107 = vmatpush1.msra.mxu0 %v69
    %108 = vmatprep.subr.mxu0 0.0
    %109 = vmatpush1.msra.mxu0 %v70
    %110 = vmatprep.subr.mxu0 0.0
    %111 = vmatpush1.msra.mxu0 0.0
    %112 = vmatprep.subr.mxu0 0.0
    %113 = vmatpush1.msra.mxu0 0.0
    %114 = vmatprep.subr.mxu0 0.0
    %115 = vmatpush1.msra.mxu0 0.0
    %116 = vmatprep.subr.mxu0 0.0
    %117 = vmatpush1.msra.mxu0 0.0
    %118 = vmatprep.subr.mxu0 0.0
    %119 = vmatpush1.msra.mxu0 0.0
    %120 = vmatprep.subr.mxu0 0.0
    %121 = vmatpush1.msra.mxu0 0.0
    %122 = vmatprep.subr.mxu0 0.0
    %123 = vmatpush1.msra.mxu0 0.0
    %124 = vmatprep.subr.mxu0 0.0
    %125 = vmatpush1.msra.mxu0 0.0
    %126 = vmatprep.subr.mxu0 0.0
    %127 = vmatpush1.msra.mxu0 0.0
    %128 = vmatprep.subr.mxu0 0.0
    %129 = vmatpush1.msra.mxu0 0.0
    %130 = vmatprep.subr.mxu0 0.0
    %131 = vmatpush1.msra.mxu0 0.0
    %132 = vmatprep.subr.mxu0 0.0
    %133 = vmatpush1.msra.mxu0 0.0
    %134 = vmatprep.subr.mxu0 0.0
    %135 = vmatpush1.msra.mxu0 0.0
    %136 = vmatprep.subr.mxu0 0.0
    %137 = vmatpush1.msra.mxu0 0.0
    %138 = vmatprep.subr.mxu0 0.0
    %139 = vmatpush1.msra.mxu0 0.0
    %140 = vmatprep.subr.mxu0 0.0
    %141 = vmatpush1.msra.mxu0 0.0
    %142 = vmatprep.mubr.f32.mxu0 0.0
    %143 = vmatmul.mubr.f32.gmra.mrb[0].mxu0 %v44
    %v144 = vpop.f32.mrb[0].mxu0
    %v145 = vadd.f32 %v76, %v144
    %v146 = vpop.f32.mrb[0].mxu0
    %147 = vdwg.mxu0
    %v148 = vtanh.pop %v145
    %v149 = vld [vmem:[%s4] sm:$0xff]
    %v150 = vld [vmem:[%s4 + $0x8] sm:$0xff]
    %v151 = vld [vmem:[%s4 + $0x10] sm:$0xff]
    %v152 = vld [vmem:[%s4 + $0x18] sm:$0xff]
    %v153 = vld [vmem:[%s4 + $0x20] sm:$0xff]
    %v154 = vld [vmem:[%s4 + $0x28] sm:$0xff]
    %v155 = vld [vmem:[%s4 + $0x30] sm:$0xff]
    %v156 = vld [vmem:[%s4 + $0x38] sm:$0xff]
    %v157 = vld [vmem:[%s4 + $0x40] sm:$0xff]
    %v158 = vld [vmem:[%s4 + $0x48] sm:$0xff]
    %v159 = vld [vmem:[%s4 + $0x50] sm:$0xff]
    %v160 = vld [vmem:[%s4 + $0x58] sm:$0xff]
    %v161 = vld [vmem:[%s4 + $0x60] sm:$0xff]
    %v162 = vld [vmem:[%s4 + $0x68] sm:$0xff]
    %v163 = vld [vmem:[%s4 + $0x70] sm:$0xff]
    %v164 = vld [vmem:[%s4 + $0x78] sm:$0xff]
    %v165 = vld [vmem:[%s5] sm:$0xff]
    %v166 = vld [vmem:[%s5 + $0x8] sm:$0xff]
    %v167 = vld [vmem:[%s5 + $0x10] sm:$0xff]
    %v168 = vld [vmem:[%s5 + $0x18] sm:$0xff]
    %v169 = vld [vmem:[%s5 + $0x20] sm:$0xff]
    %v170 = vld [vmem:[%s5 + $0x28] sm:$0xff]
    %v171 = vld [vmem:[%s5 + $0x30] sm:$0xff]
    %v172 = vld [vmem:[%s5 + $0x38] sm:$0xff]
    %v173 = vld [vmem:[%s5 + $0x40] sm:$0xff]
    %v174 = vld [vmem:[%s5 + $0x48] sm:$0xff]
    %v175 = vld [vmem:[%s5 + $0x50] sm:$0xff]
    %v176 = vld [vmem:[%s5 + $0x58] sm:$0xff]
    %v177 = vld [vmem:[%s5 + $0x60] sm:$0xff]
    %v178 = vld [vmem:[%s5 + $0x68] sm:$0xff]
    %v179 = vld [vmem:[%s5 + $0x70] sm:$0xff]
    %v180 = vld [vmem:[%s5 + $0x78] sm:$0xff]
    %181 = vmatprep.subr.mxu0 0.0
    %182 = vmatpush1.msra.mxu0 %v165
    %183 = vmatprep.subr.mxu0 0.0
    %184 = vmatpush1.msra.mxu0 %v166
    %185 = vmatprep.subr.mxu0 0.0
    %186 = vmatpush1.msra.mxu0 %v167
    %187 = vmatprep.subr.mxu0 0.0
    %188 = vmatpush1.msra.mxu0 %v168
    %189 = vmatprep.subr.mxu0 0.0
    %190 = vmatpush1.msra.mxu0 %v169
    %191 = vmatprep.subr.mxu0 0.0
    %192 = vmatpush1.msra.mxu0 %v170
    %193 = vmatprep.subr.mxu0 0.0
    %194 = vmatpush1.msra.mxu0 %v171
    %195 = vmatprep.subr.mxu0 0.0
    %196 = vmatpush1.msra.mxu0 %v172
    %197 = vmatprep.subr.mxu0 0.0
    %198 = vmatpush1.msra.mxu0 %v173
    %199 = vmatprep.subr.mxu0 0.0
    %200 = vmatpush1.msra.mxu0 %v174
    %201 = vmatprep.subr.mxu0 0.0
    %202 = vmatpush1.msra.mxu0 %v175
    %203 = vmatprep.subr.mxu0 0.0
    %204 = vmatpush1.msra.mxu0 %v176
    %205 = vmatprep.subr.mxu0 0.0
    %206 = vmatpush1.msra.mxu0 %v177
    %207 = vmatprep.subr.mxu0 0.0
    %208 = vmatpush1.msra.mxu0 %v178
    %209 = vmatprep.subr.mxu0 0.0
    %210 = vmatpush1.msra.mxu0 %v179
    %211 = vmatprep.subr.mxu0 0.0
    %212 = vmatpush1.msra.mxu0 %v180
    %213 = vmatprep.subr.mxu0 0.0
    %214 = vmatpush1.msra.mxu0 0.0
    %215 = vmatprep.subr.mxu0 0.0
    %216 = vmatpush1.msra.mxu0 0.0
    %217 = vmatprep.subr.mxu0 0.0
    %218 = vmatpush1.msra.mxu0 0.0
    %219 = vmatprep.subr.mxu0 0.0
    %220 = vmatpush1.msra.mxu0 0.0
    %221 = vmatprep.subr.mxu0 0.0
    %222 = vmatpush1.msra.mxu0 0.0
    %223 = vmatprep.subr.mxu0 0.0
    %224 = vmatpush1.msra.mxu0 0.0
    %225 = vmatprep.subr.mxu0 0.0
    %226 = vmatpush1.msra.mxu0 0.0
    %227 = vmatprep.subr.mxu0 0.0
    %228 = vmatpush1.msra.mxu0 0.0
    %229 = vmatprep.subr.mxu0 0.0
    %230 = vmatpush1.msra.mxu0 0.0
    %231 = vmatprep.subr.mxu0 0.0
    %232 = vmatpush1.msra.mxu0 0.0
    %233 = vmatprep.subr.mxu0 0.0
    %234 = vmatpush1.msra.mxu0 0.0
    %235 = vmatprep.subr.mxu0 0.0
    %236 = vmatpush1.msra.mxu0 0.0
    %237 = vmatprep.subr.mxu0 0.0
    %238 = vmatpush1.msra.mxu0 0.0
    %239 = vmatprep.subr.mxu0 0.0
    %240 = vmatpush1.msra.mxu0 0.0
    %241 = vmatprep.subr.mxu0 0.0
    %242 = vmatpush1.msra.mxu0 0.0
    %243 = vmatprep.subr.mxu0 0.0
    %244 = vmatpush1.msra.mxu0 0.0
    %245 = vmatprep.mubr.f32.mxu0 0.0
    %246 = vmatmul.mubr.f32.gmra.mrb[0].mxu0 %v148
    %v247 = vpop.f32.mrb[0].mxu0
    %v248 = vadd.f32 0.0, %v247
    %v249 = vpop.f32.mrb[0].mxu0
    %250 = vdwg.mxu0
    %251 = vmatprep.subr.mxu0 0.0
    %252 = vmatpush1.msra.mxu0 %v149
    %253 = vmatprep.subr.mxu0 0.0
    %254 = vmatpush1.msra.mxu0 %v150
    %255 = vmatprep.subr.mxu0 0.0
    %256 = vmatpush1.msra.mxu0 %v151
    %257 = vmatprep.subr.mxu0 0.0
    %258 = vmatpush1.msra.mxu0 %v152
    %259 = vmatprep.subr.mxu0 0.0
    %260 = vmatpush1.msra.mxu0 %v153
    %261 = vmatprep.subr.mxu0 0.0
    %262 = vmatpush1.msra.mxu0 %v154
    %263 = vmatprep.subr.mxu0 0.0
    %264 = vmatpush1.msra.mxu0 %v155
    %265 = vmatprep.subr.mxu0 0.0
    %266 = vmatpush1.msra.mxu0 %v156
    %267 = vmatprep.subr.mxu0 0.0
    %268 = vmatpush1.msra.mxu0 %v157
    %269 = vmatprep.subr.mxu0 0.0
    %270 = vmatpush1.msra.mxu0 %v158
    %271 = vmatprep.subr.mxu0 0.0
    %272 = vmatpush1.msra.mxu0 %v159
    %273 = vmatprep.subr.mxu0 0.0
    %274 = vmatpush1.msra.mxu0 %v160
    %275 = vmatprep.subr.mxu0 0.0
    %276 = vmatpush1.msra.mxu0 %v161
    %277 = vmatprep.subr.mxu0 0.0
    %278 = vmatpush1.msra.mxu0 %v162
    %279 = vmatprep.subr.mxu0 0.0
    %280 = vmatpush1.msra.mxu0 %v163
    %281 = vmatprep.subr.mxu0 0.0
    %282 = vmatpush1.msra.mxu0 %v164
    %283 = vmatprep.subr.mxu0 0.0
    %284 = vmatpush1.msra.mxu0 0.0
    %285 = vmatprep.subr.mxu0 0.0
    %286 = vmatpush1.msra.mxu0 0.0
    %287 = vmatprep.subr.mxu0 0.0
    %288 = vmatpush1.msra.mxu0 0.0
    %289 = vmatprep.subr.mxu0 0.0
    %290 = vmatpush1.msra.mxu0 0.0
    %291 = vmatprep.subr.mxu0 0.0
    %292 = vmatpush1.msra.mxu0 0.0
    %293 = vmatprep.subr.mxu0 0.0
    %294 = vmatpush1.msra.mxu0 0.0
    %295 = vmatprep.subr.mxu0 0.0
    %296 = vmatpush1.msra.mxu0 0.0
    %297 = vmatprep.subr.mxu0 0.0
    %298 = vmatpush1.msra.mxu0 0.0
    %299 = vmatprep.subr.mxu0 0.0
    %300 = vmatpush1.msra.mxu0 0.0
    %301 = vmatprep.subr.mxu0 0.0
    %302 = vmatpush1.msra.mxu0 0.0
    %303 = vmatprep.subr.mxu0 0.0
    %304 = vmatpush1.msra.mxu0 0.0
    %305 = vmatprep.subr.mxu0 0.0
    %306 = vmatpush1.msra.mxu0 0.0
    %307 = vmatprep.subr.mxu0 0.0
    %308 = vmatpush1.msra.mxu0 0.0
    %309 = vmatprep.subr.mxu0 0.0
    %310 = vmatpush1.msra.mxu0 0.0
    %311 = vmatprep.subr.mxu0 0.0
    %312 = vmatpush1.msra.mxu0 0.0
    %313 = vmatprep.subr.mxu0 0.0
    %314 = vmatpush1.msra.mxu0 0.0
    %315 = vmatprep.mubr.f32.mxu0 0.0
    %316 = vmatmul.mubr.f32.gmra.mrb[0].mxu0 %v49
    %v317 = vpop.f32.mrb[0].mxu0
    %v318 = vadd.f32 %v248, %v317
    %v319 = vpop.f32.mrb[0].mxu0
    %320 = vdwg.mxu0
    %v321 = vld [vmem:[%s6] sm:$0x1]
    %v323 = vlaneseq
    %v324 = vshrl.u32 %v323, 7
    %v325 = vsub.s32 0, %v324
    %v326 = vrot.slane %v321, %v325
    %v328 = vadd.f32 %v318, %v326
    %v329 = vtanh.pop %v328
    %v330 = vld [vmem:[%s7] sm:$0xff]
    %v331 = vld [vmem:[%s7 + $0x8] sm:$0xff]
    %v332 = vld [vmem:[%s7 + $0x10] sm:$0xff]
    %v333 = vld [vmem:[%s7 + $0x18] sm:$0xff]
    %v334 = vld [vmem:[%s7 + $0x20] sm:$0xff]
    %v335 = vld [vmem:[%s7 + $0x28] sm:$0xff]
    %v336 = vld [vmem:[%s7 + $0x30] sm:$0xff]
    %v337 = vld [vmem:[%s7 + $0x38] sm:$0xff]
    %v338 = vld [vmem:[%s7 + $0x40] sm:$0xff]
    %v339 = vld [vmem:[%s7 + $0x48] sm:$0xff]
    %v340 = vld [vmem:[%s7 + $0x50] sm:$0xff]
    %v341 = vld [vmem:[%s7 + $0x58] sm:$0xff]
    %v342 = vld [vmem:[%s7 + $0x60] sm:$0xff]
    %v343 = vld [vmem:[%s7 + $0x68] sm:$0xff]
    %v344 = vld [vmem:[%s7 + $0x70] sm:$0xff]
    %v345 = vld [vmem:[%s7 + $0x78] sm:$0xff]
    %v346 = vld [vmem:[%s8] sm:$0xff]
    %v347 = vld [vmem:[%s8 + $0x8] sm:$0xff]
    %v348 = vld [vmem:[%s8 + $0x10] sm:$0xff]
    %v349 = vld [vmem:[%s8 + $0x18] sm:$0xff]
    %v350 = vld [vmem:[%s8 + $0x20] sm:$0xff]
    %v351 = vld [vmem:[%s8 + $0x28] sm:$0xff]
    %v352 = vld [vmem:[%s8 + $0x30] sm:$0xff]
    %v353 = vld [vmem:[%s8 + $0x38] sm:$0xff]
    %v354 = vld [vmem:[%s8 + $0x40] sm:$0xff]
    %v355 = vld [vmem:[%s8 + $0x48] sm:$0xff]
    %v356 = vld [vmem:[%s8 + $0x50] sm:$0xff]
    %v357 = vld [vmem:[%s8 + $0x58] sm:$0xff]
    %v358 = vld [vmem:[%s8 + $0x60] sm:$0xff]
    %v359 = vld [vmem:[%s8 + $0x68] sm:$0xff]
    %v360 = vld [vmem:[%s8 + $0x70] sm:$0xff]
    %v361 = vld [vmem:[%s8 + $0x78] sm:$0xff]
    %362 = vmatprep.subr.mxu0 0.0
    %363 = vmatpush1.msra.mxu0 %v346
    %364 = vmatprep.subr.mxu0 0.0
    %365 = vmatpush1.msra.mxu0 %v347
    %366 = vmatprep.subr.mxu0 0.0
    %367 = vmatpush1.msra.mxu0 %v348
    %368 = vmatprep.subr.mxu0 0.0
    %369 = vmatpush1.msra.mxu0 %v349
    %370 = vmatprep.subr.mxu0 0.0
    %371 = vmatpush1.msra.mxu0 %v350
    %372 = vmatprep.subr.mxu0 0.0
    %373 = vmatpush1.msra.mxu0 %v351
    %374 = vmatprep.subr.mxu0 0.0
    %375 = vmatpush1.msra.mxu0 %v352
    %376 = vmatprep.subr.mxu0 0.0
    %377 = vmatpush1.msra.mxu0 %v353
    %378 = vmatprep.subr.mxu0 0.0
    %379 = vmatpush1.msra.mxu0 %v354
    %380 = vmatprep.subr.mxu0 0.0
    %381 = vmatpush1.msra.mxu0 %v355
    %382 = vmatprep.subr.mxu0 0.0
    %383 = vmatpush1.msra.mxu0 %v356
    %384 = vmatprep.subr.mxu0 0.0
    %385 = vmatpush1.msra.mxu0 %v357
    %386 = vmatprep.subr.mxu0 0.0
    %387 = vmatpush1.msra.mxu0 %v358
    %388 = vmatprep.subr.mxu0 0.0
    %389 = vmatpush1.msra.mxu0 %v359
    %390 = vmatprep.subr.mxu0 0.0
    %391 = vmatpush1.msra.mxu0 %v360
    %392 = vmatprep.subr.mxu0 0.0
    %393 = vmatpush1.msra.mxu0 %v361
    %394 = vmatprep.subr.mxu0 0.0
    %395 = vmatpush1.msra.mxu0 0.0
    %396 = vmatprep.subr.mxu0 0.0
    %397 = vmatpush1.msra.mxu0 0.0
    %398 = vmatprep.subr.mxu0 0.0
    %399 = vmatpush1.msra.mxu0 0.0
    %400 = vmatprep.subr.mxu0 0.0
    %401 = vmatpush1.msra.mxu0 0.0
    %402 = vmatprep.subr.mxu0 0.0
    %403 = vmatpush1.msra.mxu0 0.0
    %404 = vmatprep.subr.mxu0 0.0
    %405 = vmatpush1.msra.mxu0 0.0
    %406 = vmatprep.subr.mxu0 0.0
    %407 = vmatpush1.msra.mxu0 0.0
    %408 = vmatprep.subr.mxu0 0.0
    %409 = vmatpush1.msra.mxu0 0.0
    %410 = vmatprep.subr.mxu0 0.0
    %411 = vmatpush1.msra.mxu0 0.0
    %412 = vmatprep.subr.mxu0 0.0
    %413 = vmatpush1.msra.mxu0 0.0
    %414 = vmatprep.subr.mxu0 0.0
    %415 = vmatpush1.msra.mxu0 0.0
    %416 = vmatprep.subr.mxu0 0.0
    %417 = vmatpush1.msra.mxu0 0.0
    %418 = vmatprep.subr.mxu0 0.0
    %419 = vmatpush1.msra.mxu0 0.0
    %420 = vmatprep.subr.mxu0 0.0
    %421 = vmatpush1.msra.mxu0 0.0
    %422 = vmatprep.subr.mxu0 0.0
    %423 = vmatpush1.msra.mxu0 0.0
    %424 = vmatprep.subr.mxu0 0.0
    %425 = vmatpush1.msra.mxu0 0.0
    %426 = vmatprep.mubr.f32.mxu0 0.0
    %427 = vmatmul.mubr.f32.gmra.mrb[0].mxu0 %v329
    %v428 = vpop.f32.mrb[0].mxu0
    %v429 = vadd.f32 0.0, %v428
    %v430 = vpop.f32.mrb[0].mxu0
    %431 = vdwg.mxu0
    %432 = vmatprep.subr.mxu0 0.0
    %433 = vmatpush1.msra.mxu0 %v330
    %434 = vmatprep.subr.mxu0 0.0
    %435 = vmatpush1.msra.mxu0 %v331
    %436 = vmatprep.subr.mxu0 0.0
    %437 = vmatpush1.msra.mxu0 %v332
    %438 = vmatprep.subr.mxu0 0.0
    %439 = vmatpush1.msra.mxu0 %v333
    %440 = vmatprep.subr.mxu0 0.0
    %441 = vmatpush1.msra.mxu0 %v334
    %442 = vmatprep.subr.mxu0 0.0
    %443 = vmatpush1.msra.mxu0 %v335
    %444 = vmatprep.subr.mxu0 0.0
    %445 = vmatpush1.msra.mxu0 %v336
    %446 = vmatprep.subr.mxu0 0.0
    %447 = vmatpush1.msra.mxu0 %v337
    %448 = vmatprep.subr.mxu0 0.0
    %449 = vmatpush1.msra.mxu0 %v338
    %450 = vmatprep.subr.mxu0 0.0
    %451 = vmatpush1.msra.mxu0 %v339
    %452 = vmatprep.subr.mxu0 0.0
    %453 = vmatpush1.msra.mxu0 %v340
    %454 = vmatprep.subr.mxu0 0.0
    %455 = vmatpush1.msra.mxu0 %v341
    %456 = vmatprep.subr.mxu0 0.0
    %457 = vmatpush1.msra.mxu0 %v342
    %458 = vmatprep.subr.mxu0 0.0
    %459 = vmatpush1.msra.mxu0 %v343
    %460 = vmatprep.subr.mxu0 0.0
    %461 = vmatpush1.msra.mxu0 %v344
    %462 = vmatprep.subr.mxu0 0.0
    %463 = vmatpush1.msra.mxu0 %v345
    %464 = vmatprep.subr.mxu0 0.0
    %465 = vmatpush1.msra.mxu0 0.0
    %466 = vmatprep.subr.mxu0 0.0
    %467 = vmatpush1.msra.mxu0 0.0
    %468 = vmatprep.subr.mxu0 0.0
    %469 = vmatpush1.msra.mxu0 0.0
    %470 = vmatprep.subr.mxu0 0.0
    %471 = vmatpush1.msra.mxu0 0.0
    %472 = vmatprep.subr.mxu0 0.0
    %473 = vmatpush1.msra.mxu0 0.0
    %474 = vmatprep.subr.mxu0 0.0
    %475 = vmatpush1.msra.mxu0 0.0
    %476 = vmatprep.subr.mxu0 0.0
    %477 = vmatpush1.msra.mxu0 0.0
    %478 = vmatprep.subr.mxu0 0.0
    %479 = vmatpush1.msra.mxu0 0.0
    %480 = vmatprep.subr.mxu0 0.0
    %481 = vmatpush1.msra.mxu0 0.0
    %482 = vmatprep.subr.mxu0 0.0
    %483 = vmatpush1.msra.mxu0 0.0
    %484 = vmatprep.subr.mxu0 0.0
    %485 = vmatpush1.msra.mxu0 0.0
    %486 = vmatprep.subr.mxu0 0.0
    %487 = vmatpush1.msra.mxu0 0.0
    %488 = vmatprep.subr.mxu0 0.0
    %489 = vmatpush1.msra.mxu0 0.0
    %490 = vmatprep.subr.mxu0 0.0
    %491 = vmatpush1.msra.mxu0 0.0
    %492 = vmatprep.subr.mxu0 0.0
    %493 = vmatpush1.msra.mxu0 0.0
    %494 = vmatprep.subr.mxu0 0.0
    %495 = vmatpush1.msra.mxu0 0.0
    %496 = vmatprep.mubr.f32.mxu0 0.0
    %497 = vmatmul.mubr.f32.gmra.mrb[0].mxu0 %v54
    %v498 = vpop.f32.mrb[0].mxu0
    %v499 = vadd.f32 %v429, %v498
    %v500 = vpop.f32.mrb[0].mxu0
    %501 = vdwg.mxu0
    %v502 = vld [vmem:[%s9] sm:$0x1]
    %v504 = vlaneseq
    %v505 = vshrl.u32 %v504, 7
    %v506 = vsub.s32 0, %v505
    %v507 = vrot.slane %v502, %v506
    %v509 = vadd.f32 %v499, %v507
    %v510 = vtanh.pop %v509
    %v511 = vld [vmem:[%s10] sm:$0xff]
    %v512 = vld [vmem:[%s10 + $0x8] sm:$0xff]
    %v513 = vld [vmem:[%s10 + $0x10] sm:$0xff]
    %v514 = vld [vmem:[%s10 + $0x18] sm:$0xff]
    %v515 = vld [vmem:[%s10 + $0x20] sm:$0xff]
    %v516 = vld [vmem:[%s10 + $0x28] sm:$0xff]
    %v517 = vld [vmem:[%s10 + $0x30] sm:$0xff]
    %v518 = vld [vmem:[%s10 + $0x38] sm:$0xff]
    %v519 = vld [vmem:[%s10 + $0x40] sm:$0xff]
    %v520 = vld [vmem:[%s10 + $0x48] sm:$0xff]
    %v521 = vld [vmem:[%s10 + $0x50] sm:$0xff]
    %v522 = vld [vmem:[%s10 + $0x58] sm:$0xff]
    %v523 = vld [vmem:[%s10 + $0x60] sm:$0xff]
    %v524 = vld [vmem:[%s10 + $0x68] sm:$0xff]
    %v525 = vld [vmem:[%s10 + $0x70] sm:$0xff]
    %v526 = vld [vmem:[%s10 + $0x78] sm:$0xff]
    %v527 = vld [vmem:[%s11] sm:$0x1]
    %v529 = vlaneseq
    %v530 = vshrl.u32 %v529, 7
    %v531 = vsub.s32 0, %v530
    %v532 = vrot.slane %v527, %v531
    %534 = vmatprep.subr.mxu0 0.0
    %535 = vmatpush1.msra.mxu0 %v511
    %536 = vmatprep.subr.mxu0 0.0
    %537 = vmatpush1.msra.mxu0 %v512
    %538 = vmatprep.subr.mxu0 0.0
    %539 = vmatpush1.msra.mxu0 %v513
    %540 = vmatprep.subr.mxu0 0.0
    %541 = vmatpush1.msra.mxu0 %v514
    %542 = vmatprep.subr.mxu0 0.0
    %543 = vmatpush1.msra.mxu0 %v515
    %544 = vmatprep.subr.mxu0 0.0
    %545 = vmatpush1.msra.mxu0 %v516
    %546 = vmatprep.subr.mxu0 0.0
    %547 = vmatpush1.msra.mxu0 %v517
    %548 = vmatprep.subr.mxu0 0.0
    %549 = vmatpush1.msra.mxu0 %v518
    %550 = vmatprep.subr.mxu0 0.0
    %551 = vmatpush1.msra.mxu0 %v519
    %552 = vmatprep.subr.mxu0 0.0
    %553 = vmatpush1.msra.mxu0 %v520
    %554 = vmatprep.subr.mxu0 0.0
    %555 = vmatpush1.msra.mxu0 %v521
    %556 = vmatprep.subr.mxu0 0.0
    %557 = vmatpush1.msra.mxu0 %v522
    %558 = vmatprep.subr.mxu0 0.0
    %559 = vmatpush1.msra.mxu0 %v523
    %560 = vmatprep.subr.mxu0 0.0
    %561 = vmatpush1.msra.mxu0 %v524
    %562 = vmatprep.subr.mxu0 0.0
    %563 = vmatpush1.msra.mxu0 %v525
    %564 = vmatprep.subr.mxu0 0.0
    %565 = vmatpush1.msra.mxu0 %v526
    %566 = vmatprep.subr.mxu0 0.0
    %567 = vmatpush1.msra.mxu0 0.0
    %568 = vmatprep.subr.mxu0 0.0
    %569 = vmatpush1.msra.mxu0 0.0
    %570 = vmatprep.subr.mxu0 0.0
    %571 = vmatpush1.msra.mxu0 0.0
    %572 = vmatprep.subr.mxu0 0.0
    %573 = vmatpush1.msra.mxu0 0.0
    %574 = vmatprep.subr.mxu0 0.0
    %575 = vmatpush1.msra.mxu0 0.0
    %576 = vmatprep.subr.mxu0 0.0
    %577 = vmatpush1.msra.mxu0 0.0
    %578 = vmatprep.subr.mxu0 0.0
    %579 = vmatpush1.msra.mxu0 0.0
    %580 = vmatprep.subr.mxu0 0.0
    %581 = vmatpush1.msra.mxu0 0.0
    %582 = vmatprep.subr.mxu0 0.0
    %583 = vmatpush1.msra.mxu0 0.0
    %584 = vmatprep.subr.mxu0 0.0
    %585 = vmatpush1.msra.mxu0 0.0
    %586 = vmatprep.subr.mxu0 0.0
    %587 = vmatpush1.msra.mxu0 0.0
    %588 = vmatprep.subr.mxu0 0.0
    %589 = vmatpush1.msra.mxu0 0.0
    %590 = vmatprep.subr.mxu0 0.0
    %591 = vmatpush1.msra.mxu0 0.0
    %592 = vmatprep.subr.mxu0 0.0
    %593 = vmatpush1.msra.mxu0 0.0
    %594 = vmatprep.subr.mxu0 0.0
    %595 = vmatpush1.msra.mxu0 0.0
    %596 = vmatprep.subr.mxu0 0.0
    %597 = vmatpush1.msra.mxu0 0.0
    %598 = vmatprep.mubr.f32.mxu0 0.0
    %599 = vmatmul.mubr.f32.gmra.mrb[0].mxu0 %v510
    %v600 = vpop.f32.mrb[0].mxu0
    %v601 = vadd.f32 %v532, %v600
    %v602 = vpop.f32.mrb[0].mxu0
    %603 = vdwg.mxu0
    %604 = vst [vmem:[#allocation2] sm:$0x3] %v601
    // Predicated region
    $region50: #{coattention_forward.7} parent=1 // pred_check
      _
    $region51: #{coattention_forward.7} parent=1 // pred_check_branch
      %606 = sbr.rel (0) target = $region53
    $region52: #{coattention_forward.7} parent=1 // pred_region
      %s608 = ssub.s32 32, 32
      %609 = vsyncadd [#allocation3], %s608
      %s611 = sshll.u32 [#allocation2], 4
      %s612 = int_to_ptr.vmem [resolvable:$true] %s611
      %614 = dma.vmem_to_hbm [thread:$0]  %s612, 32, %s12, [#allocation3]
    $region53: #{coattention_forward.7} parent=1 // pred_fallthru
      _
    // Predicated region
    $region54: #{coattention_forward.7} parent=1 // pred_check
      _
    $region55: #{coattention_forward.7} parent=1 // pred_check_branch
      %616 = sbr.rel (0) target = $region57
    $region56: #{coattention_forward.7} parent=1 // pred_region
      %617 = dma.done [#allocation3], 32
    $region57: #{coattention_forward.7} parent=1 // pred_fallthru
      _
    %618 = vsyncpa [#allocation3], 1

// kernel: coattention_forward.6
$region0: #{coattention_forward.6}
  #allocation0 [shape = 'u32[]', space=smem, size = 0x4, offset = 0x4, fixed_abs, tag = 'smem constant byte address 0x4 - core index']
  #allocation1 [shape = 'u32[144,128]{1,0:T(1,128)}', space=vmem, size = 0x12000, scoped, tag = 'internal scratch']
  %s0 = inlined_call_operand.vmem [shape: f32[3,16,128], index: 0, kind: input, shape index: {}]
  %s1 = inlined_call_operand.vmem [shape: f32[32,128], index: 1, kind: input, shape index: {}]
  %s2 = inlined_call_operand.vmem [shape: f32[128,512], index: 2, kind: input, shape index: {}]
  %s3 = inlined_call_operand.vmem [shape: f32[128,512], index: 3, kind: input, shape index: {}]
  %s4 = inlined_call_operand.vmem [shape: f32[1,512], index: 4, kind: input, shape index: {}]
  %s5 = inlined_call_operand.vmem [shape: f32[1,512], index: 5, kind: input, shape index: {}]
  %s6 = inlined_call_operand.vmem [shape: f32[1,512], index: 6, kind: input, shape index: {}]
  %s7 = inlined_call_operand.vmem [shape: f32[128,512], index: 7, kind: input, shape index: {}]
  %s8 = inlined_call_operand.hbm [shape: f32[128,512], index: 8, kind: input, shape index: {}]
  %s9 = inlined_call_operand.vmem [shape: f32[1,512], index: 9, kind: input, shape index: {}]
  %s10 = inlined_call_operand.vmem [shape: f32[1,512], index: 10, kind: input, shape index: {}]
  %s11 = inlined_call_operand.vmem [shape: f32[3,2,128], index: 11, kind: output, shape index: {0}]
  %s12 = inlined_call_operand.vmem [shape: f32[3,2,128], index: 12, kind: output, shape index: {1}]
  %13 = xla_tuple %s11, %s12
  %s14 = sld [smem:[#allocation0]]
  $region89: #{coattention_forward.6} parent=0
    _
  %s16 = ssub.s32 1, %s14
  %s17 = scalar_select 0, %s16, %s14
  $region1: #{coattention_forward.6} parent=0
    #allocation2 [shape = 'u8[262144]{0}', space=vmem, size = 0x40000, scoped, tag = 'input window, operand 8, single buffered']
    #allocation3 [shape = 's32[2]{0}', space=sflag, size = 0x8, scoped, tag = 'scoped memory for coattention_forward.6']
    %18 = vsyncpa [#allocation3], 0
    loop: start=0, step=1, limit=5
    $region2: #{coattention_forward.6} parent=1 // loop_pre_header
      _
    $region3: #{coattention_forward.6} parent=1 // loop_header
      %s20 = sphi 0, %s24
      %p21 = scmp.ge.s32.totalorder %s20, 5
      %s30 = sphi 0, %s32
      %s33 = sphi 0, %s30
      %s34 = sphi 0, %s33
      %s50 = sphi 0, %s34
      %s54 = sphi 0, %s54
      %s56 = sphi 0, %s54
      %s57 = sphi 0, %s56
      %s71 = sphi 0, %s57
      %s75 = sphi 0, %s75
      %s77 = sphi 0, %s75
      %s78 = sphi 0, %s77
      %s92 = sphi 0, %s78
      %s96 = sphi 0, %s96
      %s98 = sphi 0, %s96
      %s99 = sphi 0, %s98
      %s113 = sphi 0, %s99
      %s117 = sphi 0, %s117
      %s119 = sphi 0, %s117
      %s120 = sphi 0, %s119
      %s134 = sphi 0, %s120
      %s138 = sphi 0, %s138
      %s140 = sphi 0, %s138
      %s141 = sphi 0, %s140
      %s155 = sphi 0, %s141
      %s159 = sphi 0, %s159
      %s161 = sphi 0, %s159
      %s162 = sphi 0, %s161
      %s176 = sphi 0, %s162
      %s180 = sphi 0, %s180
      %s182 = sphi 0, %s180
      %s183 = sphi 0, %s182
      %s197 = sphi 0, %s183
      %s201 = sphi 0, %s201
      %s203 = sphi 0, %s201
      %s204 = sphi 0, %s203
      %s218 = sphi 0, %s204
      %s222 = sphi 0, %s222
      %s224 = sphi 0, %s222
      %s225 = sphi 0, %s224
      %s239 = sphi 0, %s225
      %s243 = sphi 0, %s243
      %s245 = sphi 0, %s243
      %s246 = sphi 0, %s245
      %s260 = sphi 0, %s246
      %s266 = sphi 0, %s268
      %s269 = sphi 0, %s266
      %s270 = sphi 0, %s269
      %s286 = sphi 0, %s270
      %s292 = sphi 0, %s294
      %s295 = sphi 0, %s292
      %s296 = sphi 0, %s295
      %s312 = sphi 0, %s296
    $region4: #{coattention_forward.6} parent=1 // loop_header_branch
      %23 = sbr.rel (%p21) target = $region8
    $region5: #{coattention_forward.6} parent=1 // loop_body
      %s25 = ssub.s32 %s20, 1
      %s26 = ssub.s32 %s20, 2
      %s27 = sadd.s32 %s20, 1
      %s28 = ssub.s32 %s20, %s27
      %p29 = scmp.eq.s32.totalorder %s28, 0
      %s31 = sadd.s32 %s30, 1
      %s32 = scalar_select %p29, %s30, %s31
      %p35 = pneg %p29
      %p36 = scmp.eq.s32.totalorder %s20, 2
      %p37 = por %p35, %p36
      %p38 = scmp.ne.s32.totalorder %s30, %s33
      %p39 = scmp.eq.s32.totalorder %s20, 0
      %p40 = por %p38, %p39
      %p41 = scmp.ne.s32.totalorder %s30, %s33
      %p42 = scmp.eq.s32.totalorder %s25, 2
      %p43 = por %p41, %p42
      %p44 = scmp.ne.s32.totalorder %s33, %s34
      %p45 = scmp.eq.s32.totalorder %s25, 0
      %p46 = por %p44, %p45
      %p47 = scmp.ne.s32.totalorder %s33, %s34
      %p48 = scmp.eq.s32.totalorder %s26, 2
      %p49 = por %p47, %p48
      %p51 = scmp.ne.s32.totalorder %s34, %s50
      %p52 = scmp.eq.s32.totalorder %s26, 0
      %p53 = por %p51, %p52
      %s55 = sadd.s32 %s54, 1
      %p58 = scmp.eq.s32.totalorder %s20, 2
      %p59 = scmp.ne.s32.totalorder %s54, %s56
      %p60 = scmp.eq.s32.totalorder %s20, 0
      %p61 = por %p59, %p60
      %p62 = scmp.ne.s32.totalorder %s54, %s56
      %p63 = scmp.eq.s32.totalorder %s25, 2
      %p64 = por %p62, %p63
      %p65 = scmp.ne.s32.totalorder %s56, %s57
      %p66 = scmp.eq.s32.totalorder %s25, 0
      %p67 = por %p65, %p66
      %p68 = scmp.ne.s32.totalorder %s56, %s57
      %p69 = scmp.eq.s32.totalorder %s26, 2
      %p70 = por %p68, %p69
      %p72 = scmp.ne.s32.totalorder %s57, %s71
      %p73 = scmp.eq.s32.totalorder %s26, 0
      %p74 = por %p72, %p73
      %s76 = sadd.s32 %s75, 1
      %p79 = scmp.eq.s32.totalorder %s20, 2
      %p80 = scmp.ne.s32.totalorder %s75, %s77
      %p81 = scmp.eq.s32.totalorder %s20, 0
      %p82 = por %p80, %p81
      %p83 = scmp.ne.s32.totalorder %s75, %s77
      %p84 = scmp.eq.s32.totalorder %s25, 2
      %p85 = por %p83, %p84
      %p86 = scmp.ne.s32.totalorder %s77, %s78
      %p87 = scmp.eq.s32.totalorder %s25, 0
      %p88 = por %p86, %p87
      %p89 = scmp.ne.s32.totalorder %s77, %s78
      %p90 = scmp.eq.s32.totalorder %s26, 2
      %p91 = por %p89, %p90
      %p93 = scmp.ne.s32.totalorder %s78, %s92
      %p94 = scmp.eq.s32.totalorder %s26, 0
      %p95 = por %p93, %p94
      %s97 = sadd.s32 %s96, 1
      %p100 = scmp.eq.s32.totalorder %s20, 2
      %p101 = scmp.ne.s32.totalorder %s96, %s98
      %p102 = scmp.eq.s32.totalorder %s20, 0
      %p103 = por %p101, %p102
      %p104 = scmp.ne.s32.totalorder %s96, %s98
      %p105 = scmp.eq.s32.totalorder %s25, 2
      %p106 = por %p104, %p105
      %p107 = scmp.ne.s32.totalorder %s98, %s99
      %p108 = scmp.eq.s32.totalorder %s25, 0
      %p109 = por %p107, %p108
      %p110 = scmp.ne.s32.totalorder %s98, %s99
      %p111 = scmp.eq.s32.totalorder %s26, 2
      %p112 = por %p110, %p111
      %p114 = scmp.ne.s32.totalorder %s99, %s113
      %p115 = scmp.eq.s32.totalorder %s26, 0
      %p116 = por %p114, %p115
      %s118 = sadd.s32 %s117, 1
      %p121 = scmp.eq.s32.totalorder %s20, 2
      %p122 = scmp.ne.s32.totalorder %s117, %s119
      %p123 = scmp.eq.s32.totalorder %s20, 0
      %p124 = por %p122, %p123
      %p125 = scmp.ne.s32.totalorder %s117, %s119
      %p126 = scmp.eq.s32.totalorder %s25, 2
      %p127 = por %p125, %p126
      %p128 = scmp.ne.s32.totalorder %s119, %s120
      %p129 = scmp.eq.s32.totalorder %s25, 0
      %p130 = por %p128, %p129
      %p131 = scmp.ne.s32.totalorder %s119, %s120
      %p132 = scmp.eq.s32.totalorder %s26, 2
      %p133 = por %p131, %p132
      %p135 = scmp.ne.s32.totalorder %s120, %s134
      %p136 = scmp.eq.s32.totalorder %s26, 0
      %p137 = por %p135, %p136
      %s139 = sadd.s32 %s138, 1
      %p142 = scmp.eq.s32.totalorder %s20, 2
      %p143 = scmp.ne.s32.totalorder %s138, %s140
      %p144 = scmp.eq.s32.totalorder %s20, 0
      %p145 = por %p143, %p144
      %p146 = scmp.ne.s32.totalorder %s138, %s140
      %p147 = scmp.eq.s32.totalorder %s25, 2
      %p148 = por %p146, %p147
      %p149 = scmp.ne.s32.totalorder %s140, %s141
      %p150 = scmp.eq.s32.totalorder %s25, 0
      %p151 = por %p149, %p150
      %p152 = scmp.ne.s32.totalorder %s140, %s141
      %p153 = scmp.eq.s32.totalorder %s26, 2
      %p154 = por %p152, %p153
      %p156 = scmp.ne.s32.totalorder %s141, %s155
      %p157 = scmp.eq.s32.totalorder %s26, 0
      %p158 = por %p156, %p157
      %s160 = sadd.s32 %s159, 1
      %p163 = scmp.eq.s32.totalorder %s20, 2
      %p164 = scmp.ne.s32.totalorder %s159, %s161
      %p165 = scmp.eq.s32.totalorder %s20, 0
      %p166 = por %p164, %p165
      %p167 = scmp.ne.s32.totalorder %s159, %s161
      %p168 = scmp.eq.s32.totalorder %s25, 2
      %p169 = por %p167, %p168
      %p170 = scmp.ne.s32.totalorder %s161, %s162
      %p171 = scmp.eq.s32.totalorder %s25, 0
      %p172 = por %p170, %p171
      %p173 = scmp.ne.s32.totalorder %s161, %s162
      %p174 = scmp.eq.s32.totalorder %s26, 2
      %p175 = por %p173, %p174
      %p177 = scmp.ne.s32.totalorder %s162, %s176
      %p178 = scmp.eq.s32.totalorder %s26, 0
      %p179 = por %p177, %p178
      %s181 = sadd.s32 %s180, 1
      %p184 = scmp.eq.s32.totalorder %s20, 2
      %p185 = scmp.ne.s32.totalorder %s180, %s182
      %p186 = scmp.eq.s32.totalorder %s20, 0
      %p187 = por %p185, %p186
      %p188 = scmp.ne.s32.totalorder %s180, %s182
      %p189 = scmp.eq.s32.totalorder %s25, 2
      %p190 = por %p188, %p189
      %p191 = scmp.ne.s32.totalorder %s182, %s183
      %p192 = scmp.eq.s32.totalorder %s25, 0
      %p193 = por %p191, %p192
      %p194 = scmp.ne.s32.totalorder %s182, %s183
      %p195 = scmp.eq.s32.totalorder %s26, 2
      %p196 = por %p194, %p195
      %p198 = scmp.ne.s32.totalorder %s183, %s197
      %p199 = scmp.eq.s32.totalorder %s26, 0
      %p200 = por %p198, %p199
      %s202 = sadd.s32 %s201, 1
      %p205 = scmp.eq.s32.totalorder %s20, 2
      %p206 = scmp.ne.s32.totalorder %s201, %s203
      %p207 = scmp.eq.s32.totalorder %s20, 0
      %p208 = por %p206, %p207
      %p209 = scmp.ne.s32.totalorder %s201, %s203
      %p210 = scmp.eq.s32.totalorder %s25, 2
      %p211 = por %p209, %p210
      %p212 = scmp.ne.s32.totalorder %s203, %s204
      %p213 = scmp.eq.s32.totalorder %s25, 0
      %p214 = por %p212, %p213
      %p215 = scmp.ne.s32.totalorder %s203, %s204
      %p216 = scmp.eq.s32.totalorder %s26, 2
      %p217 = por %p215, %p216
      %p219 = scmp.ne.s32.totalorder %s204, %s218
      %p220 = scmp.eq.s32.totalorder %s26, 0
      %p221 = por %p219, %p220
      %s223 = sadd.s32 %s222, 1
      %p226 = scmp.eq.s32.totalorder %s20, 2
      %p227 = scmp.ne.s32.totalorder %s222, %s224
      %p228 = scmp.eq.s32.totalorder %s20, 0
      %p229 = por %p227, %p228
      %p230 = scmp.ne.s32.totalorder %s222, %s224
      %p231 = scmp.eq.s32.totalorder %s25, 2
      %p232 = por %p230, %p231
      %p233 = scmp.ne.s32.totalorder %s224, %s225
      %p234 = scmp.eq.s32.totalorder %s25, 0
      %p235 = por %p233, %p234
      %p236 = scmp.ne.s32.totalorder %s224, %s225
      %p237 = scmp.eq.s32.totalorder %s26, 2
      %p238 = por %p236, %p237
      %p240 = scmp.ne.s32.totalorder %s225, %s239
      %p241 = scmp.eq.s32.totalorder %s26, 0
      %p242 = por %p240, %p241
      %s244 = sadd.s32 %s243, 1
      %p247 = scmp.eq.s32.totalorder %s20, 2
      %p248 = scmp.ne.s32.totalorder %s243, %s245
      %p249 = scmp.eq.s32.totalorder %s20, 0
      %p250 = por %p248, %p249
      %p251 = scmp.ne.s32.totalorder %s243, %s245
      %p252 = scmp.eq.s32.totalorder %s25, 2
      %p253 = por %p251, %p252
      %p254 = scmp.ne.s32.totalorder %s245, %s246
      %p255 = scmp.eq.s32.totalorder %s25, 0
      %p256 = por %p254, %p255
      %p257 = scmp.ne.s32.totalorder %s245, %s246
      %p258 = scmp.eq.s32.totalorder %s26, 2
      %p259 = por %p257, %p258
      %p261 = scmp.ne.s32.totalorder %s246, %s260
      %p262 = scmp.eq.s32.totalorder %s26, 0
      %p263 = por %p261, %p262
      %s264 = ssub.s32 %s20, %s27
      %p265 = scmp.eq.s32.totalorder %s264, 0
      %s267 = sadd.s32 %s266, 1
      %s268 = scalar_select %p265, %s266, %s267
      %p271 = pneg %p265
      %p272 = scmp.eq.s32.totalorder %s20, 2
      %p273 = por %p271, %p272
      %p274 = scmp.ne.s32.totalorder %s266, %s269
      %p275 = scmp.eq.s32.totalorder %s20, 0
      %p276 = por %p274, %p275
      %p277 = scmp.ne.s32.totalorder %s266, %s269
      %p278 = scmp.eq.s32.totalorder %s25, 2
      %p279 = por %p277, %p278
      %p280 = scmp.ne.s32.totalorder %s269, %s270
      %p281 = scmp.eq.s32.totalorder %s25, 0
      %p282 = por %p280, %p281
      %p283 = scmp.ne.s32.totalorder %s269, %s270
      %p284 = scmp.eq.s32.totalorder %s26, 2
      %p285 = por %p283, %p284
      %p287 = scmp.ne.s32.totalorder %s270, %s286
      %p288 = scmp.eq.s32.totalorder %s26, 0
      %p289 = por %p287, %p288
      %s290 = ssub.s32 %s20, %s27
      %p291 = scmp.eq.s32.totalorder %s290, 0
      %s293 = sadd.s32 %s292, 1
      %s294 = scalar_select %p291, %s292, %s293
      %p297 = pneg %p291
      %p298 = scmp.eq.s32.totalorder %s20, 2
      %p299 = por %p297, %p298
      %p300 = scmp.ne.s32.totalorder %s292, %s295
      %p301 = scmp.eq.s32.totalorder %s20, 0
      %p302 = por %p300, %p301
      %p303 = scmp.ne.s32.totalorder %s292, %s295
      %p304 = scmp.eq.s32.totalorder %s25, 2
      %p305 = por %p303, %p304
      %p306 = scmp.ne.s32.totalorder %s295, %s296
      %p307 = scmp.eq.s32.totalorder %s25, 0
      %p308 = por %p306, %p307
      %p309 = scmp.ne.s32.totalorder %s295, %s296
      %p310 = scmp.eq.s32.totalorder %s26, 2
      %p311 = por %p309, %p310
      %p313 = scmp.ne.s32.totalorder %s296, %s312
      %p314 = scmp.eq.s32.totalorder %s26, 0
      %p315 = por %p313, %p314
      %p316 = scmp.le.s32.totalorder 1, %s20
      %p317 = scmp.lt.s32.totalorder %s20, 4
      %p318 = pnand %p316, %p317
      %p319 = pneg %p318
      // Predicated region
      $region9: #{coattention_forward.6} parent=5 // pred_check
        _
      $region10: #{coattention_forward.6} parent=5 // pred_check_branch
        %321 = sbr.rel (%p318) target = $region12
      $region11: #{coattention_forward.6} parent=5 // pred_region
        %s322 = ssub.s32 %s20, 1
        // Predicated region
        $region13: #{coattention_forward.6} parent=11 // pred_check
          %p323 = pneg %p67
        $region14: #{coattention_forward.6} parent=11 // pred_check_branch
          %325 = sbr.rel (%p323) target = $region16
        $region15: #{coattention_forward.6} parent=11 // pred_region
          _
        $region16: #{coattention_forward.6} parent=11 // pred_fallthru
          _
        // Predicated region
        $region17: #{coattention_forward.6} parent=11 // pred_check
          %p326 = pneg %p88
        $region18: #{coattention_forward.6} parent=11 // pred_check_branch
          %328 = sbr.rel (%p326) target = $region20
        $region19: #{coattention_forward.6} parent=11 // pred_region
          _
        $region20: #{coattention_forward.6} parent=11 // pred_fallthru
          _
        // Predicated region
        $region21: #{coattention_forward.6} parent=11 // pred_check
          %p329 = pneg %p109
        $region22: #{coattention_forward.6} parent=11 // pred_check_branch
          %331 = sbr.rel (%p329) target = $region24
        $region23: #{coattention_forward.6} parent=11 // pred_region
          _
        $region24: #{coattention_forward.6} parent=11 // pred_fallthru
          _
        // Predicated region
        $region25: #{coattention_forward.6} parent=11 // pred_check
          %p332 = pneg %p130
        $region26: #{coattention_forward.6} parent=11 // pred_check_branch
          %334 = sbr.rel (%p332) target = $region28
        $region27: #{coattention_forward.6} parent=11 // pred_region
          _
        $region28: #{coattention_forward.6} parent=11 // pred_fallthru
          _
        // Predicated region
        $region29: #{coattention_forward.6} parent=11 // pred_check
          %p335 = pneg %p151
        $region30: #{coattention_forward.6} parent=11 // pred_check_branch
          %337 = sbr.rel (%p335) target = $region32
        $region31: #{coattention_forward.6} parent=11 // pred_region
          _
        $region32: #{coattention_forward.6} parent=11 // pred_fallthru
          _
        // Predicated region
        $region33: #{coattention_forward.6} parent=11 // pred_check
          %p338 = pneg %p172
        $region34: #{coattention_forward.6} parent=11 // pred_check_branch
          %340 = sbr.rel (%p338) target = $region36
        $region35: #{coattention_forward.6} parent=11 // pred_region
          _
        $region36: #{coattention_forward.6} parent=11 // pred_fallthru
          _
        // Predicated region
        $region37: #{coattention_forward.6} parent=11 // pred_check
          %p341 = pneg %p193
        $region38: #{coattention_forward.6} parent=11 // pred_check_branch
          %343 = sbr.rel (%p341) target = $region40
        $region39: #{coattention_forward.6} parent=11 // pred_region
          _
        $region40: #{coattention_forward.6} parent=11 // pred_fallthru
          _
        // Predicated region
        $region41: #{coattention_forward.6} parent=11 // pred_check
          %p344 = pneg %p214
        $region42: #{coattention_forward.6} parent=11 // pred_check_branch
          %346 = sbr.rel (%p344) target = $region44
        $region43: #{coattention_forward.6} parent=11 // pred_region
          %s348 = ssub.s32 8192, 8192
          %349 = vsyncadd [#allocation3], %s348
          %s350 = sshll.u32 [#allocation2], 4
          %s351 = int_to_ptr.vmem [resolvable:$true] %s350
          %356 = dma.hbm_to_vmem [thread:$0]  %s8, 8192, %s351, [#allocation3], 512, 512, 32
        $region44: #{coattention_forward.6} parent=11 // pred_fallthru
          _
        // Predicated region
        $region45: #{coattention_forward.6} parent=11 // pred_check
          %p357 = pneg %p235
        $region46: #{coattention_forward.6} parent=11 // pred_check_branch
          %359 = sbr.rel (%p357) target = $region48
        $region47: #{coattention_forward.6} parent=11 // pred_region
          _
        $region48: #{coattention_forward.6} parent=11 // pred_fallthru
          _
        // Predicated region
        $region49: #{coattention_forward.6} parent=11 // pred_check
          %p360 = pneg %p256
        $region50: #{coattention_forward.6} parent=11 // pred_check_branch
          %362 = sbr.rel (%p360) target = $region52
        $region51: #{coattention_forward.6} parent=11 // pred_region
          _
        $region52: #{coattention_forward.6} parent=11 // pred_fallthru
          _
      $region12: #{coattention_forward.6} parent=5 // pred_fallthru
        _
      %p363 = scmp.lt.s32.totalorder %s20, 3
      // Predicated region
      $region53: #{coattention_forward.6} parent=5 // pred_check
        %p364 = pneg %p363
      $region54: #{coattention_forward.6} parent=5 // pred_check_branch
        %366 = sbr.rel (%p364) target = $region56
      $region55: #{coattention_forward.6} parent=5 // pred_region
        // Predicated region
        $region57: #{coattention_forward.6} parent=55 // pred_check
          %p367 = pneg %p40
        $region58: #{coattention_forward.6} parent=55 // pred_check_branch
          %369 = sbr.rel (%p367) target = $region60
        $region59: #{coattention_forward.6} parent=55 // pred_region
          %p370 = scmp.lt.s32.totalorder %s20, 2
          %s371 = scalar_select %p370, %s20, 2
          %s372 = smul.addr %s371, 2
          %s373 = smul.addr %s372, 8
          %s374 = scalar_lea.vmem %s0, %s373
        $region60: #{coattention_forward.6} parent=55 // pred_fallthru
          _
      $region56: #{coattention_forward.6} parent=5 // pred_fallthru
        _
      %p375 = scmp.le.s32.totalorder 1, %s20
      %p376 = scmp.lt.s32.totalorder %s20, 4
      %p377 = pnand %p375, %p376
      %p378 = pneg %p377
      // Predicated region
      $region61: #{coattention_forward.6} parent=5 // pred_check
        _
      $region62: #{coattention_forward.6} parent=5 // pred_check_branch
        %380 = sbr.rel (%p377) target = $region64
      $region63: #{coattention_forward.6} parent=5 // pred_region
        %s381 = ssub.s32 %s20, 1
        // Predicated region
        $region65: #{coattention_forward.6} parent=63 // pred_check
          %p382 = pneg %p214
        $region66: #{coattention_forward.6} parent=63 // pred_check_branch
          %384 = sbr.rel (%p382) target = $region68
        $region67: #{coattention_forward.6} parent=63 // pred_region
          %385 = dma.done [#allocation3], 8192
        $region68: #{coattention_forward.6} parent=63 // pred_fallthru
          _
        %p386 = scmp.lt.s32.totalorder %s25, 2
        %s387 = scalar_select %p386, %s25, 2
        %s388 = smul.addr %s387, 2
        %s389 = smul.addr %s388, 8
        %s390 = scalar_lea.vmem %s0, %s389
        %p391 = pneg %p46
        %p392 = pneg %p43
        %p393 = pneg %p67
        %p394 = pneg %p64
        %p395 = pneg %p88
        %p396 = pneg %p85
        %p397 = pneg %p109
        %p398 = pneg %p106
        %p399 = pneg %p130
        %p400 = pneg %p127
        %p401 = pneg %p151
        %p402 = pneg %p148
        %p403 = pneg %p172
        %p404 = pneg %p169
        %p405 = pneg %p193
        %p406 = pneg %p190
        %p407 = pneg %p214
        %p408 = pneg %p211
        %p409 = pneg %p235
        %p410 = pneg %p232
        %p411 = pneg %p256
        %p412 = pneg %p253
        %p413 = pneg %p282
        %p414 = pneg %p279
        %p415 = scmp.lt.s32.totalorder %s25, 2
        %s416 = scalar_select %p415, %s25, 2
        %s417 = smul.addr %s416, 2
        %s418 = scalar_lea.vmem %s11, %s417
        %p419 = pneg %p308
        %p420 = pneg %p305
        %p421 = scmp.lt.s32.totalorder %s25, 2
        %s422 = scalar_select %p421, %s25, 2
        %s423 = smul.addr %s422, 2
        %s424 = scalar_lea.vmem %s12, %s423
        %p425 = scmp.lt.s32.totalorder %s25, 2
        %s426 = scalar_select %p425, %s25, 2
        %s427 = smul.addr %s426, 2
        %s428 = smul.addr %s427, 8
        %s429 = scalar_lea.vmem %s0, %s428
        %p430 = scmp.lt.s32.totalorder %s25, 2
        %s431 = scalar_select %p430, %s25, 2
        %s432 = smul.addr %s431, 2
        %s433 = scalar_lea.vmem %s11, %s432
        %p434 = scmp.lt.s32.totalorder %s25, 2
        %s435 = scalar_select %p434, %s25, 2
        %s436 = smul.addr %s435, 2
        %s437 = scalar_lea.vmem %s12, %s436
        %v438 = vld [vmem:[%s429] sm:$0xff]
        %v439 = vld [vmem:[%s429 + $0x8] sm:$0xff]
        %v440 = vld [vmem:[%s1] sm:$0xff]
        %v441 = vld [vmem:[%s1 + $0x8] sm:$0xff]
        %v442 = vld [vmem:[%s1 + $0x10] sm:$0xff]
        %v443 = vld [vmem:[%s1 + $0x18] sm:$0xff]
        %v444 = vld [vmem:[%s2] sm:$0xff]
        %v445 = vld [vmem:[%s2 + $0x8] sm:$0xff]
        %v446 = vld [vmem:[%s2 + $0x10] sm:$0xff]
        %v447 = vld [vmem:[%s2 + $0x18] sm:$0xff]
        %v448 = vld [vmem:[%s2 + $0x20] sm:$0xff]
        %v449 = vld [vmem:[%s2 + $0x28] sm:$0xff]
        %v450 = vld [vmem:[%s2 + $0x30] sm:$0xff]
        %v451 = vld [vmem:[%s2 + $0x38] sm:$0xff]
        %v452 = vld [vmem:[%s2 + $0x40] sm:$0xff]
        %v453 = vld [vmem:[%s2 + $0x48] sm:$0xff]
        %v454 = vld [vmem:[%s2 + $0x50] sm:$0xff]
        %v455 = vld [vmem:[%s2 + $0x58] sm:$0xff]
        %v456 = vld [vmem:[%s2 + $0x60] sm:$0xff]
        %v457 = vld [vmem:[%s2 + $0x68] sm:$0xff]
        %v458 = vld [vmem:[%s2 + $0x70] sm:$0xff]
        %v459 = vld [vmem:[%s2 + $0x78] sm:$0xff]
        %v460 = vld [vmem:[%s2 + $0x80] sm:$0xff]
        %v461 = vld [vmem:[%s2 + $0x88] sm:$0xff]
        %v462 = vld [vmem:[%s2 + $0x90] sm:$0xff]
        %v463 = vld [vmem:[%s2 + $0x98] sm:$0xff]
        %v464 = vld [vmem:[%s2 + $0xa0] sm:$0xff]
        %v465 = vld [vmem:[%s2 + $0xa8] sm:$0xff]
        %v466 = vld [vmem:[%s2 + $0xb0] sm:$0xff]
        %v467 = vld [vmem:[%s2 + $0xb8] sm:$0xff]
        %v468 = vld [vmem:[%s2 + $0xc0] sm:$0xff]
        %v469 = vld [vmem:[%s2 + $0xc8] sm:$0xff]
        %v470 = vld [vmem:[%s2 + $0xd0] sm:$0xff]
        %v471 = vld [vmem:[%s2 + $0xd8] sm:$0xff]
        %v472 = vld [vmem:[%s2 + $0xe0] sm:$0xff]
        %v473 = vld [vmem:[%s2 + $0xe8] sm:$0xff]
        %v474 = vld [vmem:[%s2 + $0xf0] sm:$0xff]
        %v475 = vld [vmem:[%s2 + $0xf8] sm:$0xff]
        %v476 = vld [vmem:[%s2 + $0x100] sm:$0xff]
        %v477 = vld [vmem:[%s2 + $0x108] sm:$0xff]
        %v478 = vld [vmem:[%s2 + $0x110] sm:$0xff]
        %v479 = vld [vmem:[%s2 + $0x118] sm:$0xff]
        %v480 = vld [vmem:[%s2 + $0x120] sm:$0xff]
        %v481 = vld [vmem:[%s2 + $0x128] sm:$0xff]
        %v482 = vld [vmem:[%s2 + $0x130] sm:$0xff]
        %v483 = vld [vmem:[%s2 + $0x138] sm:$0xff]
        %v484 = vld [vmem:[%s2 + $0x140] sm:$0xff]
        %v485 = vld [vmem:[%s2 + $0x148] sm:$0xff]
        %v486 = vld [vmem:[%s2 + $0x150] sm:$0xff]
        %v487 = vld [vmem:[%s2 + $0x158] sm:$0xff]
        %v488 = vld [vmem:[%s2 + $0x160] sm:$0xff]
        %v489 = vld [vmem:[%s2 + $0x168] sm:$0xff]
        %v490 = vld [vmem:[%s2 + $0x170] sm:$0xff]
        %v491 = vld [vmem:[%s2 + $0x178] sm:$0xff]
        %v492 = vld [vmem:[%s2 + $0x180] sm:$0xff]
        %v493 = vld [vmem:[%s2 + $0x188] sm:$0xff]
        %v494 = vld [vmem:[%s2 + $0x190] sm:$0xff]
        %v495 = vld [vmem:[%s2 + $0x198] sm:$0xff]
        %v496 = vld [vmem:[%s2 + $0x1a0] sm:$0xff]
        %v497 = vld [vmem:[%s2 + $0x1a8] sm:$0xff]
        %v498 = vld [vmem:[%s2 + $0x1b0] sm:$0xff]
        %v499 = vld [vmem:[%s2 + $0x1b8] sm:$0xff]
        %v500 = vld [vmem:[%s2 + $0x1c0] sm:$0xff]
        %v501 = vld [vmem:[%s2 + $0x1c8] sm:$0xff]
        %v502 = vld [vmem:[%s2 + $0x1d0] sm:$0xff]
        %v503 = vld [vmem:[%s2 + $0x1d8] sm:$0xff]
        %v504 = vld [vmem:[%s2 + $0x1e0] sm:$0xff]
        %v505 = vld [vmem:[%s2 + $0x1e8] sm:$0xff]
        %v506 = vld [vmem:[%s2 + $0x1f0] sm:$0xff]
        %v507 = vld [vmem:[%s2 + $0x1f8] sm:$0xff]
        %508 = vmatprep.subr.mxu0 %v445
        %509 = vmatpush1.msra.mxu0 %v444
        %510 = vmatprep.subr.mxu0 %v449
        %511 = vmatpush1.msra.mxu0 %v448
        %512 = vmatprep.subr.mxu0 %v453
        %513 = vmatpush1.msra.mxu0 %v452
        %514 = vmatprep.subr.mxu0 %v457
        %515 = vmatpush1.msra.mxu0 %v456
        %516 = vmatprep.subr.mxu0 %v461
        %517 = vmatpush1.msra.mxu0 %v460
        %518 = vmatprep.subr.mxu0 %v465
        %519 = vmatpush1.msra.mxu0 %v464
        %520 = vmatprep.subr.mxu0 %v469
        %521 = vmatpush1.msra.mxu0 %v468
        %522 = vmatprep.subr.mxu0 %v473
        %523 = vmatpush1.msra.mxu0 %v472
        %524 = vmatprep.subr.mxu0 %v477
        %525 = vmatpush1.msra.mxu0 %v476
        %526 = vmatprep.subr.mxu0 %v481
        %527 = vmatpush1.msra.mxu0 %v480
        %528 = vmatprep.subr.mxu0 %v485
        %529 = vmatpush1.msra.mxu0 %v484
        %530 = vmatprep.subr.mxu0 %v489
        %531 = vmatpush1.msra.mxu0 %v488
        %532 = vmatprep.subr.mxu0 %v493
        %533 = vmatpush1.msra.mxu0 %v492
        %534 = vmatprep.subr.mxu0 %v497
        %535 = vmatpush1.msra.mxu0 %v496
        %536 = vmatprep.subr.mxu0 %v501
        %537 = vmatpush1.msra.mxu0 %v500
        %538 = vmatprep.subr.mxu0 %v505
        %539 = vmatpush1.msra.mxu0 %v504
        %540 = vmatprep.subr.mxu0 0.0
        %541 = vmatpush1.msra.mxu0 0.0
        %542 = vmatprep.subr.mxu0 0.0
        %543 = vmatpush1.msra.mxu0 0.0
        %544 = vmatprep.subr.mxu0 0.0
        %545 = vmatpush1.msra.mxu0 0.0
        %546 = vmatprep.subr.mxu0 0.0
        %547 = vmatpush1.msra.mxu0 0.0
        %548 = vmatprep.subr.mxu0 0.0
        %549 = vmatpush1.msra.mxu0 0.0
        %550 = vmatprep.subr.mxu0 0.0
        %551 = vmatpush1.msra.mxu0 0.0
        %552 = vmatprep.subr.mxu0 0.0
        %553 = vmatpush1.msra.mxu0 0.0
        %554 = vmatprep.subr.mxu0 0.0
        %555 = vmatpush1.msra.mxu0 0.0
        %556 = vmatprep.subr.mxu0 0.0
        %557 = vmatpush1.msra.mxu0 0.0
        %558 = vmatprep.subr.mxu0 0.0
        %559 = vmatpush1.msra.mxu0 0.0
        %560 = vmatprep.subr.mxu0 0.0
        %561 = vmatpush1.msra.mxu0 0.0
        %562 = vmatprep.subr.mxu0 0.0
        %563 = vmatpush1.msra.mxu0 0.0
        %564 = vmatprep.subr.mxu0 0.0
        %565 = vmatpush1.msra.mxu0 0.0
        %566 = vmatprep.subr.mxu0 0.0
        %567 = vmatpush1.msra.mxu0 0.0
        %568 = vmatprep.subr.mxu0 0.0
        %569 = vmatpush1.msra.mxu0 0.0
        %570 = vmatprep.subr.mxu0 0.0
        %571 = vmatpush1.msra.mxu0 0.0
        %572 = vmatprep.mubr.f32.mxu0 0.0
        %573 = vmatmul.mubr.f32.gmra.mrb[0].mxu0 %v438
        %v574 = vpop.f32.mrb[0].mxu0
        %v575 = vadd.f32 0.0, %v574
        %v576 = vpop.f32.mrb[0].mxu0
        %v577 = vadd.f32 0.0, %v576
        %578 = vmatprep.mubr.f32.mxu0 0.0
        %579 = vmatmul.mubr.f32.gmra.mrb[0].mxu0 %v439
        %v580 = vpop.f32.mrb[0].mxu0
        %v581 = vadd.f32 0.0, %v580
        %v582 = vpop.f32.mrb[0].mxu0
        %v583 = vadd.f32 0.0, %v582
        %584 = vdwg.mxu0
        %585 = vmatprep.subr.mxu0 %v447
        %586 = vmatpush1.msra.mxu0 %v446
        %587 = vmatprep.subr.mxu0 %v451
        %588 = vmatpush1.msra.mxu0 %v450
        %589 = vmatprep.subr.mxu0 %v455
        %590 = vmatpush1.msra.mxu0 %v454
        %591 = vmatprep.subr.mxu0 %v459
        %592 = vmatpush1.msra.mxu0 %v458
        %593 = vmatprep.subr.mxu0 %v463
        %594 = vmatpush1.msra.mxu0 %v462
        %595 = vmatprep.subr.mxu0 %v467
        %596 = vmatpush1.msra.mxu0 %v466
        %597 = vmatprep.subr.mxu0 %v471
        %598 = vmatpush1.msra.mxu0 %v470
        %599 = vmatprep.subr.mxu0 %v475
        %600 = vmatpush1.msra.mxu0 %v474
        %601 = vmatprep.subr.mxu0 %v479
        %602 = vmatpush1.msra.mxu0 %v478
        %603 = vmatprep.subr.mxu0 %v483
        %604 = vmatpush1.msra.mxu0 %v482
        %605 = vmatprep.subr.mxu0 %v487
        %606 = vmatpush1.msra.mxu0 %v486
        %607 = vmatprep.subr.mxu0 %v491
        %608 = vmatpush1.msra.mxu0 %v490
        %609 = vmatprep.subr.mxu0 %v495
        %610 = vmatpush1.msra.mxu0 %v494
        %611 = vmatprep.subr.mxu0 %v499
        %612 = vmatpush1.msra.mxu0 %v498
        %613 = vmatprep.subr.mxu0 %v503
        %614 = vmatpush1.msra.mxu0 %v502
        %615 = vmatprep.subr.mxu0 %v507
        %616 = vmatpush1.msra.mxu0 %v506
        %617 = vmatprep.subr.mxu0 0.0
        %618 = vmatpush1.msra.mxu0 0.0
        %619 = vmatprep.subr.mxu0 0.0
        %620 = vmatpush1.msra.mxu0 0.0
        %621 = vmatprep.subr.mxu0 0.0
        %622 = vmatpush1.msra.mxu0 0.0
        %623 = vmatprep.subr.mxu0 0.0
        %624 = vmatpush1.msra.mxu0 0.0
        %625 = vmatprep.subr.mxu0 0.0
        %626 = vmatpush1.msra.mxu0 0.0
        %627 = vmatprep.subr.mxu0 0.0
        %628 = vmatpush1.msra.mxu0 0.0
        %629 = vmatprep.subr.mxu0 0.0
        %630 = vmatpush1.msra.mxu0 0.0
        %631 = vmatprep.subr.mxu0 0.0
        %632 = vmatpush1.msra.mxu0 0.0
        %633 = vmatprep.subr.mxu0 0.0
        %634 = vmatpush1.msra.mxu0 0.0
        %635 = vmatprep.subr.mxu0 0.0
        %636 = vmatpush1.msra.mxu0 0.0
        %637 = vmatprep.subr.mxu0 0.0
        %638 = vmatpush1.msra.mxu0 0.0
        %639 = vmatprep.subr.mxu0 0.0
        %640 = vmatpush1.msra.mxu0 0.0
        %641 = vmatprep.subr.mxu0 0.0
        %642 = vmatpush1.msra.mxu0 0.0
        %643 = vmatprep.subr.mxu0 0.0
        %644 = vmatpush1.msra.mxu0 0.0
        %645 = vmatprep.subr.mxu0 0.0
        %646 = vmatpush1.msra.mxu0 0.0
        %647 = vmatprep.subr.mxu0 0.0
        %648 = vmatpush1.msra.mxu0 0.0
        %649 = vmatprep.mubr.f32.mxu0 0.0
        %650 = vmatmul.mubr.f32.gmra.mrb[0].mxu0 %v438
        %v651 = vpop.f32.mrb[0].mxu0
        %v652 = vadd.f32 0.0, %v651
        %v653 = vpop.f32.mrb[0].mxu0
        %v654 = vadd.f32 0.0, %v653
        %655 = vmatprep.mubr.f32.mxu0 0.0
        %656 = vmatmul.mubr.f32.gmra.mrb[0].mxu0 %v439
        %v657 = vpop.f32.mrb[0].mxu0
        %v658 = vadd.f32 0.0, %v657
        %v659 = vpop.f32.mrb[0].mxu0
        %v660 = vadd.f32 0.0, %v659
        %661 = vdwg.mxu0
        %v662 = vld [vmem:[%s7] sm:$0xff]
        %v663 = vld [vmem:[%s7 + $0x8] sm:$0xff]
        %v664 = vld [vmem:[%s7 + $0x10] sm:$0xff]
        %v665 = vld [vmem:[%s7 + $0x18] sm:$0xff]
        %v666 = vld [vmem:[%s7 + $0x20] sm:$0xff]
        %v667 = vld [vmem:[%s7 + $0x28] sm:$0xff]
        %v668 = vld [vmem:[%s7 + $0x30] sm:$0xff]
        %v669 = vld [vmem:[%s7 + $0x38] sm:$0xff]
        %v670 = vld [vmem:[%s7 + $0x40] sm:$0xff]
        %v671 = vld [vmem:[%s7 + $0x48] sm:$0xff]
        %v672 = vld [vmem:[%s7 + $0x50] sm:$0xff]
        %v673 = vld [vmem:[%s7 + $0x58] sm:$0xff]
        %v674 = vld [vmem:[%s7 + $0x60] sm:$0xff]
        %v675 = vld [vmem:[%s7 + $0x68] sm:$0xff]
        %v676 = vld [vmem:[%s7 + $0x70] sm:$0xff]
        %v677 = vld [vmem:[%s7 + $0x78] sm:$0xff]
        %v678 = vld [vmem:[%s7 + $0x80] sm:$0xff]
        %v679 = vld [vmem:[%s7 + $0x88] sm:$0xff]
        %v680 = vld [vmem:[%s7 + $0x90] sm:$0xff]
        %v681 = vld [vmem:[%s7 + $0x98] sm:$0xff]
        %v682 = vld [vmem:[%s7 + $0xa0] sm:$0xff]
        %v683 = vld [vmem:[%s7 + $0xa8] sm:$0xff]
        %v684 = vld [vmem:[%s7 + $0xb0] sm:$0xff]
        %v685 = vld [vmem:[%s7 + $0xb8] sm:$0xff]
        %v686 = vld [vmem:[%s7 + $0xc0] sm:$0xff]
        %v687 = vld [vmem:[%s7 + $0xc8] sm:$0xff]
        %v688 = vld [vmem:[%s7 + $0xd0] sm:$0xff]
        %v689 = vld [vmem:[%s7 + $0xd8] sm:$0xff]
        %v690 = vld [vmem:[%s7 + $0xe0] sm:$0xff]
        %v691 = vld [vmem:[%s7 + $0xe8] sm:$0xff]
        %v692 = vld [vmem:[%s7 + $0xf0] sm:$0xff]
        %v693 = vld [vmem:[%s7 + $0xf8] sm:$0xff]
        %v694 = vld [vmem:[%s7 + $0x100] sm:$0xff]
        %v695 = vld [vmem:[%s7 + $0x108] sm:$0xff]
        %v696 = vld [vmem:[%s7 + $0x110] sm:$0xff]
        %v697 = vld [vmem:[%s7 + $0x118] sm:$0xff]
        %v698 = vld [vmem:[%s7 + $0x120] sm:$0xff]
        %v699 = vld [vmem:[%s7 + $0x128] sm:$0xff]
        %v700 = vld [vmem:[%s7 + $0x130] sm:$0xff]
        %v701 = vld [vmem:[%s7 + $0x138] sm:$0xff]
        %v702 = vld [vmem:[%s7 + $0x140] sm:$0xff]
        %v703 = vld [vmem:[%s7 + $0x148] sm:$0xff]
        %v704 = vld [vmem:[%s7 + $0x150] sm:$0xff]
        %v705 = vld [vmem:[%s7 + $0x158] sm:$0xff]
        %v706 = vld [vmem:[%s7 + $0x160] sm:$0xff]
        %v707 = vld [vmem:[%s7 + $0x168] sm:$0xff]
        %v708 = vld [vmem:[%s7 + $0x170] sm:$0xff]
        %v709 = vld [vmem:[%s7 + $0x178] sm:$0xff]
        %v710 = vld [vmem:[%s7 + $0x180] sm:$0xff]
        %v711 = vld [vmem:[%s7 + $0x188] sm:$0xff]
        %v712 = vld [vmem:[%s7 + $0x190] sm:$0xff]
        %v713 = vld [vmem:[%s7 + $0x198] sm:$0xff]
        %v714 = vld [vmem:[%s7 + $0x1a0] sm:$0xff]
        %v715 = vld [vmem:[%s7 + $0x1a8] sm:$0xff]
        %v716 = vld [vmem:[%s7 + $0x1b0] sm:$0xff]
        %v717 = vld [vmem:[%s7 + $0x1b8] sm:$0xff]
        %v718 = vld [vmem:[%s7 + $0x1c0] sm:$0xff]
        %v719 = vld [vmem:[%s7 + $0x1c8] sm:$0xff]
        %v720 = vld [vmem:[%s7 + $0x1d0] sm:$0xff]
        %v721 = vld [vmem:[%s7 + $0x1d8] sm:$0xff]
        %v722 = vld [vmem:[%s7 + $0x1e0] sm:$0xff]
        %v723 = vld [vmem:[%s7 + $0x1e8] sm:$0xff]
        %v724 = vld [vmem:[%s7 + $0x1f0] sm:$0xff]
        %v725 = vld [vmem:[%s7 + $0x1f8] sm:$0xff]
        %v726 = vld [vmem:[%s4] sm:$0xf]
        %v728 = vlaneseq
        %v729 = vshrl.u32 %v728, 7
        %v730 = vsub.s32 0, %v729
        %v731 = vrot.slane %v726, %v730
        %v732 = vlaneseq
        %v733 = vshrl.u32 %v732, 7
        %v734 = vsub.s32 1, %v733
        %v735 = vrot.slane %v726, %v734
        %v736 = vlaneseq
        %v737 = vshrl.u32 %v736, 7
        %v738 = vsub.s32 2, %v737
        %v739 = vrot.slane %v726, %v738
        %v740 = vlaneseq
        %v741 = vshrl.u32 %v740, 7
        %v742 = vsub.s32 3, %v741
        %v743 = vrot.slane %v726, %v742
        %v748 = vadd.f32 %v575, %v731
        %v749 = vadd.f32 %v577, %v735
        %v750 = vadd.f32 %v652, %v739
        %v751 = vadd.f32 %v654, %v743
        %v752 = vadd.f32 %v581, %v731
        %v753 = vadd.f32 %v583, %v735
        %v754 = vadd.f32 %v658, %v739
        %v755 = vadd.f32 %v660, %v743
        %v756 = vtanh.pop %v748
        %v757 = vtanh.pop %v749
        %v758 = vtanh.pop %v750
        %v759 = vtanh.pop %v751
        %v760 = vtanh.pop %v752
        %v761 = vtanh.pop %v753
        %v762 = vtanh.pop %v754
        %v763 = vtanh.pop %v755
        %v764 = vld [vmem:[%s6] sm:$0xf]
        %v766 = vlaneseq
        %v767 = vshrl.u32 %v766, 7
        %v768 = vsub.s32 0, %v767
        %v769 = vrot.slane %v764, %v768
        %v770 = vlaneseq
        %v771 = vshrl.u32 %v770, 7
        %v772 = vsub.s32 1, %v771
        %v773 = vrot.slane %v764, %v772
        %v774 = vlaneseq
        %v775 = vshrl.u32 %v774, 7
        %v776 = vsub.s32 2, %v775
        %v777 = vrot.slane %v764, %v776
        %v778 = vlaneseq
        %v779 = vshrl.u32 %v778, 7
        %v780 = vsub.s32 3, %v779
        %v781 = vrot.slane %v764, %v780
        %v786 = vmul.f32 %v756, %v769
        %v787 = vmul.f32 %v757, %v773
        %v788 = vmul.f32 %v758, %v777
        %v789 = vmul.f32 %v759, %v781
        %v790 = vmul.f32 %v760, %v769
        %v791 = vmul.f32 %v761, %v773
        %v792 = vmul.f32 %v762, %v777
        %v793 = vmul.f32 %v763, %v781
        %v794 = vadd.f32 %v786, %v787
        %v795 = vadd.f32 %v794, %v788
        %v796 = vadd.f32 %v795, %v789
        %797 = vadd.xlane.f32.xlu0 %v796
        %v798 = vpop.xlane.xlu0 %797
        %v799 = vadd.f32 %v790, %v791
        %v800 = vadd.f32 %v799, %v792
        %v801 = vadd.f32 %v800, %v793
        %802 = vadd.xlane.f32.xlu0 %v801
        %v803 = vpop.xlane.xlu0 %802
        %v806 = vlaneseq
        %v807 = vand.u32 %v806, 127
        %v808 = vlaneseq
        %v809 = vshrl.u32 %v808, 7
        %v810 = vsub.s32 %v807, %v809
        %v811 = vrot.slane %v798, %v810
        %v812 = vlaneseq
        %v813 = vshrl.u32 %v812, 7
        %v814 = vsub.s32 %v807, %v813
        %v815 = vrot.slane %v803, %v814
        %vm816 = vcmask 1041409
        %v817 = vsel %vm816, %v815, %v811
        %vm819 = vcmask 58368
        %v820 = vsel %vm819, %v817, -inf
        %821 = vmax.xlane.f32.xlu0 %v820
        %v822 = vpop.xlane.xlu0 %821
        %v824 = vlaneseq
        %v825 = vshrl.u32 %v824, 7
        %v826 = vsub.s32 0, %v825
        %v827 = vrot.slane %v822, %v826
        %v828 = vlaneseq
        %v829 = vshrl.u32 %v828, 7
        %v830 = vsub.s32 1, %v829
        %v831 = vrot.slane %v822, %v830
        %v834 = vsub.f32 %v798, %v827
        %v835 = vsub.f32 %v803, %v831
        %v836 = vmul.f32 %v834, 1.442695
        %v837 = vpow.pop %v836
        %v838 = vmul.f32 %v835, 1.442695
        %v839 = vpow.pop %v838
        %842 = vset.pattern.permute.xlu0 0
        %843 = vperm.xlu0 %842, %v837
        %v844 = vpop.permute.xlu0 %843
        %845 = vset.pattern.permute.xlu0 0
        %846 = vperm.xlu0 %845, %v839
        %v847 = vpop.permute.xlu0 %846
        %v848 = vlaneseq
        %v849 = vshrl.u32 %v848, 7
        %v850 = vsub.s32 %v807, %v849
        %v851 = vrot.slane %v844, %v850
        %v852 = vlaneseq
        %v853 = vshrl.u32 %v852, 7
        %v854 = vsub.s32 %v807, %v853
        %v855 = vrot.slane %v847, %v854
        %v856 = vsel %vm816, %v855, %v851
        %v858 = vsel %vm819, %v856, 0.0
        %859 = vadd.xlane.f32.xlu0 %v858
        %v860 = vpop.xlane.xlu0 %859
        %v861 = vrcp.pop %v860
        %v863 = vlaneseq
        %v864 = vshrl.u32 %v863, 7
        %v865 = vsub.s32 0, %v864
        %v866 = vrot.slane %v861, %v865
        %v867 = vlaneseq
        %v868 = vshrl.u32 %v867, 7
        %v869 = vsub.s32 1, %v868
        %v870 = vrot.slane %v861, %v869
        %v873 = vmul.f32 %v837, %v866
        %v874 = vmul.f32 %v839, %v870
        %876 = vset.pattern.permute.xlu0 0
        %877 = vperm.xlu0 %876, %v873
        %v878 = vpop.permute.xlu0 %877
        %881 = vset.pattern.permute.xlu0 0
        %882 = vperm.xlu0 %881, %v874
        %v883 = vpop.permute.xlu0 %882
        %v885 = vmul.f32 %v878, %v438
        %v886 = vmul.f32 %v883, %v439
        %v887 = vrot.slane %v885, 4
        %v888 = vadd.f32 %v885, %v887
        %v889 = vrot.slane %v888, 2
        %v890 = vadd.f32 %v888, %v889
        %v891 = vrot.slane %v890, 1
        %v892 = vadd.f32 %v890, %v891
        %v893 = vrot.slane %v886, 4
        %v894 = vadd.f32 %v886, %v893
        %v895 = vrot.slane %v894, 2
        %v896 = vadd.f32 %v894, %v895
        %v897 = vrot.slane %v896, 1
        %v898 = vadd.f32 %v896, %v897
        %v899 = vld [vmem:[#allocation2] sm:$0xff]
        %v900 = vld [vmem:[#allocation2 + $0x8] sm:$0xff]
        %v901 = vld [vmem:[#allocation2 + $0x10] sm:$0xff]
        %v902 = vld [vmem:[#allocation2 + $0x18] sm:$0xff]
        %v903 = vld [vmem:[#allocation2 + $0x20] sm:$0xff]
        %v904 = vld [vmem:[#allocation2 + $0x28] sm:$0xff]
        %v905 = vld [vmem:[#allocation2 + $0x30] sm:$0xff]
        %v906 = vld [vmem:[#allocation2 + $0x38] sm:$0xff]
        %v907 = vld [vmem:[#allocation2 + $0x40] sm:$0xff]
        %v908 = vld [vmem:[#allocation2 + $0x48] sm:$0xff]
        %v909 = vld [vmem:[#allocation2 + $0x50] sm:$0xff]
        %v910 = vld [vmem:[#allocation2 + $0x58] sm:$0xff]
        %v911 = vld [vmem:[#allocation2 + $0x60] sm:$0xff]
        %v912 = vld [vmem:[#allocation2 + $0x68] sm:$0xff]
        %v913 = vld [vmem:[#allocation2 + $0x70] sm:$0xff]
        %v914 = vld [vmem:[#allocation2 + $0x78] sm:$0xff]
        %v915 = vld [vmem:[#allocation2 + $0x80] sm:$0xff]
        %v916 = vld [vmem:[#allocation2 + $0x88] sm:$0xff]
        %v917 = vld [vmem:[#allocation2 + $0x90] sm:$0xff]
        %v918 = vld [vmem:[#allocation2 + $0x98] sm:$0xff]
        %v919 = vld [vmem:[#allocation2 + $0xa0] sm:$0xff]
        %v920 = vld [vmem:[#allocation2 + $0xa8] sm:$0xff]
        %v921 = vld [vmem:[#allocation2 + $0xb0] sm:$0xff]
        %v922 = vld [vmem:[#allocation2 + $0xb8] sm:$0xff]
        %v923 = vld [vmem:[#allocation2 + $0xc0] sm:$0xff]
        %v924 = vld [vmem:[#allocation2 + $0xc8] sm:$0xff]
        %v925 = vld [vmem:[#allocation2 + $0xd0] sm:$0xff]
        %v926 = vld [vmem:[#allocation2 + $0xd8] sm:$0xff]
        %v927 = vld [vmem:[#allocation2 + $0xe0] sm:$0xff]
        %v928 = vld [vmem:[#allocation2 + $0xe8] sm:$0xff]
        %v929 = vld [vmem:[#allocation2 + $0xf0] sm:$0xff]
        %v930 = vld [vmem:[#allocation2 + $0xf8] sm:$0xff]
        %v931 = vld [vmem:[#allocation2 + $0x100] sm:$0xff]
        %v932 = vld [vmem:[#allocation2 + $0x108] sm:$0xff]
        %v933 = vld [vmem:[#allocation2 + $0x110] sm:$0xff]
        %v934 = vld [vmem:[#allocation2 + $0x118] sm:$0xff]
        %v935 = vld [vmem:[#allocation2 + $0x120] sm:$0xff]
        %v936 = vld [vmem:[#allocation2 + $0x128] sm:$0xff]
        %v937 = vld [vmem:[#allocation2 + $0x130] sm:$0xff]
        %v938 = vld [vmem:[#allocation2 + $0x138] sm:$0xff]
        %v939 = vld [vmem:[#allocation2 + $0x140] sm:$0xff]
        %v940 = vld [vmem:[#allocation2 + $0x148] sm:$0xff]
        %v941 = vld [vmem:[#allocation2 + $0x150] sm:$0xff]
        %v942 = vld [vmem:[#allocation2 + $0x158] sm:$0xff]
        %v943 = vld [vmem:[#allocation2 + $0x160] sm:$0xff]
        %v944 = vld [vmem:[#allocation2 + $0x168] sm:$0xff]
        %v945 = vld [vmem:[#allocation2 + $0x170] sm:$0xff]
        %v946 = vld [vmem:[#allocation2 + $0x178] sm:$0xff]
        %v947 = vld [vmem:[#allocation2 + $0x180] sm:$0xff]
        %v948 = vld [vmem:[#allocation2 + $0x188] sm:$0xff]
        %v949 = vld [vmem:[#allocation2 + $0x190] sm:$0xff]
        %v950 = vld [vmem:[#allocation2 + $0x198] sm:$0xff]
        %v951 = vld [vmem:[#allocation2 + $0x1a0] sm:$0xff]
        %v952 = vld [vmem:[#allocation2 + $0x1a8] sm:$0xff]
        %v953 = vld [vmem:[#allocation2 + $0x1b0] sm:$0xff]
        %v954 = vld [vmem:[#allocation2 + $0x1b8] sm:$0xff]
        %v955 = vld [vmem:[#allocation2 + $0x1c0] sm:$0xff]
        %v956 = vld [vmem:[#allocation2 + $0x1c8] sm:$0xff]
        %v957 = vld [vmem:[#allocation2 + $0x1d0] sm:$0xff]
        %v958 = vld [vmem:[#allocation2 + $0x1d8] sm:$0xff]
        %v959 = vld [vmem:[#allocation2 + $0x1e0] sm:$0xff]
        %v960 = vld [vmem:[#allocation2 + $0x1e8] sm:$0xff]
        %v961 = vld [vmem:[#allocation2 + $0x1f0] sm:$0xff]
        %v962 = vld [vmem:[#allocation2 + $0x1f8] sm:$0xff]
        %v965 = vsel %vm816, %v898, %v892
        %967 = vmatprep.subr.mxu0 %v900
        %968 = vmatpush1.msra.mxu0 %v899
        %969 = vmatprep.subr.mxu0 %v904
        %970 = vmatpush1.msra.mxu0 %v903
        %971 = vmatprep.subr.mxu0 %v908
        %972 = vmatpush1.msra.mxu0 %v907
        %973 = vmatprep.subr.mxu0 %v912
        %974 = vmatpush1.msra.mxu0 %v911
        %975 = vmatprep.subr.mxu0 %v916
        %976 = vmatpush1.msra.mxu0 %v915
        %977 = vmatprep.subr.mxu0 %v920
        %978 = vmatpush1.msra.mxu0 %v919
        %979 = vmatprep.subr.mxu0 %v924
        %980 = vmatpush1.msra.mxu0 %v923
        %981 = vmatprep.subr.mxu0 %v928
        %982 = vmatpush1.msra.mxu0 %v927
        %983 = vmatprep.subr.mxu0 %v932
        %984 = vmatpush1.msra.mxu0 %v931
        %985 = vmatprep.subr.mxu0 %v936
        %986 = vmatpush1.msra.mxu0 %v935
        %987 = vmatprep.subr.mxu0 %v940
        %988 = vmatpush1.msra.mxu0 %v939
        %989 = vmatprep.subr.mxu0 %v944
        %990 = vmatpush1.msra.mxu0 %v943
        %991 = vmatprep.subr.mxu0 %v948
        %992 = vmatpush1.msra.mxu0 %v947
        %993 = vmatprep.subr.mxu0 %v952
        %994 = vmatpush1.msra.mxu0 %v951
        %995 = vmatprep.subr.mxu0 %v956
        %996 = vmatpush1.msra.mxu0 %v955
        %997 = vmatprep.subr.mxu0 %v960
        %998 = vmatpush1.msra.mxu0 %v959
        %999 = vmatprep.subr.mxu0 0.0
        %1000 = vmatpush1.msra.mxu0 0.0
        %1001 = vmatprep.subr.mxu0 0.0
        %1002 = vmatpush1.msra.mxu0 0.0
        %1003 = vmatprep.subr.mxu0 0.0
        %1004 = vmatpush1.msra.mxu0 0.0
        %1005 = vmatprep.subr.mxu0 0.0
        %1006 = vmatpush1.msra.mxu0 0.0
        %1007 = vmatprep.subr.mxu0 0.0
        %1008 = vmatpush1.msra.mxu0 0.0
        %1009 = vmatprep.subr.mxu0 0.0
        %1010 = vmatpush1.msra.mxu0 0.0
        %1011 = vmatprep.subr.mxu0 0.0
        %1012 = vmatpush1.msra.mxu0 0.0
        %1013 = vmatprep.subr.mxu0 0.0
        %1014 = vmatpush1.msra.mxu0 0.0
        %1015 = vmatprep.subr.mxu0 0.0
        %1016 = vmatpush1.msra.mxu0 0.0
        %1017 = vmatprep.subr.mxu0 0.0
        %1018 = vmatpush1.msra.mxu0 0.0
        %1019 = vmatprep.subr.mxu0 0.0
        %1020 = vmatpush1.msra.mxu0 0.0
        %1021 = vmatprep.subr.mxu0 0.0
        %1022 = vmatpush1.msra.mxu0 0.0
        %1023 = vmatprep.subr.mxu0 0.0
        %1024 = vmatpush1.msra.mxu0 0.0
        %1025 = vmatprep.subr.mxu0 0.0
        %1026 = vmatpush1.msra.mxu0 0.0
        %1027 = vmatprep.subr.mxu0 0.0
        %1028 = vmatpush1.msra.mxu0 0.0
        %1029 = vmatprep.subr.mxu0 0.0
        %1030 = vmatpush1.msra.mxu0 0.0
        %1031 = vmatprep.mubr.f32.mxu0 0.0
        %1032 = vmatmul.mubr.f32.gmra.mrb[0].mxu0 %v965
        %v1033 = vpop.f32.mrb[0].mxu0
        %v1034 = vadd.f32 0.0, %v1033
        %v1035 = vpop.f32.mrb[0].mxu0
        %v1036 = vadd.f32 0.0, %v1035
        %1037 = vdwg.mxu0
        %1038 = vmatprep.subr.mxu0 %v902
        %1039 = vmatpush1.msra.mxu0 %v901
        %1040 = vmatprep.subr.mxu0 %v906
        %1041 = vmatpush1.msra.mxu0 %v905
        %1042 = vmatprep.subr.mxu0 %v910
        %1043 = vmatpush1.msra.mxu0 %v909
        %1044 = vmatprep.subr.mxu0 %v914
        %1045 = vmatpush1.msra.mxu0 %v913
        %1046 = vmatprep.subr.mxu0 %v918
        %1047 = vmatpush1.msra.mxu0 %v917
        %1048 = vmatprep.subr.mxu0 %v922
        %1049 = vmatpush1.msra.mxu0 %v921
        %1050 = vmatprep.subr.mxu0 %v926
        %1051 = vmatpush1.msra.mxu0 %v925
        %1052 = vmatprep.subr.mxu0 %v930
        %1053 = vmatpush1.msra.mxu0 %v929
        %1054 = vmatprep.subr.mxu0 %v934
        %1055 = vmatpush1.msra.mxu0 %v933
        %1056 = vmatprep.subr.mxu0 %v938
        %1057 = vmatpush1.msra.mxu0 %v937
        %1058 = vmatprep.subr.mxu0 %v942
        %1059 = vmatpush1.msra.mxu0 %v941
        %1060 = vmatprep.subr.mxu0 %v946
        %1061 = vmatpush1.msra.mxu0 %v945
        %1062 = vmatprep.subr.mxu0 %v950
        %1063 = vmatpush1.msra.mxu0 %v949
        %1064 = vmatprep.subr.mxu0 %v954
        %1065 = vmatpush1.msra.mxu0 %v953
        %1066 = vmatprep.subr.mxu0 %v958
        %1067 = vmatpush1.msra.mxu0 %v957
        %1068 = vmatprep.subr.mxu0 %v962
        %1069 = vmatpush1.msra.mxu0 %v961
        %1070 = vmatprep.subr.mxu0 0.0
        %1071 = vmatpush1.msra.mxu0 0.0
        %1072 = vmatprep.subr.mxu0 0.0
        %1073 = vmatpush1.msra.mxu0 0.0
        %1074 = vmatprep.subr.mxu0 0.0
        %1075 = vmatpush1.msra.mxu0 0.0
        %1076 = vmatprep.subr.mxu0 0.0
        %1077 = vmatpush1.msra.mxu0 0.0
        %1078 = vmatprep.subr.mxu0 0.0
        %1079 = vmatpush1.msra.mxu0 0.0
        %1080 = vmatprep.subr.mxu0 0.0
        %1081 = vmatpush1.msra.mxu0 0.0
        %1082 = vmatprep.subr.mxu0 0.0
        %1083 = vmatpush1.msra.mxu0 0.0
        %1084 = vmatprep.subr.mxu0 0.0
        %1085 = vmatpush1.msra.mxu0 0.0
        %1086 = vmatprep.subr.mxu0 0.0
        %1087 = vmatpush1.msra.mxu0 0.0
        %1088 = vmatprep.subr.mxu0 0.0
        %1089 = vmatpush1.msra.mxu0 0.0
        %1090 = vmatprep.subr.mxu0 0.0
        %1091 = vmatpush1.msra.mxu0 0.0
        %1092 = vmatprep.subr.mxu0 0.0
        %1093 = vmatpush1.msra.mxu0 0.0
        %1094 = vmatprep.subr.mxu0 0.0
        %1095 = vmatpush1.msra.mxu0 0.0
        %1096 = vmatprep.subr.mxu0 0.0
        %1097 = vmatpush1.msra.mxu0 0.0
        %1098 = vmatprep.subr.mxu0 0.0
        %1099 = vmatpush1.msra.mxu0 0.0
        %1100 = vmatprep.subr.mxu0 0.0
        %1101 = vmatpush1.msra.mxu0 0.0
        %1102 = vmatprep.mubr.f32.mxu0 0.0
        %1103 = vmatmul.mubr.f32.gmra.mrb[0].mxu0 %v965
        %v1104 = vpop.f32.mrb[0].mxu0
        %v1105 = vadd.f32 0.0, %v1104
        %v1106 = vpop.f32.mrb[0].mxu0
        %v1107 = vadd.f32 0.0, %v1106
        %1108 = vdwg.mxu0
        %v1109 = vld [vmem:[%s9] sm:$0xf]
        %v1111 = vlaneseq
        %v1112 = vshrl.u32 %v1111, 7
        %v1113 = vsub.s32 0, %v1112
        %v1114 = vrot.slane %v1109, %v1113
        %v1115 = vlaneseq
        %v1116 = vshrl.u32 %v1115, 7
        %v1117 = vsub.s32 1, %v1116
        %v1118 = vrot.slane %v1109, %v1117
        %v1119 = vlaneseq
        %v1120 = vshrl.u32 %v1119, 7
        %v1121 = vsub.s32 2, %v1120
        %v1122 = vrot.slane %v1109, %v1121
        %v1123 = vlaneseq
        %v1124 = vshrl.u32 %v1123, 7
        %v1125 = vsub.s32 3, %v1124
        %v1126 = vrot.slane %v1109, %v1125
        %1131 = vmatprep.subr.mxu0 %v663
        %1132 = vmatpush1.msra.mxu0 %v662
        %1133 = vmatprep.subr.mxu0 %v667
        %1134 = vmatpush1.msra.mxu0 %v666
        %1135 = vmatprep.subr.mxu0 %v671
        %1136 = vmatpush1.msra.mxu0 %v670
        %1137 = vmatprep.subr.mxu0 %v675
        %1138 = vmatpush1.msra.mxu0 %v674
        %1139 = vmatprep.subr.mxu0 %v679
        %1140 = vmatpush1.msra.mxu0 %v678
        %1141 = vmatprep.subr.mxu0 %v683
        %1142 = vmatpush1.msra.mxu0 %v682
        %1143 = vmatprep.subr.mxu0 %v687
        %1144 = vmatpush1.msra.mxu0 %v686
        %1145 = vmatprep.subr.mxu0 %v691
        %1146 = vmatpush1.msra.mxu0 %v690
        %1147 = vmatprep.subr.mxu0 %v695
        %1148 = vmatpush1.msra.mxu0 %v694
        %1149 = vmatprep.subr.mxu0 %v699
        %1150 = vmatpush1.msra.mxu0 %v698
        %1151 = vmatprep.subr.mxu0 %v703
        %1152 = vmatpush1.msra.mxu0 %v702
        %1153 = vmatprep.subr.mxu0 %v707
        %1154 = vmatpush1.msra.mxu0 %v706
        %1155 = vmatprep.subr.mxu0 %v711
        %1156 = vmatpush1.msra.mxu0 %v710
        %1157 = vmatprep.subr.mxu0 %v715
        %1158 = vmatpush1.msra.mxu0 %v714
        %1159 = vmatprep.subr.mxu0 %v719
        %1160 = vmatpush1.msra.mxu0 %v718
        %1161 = vmatprep.subr.mxu0 %v723
        %1162 = vmatpush1.msra.mxu0 %v722
        %1163 = vmatprep.subr.mxu0 0.0
        %1164 = vmatpush1.msra.mxu0 0.0
        %1165 = vmatprep.subr.mxu0 0.0
        %1166 = vmatpush1.msra.mxu0 0.0
        %1167 = vmatprep.subr.mxu0 0.0
        %1168 = vmatpush1.msra.mxu0 0.0
        %1169 = vmatprep.subr.mxu0 0.0
        %1170 = vmatpush1.msra.mxu0 0.0
        %1171 = vmatprep.subr.mxu0 0.0
        %1172 = vmatpush1.msra.mxu0 0.0
        %1173 = vmatprep.subr.mxu0 0.0
        %1174 = vmatpush1.msra.mxu0 0.0
        %1175 = vmatprep.subr.mxu0 0.0
        %1176 = vmatpush1.msra.mxu0 0.0
        %1177 = vmatprep.subr.mxu0 0.0
        %1178 = vmatpush1.msra.mxu0 0.0
        %1179 = vmatprep.subr.mxu0 0.0
        %1180 = vmatpush1.msra.mxu0 0.0
        %1181 = vmatprep.subr.mxu0 0.0
        %1182 = vmatpush1.msra.mxu0 0.0
        %1183 = vmatprep.subr.mxu0 0.0
        %1184 = vmatpush1.msra.mxu0 0.0
        %1185 = vmatprep.subr.mxu0 0.0
        %1186 = vmatpush1.msra.mxu0 0.0
        %1187 = vmatprep.subr.mxu0 0.0
        %1188 = vmatpush1.msra.mxu0 0.0
        %1189 = vmatprep.subr.mxu0 0.0
        %1190 = vmatpush1.msra.mxu0 0.0
        %1191 = vmatprep.subr.mxu0 0.0
        %1192 = vmatpush1.msra.mxu0 0.0
        %1193 = vmatprep.subr.mxu0 0.0
        %1194 = vmatpush1.msra.mxu0 0.0
        %1195 = vmatprep.mubr.f32.mxu0 0.0
        %1196 = vmatmul.mubr.f32.gmra.mrb[0].mxu0 %v440
        %v1197 = vpop.f32.mrb[0].mxu0
        %v1198 = vadd.f32 %v1114, %v1197
        %v1199 = vpop.f32.mrb[0].mxu0
        %v1200 = vadd.f32 %v1118, %v1199
        %1201 = vmatprep.mubr.f32.mxu0 0.0
        %1202 = vmatmul.mubr.f32.gmra.mrb[0].mxu0 %v441
        %v1203 = vpop.f32.mrb[0].mxu0
        %v1204 = vadd.f32 %v1114, %v1203
        %v1205 = vpop.f32.mrb[0].mxu0
        %v1206 = vadd.f32 %v1118, %v1205
        %1207 = vmatprep.mubr.f32.mxu0 0.0
        %1208 = vmatmul.mubr.f32.gmra.mrb[0].mxu0 %v442
        %v1209 = vpop.f32.mrb[0].mxu0
        %v1210 = vadd.f32 %v1114, %v1209
        %v1211 = vpop.f32.mrb[0].mxu0
        %v1212 = vadd.f32 %v1118, %v1211
        %1213 = vmatprep.mubr.f32.mxu0 0.0
        %1214 = vmatmul.mubr.f32.gmra.mrb[0].mxu0 %v443
        %v1215 = vpop.f32.mrb[0].mxu0
        %v1216 = vadd.f32 %v1114, %v1215
        %v1217 = vpop.f32.mrb[0].mxu0
        %v1218 = vadd.f32 %v1118, %v1217
        %1219 = vdwg.mxu0
        %1220 = vmatprep.subr.mxu0 %v665
        %1221 = vmatpush1.msra.mxu0 %v664
        %1222 = vmatprep.subr.mxu0 %v669
        %1223 = vmatpush1.msra.mxu0 %v668
        %1224 = vmatprep.subr.mxu0 %v673
        %1225 = vmatpush1.msra.mxu0 %v672
        %1226 = vmatprep.subr.mxu0 %v677
        %1227 = vmatpush1.msra.mxu0 %v676
        %1228 = vmatprep.subr.mxu0 %v681
        %1229 = vmatpush1.msra.mxu0 %v680
        %1230 = vmatprep.subr.mxu0 %v685
        %1231 = vmatpush1.msra.mxu0 %v684
        %1232 = vmatprep.subr.mxu0 %v689
        %1233 = vmatpush1.msra.mxu0 %v688
        %1234 = vmatprep.subr.mxu0 %v693
        %1235 = vmatpush1.msra.mxu0 %v692
        %1236 = vmatprep.subr.mxu0 %v697
        %1237 = vmatpush1.msra.mxu0 %v696
        %1238 = vmatprep.subr.mxu0 %v701
        %1239 = vmatpush1.msra.mxu0 %v700
        %1240 = vmatprep.subr.mxu0 %v705
        %1241 = vmatpush1.msra.mxu0 %v704
        %1242 = vmatprep.subr.mxu0 %v709
        %1243 = vmatpush1.msra.mxu0 %v708
        %1244 = vmatprep.subr.mxu0 %v713
        %1245 = vmatpush1.msra.mxu0 %v712
        %1246 = vmatprep.subr.mxu0 %v717
        %1247 = vmatpush1.msra.mxu0 %v716
        %1248 = vmatprep.subr.mxu0 %v721
        %1249 = vmatpush1.msra.mxu0 %v720
        %1250 = vmatprep.subr.mxu0 %v725
        %1251 = vmatpush1.msra.mxu0 %v724
        %1252 = vmatprep.subr.mxu0 0.0
        %1253 = vmatpush1.msra.mxu0 0.0
        %1254 = vmatprep.subr.mxu0 0.0
        %1255 = vmatpush1.msra.mxu0 0.0
        %1256 = vmatprep.subr.mxu0 0.0
        %1257 = vmatpush1.msra.mxu0 0.0
        %1258 = vmatprep.subr.mxu0 0.0
        %1259 = vmatpush1.msra.mxu0 0.0
        %1260 = vmatprep.subr.mxu0 0.0
        %1261 = vmatpush1.msra.mxu0 0.0
        %1262 = vmatprep.subr.mxu0 0.0
        %1263 = vmatpush1.msra.mxu0 0.0
        %1264 = vmatprep.subr.mxu0 0.0
        %1265 = vmatpush1.msra.mxu0 0.0
        %1266 = vmatprep.subr.mxu0 0.0
        %1267 = vmatpush1.msra.mxu0 0.0
        %1268 = vmatprep.subr.mxu0 0.0
        %1269 = vmatpush1.msra.mxu0 0.0
        %1270 = vmatprep.subr.mxu0 0.0
        %1271 = vmatpush1.msra.mxu0 0.0
        %1272 = vmatprep.subr.mxu0 0.0
        %1273 = vmatpush1.msra.mxu0 0.0
        %1274 = vmatprep.subr.mxu0 0.0
        %1275 = vmatpush1.msra.mxu0 0.0
        %1276 = vmatprep.subr.mxu0 0.0
        %1277 = vmatpush1.msra.mxu0 0.0
        %1278 = vmatprep.subr.mxu0 0.0
        %1279 = vmatpush1.msra.mxu0 0.0
        %1280 = vmatprep.subr.mxu0 0.0
        %1281 = vmatpush1.msra.mxu0 0.0
        %1282 = vmatprep.subr.mxu0 0.0
        %1283 = vmatpush1.msra.mxu0 0.0
        %1284 = vmatprep.mubr.f32.mxu0 0.0
        %1285 = vmatmul.mubr.f32.gmra.mrb[0].mxu0 %v440
        %v1286 = vpop.f32.mrb[0].mxu0
        %v1287 = vadd.f32 %v1122, %v1286
        %v1288 = vpop.f32.mrb[0].mxu0
        %v1289 = vadd.f32 %v1126, %v1288
        %1290 = vmatprep.mubr.f32.mxu0 0.0
        %1291 = vmatmul.mubr.f32.gmra.mrb[0].mxu0 %v441
        %v1292 = vpop.f32.mrb[0].mxu0
        %v1293 = vadd.f32 %v1122, %v1292
        %v1294 = vpop.f32.mrb[0].mxu0
        %v1295 = vadd.f32 %v1126, %v1294
        %1296 = vmatprep.mubr.f32.mxu0 0.0
        %1297 = vmatmul.mubr.f32.gmra.mrb[0].mxu0 %v442
        %v1298 = vpop.f32.mrb[0].mxu0
        %v1299 = vadd.f32 %v1122, %v1298
        %v1300 = vpop.f32.mrb[0].mxu0
        %v1301 = vadd.f32 %v1126, %v1300
        %1302 = vmatprep.mubr.f32.mxu0 0.0
        %1303 = vmatmul.mubr.f32.gmra.mrb[0].mxu0 %v443
        %v1304 = vpop.f32.mrb[0].mxu0
        %v1305 = vadd.f32 %v1122, %v1304
        %v1306 = vpop.f32.mrb[0].mxu0
        %v1307 = vadd.f32 %v1126, %v1306
        %1308 = vdwg.mxu0
        %v1313 = vcombine.low %v1034, %v1036
        %v1314 = vcombine.low %v1105, %v1107
        %v1316 = vunpack.c.l.s4 1966171168
        %v1317 = vunpack.c.0.s8 %v1316
        %v1318 = vlaneseq
        %v1319 = vshrl.u32 %v1318, 7
        %v1320 = vsub.s32 %v1317, %v1319
        %v1321 = vrot.slane %v1313, %v1320
        %v1323 = vunpack.c.l.s4 1966171168
        %v1324 = vunpack.c.0.s8 %v1323
        %v1325 = vlaneseq
        %v1326 = vshrl.u32 %v1325, 7
        %v1327 = vsub.s32 %v1324, %v1326
        %v1328 = vrot.slane %v1314, %v1327
        %v1329 = vcombine.low %v1321, %v1328
        %v1330 = vcombine.high %v1321, %v1328
        %v1332 = vunpack.c.l.s4 1966171168
        %v1333 = vunpack.c.0.s8 %v1332
        %v1334 = vlaneseq
        %v1335 = vshrl.u32 %v1334, 7
        %v1336 = vsub.s32 %v1333, %v1335
        %v1337 = vrot.slane %v1329, %v1336
        %v1339 = vunpack.c.l.s4 1966171168
        %v1340 = vunpack.c.0.s8 %v1339
        %v1341 = vlaneseq
        %v1342 = vshrl.u32 %v1341, 7
        %v1343 = vsub.s32 %v1340, %v1342
        %v1344 = vrot.slane %v1330, %v1343
        %v1345 = vlaneseq
        %v1346 = vshrl.u32 %v1345, 7
        %v1347 = vsub.s32 0, %v1346
        %v1348 = vrot.slane %v1337, %v1347
        %v1349 = vlaneseq
        %v1350 = vshrl.u32 %v1349, 7
        %v1351 = vsub.s32 1, %v1350
        %v1352 = vrot.slane %v1337, %v1351
        %v1353 = vlaneseq
        %v1354 = vshrl.u32 %v1353, 7
        %v1355 = vsub.s32 2, %v1354
        %v1356 = vrot.slane %v1337, %v1355
        %v1357 = vlaneseq
        %v1358 = vshrl.u32 %v1357, 7
        %v1359 = vsub.s32 3, %v1358
        %v1360 = vrot.slane %v1337, %v1359
        %v1361 = vlaneseq
        %v1362 = vshrl.u32 %v1361, 7
        %v1363 = vsub.s32 0, %v1362
        %v1364 = vrot.slane %v1344, %v1363
        %v1365 = vlaneseq
        %v1366 = vshrl.u32 %v1365, 7
        %v1367 = vsub.s32 1, %v1366
        %v1368 = vrot.slane %v1344, %v1367
        %v1369 = vlaneseq
        %v1370 = vshrl.u32 %v1369, 7
        %v1371 = vsub.s32 2, %v1370
        %v1372 = vrot.slane %v1344, %v1371
        %v1373 = vlaneseq
        %v1374 = vshrl.u32 %v1373, 7
        %v1375 = vsub.s32 3, %v1374
        %v1376 = vrot.slane %v1344, %v1375
        %v1385 = vadd.f32 %v1198, %v1348
        %v1386 = vadd.f32 %v1200, %v1352
        %v1387 = vadd.f32 %v1287, %v1356
        %v1388 = vadd.f32 %v1289, %v1360
        %v1389 = vadd.f32 %v1204, %v1348
        %v1390 = vadd.f32 %v1206, %v1352
        %v1391 = vadd.f32 %v1293, %v1356
        %v1392 = vadd.f32 %v1295, %v1360
        %v1393 = vadd.f32 %v1210, %v1364
        %v1394 = vadd.f32 %v1212, %v1368
        %v1395 = vadd.f32 %v1299, %v1372
        %v1396 = vadd.f32 %v1301, %v1376
        %v1397 = vadd.f32 %v1216, %v1364
        %v1398 = vadd.f32 %v1218, %v1368
        %v1399 = vadd.f32 %v1305, %v1372
        %v1400 = vadd.f32 %v1307, %v1376
        %v1401 = vtanh.pop %v1385
        %v1402 = vtanh.pop %v1386
        %v1403 = vtanh.pop %v1387
        %v1404 = vtanh.pop %v1388
        %v1405 = vtanh.pop %v1389
        %v1406 = vtanh.pop %v1390
        %v1407 = vtanh.pop %v1391
        %v1408 = vtanh.pop %v1392
        %v1409 = vtanh.pop %v1393
        %v1410 = vtanh.pop %v1394
        %v1411 = vtanh.pop %v1395
        %v1412 = vtanh.pop %v1396
        %v1413 = vtanh.pop %v1397
        %v1414 = vtanh.pop %v1398
        %v1415 = vtanh.pop %v1399
        %v1416 = vtanh.pop %v1400
        %v1417 = vld [vmem:[%s10] sm:$0xf]
        %v1419 = vlaneseq
        %v1420 = vshrl.u32 %v1419, 7
        %v1421 = vsub.s32 0, %v1420
        %v1422 = vrot.slane %v1417, %v1421
        %v1423 = vlaneseq
        %v1424 = vshrl.u32 %v1423, 7
        %v1425 = vsub.s32 1, %v1424
        %v1426 = vrot.slane %v1417, %v1425
        %v1427 = vlaneseq
        %v1428 = vshrl.u32 %v1427, 7
        %v1429 = vsub.s32 2, %v1428
        %v1430 = vrot.slane %v1417, %v1429
        %v1431 = vlaneseq
        %v1432 = vshrl.u32 %v1431, 7
        %v1433 = vsub.s32 3, %v1432
        %v1434 = vrot.slane %v1417, %v1433
        %v1439 = vmul.f32 %v1401, %v1422
        %v1440 = vmul.f32 %v1402, %v1426
        %v1441 = vmul.f32 %v1403, %v1430
        %v1442 = vmul.f32 %v1404, %v1434
        %v1443 = vmul.f32 %v1405, %v1422
        %v1444 = vmul.f32 %v1406, %v1426
        %v1445 = vmul.f32 %v1407, %v1430
        %v1446 = vmul.f32 %v1408, %v1434
        %v1447 = vmul.f32 %v1409, %v1422
        %v1448 = vmul.f32 %v1410, %v1426
        %v1449 = vmul.f32 %v1411, %v1430
        %v1450 = vmul.f32 %v1412, %v1434
        %v1451 = vmul.f32 %v1413, %v1422
        %v1452 = vmul.f32 %v1414, %v1426
        %v1453 = vmul.f32 %v1415, %v1430
        %v1454 = vmul.f32 %v1416, %v1434
        %v1455 = vadd.f32 %v1439, %v1440
        %v1456 = vadd.f32 %v1455, %v1441
        %v1457 = vadd.f32 %v1456, %v1442
        %1458 = vadd.xlane.f32.xlu0 %v1457
        %v1459 = vpop.xlane.xlu0 %1458
        %v1460 = vadd.f32 %v1443, %v1444
        %v1461 = vadd.f32 %v1460, %v1445
        %v1462 = vadd.f32 %v1461, %v1446
        %1463 = vadd.xlane.f32.xlu0 %v1462
        %v1464 = vpop.xlane.xlu0 %1463
        %v1465 = vadd.f32 %v1447, %v1448
        %v1466 = vadd.f32 %v1465, %v1449
        %v1467 = vadd.f32 %v1466, %v1450
        %1468 = vadd.xlane.f32.xlu0 %v1467
        %v1469 = vpop.xlane.xlu0 %1468
        %v1470 = vadd.f32 %v1451, %v1452
        %v1471 = vadd.f32 %v1470, %v1453
        %v1472 = vadd.f32 %v1471, %v1454
        %1473 = vadd.xlane.f32.xlu0 %v1472
        %v1474 = vpop.xlane.xlu0 %1473
        %v1479 = vlaneseq
        %v1480 = vshrl.u32 %v1479, 7
        %v1481 = vsub.s32 %v807, %v1480
        %v1482 = vrot.slane %v1459, %v1481
        %v1483 = vadd.s32 %v807, 4294967288
        %v1484 = vlaneseq
        %v1485 = vshrl.u32 %v1484, 7
        %v1486 = vsub.s32 %v1483, %v1485
        %v1487 = vrot.slane %v1464, %v1486
        %vm1488 = vcmask 130112
        %v1489 = vsel %vm1488, %v1487, %v1482
        %v1490 = vlaneseq
        %v1491 = vshrl.u32 %v1490, 7
        %v1492 = vsub.s32 %v807, %v1491
        %v1493 = vrot.slane %v1469, %v1492
        %v1494 = vlaneseq
        %v1495 = vshrl.u32 %v1494, 7
        %v1496 = vsub.s32 %v1483, %v1495
        %v1497 = vrot.slane %v1474, %v1496
        %v1498 = vsel %vm1488, %v1497, %v1493
        %v1499 = vsel %vm816, %v1498, %v1489
        %vm1501 = vcmask 123904
        %v1502 = vsel %vm1501, %v1499, -inf
        %1503 = vmax.xlane.f32.xlu0 %v1502
        %v1504 = vpop.xlane.xlu0 %1503
        %v1506 = vlaneseq
        %v1507 = vshrl.u32 %v1506, 7
        %v1508 = vsub.s32 0, %v1507
        %v1509 = vrot.slane %v1504, %v1508
        %v1510 = vlaneseq
        %v1511 = vshrl.u32 %v1510, 7
        %v1512 = vsub.s32 1, %v1511
        %v1513 = vrot.slane %v1504, %v1512
        %v1516 = vsub.f32 %v1459, %v1509
        %v1517 = vsub.f32 %v1464, %v1509
        %v1518 = vsub.f32 %v1469, %v1513
        %v1519 = vsub.f32 %v1474, %v1513
        %v1520 = vmul.f32 %v1516, 1.442695
        %v1521 = vpow.pop %v1520
        %v1522 = vmul.f32 %v1517, 1.442695
        %v1523 = vpow.pop %v1522
        %v1524 = vmul.f32 %v1518, 1.442695
        %v1525 = vpow.pop %v1524
        %v1526 = vmul.f32 %v1519, 1.442695
        %v1527 = vpow.pop %v1526
        %1532 = vset.pattern.permute.xlu0 0
        %1533 = vperm.xlu0 %1532, %v1521
        %v1534 = vpop.permute.xlu0 %1533
        %1535 = vset.pattern.permute.xlu0 0
        %1536 = vperm.xlu0 %1535, %v1523
        %v1537 = vpop.permute.xlu0 %1536
        %1538 = vset.pattern.permute.xlu0 0
        %1539 = vperm.xlu0 %1538, %v1525
        %v1540 = vpop.permute.xlu0 %1539
        %1541 = vset.pattern.permute.xlu0 0
        %1542 = vperm.xlu0 %1541, %v1527
        %v1543 = vpop.permute.xlu0 %1542
        %v1544 = vlaneseq
        %v1545 = vshrl.u32 %v1544, 7
        %v1546 = vsub.s32 %v807, %v1545
        %v1547 = vrot.slane %v1534, %v1546
        %v1548 = vlaneseq
        %v1549 = vshrl.u32 %v1548, 7
        %v1550 = vsub.s32 %v1483, %v1549
        %v1551 = vrot.slane %v1537, %v1550
        %v1552 = vsel %vm1488, %v1551, %v1547
        %v1553 = vlaneseq
        %v1554 = vshrl.u32 %v1553, 7
        %v1555 = vsub.s32 %v807, %v1554
        %v1556 = vrot.slane %v1540, %v1555
        %v1557 = vlaneseq
        %v1558 = vshrl.u32 %v1557, 7
        %v1559 = vsub.s32 %v1483, %v1558
        %v1560 = vrot.slane %v1543, %v1559
        %v1561 = vsel %vm1488, %v1560, %v1556
        %v1562 = vsel %vm816, %v1561, %v1552
        %v1564 = vsel %vm1501, %v1562, 0.0
        %1565 = vadd.xlane.f32.xlu0 %v1564
        %v1566 = vpop.xlane.xlu0 %1565
        %v1567 = vrcp.pop %v1566
        %v1569 = vlaneseq
        %v1570 = vshrl.u32 %v1569, 7
        %v1571 = vsub.s32 0, %v1570
        %v1572 = vrot.slane %v1567, %v1571
        %v1573 = vlaneseq
        %v1574 = vshrl.u32 %v1573, 7
        %v1575 = vsub.s32 1, %v1574
        %v1576 = vrot.slane %v1567, %v1575
        %v1579 = vmul.f32 %v1521, %v1572
        %v1580 = vmul.f32 %v1523, %v1572
        %v1581 = vmul.f32 %v1525, %v1576
        %v1582 = vmul.f32 %v1527, %v1576
        %1584 = vset.pattern.permute.xlu0 0
        %1585 = vperm.xlu0 %1584, %v1579
        %v1586 = vpop.permute.xlu0 %1585
        %1589 = vset.pattern.permute.xlu0 0
        %1590 = vperm.xlu0 %1589, %v1580
        %v1591 = vpop.permute.xlu0 %1590
        %1594 = vset.pattern.permute.xlu0 0
        %1595 = vperm.xlu0 %1594, %v1581
        %v1596 = vpop.permute.xlu0 %1595
        %1599 = vset.pattern.permute.xlu0 0
        %1600 = vperm.xlu0 %1599, %v1582
        %v1601 = vpop.permute.xlu0 %1600
        %v1603 = vmul.f32 %v1586, %v440
        %v1604 = vmul.f32 %v1591, %v441
        %v1605 = vmul.f32 %v1596, %v442
        %v1606 = vmul.f32 %v1601, %v443
        %v1607 = vadd.f32 %v1603, %v1604
        %v1608 = vrot.slane %v1607, 4
        %v1609 = vadd.f32 %v1607, %v1608
        %v1610 = vrot.slane %v1609, 2
        %v1611 = vadd.f32 %v1609, %v1610
        %v1612 = vrot.slane %v1611, 1
        %v1613 = vadd.f32 %v1611, %v1612
        %v1614 = vadd.f32 %v1605, %v1606
        %v1615 = vrot.slane %v1614, 4
        %v1616 = vadd.f32 %v1614, %v1615
        %v1617 = vrot.slane %v1616, 2
        %v1618 = vadd.f32 %v1616, %v1617
        %v1619 = vrot.slane %v1618, 1
        %v1620 = vadd.f32 %v1618, %v1619
        %v1621 = vld [vmem:[%s3] sm:$0xff]
        %v1622 = vld [vmem:[%s3 + $0x8] sm:$0xff]
        %v1623 = vld [vmem:[%s3 + $0x10] sm:$0xff]
        %v1624 = vld [vmem:[%s3 + $0x18] sm:$0xff]
        %v1625 = vld [vmem:[%s3 + $0x20] sm:$0xff]
        %v1626 = vld [vmem:[%s3 + $0x28] sm:$0xff]
        %v1627 = vld [vmem:[%s3 + $0x30] sm:$0xff]
        %v1628 = vld [vmem:[%s3 + $0x38] sm:$0xff]
        %v1629 = vld [vmem:[%s3 + $0x40] sm:$0xff]
        %v1630 = vld [vmem:[%s3 + $0x48] sm:$0xff]
        %v1631 = vld [vmem:[%s3 + $0x50] sm:$0xff]
        %v1632 = vld [vmem:[%s3 + $0x58] sm:$0xff]
        %v1633 = vld [vmem:[%s3 + $0x60] sm:$0xff]
        %v1634 = vld [vmem:[%s3 + $0x68] sm:$0xff]
        %v1635 = vld [vmem:[%s3 + $0x70] sm:$0xff]
        %v1636 = vld [vmem:[%s3 + $0x78] sm:$0xff]
        %v1637 = vld [vmem:[%s3 + $0x80] sm:$0xff]
        %v1638 = vld [vmem:[%s3 + $0x88] sm:$0xff]
        %v1639 = vld [vmem:[%s3 + $0x90] sm:$0xff]
        %v1640 = vld [vmem:[%s3 + $0x98] sm:$0xff]
        %v1641 = vld [vmem:[%s3 + $0xa0] sm:$0xff]
        %v1642 = vld [vmem:[%s3 + $0xa8] sm:$0xff]
        %v1643 = vld [vmem:[%s3 + $0xb0] sm:$0xff]
        %v1644 = vld [vmem:[%s3 + $0xb8] sm:$0xff]
        %v1645 = vld [vmem:[%s3 + $0xc0] sm:$0xff]
        %v1646 = vld [vmem:[%s3 + $0xc8] sm:$0xff]
        %v1647 = vld [vmem:[%s3 + $0xd0] sm:$0xff]
        %v1648 = vld [vmem:[%s3 + $0xd8] sm:$0xff]
        %v1649 = vld [vmem:[%s3 + $0xe0] sm:$0xff]
        %v1650 = vld [vmem:[%s3 + $0xe8] sm:$0xff]
        %v1651 = vld [vmem:[%s3 + $0xf0] sm:$0xff]
        %v1652 = vld [vmem:[%s3 + $0xf8] sm:$0xff]
        %v1653 = vld [vmem:[%s3 + $0x100] sm:$0xff]
        %v1654 = vld [vmem:[%s3 + $0x108] sm:$0xff]
        %v1655 = vld [vmem:[%s3 + $0x110] sm:$0xff]
        %v1656 = vld [vmem:[%s3 + $0x118] sm:$0xff]
        %v1657 = vld [vmem:[%s3 + $0x120] sm:$0xff]
        %v1658 = vld [vmem:[%s3 + $0x128] sm:$0xff]
        %v1659 = vld [vmem:[%s3 + $0x130] sm:$0xff]
        %v1660 = vld [vmem:[%s3 + $0x138] sm:$0xff]
        %v1661 = vld [vmem:[%s3 + $0x140] sm:$0xff]
        %v1662 = vld [vmem:[%s3 + $0x148] sm:$0xff]
        %v1663 = vld [vmem:[%s3 + $0x150] sm:$0xff]
        %v1664 = vld [vmem:[%s3 + $0x158] sm:$0xff]
        %v1665 = vld [vmem:[%s3 + $0x160] sm:$0xff]
        %v1666 = vld [vmem:[%s3 + $0x168] sm:$0xff]
        %v1667 = vld [vmem:[%s3 + $0x170] sm:$0xff]
        %v1668 = vld [vmem:[%s3 + $0x178] sm:$0xff]
        %v1669 = vld [vmem:[%s3 + $0x180] sm:$0xff]
        %v1670 = vld [vmem:[%s3 + $0x188] sm:$0xff]
        %v1671 = vld [vmem:[%s3 + $0x190] sm:$0xff]
        %v1672 = vld [vmem:[%s3 + $0x198] sm:$0xff]
        %v1673 = vld [vmem:[%s3 + $0x1a0] sm:$0xff]
        %v1674 = vld [vmem:[%s3 + $0x1a8] sm:$0xff]
        %v1675 = vld [vmem:[%s3 + $0x1b0] sm:$0xff]
        %v1676 = vld [vmem:[%s3 + $0x1b8] sm:$0xff]
        %v1677 = vld [vmem:[%s3 + $0x1c0] sm:$0xff]
        %v1678 = vld [vmem:[%s3 + $0x1c8] sm:$0xff]
        %v1679 = vld [vmem:[%s3 + $0x1d0] sm:$0xff]
        %v1680 = vld [vmem:[%s3 + $0x1d8] sm:$0xff]
        %v1681 = vld [vmem:[%s3 + $0x1e0] sm:$0xff]
        %v1682 = vld [vmem:[%s3 + $0x1e8] sm:$0xff]
        %v1683 = vld [vmem:[%s3 + $0x1f0] sm:$0xff]
        %v1684 = vld [vmem:[%s3 + $0x1f8] sm:$0xff]
        %v1687 = vsel %vm816, %v1620, %v1613
        %1689 = vmatprep.subr.mxu0 %v1622
        %1690 = vmatpush1.msra.mxu0 %v1621
        %1691 = vmatprep.subr.mxu0 %v1626
        %1692 = vmatpush1.msra.mxu0 %v1625
        %1693 = vmatprep.subr.mxu0 %v1630
        %1694 = vmatpush1.msra.mxu0 %v1629
        %1695 = vmatprep.subr.mxu0 %v1634
        %1696 = vmatpush1.msra.mxu0 %v1633
        %1697 = vmatprep.subr.mxu0 %v1638
        %1698 = vmatpush1.msra.mxu0 %v1637
        %1699 = vmatprep.subr.mxu0 %v1642
        %1700 = vmatpush1.msra.mxu0 %v1641
        %1701 = vmatprep.subr.mxu0 %v1646
        %1702 = vmatpush1.msra.mxu0 %v1645
        %1703 = vmatprep.subr.mxu0 %v1650
        %1704 = vmatpush1.msra.mxu0 %v1649
        %1705 = vmatprep.subr.mxu0 %v1654
        %1706 = vmatpush1.msra.mxu0 %v1653
        %1707 = vmatprep.subr.mxu0 %v1658
        %1708 = vmatpush1.msra.mxu0 %v1657
        %1709 = vmatprep.subr.mxu0 %v1662
        %1710 = vmatpush1.msra.mxu0 %v1661
        %1711 = vmatprep.subr.mxu0 %v1666
        %1712 = vmatpush1.msra.mxu0 %v1665
        %1713 = vmatprep.subr.mxu0 %v1670
        %1714 = vmatpush1.msra.mxu0 %v1669
        %1715 = vmatprep.subr.mxu0 %v1674
        %1716 = vmatpush1.msra.mxu0 %v1673
        %1717 = vmatprep.subr.mxu0 %v1678
        %1718 = vmatpush1.msra.mxu0 %v1677
        %1719 = vmatprep.subr.mxu0 %v1682
        %1720 = vmatpush1.msra.mxu0 %v1681
        %1721 = vmatprep.subr.mxu0 0.0
        %1722 = vmatpush1.msra.mxu0 0.0
        %1723 = vmatprep.subr.mxu0 0.0
        %1724 = vmatpush1.msra.mxu0 0.0
        %1725 = vmatprep.subr.mxu0 0.0
        %1726 = vmatpush1.msra.mxu0 0.0
        %1727 = vmatprep.subr.mxu0 0.0
        %1728 = vmatpush1.msra.mxu0 0.0
        %1729 = vmatprep.subr.mxu0 0.0
        %1730 = vmatpush1.msra.mxu0 0.0
        %1731 = vmatprep.subr.mxu0 0.0
        %1732 = vmatpush1.msra.mxu0 0.0
        %1733 = vmatprep.subr.mxu0 0.0
        %1734 = vmatpush1.msra.mxu0 0.0
        %1735 = vmatprep.subr.mxu0 0.0
        %1736 = vmatpush1.msra.mxu0 0.0
        %1737 = vmatprep.subr.mxu0 0.0
        %1738 = vmatpush1.msra.mxu0 0.0
        %1739 = vmatprep.subr.mxu0 0.0
        %1740 = vmatpush1.msra.mxu0 0.0
        %1741 = vmatprep.subr.mxu0 0.0
        %1742 = vmatpush1.msra.mxu0 0.0
        %1743 = vmatprep.subr.mxu0 0.0
        %1744 = vmatpush1.msra.mxu0 0.0
        %1745 = vmatprep.subr.mxu0 0.0
        %1746 = vmatpush1.msra.mxu0 0.0
        %1747 = vmatprep.subr.mxu0 0.0
        %1748 = vmatpush1.msra.mxu0 0.0
        %1749 = vmatprep.subr.mxu0 0.0
        %1750 = vmatpush1.msra.mxu0 0.0
        %1751 = vmatprep.subr.mxu0 0.0
        %1752 = vmatpush1.msra.mxu0 0.0
        %1753 = vmatprep.mubr.f32.mxu0 0.0
        %1754 = vmatmul.mubr.f32.gmra.mrb[0].mxu0 %v1687
        %v1755 = vpop.f32.mrb[0].mxu0
        %v1756 = vadd.f32 0.0, %v1755
        %v1757 = vpop.f32.mrb[0].mxu0
        %v1758 = vadd.f32 0.0, %v1757
        %1759 = vdwg.mxu0
        %1760 = vmatprep.subr.mxu0 %v1624
        %1761 = vmatpush1.msra.mxu0 %v1623
        %1762 = vmatprep.subr.mxu0 %v1628
        %1763 = vmatpush1.msra.mxu0 %v1627
        %1764 = vmatprep.subr.mxu0 %v1632
        %1765 = vmatpush1.msra.mxu0 %v1631
        %1766 = vmatprep.subr.mxu0 %v1636
        %1767 = vmatpush1.msra.mxu0 %v1635
        %1768 = vmatprep.subr.mxu0 %v1640
        %1769 = vmatpush1.msra.mxu0 %v1639
        %1770 = vmatprep.subr.mxu0 %v1644
        %1771 = vmatpush1.msra.mxu0 %v1643
        %1772 = vmatprep.subr.mxu0 %v1648
        %1773 = vmatpush1.msra.mxu0 %v1647
        %1774 = vmatprep.subr.mxu0 %v1652
        %1775 = vmatpush1.msra.mxu0 %v1651
        %1776 = vmatprep.subr.mxu0 %v1656
        %1777 = vmatpush1.msra.mxu0 %v1655
        %1778 = vmatprep.subr.mxu0 %v1660
        %1779 = vmatpush1.msra.mxu0 %v1659
        %1780 = vmatprep.subr.mxu0 %v1664
        %1781 = vmatpush1.msra.mxu0 %v1663
        %1782 = vmatprep.subr.mxu0 %v1668
        %1783 = vmatpush1.msra.mxu0 %v1667
        %1784 = vmatprep.subr.mxu0 %v1672
        %1785 = vmatpush1.msra.mxu0 %v1671
        %1786 = vmatprep.subr.mxu0 %v1676
        %1787 = vmatpush1.msra.mxu0 %v1675
        %1788 = vmatprep.subr.mxu0 %v1680
        %1789 = vmatpush1.msra.mxu0 %v1679
        %1790 = vmatprep.subr.mxu0 %v1684
        %1791 = vmatpush1.msra.mxu0 %v1683
        %1792 = vmatprep.subr.mxu0 0.0
        %1793 = vmatpush1.msra.mxu0 0.0
        %1794 = vmatprep.subr.mxu0 0.0
        %1795 = vmatpush1.msra.mxu0 0.0
        %1796 = vmatprep.subr.mxu0 0.0
        %1797 = vmatpush1.msra.mxu0 0.0
        %1798 = vmatprep.subr.mxu0 0.0
        %1799 = vmatpush1.msra.mxu0 0.0
        %1800 = vmatprep.subr.mxu0 0.0
        %1801 = vmatpush1.msra.mxu0 0.0
        %1802 = vmatprep.subr.mxu0 0.0
        %1803 = vmatpush1.msra.mxu0 0.0
        %1804 = vmatprep.subr.mxu0 0.0
        %1805 = vmatpush1.msra.mxu0 0.0
        %1806 = vmatprep.subr.mxu0 0.0
        %1807 = vmatpush1.msra.mxu0 0.0
        %1808 = vmatprep.subr.mxu0 0.0
        %1809 = vmatpush1.msra.mxu0 0.0
        %1810 = vmatprep.subr.mxu0 0.0
        %1811 = vmatpush1.msra.mxu0 0.0
        %1812 = vmatprep.subr.mxu0 0.0
        %1813 = vmatpush1.msra.mxu0 0.0
        %1814 = vmatprep.subr.mxu0 0.0
        %1815 = vmatpush1.msra.mxu0 0.0
        %1816 = vmatprep.subr.mxu0 0.0
        %1817 = vmatpush1.msra.mxu0 0.0
        %1818 = vmatprep.subr.mxu0 0.0
        %1819 = vmatpush1.msra.mxu0 0.0
        %1820 = vmatprep.subr.mxu0 0.0
        %1821 = vmatpush1.msra.mxu0 0.0
        %1822 = vmatprep.subr.mxu0 0.0
        %1823 = vmatpush1.msra.mxu0 0.0
        %1824 = vmatprep.mubr.f32.mxu0 0.0
        %1825 = vmatmul.mubr.f32.gmra.mrb[0].mxu0 %v1687
        %v1826 = vpop.f32.mrb[0].mxu0
        %v1827 = vadd.f32 0.0, %v1826
        %v1828 = vpop.f32.mrb[0].mxu0
        %v1829 = vadd.f32 0.0, %v1828
        %1830 = vdwg.mxu0
        %v1831 = vld [vmem:[%s5] sm:$0xf]
        %v1833 = vlaneseq
        %v1834 = vshrl.u32 %v1833, 7
        %v1835 = vsub.s32 0, %v1834
        %v1836 = vrot.slane %v1831, %v1835
        %v1837 = vlaneseq
        %v1838 = vshrl.u32 %v1837, 7
        %v1839 = vsub.s32 1, %v1838
        %v1840 = vrot.slane %v1831, %v1839
        %v1841 = vlaneseq
        %v1842 = vshrl.u32 %v1841, 7
        %v1843 = vsub.s32 2, %v1842
        %v1844 = vrot.slane %v1831, %v1843
        %v1845 = vlaneseq
        %v1846 = vshrl.u32 %v1845, 7
        %v1847 = vsub.s32 3, %v1846
        %v1848 = vrot.slane %v1831, %v1847
        %v1853 = vadd.f32 %v575, %v1836
        %v1854 = vadd.f32 %v577, %v1840
        %v1855 = vadd.f32 %v652, %v1844
        %v1856 = vadd.f32 %v654, %v1848
        %v1857 = vadd.f32 %v581, %v1836
        %v1858 = vadd.f32 %v583, %v1840
        %v1859 = vadd.f32 %v658, %v1844
        %v1860 = vadd.f32 %v660, %v1848
        %v1865 = vcombine.low %v1756, %v1758
        %v1866 = vcombine.low %v1827, %v1829
        %v1868 = vunpack.c.l.s4 1966171168
        %v1869 = vunpack.c.0.s8 %v1868
        %v1870 = vlaneseq
        %v1871 = vshrl.u32 %v1870, 7
        %v1872 = vsub.s32 %v1869, %v1871
        %v1873 = vrot.slane %v1865, %v1872
        %v1875 = vunpack.c.l.s4 1966171168
        %v1876 = vunpack.c.0.s8 %v1875
        %v1877 = vlaneseq
        %v1878 = vshrl.u32 %v1877, 7
        %v1879 = vsub.s32 %v1876, %v1878
        %v1880 = vrot.slane %v1866, %v1879
        %v1881 = vcombine.low %v1873, %v1880
        %v1882 = vcombine.high %v1873, %v1880
        %v1884 = vunpack.c.l.s4 1966171168
        %v1885 = vunpack.c.0.s8 %v1884
        %v1886 = vlaneseq
        %v1887 = vshrl.u32 %v1886, 7
        %v1888 = vsub.s32 %v1885, %v1887
        %v1889 = vrot.slane %v1881, %v1888
        %v1891 = vunpack.c.l.s4 1966171168
        %v1892 = vunpack.c.0.s8 %v1891
        %v1893 = vlaneseq
        %v1894 = vshrl.u32 %v1893, 7
        %v1895 = vsub.s32 %v1892, %v1894
        %v1896 = vrot.slane %v1882, %v1895
        %v1897 = vlaneseq
        %v1898 = vshrl.u32 %v1897, 7
        %v1899 = vsub.s32 0, %v1898
        %v1900 = vrot.slane %v1889, %v1899
        %v1901 = vlaneseq
        %v1902 = vshrl.u32 %v1901, 7
        %v1903 = vsub.s32 1, %v1902
        %v1904 = vrot.slane %v1889, %v1903
        %v1905 = vlaneseq
        %v1906 = vshrl.u32 %v1905, 7
        %v1907 = vsub.s32 2, %v1906
        %v1908 = vrot.slane %v1889, %v1907
        %v1909 = vlaneseq
        %v1910 = vshrl.u32 %v1909, 7
        %v1911 = vsub.s32 3, %v1910
        %v1912 = vrot.slane %v1889, %v1911
        %v1913 = vlaneseq
        %v1914 = vshrl.u32 %v1913, 7
        %v1915 = vsub.s32 0, %v1914
        %v1916 = vrot.slane %v1896, %v1915
        %v1917 = vlaneseq
        %v1918 = vshrl.u32 %v1917, 7
        %v1919 = vsub.s32 1, %v1918
        %v1920 = vrot.slane %v1896, %v1919
        %v1921 = vlaneseq
        %v1922 = vshrl.u32 %v1921, 7
        %v1923 = vsub.s32 2, %v1922
        %v1924 = vrot.slane %v1896, %v1923
        %v1925 = vlaneseq
        %v1926 = vshrl.u32 %v1925, 7
        %v1927 = vsub.s32 3, %v1926
        %v1928 = vrot.slane %v1896, %v1927
        %v1937 = vadd.f32 %v1853, %v1900
        %v1938 = vadd.f32 %v1854, %v1904
        %v1939 = vadd.f32 %v1855, %v1908
        %v1940 = vadd.f32 %v1856, %v1912
        %v1941 = vadd.f32 %v1857, %v1916
        %v1942 = vadd.f32 %v1858, %v1920
        %v1943 = vadd.f32 %v1859, %v1924
        %v1944 = vadd.f32 %v1860, %v1928
        %v1945 = vtanh.pop %v1937
        %v1946 = vtanh.pop %v1938
        %v1947 = vtanh.pop %v1939
        %v1948 = vtanh.pop %v1940
        %v1949 = vtanh.pop %v1941
        %v1950 = vtanh.pop %v1942
        %v1951 = vtanh.pop %v1943
        %v1952 = vtanh.pop %v1944
        %v1953 = vmul.f32 %v1945, %v769
        %v1954 = vmul.f32 %v1946, %v773
        %v1955 = vmul.f32 %v1947, %v777
        %v1956 = vmul.f32 %v1948, %v781
        %v1957 = vmul.f32 %v1949, %v769
        %v1958 = vmul.f32 %v1950, %v773
        %v1959 = vmul.f32 %v1951, %v777
        %v1960 = vmul.f32 %v1952, %v781
        %v1961 = vadd.f32 %v1953, %v1954
        %v1962 = vadd.f32 %v1961, %v1955
        %v1963 = vadd.f32 %v1962, %v1956
        %1964 = vadd.xlane.f32.xlu0 %v1963
        %v1965 = vpop.xlane.xlu0 %1964
        %v1966 = vadd.f32 %v1957, %v1958
        %v1967 = vadd.f32 %v1966, %v1959
        %v1968 = vadd.f32 %v1967, %v1960
        %1969 = vadd.xlane.f32.xlu0 %v1968
        %v1970 = vpop.xlane.xlu0 %1969
        %v1973 = vlaneseq
        %v1974 = vshrl.u32 %v1973, 7
        %v1975 = vsub.s32 %v807, %v1974
        %v1976 = vrot.slane %v1965, %v1975
        %v1977 = vlaneseq
        %v1978 = vshrl.u32 %v1977, 7
        %v1979 = vsub.s32 %v807, %v1978
        %v1980 = vrot.slane %v1970, %v1979
        %v1981 = vsel %vm816, %v1980, %v1976
        %v1983 = vsel %vm819, %v1981, -inf
        %1984 = vmax.xlane.f32.xlu0 %v1983
        %v1985 = vpop.xlane.xlu0 %1984
        %v1987 = vlaneseq
        %v1988 = vshrl.u32 %v1987, 7
        %v1989 = vsub.s32 0, %v1988
        %v1990 = vrot.slane %v1985, %v1989
        %v1991 = vlaneseq
        %v1992 = vshrl.u32 %v1991, 7
        %v1993 = vsub.s32 1, %v1992
        %v1994 = vrot.slane %v1985, %v1993
        %v1997 = vsub.f32 %v1965, %v1990
        %v1998 = vsub.f32 %v1970, %v1994
        %v1999 = vmul.f32 %v1997, 1.442695
        %v2000 = vpow.pop %v1999
        %v2001 = vmul.f32 %v1998, 1.442695
        %v2002 = vpow.pop %v2001
        %2005 = vset.pattern.permute.xlu0 0
        %2006 = vperm.xlu0 %2005, %v2000
        %v2007 = vpop.permute.xlu0 %2006
        %2008 = vset.pattern.permute.xlu0 0
        %2009 = vperm.xlu0 %2008, %v2002
        %v2010 = vpop.permute.xlu0 %2009
        %v2011 = vlaneseq
        %v2012 = vshrl.u32 %v2011, 7
        %v2013 = vsub.s32 %v807, %v2012
        %v2014 = vrot.slane %v2007, %v2013
        %v2015 = vlaneseq
        %v2016 = vshrl.u32 %v2015, 7
        %v2017 = vsub.s32 %v807, %v2016
        %v2018 = vrot.slane %v2010, %v2017
        %v2019 = vsel %vm816, %v2018, %v2014
        %v2021 = vsel %vm819, %v2019, 0.0
        %2022 = vadd.xlane.f32.xlu0 %v2021
        %v2023 = vpop.xlane.xlu0 %2022
        %v2024 = vrcp.pop %v2023
        %v2026 = vlaneseq
        %v2027 = vshrl.u32 %v2026, 7
        %v2028 = vsub.s32 0, %v2027
        %v2029 = vrot.slane %v2024, %v2028
        %v2030 = vlaneseq
        %v2031 = vshrl.u32 %v2030, 7
        %v2032 = vsub.s32 1, %v2031
        %v2033 = vrot.slane %v2024, %v2032
        %v2036 = vmul.f32 %v2000, %v2029
        %v2037 = vmul.f32 %v2002, %v2033
        %2039 = vset.pattern.permute.xlu0 0
        %2040 = vperm.xlu0 %2039, %v2036
        %v2041 = vpop.permute.xlu0 %2040
        %2044 = vset.pattern.permute.xlu0 0
        %2045 = vperm.xlu0 %2044, %v2037
        %v2046 = vpop.permute.xlu0 %2045
        %v2048 = vmul.f32 %v2041, %v438
        %v2049 = vmul.f32 %v2046, %v439
        %v2050 = vrot.slane %v2048, 4
        %v2051 = vadd.f32 %v2048, %v2050
        %v2052 = vrot.slane %v2051, 2
        %v2053 = vadd.f32 %v2051, %v2052
        %v2054 = vrot.slane %v2053, 1
        %v2055 = vadd.f32 %v2053, %v2054
        %v2056 = vrot.slane %v2049, 4
        %v2057 = vadd.f32 %v2049, %v2056
        %v2058 = vrot.slane %v2057, 2
        %v2059 = vadd.f32 %v2057, %v2058
        %v2060 = vrot.slane %v2059, 1
        %v2061 = vadd.f32 %v2059, %v2060
        %2062 = vst [vmem:[%s433] sm:$0x3] %v1687
        %v2065 = vsel %vm816, %v2061, %v2055
        %2067 = vst [vmem:[%s437] sm:$0x3] %v2065
        %p2068 = scmp.lt.s32.totalorder %s25, 2
        %s2069 = scalar_select %p2068, %s25, 2
        %s2070 = smul.addr %s2069, 2
        %s2071 = scalar_lea.vmem %s11, %s2070
        %p2072 = scmp.lt.s32.totalorder %s25, 2
        %s2073 = scalar_select %p2072, %s25, 2
        %s2074 = smul.addr %s2073, 2
        %s2075 = scalar_lea.vmem %s12, %s2074
        // Predicated region
        $region69: #{coattention_forward.6} parent=63 // pred_check
          %p2076 = pneg %p279
        $region70: #{coattention_forward.6} parent=63 // pred_check_branch
          %2078 = sbr.rel (%p2076) target = $region72
        $region71: #{coattention_forward.6} parent=63 // pred_region
          _
        $region72: #{coattention_forward.6} parent=63 // pred_fallthru
          _
        // Predicated region
        $region73: #{coattention_forward.6} parent=63 // pred_check
          %p2079 = pneg %p305
        $region74: #{coattention_forward.6} parent=63 // pred_check_branch
          %2081 = sbr.rel (%p2079) target = $region76
        $region75: #{coattention_forward.6} parent=63 // pred_region
          _
        $region76: #{coattention_forward.6} parent=63 // pred_fallthru
          _
      $region64: #{coattention_forward.6} parent=5 // pred_fallthru
        _
      %p2082 = scmp.le.s32.totalorder 2, %s20
      // Predicated region
      $region77: #{coattention_forward.6} parent=5 // pred_check
        %p2083 = pneg %p2082
      $region78: #{coattention_forward.6} parent=5 // pred_check_branch
        %2085 = sbr.rel (%p2083) target = $region80
      $region79: #{coattention_forward.6} parent=5 // pred_region
        %s2086 = ssub.s32 %s20, 2
        // Predicated region
        $region81: #{coattention_forward.6} parent=79 // pred_check
          %p2087 = pneg %p285
        $region82: #{coattention_forward.6} parent=79 // pred_check_branch
          %2089 = sbr.rel (%p2087) target = $region84
        $region83: #{coattention_forward.6} parent=79 // pred_region
          %p2090 = scmp.lt.s32.totalorder %s26, 2
          %s2091 = scalar_select %p2090, %s26, 2
          %s2092 = smul.addr %s2091, 2
          %s2093 = scalar_lea.vmem %s11, %s2092
        $region84: #{coattention_forward.6} parent=79 // pred_fallthru
          _
        // Predicated region
        $region85: #{coattention_forward.6} parent=79 // pred_check
          %p2094 = pneg %p311
        $region86: #{coattention_forward.6} parent=79 // pred_check_branch
          %2096 = sbr.rel (%p2094) target = $region88
        $region87: #{coattention_forward.6} parent=79 // pred_region
          %p2097 = scmp.lt.s32.totalorder %s26, 2
          %s2098 = scalar_select %p2097, %s26, 2
          %s2099 = smul.addr %s2098, 2
          %s2100 = scalar_lea.vmem %s12, %s2099
        $region88: #{coattention_forward.6} parent=79 // pred_fallthru
          _
      $region80: #{coattention_forward.6} parent=5 // pred_fallthru
        _
    $region6: #{coattention_forward.6} parent=1 // loop_footer
      %s24 = sadd.s32 1, %s20
    $region7: #{coattention_forward.6} parent=1 // loop_footer_branch
      %19 = sbr.rel target = $region3
    $region8: #{coattention_forward.6} parent=1 // loop_exit
      _
    %2101 = vsyncpa [#allocation3], 1
    %s2102 = scalar_lea.sflag [#allocation3], 1
    %2103 = vsyncpa %s2102, 1

// kernel: coattention_forward.5
$region0: #{coattention_forward.5}
  #allocation0 [shape = 'u32[]', space=smem, size = 0x4, offset = 0x4, fixed_abs, tag = 'smem constant byte address 0x4 - core index']
  #allocation1 [shape = 'u32[144,128]{1,0:T(1,128)}', space=vmem, size = 0x12000, scoped, tag = 'internal scratch']
  #allocation2 [shape = 'f32[2,128]{1,0:T(2,128)}', space=vmem, size = 0x400, scoped, tag = 'scratch operand']
  #allocation3 [shape = 'f32[2,128]{1,0:T(2,128)}', space=vmem, size = 0x400, scoped, tag = 'scratch operand']
  %s0 = inlined_call_operand.vmem [shape: f32[8,2,128], index: 0, kind: input, shape index: {}]
  %s1 = inlined_call_operand.vmem [shape: f32[128,512], index: 1, kind: input, shape index: {}]
  %s2 = inlined_call_operand.vmem [shape: f32[128,512], index: 2, kind: input, shape index: {}]
  %s3 = inlined_call_operand.vmem [shape: f32[1,512], index: 3, kind: input, shape index: {}]
  %s4 = inlined_call_operand.vmem [shape: f32[8,2,128], index: 4, kind: output, shape index: {}]
  %s5 = sld [smem:[#allocation0]]
  $region26: #{coattention_forward.5} parent=0
    _
  %s7 = ssub.s32 1, %s5
  %s8 = scalar_select 0, %s7, %s5
  // Predicated region
  $region2: #{coattention_forward.5} parent=0 // pred_check
    _
  $region3: #{coattention_forward.5} parent=0 // pred_check_branch
    %10 = sbr.rel (0) target = $region5
  $region4: #{coattention_forward.5} parent=0 // pred_region
    _
  $region5: #{coattention_forward.5} parent=0 // pred_fallthru
    _
  // Predicated region
  $region6: #{coattention_forward.5} parent=0 // pred_check
    _
  $region7: #{coattention_forward.5} parent=0 // pred_check_branch
    %12 = sbr.rel (0) target = $region9
  $region8: #{coattention_forward.5} parent=0 // pred_region
    _
  $region9: #{coattention_forward.5} parent=0 // pred_fallthru
    _
  // Predicated region
  $region10: #{coattention_forward.5} parent=0 // pred_check
    _
  $region11: #{coattention_forward.5} parent=0 // pred_check_branch
    %14 = sbr.rel (0) target = $region13
  $region12: #{coattention_forward.5} parent=0 // pred_region
    _
  $region13: #{coattention_forward.5} parent=0 // pred_fallthru
    _
  // Predicated region
  $region14: #{coattention_forward.5} parent=0 // pred_check
    _
  $region15: #{coattention_forward.5} parent=0 // pred_check_branch
    %16 = sbr.rel (0) target = $region17
  $region16: #{coattention_forward.5} parent=0 // pred_region
    _
  $region17: #{coattention_forward.5} parent=0 // pred_fallthru
    _
  %17 = vst [vmem:[#allocation2] sm:$0x3] 0.0
  %18 = vst [vmem:[#allocation3] sm:$0x3] 0.0
  %v19 = vld [vmem:[%s0] sm:$0x3]
  %v20 = vld [vmem:[%s1] sm:$0xff]
  %v21 = vld [vmem:[%s1 + $0x8] sm:$0xff]
  %v22 = vld [vmem:[%s1 + $0x10] sm:$0xff]
  %v23 = vld [vmem:[%s1 + $0x18] sm:$0xff]
  %v24 = vld [vmem:[%s1 + $0x20] sm:$0xff]
  %v25 = vld [vmem:[%s1 + $0x28] sm:$0xff]
  %v26 = vld [vmem:[%s1 + $0x30] sm:$0xff]
  %v27 = vld [vmem:[%s1 + $0x38] sm:$0xff]
  %v28 = vld [vmem:[%s1 + $0x40] sm:$0xff]
  %v29 = vld [vmem:[%s1 + $0x48] sm:$0xff]
  %v30 = vld [vmem:[%s1 + $0x50] sm:$0xff]
  %v31 = vld [vmem:[%s1 + $0x58] sm:$0xff]
  %v32 = vld [vmem:[%s1 + $0x60] sm:$0xff]
  %v33 = vld [vmem:[%s1 + $0x68] sm:$0xff]
  %v34 = vld [vmem:[%s1 + $0x70] sm:$0xff]
  %v35 = vld [vmem:[%s1 + $0x78] sm:$0xff]
  %v36 = vld [vmem:[%s1 + $0x80] sm:$0xff]
  %v37 = vld [vmem:[%s1 + $0x88] sm:$0xff]
  %v38 = vld [vmem:[%s1 + $0x90] sm:$0xff]
  %v39 = vld [vmem:[%s1 + $0x98] sm:$0xff]
  %v40 = vld [vmem:[%s1 + $0xa0] sm:$0xff]
  %v41 = vld [vmem:[%s1 + $0xa8] sm:$0xff]
  %v42 = vld [vmem:[%s1 + $0xb0] sm:$0xff]
  %v43 = vld [vmem:[%s1 + $0xb8] sm:$0xff]
  %v44 = vld [vmem:[%s1 + $0xc0] sm:$0xff]
  %v45 = vld [vmem:[%s1 + $0xc8] sm:$0xff]
  %v46 = vld [vmem:[%s1 + $0xd0] sm:$0xff]
  %v47 = vld [vmem:[%s1 + $0xd8] sm:$0xff]
  %v48 = vld [vmem:[%s1 + $0xe0] sm:$0xff]
  %v49 = vld [vmem:[%s1 + $0xe8] sm:$0xff]
  %v50 = vld [vmem:[%s1 + $0xf0] sm:$0xff]
  %v51 = vld [vmem:[%s1 + $0xf8] sm:$0xff]
  %v52 = vld [vmem:[%s1 + $0x100] sm:$0xff]
  %v53 = vld [vmem:[%s1 + $0x108] sm:$0xff]
  %v54 = vld [vmem:[%s1 + $0x110] sm:$0xff]
  %v55 = vld [vmem:[%s1 + $0x118] sm:$0xff]
  %v56 = vld [vmem:[%s1 + $0x120] sm:$0xff]
  %v57 = vld [vmem:[%s1 + $0x128] sm:$0xff]
  %v58 = vld [vmem:[%s1 + $0x130] sm:$0xff]
  %v59 = vld [vmem:[%s1 + $0x138] sm:$0xff]
  %v60 = vld [vmem:[%s1 + $0x140] sm:$0xff]
  %v61 = vld [vmem:[%s1 + $0x148] sm:$0xff]
  %v62 = vld [vmem:[%s1 + $0x150] sm:$0xff]
  %v63 = vld [vmem:[%s1 + $0x158] sm:$0xff]
  %v64 = vld [vmem:[%s1 + $0x160] sm:$0xff]
  %v65 = vld [vmem:[%s1 + $0x168] sm:$0xff]
  %v66 = vld [vmem:[%s1 + $0x170] sm:$0xff]
  %v67 = vld [vmem:[%s1 + $0x178] sm:$0xff]
  %v68 = vld [vmem:[%s1 + $0x180] sm:$0xff]
  %v69 = vld [vmem:[%s1 + $0x188] sm:$0xff]
  %v70 = vld [vmem:[%s1 + $0x190] sm:$0xff]
  %v71 = vld [vmem:[%s1 + $0x198] sm:$0xff]
  %v72 = vld [vmem:[%s1 + $0x1a0] sm:$0xff]
  %v73 = vld [vmem:[%s1 + $0x1a8] sm:$0xff]
  %v74 = vld [vmem:[%s1 + $0x1b0] sm:$0xff]
  %v75 = vld [vmem:[%s1 + $0x1b8] sm:$0xff]
  %v76 = vld [vmem:[%s1 + $0x1c0] sm:$0xff]
  %v77 = vld [vmem:[%s1 + $0x1c8] sm:$0xff]
  %v78 = vld [vmem:[%s1 + $0x1d0] sm:$0xff]
  %v79 = vld [vmem:[%s1 + $0x1d8] sm:$0xff]
  %v80 = vld [vmem:[%s1 + $0x1e0] sm:$0xff]
  %v81 = vld [vmem:[%s1 + $0x1e8] sm:$0xff]
  %v82 = vld [vmem:[%s1 + $0x1f0] sm:$0xff]
  %v83 = vld [vmem:[%s1 + $0x1f8] sm:$0xff]
  %v84 = vld [vmem:[#allocation2] sm:$0x3]
  %v85 = vld [vmem:[%s2] sm:$0xff]
  %v86 = vld [vmem:[%s2 + $0x8] sm:$0xff]
  %v87 = vld [vmem:[%s2 + $0x10] sm:$0xff]
  %v88 = vld [vmem:[%s2 + $0x18] sm:$0xff]
  %v89 = vld [vmem:[%s2 + $0x20] sm:$0xff]
  %v90 = vld [vmem:[%s2 + $0x28] sm:$0xff]
  %v91 = vld [vmem:[%s2 + $0x30] sm:$0xff]
  %v92 = vld [vmem:[%s2 + $0x38] sm:$0xff]
  %v93 = vld [vmem:[%s2 + $0x40] sm:$0xff]
  %v94 = vld [vmem:[%s2 + $0x48] sm:$0xff]
  %v95 = vld [vmem:[%s2 + $0x50] sm:$0xff]
  %v96 = vld [vmem:[%s2 + $0x58] sm:$0xff]
  %v97 = vld [vmem:[%s2 + $0x60] sm:$0xff]
  %v98 = vld [vmem:[%s2 + $0x68] sm:$0xff]
  %v99 = vld [vmem:[%s2 + $0x70] sm:$0xff]
  %v100 = vld [vmem:[%s2 + $0x78] sm:$0xff]
  %v101 = vld [vmem:[%s2 + $0x80] sm:$0xff]
  %v102 = vld [vmem:[%s2 + $0x88] sm:$0xff]
  %v103 = vld [vmem:[%s2 + $0x90] sm:$0xff]
  %v104 = vld [vmem:[%s2 + $0x98] sm:$0xff]
  %v105 = vld [vmem:[%s2 + $0xa0] sm:$0xff]
  %v106 = vld [vmem:[%s2 + $0xa8] sm:$0xff]
  %v107 = vld [vmem:[%s2 + $0xb0] sm:$0xff]
  %v108 = vld [vmem:[%s2 + $0xb8] sm:$0xff]
  %v109 = vld [vmem:[%s2 + $0xc0] sm:$0xff]
  %v110 = vld [vmem:[%s2 + $0xc8] sm:$0xff]
  %v111 = vld [vmem:[%s2 + $0xd0] sm:$0xff]
  %v112 = vld [vmem:[%s2 + $0xd8] sm:$0xff]
  %v113 = vld [vmem:[%s2 + $0xe0] sm:$0xff]
  %v114 = vld [vmem:[%s2 + $0xe8] sm:$0xff]
  %v115 = vld [vmem:[%s2 + $0xf0] sm:$0xff]
  %v116 = vld [vmem:[%s2 + $0xf8] sm:$0xff]
  %v117 = vld [vmem:[%s2 + $0x100] sm:$0xff]
  %v118 = vld [vmem:[%s2 + $0x108] sm:$0xff]
  %v119 = vld [vmem:[%s2 + $0x110] sm:$0xff]
  %v120 = vld [vmem:[%s2 + $0x118] sm:$0xff]
  %v121 = vld [vmem:[%s2 + $0x120] sm:$0xff]
  %v122 = vld [vmem:[%s2 + $0x128] sm:$0xff]
  %v123 = vld [vmem:[%s2 + $0x130] sm:$0xff]
  %v124 = vld [vmem:[%s2 + $0x138] sm:$0xff]
  %v125 = vld [vmem:[%s2 + $0x140] sm:$0xff]
  %v126 = vld [vmem:[%s2 + $0x148] sm:$0xff]
  %v127 = vld [vmem:[%s2 + $0x150] sm:$0xff]
  %v128 = vld [vmem:[%s2 + $0x158] sm:$0xff]
  %v129 = vld [vmem:[%s2 + $0x160] sm:$0xff]
  %v130 = vld [vmem:[%s2 + $0x168] sm:$0xff]
  %v131 = vld [vmem:[%s2 + $0x170] sm:$0xff]
  %v132 = vld [vmem:[%s2 + $0x178] sm:$0xff]
  %v133 = vld [vmem:[%s2 + $0x180] sm:$0xff]
  %v134 = vld [vmem:[%s2 + $0x188] sm:$0xff]
  %v135 = vld [vmem:[%s2 + $0x190] sm:$0xff]
  %v136 = vld [vmem:[%s2 + $0x198] sm:$0xff]
  %v137 = vld [vmem:[%s2 + $0x1a0] sm:$0xff]
  %v138 = vld [vmem:[%s2 + $0x1a8] sm:$0xff]
  %v139 = vld [vmem:[%s2 + $0x1b0] sm:$0xff]
  %v140 = vld [vmem:[%s2 + $0x1b8] sm:$0xff]
  %v141 = vld [vmem:[%s2 + $0x1c0] sm:$0xff]
  %v142 = vld [vmem:[%s2 + $0x1c8] sm:$0xff]
  %v143 = vld [vmem:[%s2 + $0x1d0] sm:$0xff]
  %v144 = vld [vmem:[%s2 + $0x1d8] sm:$0xff]
  %v145 = vld [vmem:[%s2 + $0x1e0] sm:$0xff]
  %v146 = vld [vmem:[%s2 + $0x1e8] sm:$0xff]
  %v147 = vld [vmem:[%s2 + $0x1f0] sm:$0xff]
  %v148 = vld [vmem:[%s2 + $0x1f8] sm:$0xff]
  %149 = vmatprep.subr.mxu0 %v86
  %150 = vmatpush1.msra.mxu0 %v85
  %151 = vmatprep.subr.mxu0 %v90
  %152 = vmatpush1.msra.mxu0 %v89
  %153 = vmatprep.subr.mxu0 %v94
  %154 = vmatpush1.msra.mxu0 %v93
  %155 = vmatprep.subr.mxu0 %v98
  %156 = vmatpush1.msra.mxu0 %v97
  %157 = vmatprep.subr.mxu0 %v102
  %158 = vmatpush1.msra.mxu0 %v101
  %159 = vmatprep.subr.mxu0 %v106
  %160 = vmatpush1.msra.mxu0 %v105
  %161 = vmatprep.subr.mxu0 %v110
  %162 = vmatpush1.msra.mxu0 %v109
  %163 = vmatprep.subr.mxu0 %v114
  %164 = vmatpush1.msra.mxu0 %v113
  %165 = vmatprep.subr.mxu0 %v118
  %166 = vmatpush1.msra.mxu0 %v117
  %167 = vmatprep.subr.mxu0 %v122
  %168 = vmatpush1.msra.mxu0 %v121
  %169 = vmatprep.subr.mxu0 %v126
  %170 = vmatpush1.msra.mxu0 %v125
  %171 = vmatprep.subr.mxu0 %v130
  %172 = vmatpush1.msra.mxu0 %v129
  %173 = vmatprep.subr.mxu0 %v134
  %174 = vmatpush1.msra.mxu0 %v133
  %175 = vmatprep.subr.mxu0 %v138
  %176 = vmatpush1.msra.mxu0 %v137
  %177 = vmatprep.subr.mxu0 %v142
  %178 = vmatpush1.msra.mxu0 %v141
  %179 = vmatprep.subr.mxu0 %v146
  %180 = vmatpush1.msra.mxu0 %v145
  %181 = vmatprep.subr.mxu0 0.0
  %182 = vmatpush1.msra.mxu0 0.0
  %183 = vmatprep.subr.mxu0 0.0
  %184 = vmatpush1.msra.mxu0 0.0
  %185 = vmatprep.subr.mxu0 0.0
  %186 = vmatpush1.msra.mxu0 0.0
  %187 = vmatprep.subr.mxu0 0.0
  %188 = vmatpush1.msra.mxu0 0.0
  %189 = vmatprep.subr.mxu0 0.0
  %190 = vmatpush1.msra.mxu0 0.0
  %191 = vmatprep.subr.mxu0 0.0
  %192 = vmatpush1.msra.mxu0 0.0
  %193 = vmatprep.subr.mxu0 0.0
  %194 = vmatpush1.msra.mxu0 0.0
  %195 = vmatprep.subr.mxu0 0.0
  %196 = vmatpush1.msra.mxu0 0.0
  %197 = vmatprep.subr.mxu0 0.0
  %198 = vmatpush1.msra.mxu0 0.0
  %199 = vmatprep.subr.mxu0 0.0
  %200 = vmatpush1.msra.mxu0 0.0
  %201 = vmatprep.subr.mxu0 0.0
  %202 = vmatpush1.msra.mxu0 0.0
  %203 = vmatprep.subr.mxu0 0.0
  %204 = vmatpush1.msra.mxu0 0.0
  %205 = vmatprep.subr.mxu0 0.0
  %206 = vmatpush1.msra.mxu0 0.0
  %207 = vmatprep.subr.mxu0 0.0
  %208 = vmatpush1.msra.mxu0 0.0
  %209 = vmatprep.subr.mxu0 0.0
  %210 = vmatpush1.msra.mxu0 0.0
  %211 = vmatprep.subr.mxu0 0.0
  %212 = vmatpush1.msra.mxu0 0.0
  %213 = vmatprep.mubr.f32.mxu0 0.0
  %214 = vmatmul.mubr.f32.gmra.mrb[0].mxu0 %v84
  %v215 = vpop.f32.mrb[0].mxu0
  %v216 = vadd.f32 0.0, %v215
  %v217 = vpop.f32.mrb[0].mxu0
  %v218 = vadd.f32 0.0, %v217
  %219 = vdwg.mxu0
  %220 = vmatprep.subr.mxu0 %v88
  %221 = vmatpush1.msra.mxu0 %v87
  %222 = vmatprep.subr.mxu0 %v92
  %223 = vmatpush1.msra.mxu0 %v91
  %224 = vmatprep.subr.mxu0 %v96
  %225 = vmatpush1.msra.mxu0 %v95
  %226 = vmatprep.subr.mxu0 %v100
  %227 = vmatpush1.msra.mxu0 %v99
  %228 = vmatprep.subr.mxu0 %v104
  %229 = vmatpush1.msra.mxu0 %v103
  %230 = vmatprep.subr.mxu0 %v108
  %231 = vmatpush1.msra.mxu0 %v107
  %232 = vmatprep.subr.mxu0 %v112
  %233 = vmatpush1.msra.mxu0 %v111
  %234 = vmatprep.subr.mxu0 %v116
  %235 = vmatpush1.msra.mxu0 %v115
  %236 = vmatprep.subr.mxu0 %v120
  %237 = vmatpush1.msra.mxu0 %v119
  %238 = vmatprep.subr.mxu0 %v124
  %239 = vmatpush1.msra.mxu0 %v123
  %240 = vmatprep.subr.mxu0 %v128
  %241 = vmatpush1.msra.mxu0 %v127
  %242 = vmatprep.subr.mxu0 %v132
  %243 = vmatpush1.msra.mxu0 %v131
  %244 = vmatprep.subr.mxu0 %v136
  %245 = vmatpush1.msra.mxu0 %v135
  %246 = vmatprep.subr.mxu0 %v140
  %247 = vmatpush1.msra.mxu0 %v139
  %248 = vmatprep.subr.mxu0 %v144
  %249 = vmatpush1.msra.mxu0 %v143
  %250 = vmatprep.subr.mxu0 %v148
  %251 = vmatpush1.msra.mxu0 %v147
  %252 = vmatprep.subr.mxu0 0.0
  %253 = vmatpush1.msra.mxu0 0.0
  %254 = vmatprep.subr.mxu0 0.0
  %255 = vmatpush1.msra.mxu0 0.0
  %256 = vmatprep.subr.mxu0 0.0
  %257 = vmatpush1.msra.mxu0 0.0
  %258 = vmatprep.subr.mxu0 0.0
  %259 = vmatpush1.msra.mxu0 0.0
  %260 = vmatprep.subr.mxu0 0.0
  %261 = vmatpush1.msra.mxu0 0.0
  %262 = vmatprep.subr.mxu0 0.0
  %263 = vmatpush1.msra.mxu0 0.0
  %264 = vmatprep.subr.mxu0 0.0
  %265 = vmatpush1.msra.mxu0 0.0
  %266 = vmatprep.subr.mxu0 0.0
  %267 = vmatpush1.msra.mxu0 0.0
  %268 = vmatprep.subr.mxu0 0.0
  %269 = vmatpush1.msra.mxu0 0.0
  %270 = vmatprep.subr.mxu0 0.0
  %271 = vmatpush1.msra.mxu0 0.0
  %272 = vmatprep.subr.mxu0 0.0
  %273 = vmatpush1.msra.mxu0 0.0
  %274 = vmatprep.subr.mxu0 0.0
  %275 = vmatpush1.msra.mxu0 0.0
  %276 = vmatprep.subr.mxu0 0.0
  %277 = vmatpush1.msra.mxu0 0.0
  %278 = vmatprep.subr.mxu0 0.0
  %279 = vmatpush1.msra.mxu0 0.0
  %280 = vmatprep.subr.mxu0 0.0
  %281 = vmatpush1.msra.mxu0 0.0
  %282 = vmatprep.subr.mxu0 0.0
  %283 = vmatpush1.msra.mxu0 0.0
  %284 = vmatprep.mubr.f32.mxu0 0.0
  %285 = vmatmul.mubr.f32.gmra.mrb[0].mxu0 %v84
  %v286 = vpop.f32.mrb[0].mxu0
  %v287 = vadd.f32 0.0, %v286
  %v288 = vpop.f32.mrb[0].mxu0
  %v289 = vadd.f32 0.0, %v288
  %290 = vdwg.mxu0
  %291 = vmatprep.subr.mxu0 %v21
  %292 = vmatpush1.msra.mxu0 %v20
  %293 = vmatprep.subr.mxu0 %v25
  %294 = vmatpush1.msra.mxu0 %v24
  %295 = vmatprep.subr.mxu0 %v29
  %296 = vmatpush1.msra.mxu0 %v28
  %297 = vmatprep.subr.mxu0 %v33
  %298 = vmatpush1.msra.mxu0 %v32
  %299 = vmatprep.subr.mxu0 %v37
  %300 = vmatpush1.msra.mxu0 %v36
  %301 = vmatprep.subr.mxu0 %v41
  %302 = vmatpush1.msra.mxu0 %v40
  %303 = vmatprep.subr.mxu0 %v45
  %304 = vmatpush1.msra.mxu0 %v44
  %305 = vmatprep.subr.mxu0 %v49
  %306 = vmatpush1.msra.mxu0 %v48
  %307 = vmatprep.subr.mxu0 %v53
  %308 = vmatpush1.msra.mxu0 %v52
  %309 = vmatprep.subr.mxu0 %v57
  %310 = vmatpush1.msra.mxu0 %v56
  %311 = vmatprep.subr.mxu0 %v61
  %312 = vmatpush1.msra.mxu0 %v60
  %313 = vmatprep.subr.mxu0 %v65
  %314 = vmatpush1.msra.mxu0 %v64
  %315 = vmatprep.subr.mxu0 %v69
  %316 = vmatpush1.msra.mxu0 %v68
  %317 = vmatprep.subr.mxu0 %v73
  %318 = vmatpush1.msra.mxu0 %v72
  %319 = vmatprep.subr.mxu0 %v77
  %320 = vmatpush1.msra.mxu0 %v76
  %321 = vmatprep.subr.mxu0 %v81
  %322 = vmatpush1.msra.mxu0 %v80
  %323 = vmatprep.subr.mxu0 0.0
  %324 = vmatpush1.msra.mxu0 0.0
  %325 = vmatprep.subr.mxu0 0.0
  %326 = vmatpush1.msra.mxu0 0.0
  %327 = vmatprep.subr.mxu0 0.0
  %328 = vmatpush1.msra.mxu0 0.0
  %329 = vmatprep.subr.mxu0 0.0
  %330 = vmatpush1.msra.mxu0 0.0
  %331 = vmatprep.subr.mxu0 0.0
  %332 = vmatpush1.msra.mxu0 0.0
  %333 = vmatprep.subr.mxu0 0.0
  %334 = vmatpush1.msra.mxu0 0.0
  %335 = vmatprep.subr.mxu0 0.0
  %336 = vmatpush1.msra.mxu0 0.0
  %337 = vmatprep.subr.mxu0 0.0
  %338 = vmatpush1.msra.mxu0 0.0
  %339 = vmatprep.subr.mxu0 0.0
  %340 = vmatpush1.msra.mxu0 0.0
  %341 = vmatprep.subr.mxu0 0.0
  %342 = vmatpush1.msra.mxu0 0.0
  %343 = vmatprep.subr.mxu0 0.0
  %344 = vmatpush1.msra.mxu0 0.0
  %345 = vmatprep.subr.mxu0 0.0
  %346 = vmatpush1.msra.mxu0 0.0
  %347 = vmatprep.subr.mxu0 0.0
  %348 = vmatpush1.msra.mxu0 0.0
  %349 = vmatprep.subr.mxu0 0.0
  %350 = vmatpush1.msra.mxu0 0.0
  %351 = vmatprep.subr.mxu0 0.0
  %352 = vmatpush1.msra.mxu0 0.0
  %353 = vmatprep.subr.mxu0 0.0
  %354 = vmatpush1.msra.mxu0 0.0
  %355 = vmatprep.mubr.f32.mxu0 0.0
  %356 = vmatmul.mubr.f32.gmra.mrb[0].mxu0 %v19
  %v357 = vpop.f32.mrb[0].mxu0
  %v358 = vadd.f32 %v216, %v357
  %v359 = vpop.f32.mrb[0].mxu0
  %v360 = vadd.f32 %v218, %v359
  %361 = vdwg.mxu0
  %362 = vmatprep.subr.mxu0 %v23
  %363 = vmatpush1.msra.mxu0 %v22
  %364 = vmatprep.subr.mxu0 %v27
  %365 = vmatpush1.msra.mxu0 %v26
  %366 = vmatprep.subr.mxu0 %v31
  %367 = vmatpush1.msra.mxu0 %v30
  %368 = vmatprep.subr.mxu0 %v35
  %369 = vmatpush1.msra.mxu0 %v34
  %370 = vmatprep.subr.mxu0 %v39
  %371 = vmatpush1.msra.mxu0 %v38
  %372 = vmatprep.subr.mxu0 %v43
  %373 = vmatpush1.msra.mxu0 %v42
  %374 = vmatprep.subr.mxu0 %v47
  %375 = vmatpush1.msra.mxu0 %v46
  %376 = vmatprep.subr.mxu0 %v51
  %377 = vmatpush1.msra.mxu0 %v50
  %378 = vmatprep.subr.mxu0 %v55
  %379 = vmatpush1.msra.mxu0 %v54
  %380 = vmatprep.subr.mxu0 %v59
  %381 = vmatpush1.msra.mxu0 %v58
  %382 = vmatprep.subr.mxu0 %v63
  %383 = vmatpush1.msra.mxu0 %v62
  %384 = vmatprep.subr.mxu0 %v67
  %385 = vmatpush1.msra.mxu0 %v66
  %386 = vmatprep.subr.mxu0 %v71
  %387 = vmatpush1.msra.mxu0 %v70
  %388 = vmatprep.subr.mxu0 %v75
  %389 = vmatpush1.msra.mxu0 %v74
  %390 = vmatprep.subr.mxu0 %v79
  %391 = vmatpush1.msra.mxu0 %v78
  %392 = vmatprep.subr.mxu0 %v83
  %393 = vmatpush1.msra.mxu0 %v82
  %394 = vmatprep.subr.mxu0 0.0
  %395 = vmatpush1.msra.mxu0 0.0
  %396 = vmatprep.subr.mxu0 0.0
  %397 = vmatpush1.msra.mxu0 0.0
  %398 = vmatprep.subr.mxu0 0.0
  %399 = vmatpush1.msra.mxu0 0.0
  %400 = vmatprep.subr.mxu0 0.0
  %401 = vmatpush1.msra.mxu0 0.0
  %402 = vmatprep.subr.mxu0 0.0
  %403 = vmatpush1.msra.mxu0 0.0
  %404 = vmatprep.subr.mxu0 0.0
  %405 = vmatpush1.msra.mxu0 0.0
  %406 = vmatprep.subr.mxu0 0.0
  %407 = vmatpush1.msra.mxu0 0.0
  %408 = vmatprep.subr.mxu0 0.0
  %409 = vmatpush1.msra.mxu0 0.0
  %410 = vmatprep.subr.mxu0 0.0
  %411 = vmatpush1.msra.mxu0 0.0
  %412 = vmatprep.subr.mxu0 0.0
  %413 = vmatpush1.msra.mxu0 0.0
  %414 = vmatprep.subr.mxu0 0.0
  %415 = vmatpush1.msra.mxu0 0.0
  %416 = vmatprep.subr.mxu0 0.0
  %417 = vmatpush1.msra.mxu0 0.0
  %418 = vmatprep.subr.mxu0 0.0
  %419 = vmatpush1.msra.mxu0 0.0
  %420 = vmatprep.subr.mxu0 0.0
  %421 = vmatpush1.msra.mxu0 0.0
  %422 = vmatprep.subr.mxu0 0.0
  %423 = vmatpush1.msra.mxu0 0.0
  %424 = vmatprep.subr.mxu0 0.0
  %425 = vmatpush1.msra.mxu0 0.0
  %426 = vmatprep.mubr.f32.mxu0 0.0
  %427 = vmatmul.mubr.f32.gmra.mrb[0].mxu0 %v19
  %v428 = vpop.f32.mrb[0].mxu0
  %v429 = vadd.f32 %v287, %v428
  %v430 = vpop.f32.mrb[0].mxu0
  %v431 = vadd.f32 %v289, %v430
  %432 = vdwg.mxu0
  %v433 = vld [vmem:[%s3] sm:$0xf]
  %v435 = vlaneseq
  %v436 = vshrl.u32 %v435, 7
  %v437 = vsub.s32 0, %v436
  %v438 = vrot.slane %v433, %v437
  %v439 = vlaneseq
  %v440 = vshrl.u32 %v439, 7
  %v441 = vsub.s32 1, %v440
  %v442 = vrot.slane %v433, %v441
  %v443 = vlaneseq
  %v444 = vshrl.u32 %v443, 7
  %v445 = vsub.s32 2, %v444
  %v446 = vrot.slane %v433, %v445
  %v447 = vlaneseq
  %v448 = vshrl.u32 %v447, 7
  %v449 = vsub.s32 3, %v448
  %v450 = vrot.slane %v433, %v449
  %v455 = vadd.f32 %v358, %v438
  %v456 = vadd.f32 %v360, %v442
  %v457 = vadd.f32 %v429, %v446
  %v458 = vadd.f32 %v431, %v450
  %v459 = vxor.u32 %v455, 2147483648
  %v460 = vmul.f32 %v459, 1.442695
  %v461 = vpow.pop %v460
  %v462 = vadd.f32 %v461, 1.0
  %v463 = vrcp.pop %v462
  %v464 = vmul.f32 1.0, %v463
  %v465 = vxor.u32 %v456, 2147483648
  %v466 = vmul.f32 %v465, 1.442695
  %v467 = vpow.pop %v466
  %v468 = vadd.f32 %v467, 1.0
  %v469 = vrcp.pop %v468
  %v470 = vmul.f32 1.0, %v469
  %v471 = vtanh.pop %v457
  %v472 = vxor.u32 %v458, 2147483648
  %v473 = vmul.f32 %v472, 1.442695
  %v474 = vpow.pop %v473
  %v475 = vadd.f32 %v474, 1.0
  %v476 = vrcp.pop %v475
  %v477 = vmul.f32 1.0, %v476
  %v478 = vld [vmem:[#allocation3] sm:$0x3]
  %v479 = vmul.f32 %v470, %v478
  %v480 = vmul.f32 %v464, %v471
  %v481 = vadd.f32 %v479, %v480
  %v482 = vtanh.pop %v481
  %v483 = vmul.f32 %v477, %v482
  %484 = vst [vmem:[#allocation3] sm:$0x3] %v481
  %485 = vst [vmem:[#allocation2] sm:$0x3] %v483
  %486 = vst [vmem:[%s4] sm:$0x3] %v483
  %s487 = scalar_lea.vmem %s0, 2
  %v488 = vld [vmem:[%s487] sm:$0x3]
  %v489 = vld [vmem:[%s1] sm:$0xff]
  %v490 = vld [vmem:[%s1 + $0x8] sm:$0xff]
  %v491 = vld [vmem:[%s1 + $0x10] sm:$0xff]
  %v492 = vld [vmem:[%s1 + $0x18] sm:$0xff]
  %v493 = vld [vmem:[%s1 + $0x20] sm:$0xff]
  %v494 = vld [vmem:[%s1 + $0x28] sm:$0xff]
  %v495 = vld [vmem:[%s1 + $0x30] sm:$0xff]
  %v496 = vld [vmem:[%s1 + $0x38] sm:$0xff]
  %v497 = vld [vmem:[%s1 + $0x40] sm:$0xff]
  %v498 = vld [vmem:[%s1 + $0x48] sm:$0xff]
  %v499 = vld [vmem:[%s1 + $0x50] sm:$0xff]
  %v500 = vld [vmem:[%s1 + $0x58] sm:$0xff]
  %v501 = vld [vmem:[%s1 + $0x60] sm:$0xff]
  %v502 = vld [vmem:[%s1 + $0x68] sm:$0xff]
  %v503 = vld [vmem:[%s1 + $0x70] sm:$0xff]
  %v504 = vld [vmem:[%s1 + $0x78] sm:$0xff]
  %v505 = vld [vmem:[%s1 + $0x80] sm:$0xff]
  %v506 = vld [vmem:[%s1 + $0x88] sm:$0xff]
  %v507 = vld [vmem:[%s1 + $0x90] sm:$0xff]
  %v508 = vld [vmem:[%s1 + $0x98] sm:$0xff]
  %v509 = vld [vmem:[%s1 + $0xa0] sm:$0xff]
  %v510 = vld [vmem:[%s1 + $0xa8] sm:$0xff]
  %v511 = vld [vmem:[%s1 + $0xb0] sm:$0xff]
  %v512 = vld [vmem:[%s1 + $0xb8] sm:$0xff]
  %v513 = vld [vmem:[%s1 + $0xc0] sm:$0xff]
  %v514 = vld [vmem:[%s1 + $0xc8] sm:$0xff]
  %v515 = vld [vmem:[%s1 + $0xd0] sm:$0xff]
  %v516 = vld [vmem:[%s1 + $0xd8] sm:$0xff]
  %v517 = vld [vmem:[%s1 + $0xe0] sm:$0xff]
  %v518 = vld [vmem:[%s1 + $0xe8] sm:$0xff]
  %v519 = vld [vmem:[%s1 + $0xf0] sm:$0xff]
  %v520 = vld [vmem:[%s1 + $0xf8] sm:$0xff]
  %v521 = vld [vmem:[%s1 + $0x100] sm:$0xff]
  %v522 = vld [vmem:[%s1 + $0x108] sm:$0xff]
  %v523 = vld [vmem:[%s1 + $0x110] sm:$0xff]
  %v524 = vld [vmem:[%s1 + $0x118] sm:$0xff]
  %v525 = vld [vmem:[%s1 + $0x120] sm:$0xff]
  %v526 = vld [vmem:[%s1 + $0x128] sm:$0xff]
  %v527 = vld [vmem:[%s1 + $0x130] sm:$0xff]
  %v528 = vld [vmem:[%s1 + $0x138] sm:$0xff]
  %v529 = vld [vmem:[%s1 + $0x140] sm:$0xff]
  %v530 = vld [vmem:[%s1 + $0x148] sm:$0xff]
  %v531 = vld [vmem:[%s1 + $0x150] sm:$0xff]
  %v532 = vld [vmem:[%s1 + $0x158] sm:$0xff]
  %v533 = vld [vmem:[%s1 + $0x160] sm:$0xff]
  %v534 = vld [vmem:[%s1 + $0x168] sm:$0xff]
  %v535 = vld [vmem:[%s1 + $0x170] sm:$0xff]
  %v536 = vld [vmem:[%s1 + $0x178] sm:$0xff]
  %v537 = vld [vmem:[%s1 + $0x180] sm:$0xff]
  %v538 = vld [vmem:[%s1 + $0x188] sm:$0xff]
  %v539 = vld [vmem:[%s1 + $0x190] sm:$0xff]
  %v540 = vld [vmem:[%s1 + $0x198] sm:$0xff]
  %v541 = vld [vmem:[%s1 + $0x1a0] sm:$0xff]
  %v542 = vld [vmem:[%s1 + $0x1a8] sm:$0xff]
  %v543 = vld [vmem:[%s1 + $0x1b0] sm:$0xff]
  %v544 = vld [vmem:[%s1 + $0x1b8] sm:$0xff]
  %v545 = vld [vmem:[%s1 + $0x1c0] sm:$0xff]
  %v546 = vld [vmem:[%s1 + $0x1c8] sm:$0xff]
  %v547 = vld [vmem:[%s1 + $0x1d0] sm:$0xff]
  %v548 = vld [vmem:[%s1 + $0x1d8] sm:$0xff]
  %v549 = vld [vmem:[%s1 + $0x1e0] sm:$0xff]
  %v550 = vld [vmem:[%s1 + $0x1e8] sm:$0xff]
  %v551 = vld [vmem:[%s1 + $0x1f0] sm:$0xff]
  %v552 = vld [vmem:[%s1 + $0x1f8] sm:$0xff]
  %v553 = vld [vmem:[#allocation2] sm:$0x3]
  %v554 = vld [vmem:[%s2] sm:$0xff]
  %v555 = vld [vmem:[%s2 + $0x8] sm:$0xff]
  %v556 = vld [vmem:[%s2 + $0x10] sm:$0xff]
  %v557 = vld [vmem:[%s2 + $0x18] sm:$0xff]
  %v558 = vld [vmem:[%s2 + $0x20] sm:$0xff]
  %v559 = vld [vmem:[%s2 + $0x28] sm:$0xff]
  %v560 = vld [vmem:[%s2 + $0x30] sm:$0xff]
  %v561 = vld [vmem:[%s2 + $0x38] sm:$0xff]
  %v562 = vld [vmem:[%s2 + $0x40] sm:$0xff]
  %v563 = vld [vmem:[%s2 + $0x48] sm:$0xff]
  %v564 = vld [vmem:[%s2 + $0x50] sm:$0xff]
  %v565 = vld [vmem:[%s2 + $0x58] sm:$0xff]
  %v566 = vld [vmem:[%s2 + $0x60] sm:$0xff]
  %v567 = vld [vmem:[%s2 + $0x68] sm:$0xff]
  %v568 = vld [vmem:[%s2 + $0x70] sm:$0xff]
  %v569 = vld [vmem:[%s2 + $0x78] sm:$0xff]
  %v570 = vld [vmem:[%s2 + $0x80] sm:$0xff]
  %v571 = vld [vmem:[%s2 + $0x88] sm:$0xff]
  %v572 = vld [vmem:[%s2 + $0x90] sm:$0xff]
  %v573 = vld [vmem:[%s2 + $0x98] sm:$0xff]
  %v574 = vld [vmem:[%s2 + $0xa0] sm:$0xff]
  %v575 = vld [vmem:[%s2 + $0xa8] sm:$0xff]
  %v576 = vld [vmem:[%s2 + $0xb0] sm:$0xff]
  %v577 = vld [vmem:[%s2 + $0xb8] sm:$0xff]
  %v578 = vld [vmem:[%s2 + $0xc0] sm:$0xff]
  %v579 = vld [vmem:[%s2 + $0xc8] sm:$0xff]
  %v580 = vld [vmem:[%s2 + $0xd0] sm:$0xff]
  %v581 = vld [vmem:[%s2 + $0xd8] sm:$0xff]
  %v582 = vld [vmem:[%s2 + $0xe0] sm:$0xff]
  %v583 = vld [vmem:[%s2 + $0xe8] sm:$0xff]
  %v584 = vld [vmem:[%s2 + $0xf0] sm:$0xff]
  %v585 = vld [vmem:[%s2 + $0xf8] sm:$0xff]
  %v586 = vld [vmem:[%s2 + $0x100] sm:$0xff]
  %v587 = vld [vmem:[%s2 + $0x108] sm:$0xff]
  %v588 = vld [vmem:[%s2 + $0x110] sm:$0xff]
  %v589 = vld [vmem:[%s2 + $0x118] sm:$0xff]
  %v590 = vld [vmem:[%s2 + $0x120] sm:$0xff]
  %v591 = vld [vmem:[%s2 + $0x128] sm:$0xff]
  %v592 = vld [vmem:[%s2 + $0x130] sm:$0xff]
  %v593 = vld [vmem:[%s2 + $0x138] sm:$0xff]
  %v594 = vld [vmem:[%s2 + $0x140] sm:$0xff]
  %v595 = vld [vmem:[%s2 + $0x148] sm:$0xff]
  %v596 = vld [vmem:[%s2 + $0x150] sm:$0xff]
  %v597 = vld [vmem:[%s2 + $0x158] sm:$0xff]
  %v598 = vld [vmem:[%s2 + $0x160] sm:$0xff]
  %v599 = vld [vmem:[%s2 + $0x168] sm:$0xff]
  %v600 = vld [vmem:[%s2 + $0x170] sm:$0xff]
  %v601 = vld [vmem:[%s2 + $0x178] sm:$0xff]
  %v602 = vld [vmem:[%s2 + $0x180] sm:$0xff]
  %v603 = vld [vmem:[%s2 + $0x188] sm:$0xff]
  %v604 = vld [vmem:[%s2 + $0x190] sm:$0xff]
  %v605 = vld [vmem:[%s2 + $0x198] sm:$0xff]
  %v606 = vld [vmem:[%s2 + $0x1a0] sm:$0xff]
  %v607 = vld [vmem:[%s2 + $0x1a8] sm:$0xff]
  %v608 = vld [vmem:[%s2 + $0x1b0] sm:$0xff]
  %v609 = vld [vmem:[%s2 + $0x1b8] sm:$0xff]
  %v610 = vld [vmem:[%s2 + $0x1c0] sm:$0xff]
  %v611 = vld [vmem:[%s2 + $0x1c8] sm:$0xff]
  %v612 = vld [vmem:[%s2 + $0x1d0] sm:$0xff]
  %v613 = vld [vmem:[%s2 + $0x1d8] sm:$0xff]
  %v614 = vld [vmem:[%s2 + $0x1e0] sm:$0xff]
  %v615 = vld [vmem:[%s2 + $0x1e8] sm:$0xff]
  %v616 = vld [vmem:[%s2 + $0x1f0] sm:$0xff]
  %v617 = vld [vmem:[%s2 + $0x1f8] sm:$0xff]
  %618 = vmatprep.subr.mxu0 %v555
  %619 = vmatpush1.msra.mxu0 %v554
  %620 = vmatprep.subr.mxu0 %v559
  %621 = vmatpush1.msra.mxu0 %v558
  %622 = vmatprep.subr.mxu0 %v563
  %623 = vmatpush1.msra.mxu0 %v562
  %624 = vmatprep.subr.mxu0 %v567
  %625 = vmatpush1.msra.mxu0 %v566
  %626 = vmatprep.subr.mxu0 %v571
  %627 = vmatpush1.msra.mxu0 %v570
  %628 = vmatprep.subr.mxu0 %v575
  %629 = vmatpush1.msra.mxu0 %v574
  %630 = vmatprep.subr.mxu0 %v579
  %631 = vmatpush1.msra.mxu0 %v578
  %632 = vmatprep.subr.mxu0 %v583
  %633 = vmatpush1.msra.mxu0 %v582
  %634 = vmatprep.subr.mxu0 %v587
  %635 = vmatpush1.msra.mxu0 %v586
  %636 = vmatprep.subr.mxu0 %v591
  %637 = vmatpush1.msra.mxu0 %v590
  %638 = vmatprep.subr.mxu0 %v595
  %639 = vmatpush1.msra.mxu0 %v594
  %640 = vmatprep.subr.mxu0 %v599
  %641 = vmatpush1.msra.mxu0 %v598
  %642 = vmatprep.subr.mxu0 %v603
  %643 = vmatpush1.msra.mxu0 %v602
  %644 = vmatprep.subr.mxu0 %v607
  %645 = vmatpush1.msra.mxu0 %v606
  %646 = vmatprep.subr.mxu0 %v611
  %647 = vmatpush1.msra.mxu0 %v610
  %648 = vmatprep.subr.mxu0 %v615
  %649 = vmatpush1.msra.mxu0 %v614
  %650 = vmatprep.subr.mxu0 0.0
  %651 = vmatpush1.msra.mxu0 0.0
  %652 = vmatprep.subr.mxu0 0.0
  %653 = vmatpush1.msra.mxu0 0.0
  %654 = vmatprep.subr.mxu0 0.0
  %655 = vmatpush1.msra.mxu0 0.0
  %656 = vmatprep.subr.mxu0 0.0
  %657 = vmatpush1.msra.mxu0 0.0
  %658 = vmatprep.subr.mxu0 0.0
  %659 = vmatpush1.msra.mxu0 0.0
  %660 = vmatprep.subr.mxu0 0.0
  %661 = vmatpush1.msra.mxu0 0.0
  %662 = vmatprep.subr.mxu0 0.0
  %663 = vmatpush1.msra.mxu0 0.0
  %664 = vmatprep.subr.mxu0 0.0
  %665 = vmatpush1.msra.mxu0 0.0
  %666 = vmatprep.subr.mxu0 0.0
  %667 = vmatpush1.msra.mxu0 0.0
  %668 = vmatprep.subr.mxu0 0.0
  %669 = vmatpush1.msra.mxu0 0.0
  %670 = vmatprep.subr.mxu0 0.0
  %671 = vmatpush1.msra.mxu0 0.0
  %672 = vmatprep.subr.mxu0 0.0
  %673 = vmatpush1.msra.mxu0 0.0
  %674 = vmatprep.subr.mxu0 0.0
  %675 = vmatpush1.msra.mxu0 0.0
  %676 = vmatprep.subr.mxu0 0.0
  %677 = vmatpush1.msra.mxu0 0.0
  %678 = vmatprep.subr.mxu0 0.0
  %679 = vmatpush1.msra.mxu0 0.0
  %680 = vmatprep.subr.mxu0 0.0
  %681 = vmatpush1.msra.mxu0 0.0
  %682 = vmatprep.mubr.f32.mxu0 0.0
  %683 = vmatmul.mubr.f32.gmra.mrb[0].mxu0 %v553
  %v684 = vpop.f32.mrb[0].mxu0
  %v685 = vadd.f32 0.0, %v684
  %v686 = vpop.f32.mrb[0].mxu0
  %v687 = vadd.f32 0.0, %v686
  %688 = vdwg.mxu0
  %689 = vmatprep.subr.mxu0 %v557
  %690 = vmatpush1.msra.mxu0 %v556
  %691 = vmatprep.subr.mxu0 %v561
  %692 = vmatpush1.msra.mxu0 %v560
  %693 = vmatprep.subr.mxu0 %v565
  %694 = vmatpush1.msra.mxu0 %v564
  %695 = vmatprep.subr.mxu0 %v569
  %696 = vmatpush1.msra.mxu0 %v568
  %697 = vmatprep.subr.mxu0 %v573
  %698 = vmatpush1.msra.mxu0 %v572
  %699 = vmatprep.subr.mxu0 %v577
  %700 = vmatpush1.msra.mxu0 %v576
  %701 = vmatprep.subr.mxu0 %v581
  %702 = vmatpush1.msra.mxu0 %v580
  %703 = vmatprep.subr.mxu0 %v585
  %704 = vmatpush1.msra.mxu0 %v584
  %705 = vmatprep.subr.mxu0 %v589
  %706 = vmatpush1.msra.mxu0 %v588
  %707 = vmatprep.subr.mxu0 %v593
  %708 = vmatpush1.msra.mxu0 %v592
  %709 = vmatprep.subr.mxu0 %v597
  %710 = vmatpush1.msra.mxu0 %v596
  %711 = vmatprep.subr.mxu0 %v601
  %712 = vmatpush1.msra.mxu0 %v600
  %713 = vmatprep.subr.mxu0 %v605
  %714 = vmatpush1.msra.mxu0 %v604
  %715 = vmatprep.subr.mxu0 %v609
  %716 = vmatpush1.msra.mxu0 %v608
  %717 = vmatprep.subr.mxu0 %v613
  %718 = vmatpush1.msra.mxu0 %v612
  %719 = vmatprep.subr.mxu0 %v617
  %720 = vmatpush1.msra.mxu0 %v616
  %721 = vmatprep.subr.mxu0 0.0
  %722 = vmatpush1.msra.mxu0 0.0
  %723 = vmatprep.subr.mxu0 0.0
  %724 = vmatpush1.msra.mxu0 0.0
  %725 = vmatprep.subr.mxu0 0.0
  %726 = vmatpush1.msra.mxu0 0.0
  %727 = vmatprep.subr.mxu0 0.0
  %728 = vmatpush1.msra.mxu0 0.0
  %729 = vmatprep.subr.mxu0 0.0
  %730 = vmatpush1.msra.mxu0 0.0
  %731 = vmatprep.subr.mxu0 0.0
  %732 = vmatpush1.msra.mxu0 0.0
  %733 = vmatprep.subr.mxu0 0.0
  %734 = vmatpush1.msra.mxu0 0.0
  %735 = vmatprep.subr.mxu0 0.0
  %736 = vmatpush1.msra.mxu0 0.0
  %737 = vmatprep.subr.mxu0 0.0
  %738 = vmatpush1.msra.mxu0 0.0
  %739 = vmatprep.subr.mxu0 0.0
  %740 = vmatpush1.msra.mxu0 0.0
  %741 = vmatprep.subr.mxu0 0.0
  %742 = vmatpush1.msra.mxu0 0.0
  %743 = vmatprep.subr.mxu0 0.0
  %744 = vmatpush1.msra.mxu0 0.0
  %745 = vmatprep.subr.mxu0 0.0
  %746 = vmatpush1.msra.mxu0 0.0
  %747 = vmatprep.subr.mxu0 0.0
  %748 = vmatpush1.msra.mxu0 0.0
  %749 = vmatprep.subr.mxu0 0.0
  %750 = vmatpush1.msra.mxu0 0.0
  %751 = vmatprep.subr.mxu0 0.0
  %752 = vmatpush1.msra.mxu0 0.0
  %753 = vmatprep.mubr.f32.mxu0 0.0
  %754 = vmatmul.mubr.f32.gmra.mrb[0].mxu0 %v553
  %v755 = vpop.f32.mrb[0].mxu0
  %v756 = vadd.f32 0.0, %v755
  %v757 = vpop.f32.mrb[0].mxu0
  %v758 = vadd.f32 0.0, %v757
  %759 = vdwg.mxu0
  %760 = vmatprep.subr.mxu0 %v490
  %761 = vmatpush1.msra.mxu0 %v489
  %762 = vmatprep.subr.mxu0 %v494
  %763 = vmatpush1.msra.mxu0 %v493
  %764 = vmatprep.subr.mxu0 %v498
  %765 = vmatpush1.msra.mxu0 %v497
  %766 = vmatprep.subr.mxu0 %v502
  %767 = vmatpush1.msra.mxu0 %v501
  %768 = vmatprep.subr.mxu0 %v506
  %769 = vmatpush1.msra.mxu0 %v505
  %770 = vmatprep.subr.mxu0 %v510
  %771 = vmatpush1.msra.mxu0 %v509
  %772 = vmatprep.subr.mxu0 %v514
  %773 = vmatpush1.msra.mxu0 %v513
  %774 = vmatprep.subr.mxu0 %v518
  %775 = vmatpush1.msra.mxu0 %v517
  %776 = vmatprep.subr.mxu0 %v522
  %777 = vmatpush1.msra.mxu0 %v521
  %778 = vmatprep.subr.mxu0 %v526
  %779 = vmatpush1.msra.mxu0 %v525
  %780 = vmatprep.subr.mxu0 %v530
  %781 = vmatpush1.msra.mxu0 %v529
  %782 = vmatprep.subr.mxu0 %v534
  %783 = vmatpush1.msra.mxu0 %v533
  %784 = vmatprep.subr.mxu0 %v538
  %785 = vmatpush1.msra.mxu0 %v537
  %786 = vmatprep.subr.mxu0 %v542
  %787 = vmatpush1.msra.mxu0 %v541
  %788 = vmatprep.subr.mxu0 %v546
  %789 = vmatpush1.msra.mxu0 %v545
  %790 = vmatprep.subr.mxu0 %v550
  %791 = vmatpush1.msra.mxu0 %v549
  %792 = vmatprep.subr.mxu0 0.0
  %793 = vmatpush1.msra.mxu0 0.0
  %794 = vmatprep.subr.mxu0 0.0
  %795 = vmatpush1.msra.mxu0 0.0
  %796 = vmatprep.subr.mxu0 0.0
  %797 = vmatpush1.msra.mxu0 0.0
  %798 = vmatprep.subr.mxu0 0.0
  %799 = vmatpush1.msra.mxu0 0.0
  %800 = vmatprep.subr.mxu0 0.0
  %801 = vmatpush1.msra.mxu0 0.0
  %802 = vmatprep.subr.mxu0 0.0
  %803 = vmatpush1.msra.mxu0 0.0
  %804 = vmatprep.subr.mxu0 0.0
  %805 = vmatpush1.msra.mxu0 0.0
  %806 = vmatprep.subr.mxu0 0.0
  %807 = vmatpush1.msra.mxu0 0.0
  %808 = vmatprep.subr.mxu0 0.0
  %809 = vmatpush1.msra.mxu0 0.0
  %810 = vmatprep.subr.mxu0 0.0
  %811 = vmatpush1.msra.mxu0 0.0
  %812 = vmatprep.subr.mxu0 0.0
  %813 = vmatpush1.msra.mxu0 0.0
  %814 = vmatprep.subr.mxu0 0.0
  %815 = vmatpush1.msra.mxu0 0.0
  %816 = vmatprep.subr.mxu0 0.0
  %817 = vmatpush1.msra.mxu0 0.0
  %818 = vmatprep.subr.mxu0 0.0
  %819 = vmatpush1.msra.mxu0 0.0
  %820 = vmatprep.subr.mxu0 0.0
  %821 = vmatpush1.msra.mxu0 0.0
  %822 = vmatprep.subr.mxu0 0.0
  %823 = vmatpush1.msra.mxu0 0.0
  %824 = vmatprep.mubr.f32.mxu0 0.0
  %825 = vmatmul.mubr.f32.gmra.mrb[0].mxu0 %v488
  %v826 = vpop.f32.mrb[0].mxu0
  %v827 = vadd.f32 %v685, %v826
  %v828 = vpop.f32.mrb[0].mxu0
  %v829 = vadd.f32 %v687, %v828
  %830 = vdwg.mxu0
  %831 = vmatprep.subr.mxu0 %v492
  %832 = vmatpush1.msra.mxu0 %v491
  %833 = vmatprep.subr.mxu0 %v496
  %834 = vmatpush1.msra.mxu0 %v495
  %835 = vmatprep.subr.mxu0 %v500
  %836 = vmatpush1.msra.mxu0 %v499
  %837 = vmatprep.subr.mxu0 %v504
  %838 = vmatpush1.msra.mxu0 %v503
  %839 = vmatprep.subr.mxu0 %v508
  %840 = vmatpush1.msra.mxu0 %v507
  %841 = vmatprep.subr.mxu0 %v512
  %842 = vmatpush1.msra.mxu0 %v511
  %843 = vmatprep.subr.mxu0 %v516
  %844 = vmatpush1.msra.mxu0 %v515
  %845 = vmatprep.subr.mxu0 %v520
  %846 = vmatpush1.msra.mxu0 %v519
  %847 = vmatprep.subr.mxu0 %v524
  %848 = vmatpush1.msra.mxu0 %v523
  %849 = vmatprep.subr.mxu0 %v528
  %850 = vmatpush1.msra.mxu0 %v527
  %851 = vmatprep.subr.mxu0 %v532
  %852 = vmatpush1.msra.mxu0 %v531
  %853 = vmatprep.subr.mxu0 %v536
  %854 = vmatpush1.msra.mxu0 %v535
  %855 = vmatprep.subr.mxu0 %v540
  %856 = vmatpush1.msra.mxu0 %v539
  %857 = vmatprep.subr.mxu0 %v544
  %858 = vmatpush1.msra.mxu0 %v543
  %859 = vmatprep.subr.mxu0 %v548
  %860 = vmatpush1.msra.mxu0 %v547
  %861 = vmatprep.subr.mxu0 %v552
  %862 = vmatpush1.msra.mxu0 %v551
  %863 = vmatprep.subr.mxu0 0.0
  %864 = vmatpush1.msra.mxu0 0.0
  %865 = vmatprep.subr.mxu0 0.0
  %866 = vmatpush1.msra.mxu0 0.0
  %867 = vmatprep.subr.mxu0 0.0
  %868 = vmatpush1.msra.mxu0 0.0
  %869 = vmatprep.subr.mxu0 0.0
  %870 = vmatpush1.msra.mxu0 0.0
  %871 = vmatprep.subr.mxu0 0.0
  %872 = vmatpush1.msra.mxu0 0.0
  %873 = vmatprep.subr.mxu0 0.0
  %874 = vmatpush1.msra.mxu0 0.0
  %875 = vmatprep.subr.mxu0 0.0
  %876 = vmatpush1.msra.mxu0 0.0
  %877 = vmatprep.subr.mxu0 0.0
  %878 = vmatpush1.msra.mxu0 0.0
  %879 = vmatprep.subr.mxu0 0.0
  %880 = vmatpush1.msra.mxu0 0.0
  %881 = vmatprep.subr.mxu0 0.0
  %882 = vmatpush1.msra.mxu0 0.0
  %883 = vmatprep.subr.mxu0 0.0
  %884 = vmatpush1.msra.mxu0 0.0
  %885 = vmatprep.subr.mxu0 0.0
  %886 = vmatpush1.msra.mxu0 0.0
  %887 = vmatprep.subr.mxu0 0.0
  %888 = vmatpush1.msra.mxu0 0.0
  %889 = vmatprep.subr.mxu0 0.0
  %890 = vmatpush1.msra.mxu0 0.0
  %891 = vmatprep.subr.mxu0 0.0
  %892 = vmatpush1.msra.mxu0 0.0
  %893 = vmatprep.subr.mxu0 0.0
  %894 = vmatpush1.msra.mxu0 0.0
  %895 = vmatprep.mubr.f32.mxu0 0.0
  %896 = vmatmul.mubr.f32.gmra.mrb[0].mxu0 %v488
  %v897 = vpop.f32.mrb[0].mxu0
  %v898 = vadd.f32 %v756, %v897
  %v899 = vpop.f32.mrb[0].mxu0
  %v900 = vadd.f32 %v758, %v899
  %901 = vdwg.mxu0
  %v902 = vld [vmem:[%s3] sm:$0xf]
  %v904 = vlaneseq
  %v905 = vshrl.u32 %v904, 7
  %v906 = vsub.s32 0, %v905
  %v907 = vrot.slane %v902, %v906
  %v908 = vlaneseq
  %v909 = vshrl.u32 %v908, 7
  %v910 = vsub.s32 1, %v909
  %v911 = vrot.slane %v902, %v910
  %v912 = vlaneseq
  %v913 = vshrl.u32 %v912, 7
  %v914 = vsub.s32 2, %v913
  %v915 = vrot.slane %v902, %v914
  %v916 = vlaneseq
  %v917 = vshrl.u32 %v916, 7
  %v918 = vsub.s32 3, %v917
  %v919 = vrot.slane %v902, %v918
  %v924 = vadd.f32 %v827, %v907
  %v925 = vadd.f32 %v829, %v911
  %v926 = vadd.f32 %v898, %v915
  %v927 = vadd.f32 %v900, %v919
  %v928 = vxor.u32 %v924, 2147483648
  %v929 = vmul.f32 %v928, 1.442695
  %v930 = vpow.pop %v929
  %v931 = vadd.f32 %v930, 1.0
  %v932 = vrcp.pop %v931
  %v933 = vmul.f32 1.0, %v932
  %v934 = vxor.u32 %v925, 2147483648
  %v935 = vmul.f32 %v934, 1.442695
  %v936 = vpow.pop %v935
  %v937 = vadd.f32 %v936, 1.0
  %v938 = vrcp.pop %v937
  %v939 = vmul.f32 1.0, %v938
  %v940 = vtanh.pop %v926
  %v941 = vxor.u32 %v927, 2147483648
  %v942 = vmul.f32 %v941, 1.442695
  %v943 = vpow.pop %v942
  %v944 = vadd.f32 %v943, 1.0
  %v945 = vrcp.pop %v944
  %v946 = vmul.f32 1.0, %v945
  %v947 = vld [vmem:[#allocation3] sm:$0x3]
  %v948 = vmul.f32 %v939, %v947
  %v949 = vmul.f32 %v933, %v940
  %v950 = vadd.f32 %v948, %v949
  %v951 = vtanh.pop %v950
  %v952 = vmul.f32 %v946, %v951
  %953 = vst [vmem:[#allocation3] sm:$0x3] %v950
  %954 = vst [vmem:[#allocation2] sm:$0x3] %v952
  %s955 = scalar_lea.vmem %s4, 2
  %956 = vst [vmem:[%s955] sm:$0x3] %v952
  %s957 = scalar_lea.vmem %s0, 4
  %v958 = vld [vmem:[%s957] sm:$0x3]
  %v959 = vld [vmem:[%s1] sm:$0xff]
  %v960 = vld [vmem:[%s1 + $0x8] sm:$0xff]
  %v961 = vld [vmem:[%s1 + $0x10] sm:$0xff]
  %v962 = vld [vmem:[%s1 + $0x18] sm:$0xff]
  %v963 = vld [vmem:[%s1 + $0x20] sm:$0xff]
  %v964 = vld [vmem:[%s1 + $0x28] sm:$0xff]
  %v965 = vld [vmem:[%s1 + $0x30] sm:$0xff]
  %v966 = vld [vmem:[%s1 + $0x38] sm:$0xff]
  %v967 = vld [vmem:[%s1 + $0x40] sm:$0xff]
  %v968 = vld [vmem:[%s1 + $0x48] sm:$0xff]
  %v969 = vld [vmem:[%s1 + $0x50] sm:$0xff]
  %v970 = vld [vmem:[%s1 + $0x58] sm:$0xff]
  %v971 = vld [vmem:[%s1 + $0x60] sm:$0xff]
  %v972 = vld [vmem:[%s1 + $0x68] sm:$0xff]
  %v973 = vld [vmem:[%s1 + $0x70] sm:$0xff]
  %v974 = vld [vmem:[%s1 + $0x78] sm:$0xff]
  %v975 = vld [vmem:[%s1 + $0x80] sm:$0xff]
  %v976 = vld [vmem:[%s1 + $0x88] sm:$0xff]
  %v977 = vld [vmem:[%s1 + $0x90] sm:$0xff]
  %v978 = vld [vmem:[%s1 + $0x98] sm:$0xff]
  %v979 = vld [vmem:[%s1 + $0xa0] sm:$0xff]
  %v980 = vld [vmem:[%s1 + $0xa8] sm:$0xff]
  %v981 = vld [vmem:[%s1 + $0xb0] sm:$0xff]
  %v982 = vld [vmem:[%s1 + $0xb8] sm:$0xff]
  %v983 = vld [vmem:[%s1 + $0xc0] sm:$0xff]
  %v984 = vld [vmem:[%s1 + $0xc8] sm:$0xff]
  %v985 = vld [vmem:[%s1 + $0xd0] sm:$0xff]
  %v986 = vld [vmem:[%s1 + $0xd8] sm:$0xff]
  %v987 = vld [vmem:[%s1 + $0xe0] sm:$0xff]
  %v988 = vld [vmem:[%s1 + $0xe8] sm:$0xff]
  %v989 = vld [vmem:[%s1 + $0xf0] sm:$0xff]
  %v990 = vld [vmem:[%s1 + $0xf8] sm:$0xff]
  %v991 = vld [vmem:[%s1 + $0x100] sm:$0xff]
  %v992 = vld [vmem:[%s1 + $0x108] sm:$0xff]
  %v993 = vld [vmem:[%s1 + $0x110] sm:$0xff]
  %v994 = vld [vmem:[%s1 + $0x118] sm:$0xff]
  %v995 = vld [vmem:[%s1 + $0x120] sm:$0xff]
  %v996 = vld [vmem:[%s1 + $0x128] sm:$0xff]
  %v997 = vld [vmem:[%s1 + $0x130] sm:$0xff]
  %v998 = vld [vmem:[%s1 + $0x138] sm:$0xff]
  %v999 = vld [vmem:[%s1 + $0x140] sm:$0xff]
  %v1000 = vld [vmem:[%s1 + $0x148] sm:$0xff]
  %v1001 = vld [vmem:[%s1 + $0x150] sm:$0xff]
  %v1002 = vld [vmem:[%s1 + $0x158] sm:$0xff]
  %v1003 = vld [vmem:[%s1 + $0x160] sm:$0xff]
  %v1004 = vld [vmem:[%s1 + $0x168] sm:$0xff]
  %v1005 = vld [vmem:[%s1 + $0x170] sm:$0xff]
  %v1006 = vld [vmem:[%s1 + $0x178] sm:$0xff]
  %v1007 = vld [vmem:[%s1 + $0x180] sm:$0xff]
  %v1008 = vld [vmem:[%s1 + $0x188] sm:$0xff]
  %v1009 = vld [vmem:[%s1 + $0x190] sm:$0xff]
  %v1010 = vld [vmem:[%s1 + $0x198] sm:$0xff]
  %v1011 = vld [vmem:[%s1 + $0x1a0] sm:$0xff]
  %v1012 = vld [vmem:[%s1 + $0x1a8] sm:$0xff]
  %v1013 = vld [vmem:[%s1 + $0x1b0] sm:$0xff]
  %v1014 = vld [vmem:[%s1 + $0x1b8] sm:$0xff]
  %v1015 = vld [vmem:[%s1 + $0x1c0] sm:$0xff]
  %v1016 = vld [vmem:[%s1 + $0x1c8] sm:$0xff]
  %v1017 = vld [vmem:[%s1 + $0x1d0] sm:$0xff]
  %v1018 = vld [vmem:[%s1 + $0x1d8] sm:$0xff]
  %v1019 = vld [vmem:[%s1 + $0x1e0] sm:$0xff]
  %v1020 = vld [vmem:[%s1 + $0x1e8] sm:$0xff]
  %v1021 = vld [vmem:[%s1 + $0x1f0] sm:$0xff]
  %v1022 = vld [vmem:[%s1 + $0x1f8] sm:$0xff]
  %v1023 = vld [vmem:[#allocation2] sm:$0x3]
  %v1024 = vld [vmem:[%s2] sm:$0xff]
  %v1025 = vld [vmem:[%s2 + $0x8] sm:$0xff]
  %v1026 = vld [vmem:[%s2 + $0x10] sm:$0xff]
  %v1027 = vld [vmem:[%s2 + $0x18] sm:$0xff]
  %v1028 = vld [vmem:[%s2 + $0x20] sm:$0xff]
  %v1029 = vld [vmem:[%s2 + $0x28] sm:$0xff]
  %v1030 = vld [vmem:[%s2 + $0x30] sm:$0xff]
  %v1031 = vld [vmem:[%s2 + $0x38] sm:$0xff]
  %v1032 = vld [vmem:[%s2 + $0x40] sm:$0xff]
  %v1033 = vld [vmem:[%s2 + $0x48] sm:$0xff]
  %v1034 = vld [vmem:[%s2 + $0x50] sm:$0xff]
  %v1035 = vld [vmem:[%s2 + $0x58] sm:$0xff]
  %v1036 = vld [vmem:[%s2 + $0x60] sm:$0xff]
  %v1037 = vld [vmem:[%s2 + $0x68] sm:$0xff]
  %v1038 = vld [vmem:[%s2 + $0x70] sm:$0xff]
  %v1039 = vld [vmem:[%s2 + $0x78] sm:$0xff]
  %v1040 = vld [vmem:[%s2 + $0x80] sm:$0xff]
  %v1041 = vld [vmem:[%s2 + $0x88] sm:$0xff]
  %v1042 = vld [vmem:[%s2 + $0x90] sm:$0xff]
  %v1043 = vld [vmem:[%s2 + $0x98] sm:$0xff]
  %v1044 = vld [vmem:[%s2 + $0xa0] sm:$0xff]
  %v1045 = vld [vmem:[%s2 + $0xa8] sm:$0xff]
  %v1046 = vld [vmem:[%s2 + $0xb0] sm:$0xff]
  %v1047 = vld [vmem:[%s2 + $0xb8] sm:$0xff]
  %v1048 = vld [vmem:[%s2 + $0xc0] sm:$0xff]
  %v1049 = vld [vmem:[%s2 + $0xc8] sm:$0xff]
  %v1050 = vld [vmem:[%s2 + $0xd0] sm:$0xff]
  %v1051 = vld [vmem:[%s2 + $0xd8] sm:$0xff]
  %v1052 = vld [vmem:[%s2 + $0xe0] sm:$0xff]
  %v1053 = vld [vmem:[%s2 + $0xe8] sm:$0xff]
  %v1054 = vld [vmem:[%s2 + $0xf0] sm:$0xff]
  %v1055 = vld [vmem:[%s2 + $0xf8] sm:$0xff]
  %v1056 = vld [vmem:[%s2 + $0x100] sm:$0xff]
  %v1057 = vld [vmem:[%s2 + $0x108] sm:$0xff]
  %v1058 = vld [vmem:[%s2 + $0x110] sm:$0xff]
  %v1059 = vld [vmem:[%s2 + $0x118] sm:$0xff]
  %v1060 = vld [vmem:[%s2 + $0x120] sm:$0xff]
  %v1061 = vld [vmem:[%s2 + $0x128] sm:$0xff]
  %v1062 = vld [vmem:[%s2 + $0x130] sm:$0xff]
  %v1063 = vld [vmem:[%s2 + $0x138] sm:$0xff]
  %v1064 = vld [vmem:[%s2 + $0x140] sm:$0xff]
  %v1065 = vld [vmem:[%s2 + $0x148] sm:$0xff]
  %v1066 = vld [vmem:[%s2 + $0x150] sm:$0xff]
  %v1067 = vld [vmem:[%s2 + $0x158] sm:$0xff]
  %v1068 = vld [vmem:[%s2 + $0x160] sm:$0xff]
  %v1069 = vld [vmem:[%s2 + $0x168] sm:$0xff]
  %v1070 = vld [vmem:[%s2 + $0x170] sm:$0xff]
  %v1071 = vld [vmem:[%s2 + $0x178] sm:$0xff]
  %v1072 = vld [vmem:[%s2 + $0x180] sm:$0xff]
  %v1073 = vld [vmem:[%s2 + $0x188] sm:$0xff]
  %v1074 = vld [vmem:[%s2 + $0x190] sm:$0xff]
  %v1075 = vld [vmem:[%s2 + $0x198] sm:$0xff]
  %v1076 = vld [vmem:[%s2 + $0x1a0] sm:$0xff]
  %v1077 = vld [vmem:[%s2 + $0x1a8] sm:$0xff]
  %v1078 = vld [vmem:[%s2 + $0x1b0] sm:$0xff]
  %v1079 = vld [vmem:[%s2 + $0x1b8] sm:$0xff]
  %v1080 = vld [vmem:[%s2 + $0x1c0] sm:$0xff]
  %v1081 = vld [vmem:[%s2 + $0x1c8] sm:$0xff]
  %v1082 = vld [vmem:[%s2 + $0x1d0] sm:$0xff]
  %v1083 = vld [vmem:[%s2 + $0x1d8] sm:$0xff]
  %v1084 = vld [vmem:[%s2 + $0x1e0] sm:$0xff]
  %v1085 = vld [vmem:[%s2 + $0x1e8] sm:$0xff]
  %v1086 = vld [vmem:[%s2 + $0x1f0] sm:$0xff]
  %v1087 = vld [vmem:[%s2 + $0x1f8] sm:$0xff]
  %1088 = vmatprep.subr.mxu0 %v1025
  %1089 = vmatpush1.msra.mxu0 %v1024
  %1090 = vmatprep.subr.mxu0 %v1029
  %1091 = vmatpush1.msra.mxu0 %v1028
  %1092 = vmatprep.subr.mxu0 %v1033
  %1093 = vmatpush1.msra.mxu0 %v1032
  %1094 = vmatprep.subr.mxu0 %v1037
  %1095 = vmatpush1.msra.mxu0 %v1036
  %1096 = vmatprep.subr.mxu0 %v1041
  %1097 = vmatpush1.msra.mxu0 %v1040
  %1098 = vmatprep.subr.mxu0 %v1045
  %1099 = vmatpush1.msra.mxu0 %v1044
  %1100 = vmatprep.subr.mxu0 %v1049
  %1101 = vmatpush1.msra.mxu0 %v1048
  %1102 = vmatprep.subr.mxu0 %v1053
  %1103 = vmatpush1.msra.mxu0 %v1052
  %1104 = vmatprep.subr.mxu0 %v1057
  %1105 = vmatpush1.msra.mxu0 %v1056
  %1106 = vmatprep.subr.mxu0 %v1061
  %1107 = vmatpush1.msra.mxu0 %v1060
  %1108 = vmatprep.subr.mxu0 %v1065
  %1109 = vmatpush1.msra.mxu0 %v1064
  %1110 = vmatprep.subr.mxu0 %v1069
  %1111 = vmatpush1.msra.mxu0 %v1068
  %1112 = vmatprep.subr.mxu0 %v1073
  %1113 = vmatpush1.msra.mxu0 %v1072
  %1114 = vmatprep.subr.mxu0 %v1077
  %1115 = vmatpush1.msra.mxu0 %v1076
  %1116 = vmatprep.subr.mxu0 %v1081
  %1117 = vmatpush1.msra.mxu0 %v1080
  %1118 = vmatprep.subr.mxu0 %v1085
  %1119 = vmatpush1.msra.mxu0 %v1084
  %1120 = vmatprep.subr.mxu0 0.0
  %1121 = vmatpush1.msra.mxu0 0.0
  %1122 = vmatprep.subr.mxu0 0.0
  %1123 = vmatpush1.msra.mxu0 0.0
  %1124 = vmatprep.subr.mxu0 0.0
  %1125 = vmatpush1.msra.mxu0 0.0
  %1126 = vmatprep.subr.mxu0 0.0
  %1127 = vmatpush1.msra.mxu0 0.0
  %1128 = vmatprep.subr.mxu0 0.0
  %1129 = vmatpush1.msra.mxu0 0.0
  %1130 = vmatprep.subr.mxu0 0.0
  %1131 = vmatpush1.msra.mxu0 0.0
  %1132 = vmatprep.subr.mxu0 0.0
  %1133 = vmatpush1.msra.mxu0 0.0
  %1134 = vmatprep.subr.mxu0 0.0
  %1135 = vmatpush1.msra.mxu0 0.0
  %1136 = vmatprep.subr.mxu0 0.0
  %1137 = vmatpush1.msra.mxu0 0.0
  %1138 = vmatprep.subr.mxu0 0.0
  %1139 = vmatpush1.msra.mxu0 0.0
  %1140 = vmatprep.subr.mxu0 0.0
  %1141 = vmatpush1.msra.mxu0 0.0
  %1142 = vmatprep.subr.mxu0 0.0
  %1143 = vmatpush1.msra.mxu0 0.0
  %1144 = vmatprep.subr.mxu0 0.0
  %1145 = vmatpush1.msra.mxu0 0.0
  %1146 = vmatprep.subr.mxu0 0.0
  %1147 = vmatpush1.msra.mxu0 0.0
  %1148 = vmatprep.subr.mxu0 0.0
  %1149 = vmatpush1.msra.mxu0 0.0
  %1150 = vmatprep.subr.mxu0 0.0
  %1151 = vmatpush1.msra.mxu0 0.0
  %1152 = vmatprep.mubr.f32.mxu0 0.0
  %1153 = vmatmul.mubr.f32.gmra.mrb[0].mxu0 %v1023
  %v1154 = vpop.f32.mrb[0].mxu0
  %v1155 = vadd.f32 0.0, %v1154
  %v1156 = vpop.f32.mrb[0].mxu0
  %v1157 = vadd.f32 0.0, %v1156
  %1158 = vdwg.mxu0
  %1159 = vmatprep.subr.mxu0 %v1027
  %1160 = vmatpush1.msra.mxu0 %v1026
  %1161 = vmatprep.subr.mxu0 %v1031
  %1162 = vmatpush1.msra.mxu0 %v1030
  %1163 = vmatprep.subr.mxu0 %v1035
  %1164 = vmatpush1.msra.mxu0 %v1034
  %1165 = vmatprep.subr.mxu0 %v1039
  %1166 = vmatpush1.msra.mxu0 %v1038
  %1167 = vmatprep.subr.mxu0 %v1043
  %1168 = vmatpush1.msra.mxu0 %v1042
  %1169 = vmatprep.subr.mxu0 %v1047
  %1170 = vmatpush1.msra.mxu0 %v1046
  %1171 = vmatprep.subr.mxu0 %v1051
  %1172 = vmatpush1.msra.mxu0 %v1050
  %1173 = vmatprep.subr.mxu0 %v1055
  %1174 = vmatpush1.msra.mxu0 %v1054
  %1175 = vmatprep.subr.mxu0 %v1059
  %1176 = vmatpush1.msra.mxu0 %v1058
  %1177 = vmatprep.subr.mxu0 %v1063
  %1178 = vmatpush1.msra.mxu0 %v1062
  %1179 = vmatprep.subr.mxu0 %v1067
  %1180 = vmatpush1.msra.mxu0 %v1066
  %1181 = vmatprep.subr.mxu0 %v1071
  %1182 = vmatpush1.msra.mxu0 %v1070
  %1183 = vmatprep.subr.mxu0 %v1075
  %1184 = vmatpush1.msra.mxu0 %v1074
  %1185 = vmatprep.subr.mxu0 %v1079
  %1186 = vmatpush1.msra.mxu0 %v1078
  %1187 = vmatprep.subr.mxu0 %v1083
  %1188 = vmatpush1.msra.mxu0 %v1082
  %1189 = vmatprep.subr.mxu0 %v1087
  %1190 = vmatpush1.msra.mxu0 %v1086
  %1191 = vmatprep.subr.mxu0 0.0
  %1192 = vmatpush1.msra.mxu0 0.0
  %1193 = vmatprep.subr.mxu0 0.0
  %1194 = vmatpush1.msra.mxu0 0.0
  %1195 = vmatprep.subr.mxu0 0.0
  %1196 = vmatpush1.msra.mxu0 0.0
  %1197 = vmatprep.subr.mxu0 0.0
  %1198 = vmatpush1.msra.mxu0 0.0
  %1199 = vmatprep.subr.mxu0 0.0
  %1200 = vmatpush1.msra.mxu0 0.0
  %1201 = vmatprep.subr.mxu0 0.0
  %1202 = vmatpush1.msra.mxu0 0.0
  %1203 = vmatprep.subr.mxu0 0.0
  %1204 = vmatpush1.msra.mxu0 0.0
  %1205 = vmatprep.subr.mxu0 0.0
  %1206 = vmatpush1.msra.mxu0 0.0
  %1207 = vmatprep.subr.mxu0 0.0
  %1208 = vmatpush1.msra.mxu0 0.0
  %1209 = vmatprep.subr.mxu0 0.0
  %1210 = vmatpush1.msra.mxu0 0.0
  %1211 = vmatprep.subr.mxu0 0.0
  %1212 = vmatpush1.msra.mxu0 0.0
  %1213 = vmatprep.subr.mxu0 0.0
  %1214 = vmatpush1.msra.mxu0 0.0
  %1215 = vmatprep.subr.mxu0 0.0
  %1216 = vmatpush1.msra.mxu0 0.0
  %1217 = vmatprep.subr.mxu0 0.0
  %1218 = vmatpush1.msra.mxu0 0.0
  %1219 = vmatprep.subr.mxu0 0.0
  %1220 = vmatpush1.msra.mxu0 0.0
  %1221 = vmatprep.subr.mxu0 0.0
  %1222 = vmatpush1.msra.mxu0 0.0
  %1223 = vmatprep.mubr.f32.mxu0 0.0
  %1224 = vmatmul.mubr.f32.gmra.mrb[0].mxu0 %v1023
  %v1225 = vpop.f32.mrb[0].mxu0
  %v1226 = vadd.f32 0.0, %v1225
  %v1227 = vpop.f32.mrb[0].mxu0
  %v1228 = vadd.f32 0.0, %v1227
  %1229 = vdwg.mxu0
  %1230 = vmatprep.subr.mxu0 %v960
  %1231 = vmatpush1.msra.mxu0 %v959
  %1232 = vmatprep.subr.mxu0 %v964
  %1233 = vmatpush1.msra.mxu0 %v963
  %1234 = vmatprep.subr.mxu0 %v968
  %1235 = vmatpush1.msra.mxu0 %v967
  %1236 = vmatprep.subr.mxu0 %v972
  %1237 = vmatpush1.msra.mxu0 %v971
  %1238 = vmatprep.subr.mxu0 %v976
  %1239 = vmatpush1.msra.mxu0 %v975
  %1240 = vmatprep.subr.mxu0 %v980
  %1241 = vmatpush1.msra.mxu0 %v979
  %1242 = vmatprep.subr.mxu0 %v984
  %1243 = vmatpush1.msra.mxu0 %v983
  %1244 = vmatprep.subr.mxu0 %v988
  %1245 = vmatpush1.msra.mxu0 %v987
  %1246 = vmatprep.subr.mxu0 %v992
  %1247 = vmatpush1.msra.mxu0 %v991
  %1248 = vmatprep.subr.mxu0 %v996
  %1249 = vmatpush1.msra.mxu0 %v995
  %1250 = vmatprep.subr.mxu0 %v1000
  %1251 = vmatpush1.msra.mxu0 %v999
  %1252 = vmatprep.subr.mxu0 %v1004
  %1253 = vmatpush1.msra.mxu0 %v1003
  %1254 = vmatprep.subr.mxu0 %v1008
  %1255 = vmatpush1.msra.mxu0 %v1007
  %1256 = vmatprep.subr.mxu0 %v1012
  %1257 = vmatpush1.msra.mxu0 %v1011
  %1258 = vmatprep.subr.mxu0 %v1016
  %1259 = vmatpush1.msra.mxu0 %v1015
  %1260 = vmatprep.subr.mxu0 %v1020
  %1261 = vmatpush1.msra.mxu0 %v1019
  %1262 = vmatprep.subr.mxu0 0.0
  %1263 = vmatpush1.msra.mxu0 0.0
  %1264 = vmatprep.subr.mxu0 0.0
  %1265 = vmatpush1.msra.mxu0 0.0
  %1266 = vmatprep.subr.mxu0 0.0
  %1267 = vmatpush1.msra.mxu0 0.0
  %1268 = vmatprep.subr.mxu0 0.0
  %1269 = vmatpush1.msra.mxu0 0.0
  %1270 = vmatprep.subr.mxu0 0.0
  %1271 = vmatpush1.msra.mxu0 0.0
  %1272 = vmatprep.subr.mxu0 0.0
  %1273 = vmatpush1.msra.mxu0 0.0
  %1274 = vmatprep.subr.mxu0 0.0
  %1275 = vmatpush1.msra.mxu0 0.0
  %1276 = vmatprep.subr.mxu0 0.0
  %1277 = vmatpush1.msra.mxu0 0.0
  %1278 = vmatprep.subr.mxu0 0.0
  %1279 = vmatpush1.msra.mxu0 0.0
  %1280 = vmatprep.subr.mxu0 0.0
  %1281 = vmatpush1.msra.mxu0 0.0
  %1282 = vmatprep.subr.mxu0 0.0
  %1283 = vmatpush1.msra.mxu0 0.0
  %1284 = vmatprep.subr.mxu0 0.0
  %1285 = vmatpush1.msra.mxu0 0.0
  %1286 = vmatprep.subr.mxu0 0.0
  %1287 = vmatpush1.msra.mxu0 0.0
  %1288 = vmatprep.subr.mxu0 0.0
  %1289 = vmatpush1.msra.mxu0 0.0
  %1290 = vmatprep.subr.mxu0 0.0
  %1291 = vmatpush1.msra.mxu0 0.0
  %1292 = vmatprep.subr.mxu0 0.0
  %1293 = vmatpush1.msra.mxu0 0.0
  %1294 = vmatprep.mubr.f32.mxu0 0.0
  %1295 = vmatmul.mubr.f32.gmra.mrb[0].mxu0 %v958
  %v1296 = vpop.f32.mrb[0].mxu0
  %v1297 = vadd.f32 %v1155, %v1296
  %v1298 = vpop.f32.mrb[0].mxu0
  %v1299 = vadd.f32 %v1157, %v1298
  %1300 = vdwg.mxu0
  %1301 = vmatprep.subr.mxu0 %v962
  %1302 = vmatpush1.msra.mxu0 %v961
  %1303 = vmatprep.subr.mxu0 %v966
  %1304 = vmatpush1.msra.mxu0 %v965
  %1305 = vmatprep.subr.mxu0 %v970
  %1306 = vmatpush1.msra.mxu0 %v969
  %1307 = vmatprep.subr.mxu0 %v974
  %1308 = vmatpush1.msra.mxu0 %v973
  %1309 = vmatprep.subr.mxu0 %v978
  %1310 = vmatpush1.msra.mxu0 %v977
  %1311 = vmatprep.subr.mxu0 %v982
  %1312 = vmatpush1.msra.mxu0 %v981
  %1313 = vmatprep.subr.mxu0 %v986
  %1314 = vmatpush1.msra.mxu0 %v985
  %1315 = vmatprep.subr.mxu0 %v990
  %1316 = vmatpush1.msra.mxu0 %v989
  %1317 = vmatprep.subr.mxu0 %v994
  %1318 = vmatpush1.msra.mxu0 %v993
  %1319 = vmatprep.subr.mxu0 %v998
  %1320 = vmatpush1.msra.mxu0 %v997
  %1321 = vmatprep.subr.mxu0 %v1002
  %1322 = vmatpush1.msra.mxu0 %v1001
  %1323 = vmatprep.subr.mxu0 %v1006
  %1324 = vmatpush1.msra.mxu0 %v1005
  %1325 = vmatprep.subr.mxu0 %v1010
  %1326 = vmatpush1.msra.mxu0 %v1009
  %1327 = vmatprep.subr.mxu0 %v1014
  %1328 = vmatpush1.msra.mxu0 %v1013
  %1329 = vmatprep.subr.mxu0 %v1018
  %1330 = vmatpush1.msra.mxu0 %v1017
  %1331 = vmatprep.subr.mxu0 %v1022
  %1332 = vmatpush1.msra.mxu0 %v1021
  %1333 = vmatprep.subr.mxu0 0.0
  %1334 = vmatpush1.msra.mxu0 0.0
  %1335 = vmatprep.subr.mxu0 0.0
  %1336 = vmatpush1.msra.mxu0 0.0
  %1337 = vmatprep.subr.mxu0 0.0
  %1338 = vmatpush1.msra.mxu0 0.0
  %1339 = vmatprep.subr.mxu0 0.0
  %1340 = vmatpush1.msra.mxu0 0.0
  %1341 = vmatprep.subr.mxu0 0.0
  %1342 = vmatpush1.msra.mxu0 0.0
  %1343 = vmatprep.subr.mxu0 0.0
  %1344 = vmatpush1.msra.mxu0 0.0
  %1345 = vmatprep.subr.mxu0 0.0
  %1346 = vmatpush1.msra.mxu0 0.0
  %1347 = vmatprep.subr.mxu0 0.0
  %1348 = vmatpush1.msra.mxu0 0.0
  %1349 = vmatprep.subr.mxu0 0.0
  %1350 = vmatpush1.msra.mxu0 0.0
  %1351 = vmatprep.subr.mxu0 0.0
  %1352 = vmatpush1.msra.mxu0 0.0
  %1353 = vmatprep.subr.mxu0 0.0
  %1354 = vmatpush1.msra.mxu0 0.0
  %1355 = vmatprep.subr.mxu0 0.0
  %1356 = vmatpush1.msra.mxu0 0.0
  %1357 = vmatprep.subr.mxu0 0.0
  %1358 = vmatpush1.msra.mxu0 0.0
  %1359 = vmatprep.subr.mxu0 0.0
  %1360 = vmatpush1.msra.mxu0 0.0
  %1361 = vmatprep.subr.mxu0 0.0
  %1362 = vmatpush1.msra.mxu0 0.0
  %1363 = vmatprep.subr.mxu0 0.0
  %1364 = vmatpush1.msra.mxu0 0.0
  %1365 = vmatprep.mubr.f32.mxu0 0.0
  %1366 = vmatmul.mubr.f32.gmra.mrb[0].mxu0 %v958
  %v1367 = vpop.f32.mrb[0].mxu0
  %v1368 = vadd.f32 %v1226, %v1367
  %v1369 = vpop.f32.mrb[0].mxu0
  %v1370 = vadd.f32 %v1228, %v1369
  %1371 = vdwg.mxu0
  %v1372 = vld [vmem:[%s3] sm:$0xf]
  %v1374 = vlaneseq
  %v1375 = vshrl.u32 %v1374, 7
  %v1376 = vsub.s32 0, %v1375
  %v1377 = vrot.slane %v1372, %v1376
  %v1378 = vlaneseq
  %v1379 = vshrl.u32 %v1378, 7
  %v1380 = vsub.s32 1, %v1379
  %v1381 = vrot.slane %v1372, %v1380
  %v1382 = vlaneseq
  %v1383 = vshrl.u32 %v1382, 7
  %v1384 = vsub.s32 2, %v1383
  %v1385 = vrot.slane %v1372, %v1384
  %v1386 = vlaneseq
  %v1387 = vshrl.u32 %v1386, 7
  %v1388 = vsub.s32 3, %v1387
  %v1389 = vrot.slane %v1372, %v1388
  %v1394 = vadd.f32 %v1297, %v1377
  %v1395 = vadd.f32 %v1299, %v1381
  %v1396 = vadd.f32 %v1368, %v1385
  %v1397 = vadd.f32 %v1370, %v1389
  %v1398 = vxor.u32 %v1394, 2147483648
  %v1399 = vmul.f32 %v1398, 1.442695
  %v1400 = vpow.pop %v1399
  %v1401 = vadd.f32 %v1400, 1.0
  %v1402 = vrcp.pop %v1401
  %v1403 = vmul.f32 1.0, %v1402
  %v1404 = vxor.u32 %v1395, 2147483648
  %v1405 = vmul.f32 %v1404, 1.442695
  %v1406 = vpow.pop %v1405
  %v1407 = vadd.f32 %v1406, 1.0
  %v1408 = vrcp.pop %v1407
  %v1409 = vmul.f32 1.0, %v1408
  %v1410 = vtanh.pop %v1396
  %v1411 = vxor.u32 %v1397, 2147483648
  %v1412 = vmul.f32 %v1411, 1.442695
  %v1413 = vpow.pop %v1412
  %v1414 = vadd.f32 %v1413, 1.0
  %v1415 = vrcp.pop %v1414
  %v1416 = vmul.f32 1.0, %v1415
  %v1417 = vld [vmem:[#allocation3] sm:$0x3]
  %v1418 = vmul.f32 %v1409, %v1417
  %v1419 = vmul.f32 %v1403, %v1410
  %v1420 = vadd.f32 %v1418, %v1419
  %v1421 = vtanh.pop %v1420
  %v1422 = vmul.f32 %v1416, %v1421
  %1423 = vst [vmem:[#allocation3] sm:$0x3] %v1420
  %1424 = vst [vmem:[#allocation2] sm:$0x3] %v1422
  %s1425 = scalar_lea.vmem %s4, 4
  %1426 = vst [vmem:[%s1425] sm:$0x3] %v1422
  %s1427 = scalar_lea.vmem %s0, 6
  %v1428 = vld [vmem:[%s1427] sm:$0x3]
  %v1429 = vld [vmem:[%s1] sm:$0xff]
  %v1430 = vld [vmem:[%s1 + $0x8] sm:$0xff]
  %v1431 = vld [vmem:[%s1 + $0x10] sm:$0xff]
  %v1432 = vld [vmem:[%s1 + $0x18] sm:$0xff]
  %v1433 = vld [vmem:[%s1 + $0x20] sm:$0xff]
  %v1434 = vld [vmem:[%s1 + $0x28] sm:$0xff]
  %v1435 = vld [vmem:[%s1 + $0x30] sm:$0xff]
  %v1436 = vld [vmem:[%s1 + $0x38] sm:$0xff]
  %v1437 = vld [vmem:[%s1 + $0x40] sm:$0xff]
  %v1438 = vld [vmem:[%s1 + $0x48] sm:$0xff]
  %v1439 = vld [vmem:[%s1 + $0x50] sm:$0xff]
  %v1440 = vld [vmem:[%s1 + $0x58] sm:$0xff]
  %v1441 = vld [vmem:[%s1 + $0x60] sm:$0xff]
  %v1442 = vld [vmem:[%s1 + $0x68] sm:$0xff]
  %v1443 = vld [vmem:[%s1 + $0x70] sm:$0xff]
  %v1444 = vld [vmem:[%s1 + $0x78] sm:$0xff]
  %v1445 = vld [vmem:[%s1 + $0x80] sm:$0xff]
  %v1446 = vld [vmem:[%s1 + $0x88] sm:$0xff]
  %v1447 = vld [vmem:[%s1 + $0x90] sm:$0xff]
  %v1448 = vld [vmem:[%s1 + $0x98] sm:$0xff]
  %v1449 = vld [vmem:[%s1 + $0xa0] sm:$0xff]
  %v1450 = vld [vmem:[%s1 + $0xa8] sm:$0xff]
  %v1451 = vld [vmem:[%s1 + $0xb0] sm:$0xff]
  %v1452 = vld [vmem:[%s1 + $0xb8] sm:$0xff]
  %v1453 = vld [vmem:[%s1 + $0xc0] sm:$0xff]
  %v1454 = vld [vmem:[%s1 + $0xc8] sm:$0xff]
  %v1455 = vld [vmem:[%s1 + $0xd0] sm:$0xff]
  %v1456 = vld [vmem:[%s1 + $0xd8] sm:$0xff]
  %v1457 = vld [vmem:[%s1 + $0xe0] sm:$0xff]
  %v1458 = vld [vmem:[%s1 + $0xe8] sm:$0xff]
  %v1459 = vld [vmem:[%s1 + $0xf0] sm:$0xff]
  %v1460 = vld [vmem:[%s1 + $0xf8] sm:$0xff]
  %v1461 = vld [vmem:[%s1 + $0x100] sm:$0xff]
  %v1462 = vld [vmem:[%s1 + $0x108] sm:$0xff]
  %v1463 = vld [vmem:[%s1 + $0x110] sm:$0xff]
  %v1464 = vld [vmem:[%s1 + $0x118] sm:$0xff]
  %v1465 = vld [vmem:[%s1 + $0x120] sm:$0xff]
  %v1466 = vld [vmem:[%s1 + $0x128] sm:$0xff]
  %v1467 = vld [vmem:[%s1 + $0x130] sm:$0xff]
  %v1468 = vld [vmem:[%s1 + $0x138] sm:$0xff]
  %v1469 = vld [vmem:[%s1 + $0x140] sm:$0xff]
  %v1470 = vld [vmem:[%s1 + $0x148] sm:$0xff]
  %v1471 = vld [vmem:[%s1 + $0x150] sm:$0xff]
  %v1472 = vld [vmem:[%s1 + $0x158] sm:$0xff]
  %v1473 = vld [vmem:[%s1 + $0x160] sm:$0xff]
  %v1474 = vld [vmem:[%s1 + $0x168] sm:$0xff]
  %v1475 = vld [vmem:[%s1 + $0x170] sm:$0xff]
  %v1476 = vld [vmem:[%s1 + $0x178] sm:$0xff]
  %v1477 = vld [vmem:[%s1 + $0x180] sm:$0xff]
  %v1478 = vld [vmem:[%s1 + $0x188] sm:$0xff]
  %v1479 = vld [vmem:[%s1 + $0x190] sm:$0xff]
  %v1480 = vld [vmem:[%s1 + $0x198] sm:$0xff]
  %v1481 = vld [vmem:[%s1 + $0x1a0] sm:$0xff]
  %v1482 = vld [vmem:[%s1 + $0x1a8] sm:$0xff]
  %v1483 = vld [vmem:[%s1 + $0x1b0] sm:$0xff]
  %v1484 = vld [vmem:[%s1 + $0x1b8] sm:$0xff]
  %v1485 = vld [vmem:[%s1 + $0x1c0] sm:$0xff]
  %v1486 = vld [vmem:[%s1 + $0x1c8] sm:$0xff]
  %v1487 = vld [vmem:[%s1 + $0x1d0] sm:$0xff]
  %v1488 = vld [vmem:[%s1 + $0x1d8] sm:$0xff]
  %v1489 = vld [vmem:[%s1 + $0x1e0] sm:$0xff]
  %v1490 = vld [vmem:[%s1 + $0x1e8] sm:$0xff]
  %v1491 = vld [vmem:[%s1 + $0x1f0] sm:$0xff]
  %v1492 = vld [vmem:[%s1 + $0x1f8] sm:$0xff]
  %v1493 = vld [vmem:[#allocation2] sm:$0x3]
  %v1494 = vld [vmem:[%s2] sm:$0xff]
  %v1495 = vld [vmem:[%s2 + $0x8] sm:$0xff]
  %v1496 = vld [vmem:[%s2 + $0x10] sm:$0xff]
  %v1497 = vld [vmem:[%s2 + $0x18] sm:$0xff]
  %v1498 = vld [vmem:[%s2 + $0x20] sm:$0xff]
  %v1499 = vld [vmem:[%s2 + $0x28] sm:$0xff]
  %v1500 = vld [vmem:[%s2 + $0x30] sm:$0xff]
  %v1501 = vld [vmem:[%s2 + $0x38] sm:$0xff]
  %v1502 = vld [vmem:[%s2 + $0x40] sm:$0xff]
  %v1503 = vld [vmem:[%s2 + $0x48] sm:$0xff]
  %v1504 = vld [vmem:[%s2 + $0x50] sm:$0xff]
  %v1505 = vld [vmem:[%s2 + $0x58] sm:$0xff]
  %v1506 = vld [vmem:[%s2 + $0x60] sm:$0xff]
  %v1507 = vld [vmem:[%s2 + $0x68] sm:$0xff]
  %v1508 = vld [vmem:[%s2 + $0x70] sm:$0xff]
  %v1509 = vld [vmem:[%s2 + $0x78] sm:$0xff]
  %v1510 = vld [vmem:[%s2 + $0x80] sm:$0xff]
  %v1511 = vld [vmem:[%s2 + $0x88] sm:$0xff]
  %v1512 = vld [vmem:[%s2 + $0x90] sm:$0xff]
  %v1513 = vld [vmem:[%s2 + $0x98] sm:$0xff]
  %v1514 = vld [vmem:[%s2 + $0xa0] sm:$0xff]
  %v1515 = vld [vmem:[%s2 + $0xa8] sm:$0xff]
  %v1516 = vld [vmem:[%s2 + $0xb0] sm:$0xff]
  %v1517 = vld [vmem:[%s2 + $0xb8] sm:$0xff]
  %v1518 = vld [vmem:[%s2 + $0xc0] sm:$0xff]
  %v1519 = vld [vmem:[%s2 + $0xc8] sm:$0xff]
  %v1520 = vld [vmem:[%s2 + $0xd0] sm:$0xff]
  %v1521 = vld [vmem:[%s2 + $0xd8] sm:$0xff]
  %v1522 = vld [vmem:[%s2 + $0xe0] sm:$0xff]
  %v1523 = vld [vmem:[%s2 + $0xe8] sm:$0xff]
  %v1524 = vld [vmem:[%s2 + $0xf0] sm:$0xff]
  %v1525 = vld [vmem:[%s2 + $0xf8] sm:$0xff]
  %v1526 = vld [vmem:[%s2 + $0x100] sm:$0xff]
  %v1527 = vld [vmem:[%s2 + $0x108] sm:$0xff]
  %v1528 = vld [vmem:[%s2 + $0x110] sm:$0xff]
  %v1529 = vld [vmem:[%s2 + $0x118] sm:$0xff]
  %v1530 = vld [vmem:[%s2 + $0x120] sm:$0xff]
  %v1531 = vld [vmem:[%s2 + $0x128] sm:$0xff]
  %v1532 = vld [vmem:[%s2 + $0x130] sm:$0xff]
  %v1533 = vld [vmem:[%s2 + $0x138] sm:$0xff]
  %v1534 = vld [vmem:[%s2 + $0x140] sm:$0xff]
  %v1535 = vld [vmem:[%s2 + $0x148] sm:$0xff]
  %v1536 = vld [vmem:[%s2 + $0x150] sm:$0xff]
  %v1537 = vld [vmem:[%s2 + $0x158] sm:$0xff]
  %v1538 = vld [vmem:[%s2 + $0x160] sm:$0xff]
  %v1539 = vld [vmem:[%s2 + $0x168] sm:$0xff]
  %v1540 = vld [vmem:[%s2 + $0x170] sm:$0xff]
  %v1541 = vld [vmem:[%s2 + $0x178] sm:$0xff]
  %v1542 = vld [vmem:[%s2 + $0x180] sm:$0xff]
  %v1543 = vld [vmem:[%s2 + $0x188] sm:$0xff]
  %v1544 = vld [vmem:[%s2 + $0x190] sm:$0xff]
  %v1545 = vld [vmem:[%s2 + $0x198] sm:$0xff]
  %v1546 = vld [vmem:[%s2 + $0x1a0] sm:$0xff]
  %v1547 = vld [vmem:[%s2 + $0x1a8] sm:$0xff]
  %v1548 = vld [vmem:[%s2 + $0x1b0] sm:$0xff]
  %v1549 = vld [vmem:[%s2 + $0x1b8] sm:$0xff]
  %v1550 = vld [vmem:[%s2 + $0x1c0] sm:$0xff]
  %v1551 = vld [vmem:[%s2 + $0x1c8] sm:$0xff]
  %v1552 = vld [vmem:[%s2 + $0x1d0] sm:$0xff]
  %v1553 = vld [vmem:[%s2 + $0x1d8] sm:$0xff]
  %v1554 = vld [vmem:[%s2 + $0x1e0] sm:$0xff]
  %v1555 = vld [vmem:[%s2 + $0x1e8] sm:$0xff]
  %v1556 = vld [vmem:[%s2 + $0x1f0] sm:$0xff]
  %v1557 = vld [vmem:[%s2 + $0x1f8] sm:$0xff]
  %1558 = vmatprep.subr.mxu0 %v1495
  %1559 = vmatpush1.msra.mxu0 %v1494
  %1560 = vmatprep.subr.mxu0 %v1499
  %1561 = vmatpush1.msra.mxu0 %v1498
  %1562 = vmatprep.subr.mxu0 %v1503
  %1563 = vmatpush1.msra.mxu0 %v1502
  %1564 = vmatprep.subr.mxu0 %v1507
  %1565 = vmatpush1.msra.mxu0 %v1506
  %1566 = vmatprep.subr.mxu0 %v1511
  %1567 = vmatpush1.msra.mxu0 %v1510
  %1568 = vmatprep.subr.mxu0 %v1515
  %1569 = vmatpush1.msra.mxu0 %v1514
  %1570 = vmatprep.subr.mxu0 %v1519
  %1571 = vmatpush1.msra.mxu0 %v1518
  %1572 = vmatprep.subr.mxu0 %v1523
  %1573 = vmatpush1.msra.mxu0 %v1522
  %1574 = vmatprep.subr.mxu0 %v1527
  %1575 = vmatpush1.msra.mxu0 %v1526
  %1576 = vmatprep.subr.mxu0 %v1531
  %1577 = vmatpush1.msra.mxu0 %v1530
  %1578 = vmatprep.subr.mxu0 %v1535
  %1579 = vmatpush1.msra.mxu0 %v1534
  %1580 = vmatprep.subr.mxu0 %v1539
  %1581 = vmatpush1.msra.mxu0 %v1538
  %1582 = vmatprep.subr.mxu0 %v1543
  %1583 = vmatpush1.msra.mxu0 %v1542
  %1584 = vmatprep.subr.mxu0 %v1547
  %1585 = vmatpush1.msra.mxu0 %v1546
  %1586 = vmatprep.subr.mxu0 %v1551
  %1587 = vmatpush1.msra.mxu0 %v1550
  %1588 = vmatprep.subr.mxu0 %v1555
  %1589 = vmatpush1.msra.mxu0 %v1554
  %1590 = vmatprep.subr.mxu0 0.0
  %1591 = vmatpush1.msra.mxu0 0.0
  %1592 = vmatprep.subr.mxu0 0.0
  %1593 = vmatpush1.msra.mxu0 0.0
  %1594 = vmatprep.subr.mxu0 0.0
  %1595 = vmatpush1.msra.mxu0 0.0
  %1596 = vmatprep.subr.mxu0 0.0
  %1597 = vmatpush1.msra.mxu0 0.0
  %1598 = vmatprep.subr.mxu0 0.0
  %1599 = vmatpush1.msra.mxu0 0.0
  %1600 = vmatprep.subr.mxu0 0.0
  %1601 = vmatpush1.msra.mxu0 0.0
  %1602 = vmatprep.subr.mxu0 0.0
  %1603 = vmatpush1.msra.mxu0 0.0
  %1604 = vmatprep.subr.mxu0 0.0
  %1605 = vmatpush1.msra.mxu0 0.0
  %1606 = vmatprep.subr.mxu0 0.0
  %1607 = vmatpush1.msra.mxu0 0.0
  %1608 = vmatprep.subr.mxu0 0.0
  %1609 = vmatpush1.msra.mxu0 0.0
  %1610 = vmatprep.subr.mxu0 0.0
  %1611 = vmatpush1.msra.mxu0 0.0
  %1612 = vmatprep.subr.mxu0 0.0
  %1613 = vmatpush1.msra.mxu0 0.0
  %1614 = vmatprep.subr.mxu0 0.0
  %1615 = vmatpush1.msra.mxu0 0.0
  %1616 = vmatprep.subr.mxu0 0.0
  %1617 = vmatpush1.msra.mxu0 0.0
  %1618 = vmatprep.subr.mxu0 0.0
  %1619 = vmatpush1.msra.mxu0 0.0
  %1620 = vmatprep.subr.mxu0 0.0
  %1621 = vmatpush1.msra.mxu0 0.0
  %1622 = vmatprep.mubr.f32.mxu0 0.0
  %1623 = vmatmul.mubr.f32.gmra.mrb[0].mxu0 %v1493
  %v1624 = vpop.f32.mrb[0].mxu0
  %v1625 = vadd.f32 0.0, %v1624
  %v1626 = vpop.f32.mrb[0].mxu0
  %v1627 = vadd.f32 0.0, %v1626
  %1628 = vdwg.mxu0
  %1629 = vmatprep.subr.mxu0 %v1497
  %1630 = vmatpush1.msra.mxu0 %v1496
  %1631 = vmatprep.subr.mxu0 %v1501
  %1632 = vmatpush1.msra.mxu0 %v1500
  %1633 = vmatprep.subr.mxu0 %v1505
  %1634 = vmatpush1.msra.mxu0 %v1504
  %1635 = vmatprep.subr.mxu0 %v1509
  %1636 = vmatpush1.msra.mxu0 %v1508
  %1637 = vmatprep.subr.mxu0 %v1513
  %1638 = vmatpush1.msra.mxu0 %v1512
  %1639 = vmatprep.subr.mxu0 %v1517
  %1640 = vmatpush1.msra.mxu0 %v1516
  %1641 = vmatprep.subr.mxu0 %v1521
  %1642 = vmatpush1.msra.mxu0 %v1520
  %1643 = vmatprep.subr.mxu0 %v1525
  %1644 = vmatpush1.msra.mxu0 %v1524
  %1645 = vmatprep.subr.mxu0 %v1529
  %1646 = vmatpush1.msra.mxu0 %v1528
  %1647 = vmatprep.subr.mxu0 %v1533
  %1648 = vmatpush1.msra.mxu0 %v1532
  %1649 = vmatprep.subr.mxu0 %v1537
  %1650 = vmatpush1.msra.mxu0 %v1536
  %1651 = vmatprep.subr.mxu0 %v1541
  %1652 = vmatpush1.msra.mxu0 %v1540
  %1653 = vmatprep.subr.mxu0 %v1545
  %1654 = vmatpush1.msra.mxu0 %v1544
  %1655 = vmatprep.subr.mxu0 %v1549
  %1656 = vmatpush1.msra.mxu0 %v1548
  %1657 = vmatprep.subr.mxu0 %v1553
  %1658 = vmatpush1.msra.mxu0 %v1552
  %1659 = vmatprep.subr.mxu0 %v1557
  %1660 = vmatpush1.msra.mxu0 %v1556
  %1661 = vmatprep.subr.mxu0 0.0
  %1662 = vmatpush1.msra.mxu0 0.0
  %1663 = vmatprep.subr.mxu0 0.0
  %1664 = vmatpush1.msra.mxu0 0.0
  %1665 = vmatprep.subr.mxu0 0.0
  %1666 = vmatpush1.msra.mxu0 0.0
  %1667 = vmatprep.subr.mxu0 0.0
  %1668 = vmatpush1.msra.mxu0 0.0
  %1669 = vmatprep.subr.mxu0 0.0
  %1670 = vmatpush1.msra.mxu0 0.0
  %1671 = vmatprep.subr.mxu0 0.0
  %1672 = vmatpush1.msra.mxu0 0.0
  %1673 = vmatprep.subr.mxu0 0.0
  %1674 = vmatpush1.msra.mxu0 0.0
  %1675 = vmatprep.subr.mxu0 0.0
  %1676 = vmatpush1.msra.mxu0 0.0
  %1677 = vmatprep.subr.mxu0 0.0
  %1678 = vmatpush1.msra.mxu0 0.0
  %1679 = vmatprep.subr.mxu0 0.0
  %1680 = vmatpush1.msra.mxu0 0.0
  %1681 = vmatprep.subr.mxu0 0.0
  %1682 = vmatpush1.msra.mxu0 0.0
  %1683 = vmatprep.subr.mxu0 0.0
  %1684 = vmatpush1.msra.mxu0 0.0
  %1685 = vmatprep.subr.mxu0 0.0
  %1686 = vmatpush1.msra.mxu0 0.0
  %1687 = vmatprep.subr.mxu0 0.0
  %1688 = vmatpush1.msra.mxu0 0.0
  %1689 = vmatprep.subr.mxu0 0.0
  %1690 = vmatpush1.msra.mxu0 0.0
  %1691 = vmatprep.subr.mxu0 0.0
  %1692 = vmatpush1.msra.mxu0 0.0
  %1693 = vmatprep.mubr.f32.mxu0 0.0
  %1694 = vmatmul.mubr.f32.gmra.mrb[0].mxu0 %v1493
  %v1695 = vpop.f32.mrb[0].mxu0
  %v1696 = vadd.f32 0.0, %v1695
  %v1697 = vpop.f32.mrb[0].mxu0
  %v1698 = vadd.f32 0.0, %v1697
  %1699 = vdwg.mxu0
  %1700 = vmatprep.subr.mxu0 %v1430
  %1701 = vmatpush1.msra.mxu0 %v1429
  %1702 = vmatprep.subr.mxu0 %v1434
  %1703 = vmatpush1.msra.mxu0 %v1433
  %1704 = vmatprep.subr.mxu0 %v1438
  %1705 = vmatpush1.msra.mxu0 %v1437
  %1706 = vmatprep.subr.mxu0 %v1442
  %1707 = vmatpush1.msra.mxu0 %v1441
  %1708 = vmatprep.subr.mxu0 %v1446
  %1709 = vmatpush1.msra.mxu0 %v1445
  %1710 = vmatprep.subr.mxu0 %v1450
  %1711 = vmatpush1.msra.mxu0 %v1449
  %1712 = vmatprep.subr.mxu0 %v1454
  %1713 = vmatpush1.msra.mxu0 %v1453
  %1714 = vmatprep.subr.mxu0 %v1458
  %1715 = vmatpush1.msra.mxu0 %v1457
  %1716 = vmatprep.subr.mxu0 %v1462
  %1717 = vmatpush1.msra.mxu0 %v1461
  %1718 = vmatprep.subr.mxu0 %v1466
  %1719 = vmatpush1.msra.mxu0 %v1465
  %1720 = vmatprep.subr.mxu0 %v1470
  %1721 = vmatpush1.msra.mxu0 %v1469
  %1722 = vmatprep.subr.mxu0 %v1474
  %1723 = vmatpush1.msra.mxu0 %v1473
  %1724 = vmatprep.subr.mxu0 %v1478
  %1725 = vmatpush1.msra.mxu0 %v1477
  %1726 = vmatprep.subr.mxu0 %v1482
  %1727 = vmatpush1.msra.mxu0 %v1481
  %1728 = vmatprep.subr.mxu0 %v1486
  %1729 = vmatpush1.msra.mxu0 %v1485
  %1730 = vmatprep.subr.mxu0 %v1490
  %1731 = vmatpush1.msra.mxu0 %v1489
  %1732 = vmatprep.subr.mxu0 0.0
  %1733 = vmatpush1.msra.mxu0 0.0
  %1734 = vmatprep.subr.mxu0 0.0
  %1735 = vmatpush1.msra.mxu0 0.0
  %1736 = vmatprep.subr.mxu0 0.0
  %1737 = vmatpush1.msra.mxu0 0.0
  %1738 = vmatprep.subr.mxu0 0.0
  %1739 = vmatpush1.msra.mxu0 0.0
  %1740 = vmatprep.subr.mxu0 0.0
  %1741 = vmatpush1.msra.mxu0 0.0
  %1742 = vmatprep.subr.mxu0 0.0
  %1743 = vmatpush1.msra.mxu0 0.0
  %1744 = vmatprep.subr.mxu0 0.0
  %1745 = vmatpush1.msra.mxu0 0.0
  %1746 = vmatprep.subr.mxu0 0.0
  %1747 = vmatpush1.msra.mxu0 0.0
  %1748 = vmatprep.subr.mxu0 0.0
  %1749 = vmatpush1.msra.mxu0 0.0
  %1750 = vmatprep.subr.mxu0 0.0
  %1751 = vmatpush1.msra.mxu0 0.0
  %1752 = vmatprep.subr.mxu0 0.0
  %1753 = vmatpush1.msra.mxu0 0.0
  %1754 = vmatprep.subr.mxu0 0.0
  %1755 = vmatpush1.msra.mxu0 0.0
  %1756 = vmatprep.subr.mxu0 0.0
  %1757 = vmatpush1.msra.mxu0 0.0
  %1758 = vmatprep.subr.mxu0 0.0
  %1759 = vmatpush1.msra.mxu0 0.0
  %1760 = vmatprep.subr.mxu0 0.0
  %1761 = vmatpush1.msra.mxu0 0.0
  %1762 = vmatprep.subr.mxu0 0.0
  %1763 = vmatpush1.msra.mxu0 0.0
  %1764 = vmatprep.mubr.f32.mxu0 0.0
  %1765 = vmatmul.mubr.f32.gmra.mrb[0].mxu0 %v1428
  %v1766 = vpop.f32.mrb[0].mxu0
  %v1767 = vadd.f32 %v1625, %v1766
  %v1768 = vpop.f32.mrb[0].mxu0
  %v1769 = vadd.f32 %v1627, %v1768
  %1770 = vdwg.mxu0
  %1771 = vmatprep.subr.mxu0 %v1432
  %1772 = vmatpush1.msra.mxu0 %v1431
  %1773 = vmatprep.subr.mxu0 %v1436
  %1774 = vmatpush1.msra.mxu0 %v1435
  %1775 = vmatprep.subr.mxu0 %v1440
  %1776 = vmatpush1.msra.mxu0 %v1439
  %1777 = vmatprep.subr.mxu0 %v1444
  %1778 = vmatpush1.msra.mxu0 %v1443
  %1779 = vmatprep.subr.mxu0 %v1448
  %1780 = vmatpush1.msra.mxu0 %v1447
  %1781 = vmatprep.subr.mxu0 %v1452
  %1782 = vmatpush1.msra.mxu0 %v1451
  %1783 = vmatprep.subr.mxu0 %v1456
  %1784 = vmatpush1.msra.mxu0 %v1455
  %1785 = vmatprep.subr.mxu0 %v1460
  %1786 = vmatpush1.msra.mxu0 %v1459
  %1787 = vmatprep.subr.mxu0 %v1464
  %1788 = vmatpush1.msra.mxu0 %v1463
  %1789 = vmatprep.subr.mxu0 %v1468
  %1790 = vmatpush1.msra.mxu0 %v1467
  %1791 = vmatprep.subr.mxu0 %v1472
  %1792 = vmatpush1.msra.mxu0 %v1471
  %1793 = vmatprep.subr.mxu0 %v1476
  %1794 = vmatpush1.msra.mxu0 %v1475
  %1795 = vmatprep.subr.mxu0 %v1480
  %1796 = vmatpush1.msra.mxu0 %v1479
  %1797 = vmatprep.subr.mxu0 %v1484
  %1798 = vmatpush1.msra.mxu0 %v1483
  %1799 = vmatprep.subr.mxu0 %v1488
  %1800 = vmatpush1.msra.mxu0 %v1487
  %1801 = vmatprep.subr.mxu0 %v1492
  %1802 = vmatpush1.msra.mxu0 %v1491
  %1803 = vmatprep.subr.mxu0 0.0
  %1804 = vmatpush1.msra.mxu0 0.0
  %1805 = vmatprep.subr.mxu0 0.0
  %1806 = vmatpush1.msra.mxu0 0.0
  %1807 = vmatprep.subr.mxu0 0.0
  %1808 = vmatpush1.msra.mxu0 0.0
  %1809 = vmatprep.subr.mxu0 0.0
  %1810 = vmatpush1.msra.mxu0 0.0
  %1811 = vmatprep.subr.mxu0 0.0
  %1812 = vmatpush1.msra.mxu0 0.0
  %1813 = vmatprep.subr.mxu0 0.0
  %1814 = vmatpush1.msra.mxu0 0.0
  %1815 = vmatprep.subr.mxu0 0.0
  %1816 = vmatpush1.msra.mxu0 0.0
  %1817 = vmatprep.subr.mxu0 0.0
  %1818 = vmatpush1.msra.mxu0 0.0
  %1819 = vmatprep.subr.mxu0 0.0
  %1820 = vmatpush1.msra.mxu0 0.0
  %1821 = vmatprep.subr.mxu0 0.0
  %1822 = vmatpush1.msra.mxu0 0.0
  %1823 = vmatprep.subr.mxu0 0.0
  %1824 = vmatpush1.msra.mxu0 0.0
  %1825 = vmatprep.subr.mxu0 0.0
  %1826 = vmatpush1.msra.mxu0 0.0
  %1827 = vmatprep.subr.mxu0 0.0
  %1828 = vmatpush1.msra.mxu0 0.0
  %1829 = vmatprep.subr.mxu0 0.0
  %1830 = vmatpush1.msra.mxu0 0.0
  %1831 = vmatprep.subr.mxu0 0.0
  %1832 = vmatpush1.msra.mxu0 0.0
  %1833 = vmatprep.subr.mxu0 0.0
  %1834 = vmatpush1.msra.mxu0 0.0
  %1835 = vmatprep.mubr.f32.mxu0 0.0
  %1836 = vmatmul.mubr.f32.gmra.mrb[0].mxu0 %v1428
  %v1837 = vpop.f32.mrb[0].mxu0
  %v1838 = vadd.f32 %v1696, %v1837
  %v1839 = vpop.f32.mrb[0].mxu0
  %v1840 = vadd.f32 %v1698, %v1839
  %1841 = vdwg.mxu0
  %v1842 = vld [vmem:[%s3] sm:$0xf]
  %v1844 = vlaneseq
  %v1845 = vshrl.u32 %v1844, 7
  %v1846 = vsub.s32 0, %v1845
  %v1847 = vrot.slane %v1842, %v1846
  %v1848 = vlaneseq
  %v1849 = vshrl.u32 %v1848, 7
  %v1850 = vsub.s32 1, %v1849
  %v1851 = vrot.slane %v1842, %v1850
  %v1852 = vlaneseq
  %v1853 = vshrl.u32 %v1852, 7
  %v1854 = vsub.s32 2, %v1853
  %v1855 = vrot.slane %v1842, %v1854
  %v1856 = vlaneseq
  %v1857 = vshrl.u32 %v1856, 7
  %v1858 = vsub.s32 3, %v1857
  %v1859 = vrot.slane %v1842, %v1858
  %v1864 = vadd.f32 %v1767, %v1847
  %v1865 = vadd.f32 %v1769, %v1851
  %v1866 = vadd.f32 %v1838, %v1855
  %v1867 = vadd.f32 %v1840, %v1859
  %v1868 = vxor.u32 %v1864, 2147483648
  %v1869 = vmul.f32 %v1868, 1.442695
  %v1870 = vpow.pop %v1869
  %v1871 = vadd.f32 %v1870, 1.0
  %v1872 = vrcp.pop %v1871
  %v1873 = vmul.f32 1.0, %v1872
  %v1874 = vxor.u32 %v1865, 2147483648
  %v1875 = vmul.f32 %v1874, 1.442695
  %v1876 = vpow.pop %v1875
  %v1877 = vadd.f32 %v1876, 1.0
  %v1878 = vrcp.pop %v1877
  %v1879 = vmul.f32 1.0, %v1878
  %v1880 = vtanh.pop %v1866
  %v1881 = vxor.u32 %v1867, 2147483648
  %v1882 = vmul.f32 %v1881, 1.442695
  %v1883 = vpow.pop %v1882
  %v1884 = vadd.f32 %v1883, 1.0
  %v1885 = vrcp.pop %v1884
  %v1886 = vmul.f32 1.0, %v1885
  %v1887 = vld [vmem:[#allocation3] sm:$0x3]
  %v1888 = vmul.f32 %v1879, %v1887
  %v1889 = vmul.f32 %v1873, %v1880
  %v1890 = vadd.f32 %v1888, %v1889
  %v1891 = vtanh.pop %v1890
  %v1892 = vmul.f32 %v1886, %v1891
  %1893 = vst [vmem:[#allocation3] sm:$0x3] %v1890
  %1894 = vst [vmem:[#allocation2] sm:$0x3] %v1892
  %s1895 = scalar_lea.vmem %s4, 6
  %1896 = vst [vmem:[%s1895] sm:$0x3] %v1892
  %s1897 = scalar_lea.vmem %s0, 8
  %v1898 = vld [vmem:[%s1897] sm:$0x3]
  %v1899 = vld [vmem:[%s1] sm:$0xff]
  %v1900 = vld [vmem:[%s1 + $0x8] sm:$0xff]
  %v1901 = vld [vmem:[%s1 + $0x10] sm:$0xff]
  %v1902 = vld [vmem:[%s1 + $0x18] sm:$0xff]
  %v1903 = vld [vmem:[%s1 + $0x20] sm:$0xff]
  %v1904 = vld [vmem:[%s1 + $0x28] sm:$0xff]
  %v1905 = vld [vmem:[%s1 + $0x30] sm:$0xff]
  %v1906 = vld [vmem:[%s1 + $0x38] sm:$0xff]
  %v1907 = vld [vmem:[%s1 + $0x40] sm:$0xff]
  %v1908 = vld [vmem:[%s1 + $0x48] sm:$0xff]
  %v1909 = vld [vmem:[%s1 + $0x50] sm:$0xff]
  %v1910 = vld [vmem:[%s1 + $0x58] sm:$0xff]
  %v1911 = vld [vmem:[%s1 + $0x60] sm:$0xff]
  %v1912 = vld [vmem:[%s1 + $0x68] sm:$0xff]
  %v1913 = vld [vmem:[%s1 + $0x70] sm:$0xff]
  %v1914 = vld [vmem:[%s1 + $0x78] sm:$0xff]
  %v1915 = vld [vmem:[%s1 + $0x80] sm:$0xff]
  %v1916 = vld [vmem:[%s1 + $0x88] sm:$0xff]
  %v1917 = vld [vmem:[%s1 + $0x90] sm:$0xff]
  %v1918 = vld [vmem:[%s1 + $0x98] sm:$0xff]
  %v1919 = vld [vmem:[%s1 + $0xa0] sm:$0xff]
  %v1920 = vld [vmem:[%s1 + $0xa8] sm:$0xff]
  %v1921 = vld [vmem:[%s1 + $0xb0] sm:$0xff]
  %v1922 = vld [vmem:[%s1 + $0xb8] sm:$0xff]
  %v1923 = vld [vmem:[%s1 + $0xc0] sm:$0xff]
  %v1924 = vld [vmem:[%s1 + $0xc8] sm:$0xff]
  %v1925 = vld [vmem:[%s1 + $0xd0] sm:$0xff]
  %v1926 = vld [vmem:[%s1 + $0xd8] sm:$0xff]
  %v1927 = vld [vmem:[%s1 + $0xe0] sm:$0xff]
  %v1928 = vld [vmem:[%s1 + $0xe8] sm:$0xff]
  %v1929 = vld [vmem:[%s1 + $0xf0] sm:$0xff]
  %v1930 = vld [vmem:[%s1 + $0xf8] sm:$0xff]
  %v1931 = vld [vmem:[%s1 + $0x100] sm:$0xff]
  %v1932 = vld [vmem:[%s1 + $0x108] sm:$0xff]
  %v1933 = vld [vmem:[%s1 + $0x110] sm:$0xff]
  %v1934 = vld [vmem:[%s1 + $0x118] sm:$0xff]
  %v1935 = vld [vmem:[%s1 + $0x120] sm:$0xff]
  %v1936 = vld [vmem:[%s1 + $0x128] sm:$0xff]
  %v1937 = vld [vmem:[%s1 + $0x130] sm:$0xff]
  %v1938 = vld [vmem:[%s1 + $0x138] sm:$0xff]
  %v1939 = vld [vmem:[%s1 + $0x140] sm:$0xff]
  %v1940 = vld [vmem:[%s1 + $0x148] sm:$0xff]
  %v1941 = vld [vmem:[%s1 + $0x150] sm:$0xff]
  %v1942 = vld [vmem:[%s1 + $0x158] sm:$0xff]
  %v1943 = vld [vmem:[%s1 + $0x160] sm:$0xff]
  %v1944 = vld [vmem:[%s1 + $0x168] sm:$0xff]
  %v1945 = vld [vmem:[%s1 + $0x170] sm:$0xff]
  %v1946 = vld [vmem:[%s1 + $0x178] sm:$0xff]
  %v1947 = vld [vmem:[%s1 + $0x180] sm:$0xff]
  %v1948 = vld [vmem:[%s1 + $0x188] sm:$0xff]
  %v1949 = vld [vmem:[%s1 + $0x190] sm:$0xff]
  %v1950 = vld [vmem:[%s1 + $0x198] sm:$0xff]
  %v1951 = vld [vmem:[%s1 + $0x1a0] sm:$0xff]
  %v1952 = vld [vmem:[%s1 + $0x1a8] sm:$0xff]
  %v1953 = vld [vmem:[%s1 + $0x1b0] sm:$0xff]
  %v1954 = vld [vmem:[%s1 + $0x1b8] sm:$0xff]
  %v1955 = vld [vmem:[%s1 + $0x1c0] sm:$0xff]
  %v1956 = vld [vmem:[%s1 + $0x1c8] sm:$0xff]
  %v1957 = vld [vmem:[%s1 + $0x1d0] sm:$0xff]
  %v1958 = vld [vmem:[%s1 + $0x1d8] sm:$0xff]
  %v1959 = vld [vmem:[%s1 + $0x1e0] sm:$0xff]
  %v1960 = vld [vmem:[%s1 + $0x1e8] sm:$0xff]
  %v1961 = vld [vmem:[%s1 + $0x1f0] sm:$0xff]
  %v1962 = vld [vmem:[%s1 + $0x1f8] sm:$0xff]
  %v1963 = vld [vmem:[#allocation2] sm:$0x3]
  %v1964 = vld [vmem:[%s2] sm:$0xff]
  %v1965 = vld [vmem:[%s2 + $0x8] sm:$0xff]
  %v1966 = vld [vmem:[%s2 + $0x10] sm:$0xff]
  %v1967 = vld [vmem:[%s2 + $0x18] sm:$0xff]
  %v1968 = vld [vmem:[%s2 + $0x20] sm:$0xff]
  %v1969 = vld [vmem:[%s2 + $0x28] sm:$0xff]
  %v1970 = vld [vmem:[%s2 + $0x30] sm:$0xff]
  %v1971 = vld [vmem:[%s2 + $0x38] sm:$0xff]
  %v1972 = vld [vmem:[%s2 + $0x40] sm:$0xff]
  %v1973 = vld [vmem:[%s2 + $0x48] sm:$0xff]
  %v1974 = vld [vmem:[%s2 + $0x50] sm:$0xff]
  %v1975 = vld [vmem:[%s2 + $0x58] sm:$0xff]
  %v1976 = vld [vmem:[%s2 + $0x60] sm:$0xff]
  %v1977 = vld [vmem:[%s2 + $0x68] sm:$0xff]
  %v1978 = vld [vmem:[%s2 + $0x70] sm:$0xff]
  %v1979 = vld [vmem:[%s2 + $0x78] sm:$0xff]
  %v1980 = vld [vmem:[%s2 + $0x80] sm:$0xff]
  %v1981 = vld [vmem:[%s2 + $0x88] sm:$0xff]
  %v1982 = vld [vmem:[%s2 + $0x90] sm:$0xff]
  %v1983 = vld [vmem:[%s2 + $0x98] sm:$0xff]
  %v1984 = vld [vmem:[%s2 + $0xa0] sm:$0xff]
  %v1985 = vld [vmem:[%s2 + $0xa8] sm:$0xff]
  %v1986 = vld [vmem:[%s2 + $0xb0] sm:$0xff]
  %v1987 = vld [vmem:[%s2 + $0xb8] sm:$0xff]
  %v1988 = vld [vmem:[%s2 + $0xc0] sm:$0xff]
  %v1989 = vld [vmem:[%s2 + $0xc8] sm:$0xff]
  %v1990 = vld [vmem:[%s2 + $0xd0] sm:$0xff]
  %v1991 = vld [vmem:[%s2 + $0xd8] sm:$0xff]
  %v1992 = vld [vmem:[%s2 + $0xe0] sm:$0xff]
  %v1993 = vld [vmem:[%s2 + $0xe8] sm:$0xff]
  %v1994 = vld [vmem:[%s2 + $0xf0] sm:$0xff]
  %v1995 = vld [vmem:[%s2 + $0xf8] sm:$0xff]
  %v1996 = vld [vmem:[%s2 + $0x100] sm:$0xff]
  %v1997 = vld [vmem:[%s2 + $0x108] sm:$0xff]
  %v1998 = vld [vmem:[%s2 + $0x110] sm:$0xff]
  %v1999 = vld [vmem:[%s2 + $0x118] sm:$0xff]
  %v2000 = vld [vmem:[%s2 + $0x120] sm:$0xff]
  %v2001 = vld [vmem:[%s2 + $0x128] sm:$0xff]
  %v2002 = vld [vmem:[%s2 + $0x130] sm:$0xff]
  %v2003 = vld [vmem:[%s2 + $0x138] sm:$0xff]
  %v2004 = vld [vmem:[%s2 + $0x140] sm:$0xff]
  %v2005 = vld [vmem:[%s2 + $0x148] sm:$0xff]
  %v2006 = vld [vmem:[%s2 + $0x150] sm:$0xff]
  %v2007 = vld [vmem:[%s2 + $0x158] sm:$0xff]
  %v2008 = vld [vmem:[%s2 + $0x160] sm:$0xff]
  %v2009 = vld [vmem:[%s2 + $0x168] sm:$0xff]
  %v2010 = vld [vmem:[%s2 + $0x170] sm:$0xff]
  %v2011 = vld [vmem:[%s2 + $0x178] sm:$0xff]
  %v2012 = vld [vmem:[%s2 + $0x180] sm:$0xff]
  %v2013 = vld [vmem:[%s2 + $0x188] sm:$0xff]
  %v2014 = vld [vmem:[%s2 + $0x190] sm:$0xff]
  %v2015 = vld [vmem:[%s2 + $0x198] sm:$0xff]
  %v2016 = vld [vmem:[%s2 + $0x1a0] sm:$0xff]
  %v2017 = vld [vmem:[%s2 + $0x1a8] sm:$0xff]
  %v2018 = vld [vmem:[%s2 + $0x1b0] sm:$0xff]
  %v2019 = vld [vmem:[%s2 + $0x1b8] sm:$0xff]
  %v2020 = vld [vmem:[%s2 + $0x1c0] sm:$0xff]
  %v2021 = vld [vmem:[%s2 + $0x1c8] sm:$0xff]
  %v2022 = vld [vmem:[%s2 + $0x1d0] sm:$0xff]
  %v2023 = vld [vmem:[%s2 + $0x1d8] sm:$0xff]
  %v2024 = vld [vmem:[%s2 + $0x1e0] sm:$0xff]
  %v2025 = vld [vmem:[%s2 + $0x1e8] sm:$0xff]
  %v2026 = vld [vmem:[%s2 + $0x1f0] sm:$0xff]
  %v2027 = vld [vmem:[%s2 + $0x1f8] sm:$0xff]
  %2028 = vmatprep.subr.mxu0 %v1965
  %2029 = vmatpush1.msra.mxu0 %v1964
  %2030 = vmatprep.subr.mxu0 %v1969
  %2031 = vmatpush1.msra.mxu0 %v1968
  %2032 = vmatprep.subr.mxu0 %v1973
  %2033 = vmatpush1.msra.mxu0 %v1972
  %2034 = vmatprep.subr.mxu0 %v1977
  %2035 = vmatpush1.msra.mxu0 %v1976
  %2036 = vmatprep.subr.mxu0 %v1981
  %2037 = vmatpush1.msra.mxu0 %v1980
  %2038 = vmatprep.subr.mxu0 %v1985
  %2039 = vmatpush1.msra.mxu0 %v1984
  %2040 = vmatprep.subr.mxu0 %v1989
  %2041 = vmatpush1.msra.mxu0 %v1988
  %2042 = vmatprep.subr.mxu0 %v1993
  %2043 = vmatpush1.msra.mxu0 %v1992
  %2044 = vmatprep.subr.mxu0 %v1997
  %2045 = vmatpush1.msra.mxu0 %v1996
  %2046 = vmatprep.subr.mxu0 %v2001
  %2047 = vmatpush1.msra.mxu0 %v2000
  %2048 = vmatprep.subr.mxu0 %v2005
  %2049 = vmatpush1.msra.mxu0 %v2004
  %2050 = vmatprep.subr.mxu0 %v2009
  %2051 = vmatpush1.msra.mxu0 %v2008
  %2052 = vmatprep.subr.mxu0 %v2013
  %2053 = vmatpush1.msra.mxu0 %v2012
  %2054 = vmatprep.subr.mxu0 %v2017
  %2055 = vmatpush1.msra.mxu0 %v2016
  %2056 = vmatprep.subr.mxu0 %v2021
  %2057 = vmatpush1.msra.mxu0 %v2020
  %2058 = vmatprep.subr.mxu0 %v2025
  %2059 = vmatpush1.msra.mxu0 %v2024
  %2060 = vmatprep.subr.mxu0 0.0
  %2061 = vmatpush1.msra.mxu0 0.0
  %2062 = vmatprep.subr.mxu0 0.0
  %2063 = vmatpush1.msra.mxu0 0.0
  %2064 = vmatprep.subr.mxu0 0.0
  %2065 = vmatpush1.msra.mxu0 0.0
  %2066 = vmatprep.subr.mxu0 0.0
  %2067 = vmatpush1.msra.mxu0 0.0
  %2068 = vmatprep.subr.mxu0 0.0
  %2069 = vmatpush1.msra.mxu0 0.0
  %2070 = vmatprep.subr.mxu0 0.0
  %2071 = vmatpush1.msra.mxu0 0.0
  %2072 = vmatprep.subr.mxu0 0.0
  %2073 = vmatpush1.msra.mxu0 0.0
  %2074 = vmatprep.subr.mxu0 0.0
  %2075 = vmatpush1.msra.mxu0 0.0
  %2076 = vmatprep.subr.mxu0 0.0
  %2077 = vmatpush1.msra.mxu0 0.0
  %2078 = vmatprep.subr.mxu0 0.0
  %2079 = vmatpush1.msra.mxu0 0.0
  %2080 = vmatprep.subr.mxu0 0.0
  %2081 = vmatpush1.msra.mxu0 0.0
  %2082 = vmatprep.subr.mxu0 0.0
  %2083 = vmatpush1.msra.mxu0 0.0
  %2084 = vmatprep.subr.mxu0 0.0
  %2085 = vmatpush1.msra.mxu0 0.0
  %2086 = vmatprep.subr.mxu0 0.0
  %2087 = vmatpush1.msra.mxu0 0.0
  %2088 = vmatprep.subr.mxu0 0.0
  %2089 = vmatpush1.msra.mxu0 0.0
  %2090 = vmatprep.subr.mxu0 0.0
  %2091 = vmatpush1.msra.mxu0 0.0
  %2092 = vmatprep.mubr.f32.mxu0 0.0
  %2093 = vmatmul.mubr.f32.gmra.mrb[0].mxu0 %v1963
  %v2094 = vpop.f32.mrb[0].mxu0
  %v2095 = vadd.f32 0.0, %v2094
  %v2096 = vpop.f32.mrb[0].mxu0
  %v2097 = vadd.f32 0.0, %v2096
  %2098 = vdwg.mxu0
  %2099 = vmatprep.subr.mxu0 %v1967
  %2100 = vmatpush1.msra.mxu0 %v1966
  %2101 = vmatprep.subr.mxu0 %v1971
  %2102 = vmatpush1.msra.mxu0 %v1970
  %2103 = vmatprep.subr.mxu0 %v1975
  %2104 = vmatpush1.msra.mxu0 %v1974
  %2105 = vmatprep.subr.mxu0 %v1979
  %2106 = vmatpush1.msra.mxu0 %v1978
  %2107 = vmatprep.subr.mxu0 %v1983
  %2108 = vmatpush1.msra.mxu0 %v1982
  %2109 = vmatprep.subr.mxu0 %v1987
  %2110 = vmatpush1.msra.mxu0 %v1986
  %2111 = vmatprep.subr.mxu0 %v1991
  %2112 = vmatpush1.msra.mxu0 %v1990
  %2113 = vmatprep.subr.mxu0 %v1995
  %2114 = vmatpush1.msra.mxu0 %v1994
  %2115 = vmatprep.subr.mxu0 %v1999
  %2116 = vmatpush1.msra.mxu0 %v1998
  %2117 = vmatprep.subr.mxu0 %v2003
  %2118 = vmatpush1.msra.mxu0 %v2002
  %2119 = vmatprep.subr.mxu0 %v2007
  %2120 = vmatpush1.msra.mxu0 %v2006
  %2121 = vmatprep.subr.mxu0 %v2011
  %2122 = vmatpush1.msra.mxu0 %v2010
  %2123 = vmatprep.subr.mxu0 %v2015
  %2124 = vmatpush1.msra.mxu0 %v2014
  %2125 = vmatprep.subr.mxu0 %v2019
  %2126 = vmatpush1.msra.mxu0 %v2018
  %2127 = vmatprep.subr.mxu0 %v2023
  %2128 = vmatpush1.msra.mxu0 %v2022
  %2129 = vmatprep.subr.mxu0 %v2027
  %2130 = vmatpush1.msra.mxu0 %v2026
  %2131 = vmatprep.subr.mxu0 0.0
  %2132 = vmatpush1.msra.mxu0 0.0
  %2133 = vmatprep.subr.mxu0 0.0
  %2134 = vmatpush1.msra.mxu0 0.0
  %2135 = vmatprep.subr.mxu0 0.0
  %2136 = vmatpush1.msra.mxu0 0.0
  %2137 = vmatprep.subr.mxu0 0.0
  %2138 = vmatpush1.msra.mxu0 0.0
  %2139 = vmatprep.subr.mxu0 0.0
  %2140 = vmatpush1.msra.mxu0 0.0
  %2141 = vmatprep.subr.mxu0 0.0
  %2142 = vmatpush1.msra.mxu0 0.0
  %2143 = vmatprep.subr.mxu0 0.0
  %2144 = vmatpush1.msra.mxu0 0.0
  %2145 = vmatprep.subr.mxu0 0.0
  %2146 = vmatpush1.msra.mxu0 0.0
  %2147 = vmatprep.subr.mxu0 0.0
  %2148 = vmatpush1.msra.mxu0 0.0
  %2149 = vmatprep.subr.mxu0 0.0
  %2150 = vmatpush1.msra.mxu0 0.0
  %2151 = vmatprep.subr.mxu0 0.0
  %2152 = vmatpush1.msra.mxu0 0.0
  %2153 = vmatprep.subr.mxu0 0.0
  %2154 = vmatpush1.msra.mxu0 0.0
  %2155 = vmatprep.subr.mxu0 0.0
  %2156 = vmatpush1.msra.mxu0 0.0
  %2157 = vmatprep.subr.mxu0 0.0
  %2158 = vmatpush1.msra.mxu0 0.0
  %2159 = vmatprep.subr.mxu0 0.0
  %2160 = vmatpush1.msra.mxu0 0.0
  %2161 = vmatprep.subr.mxu0 0.0
  %2162 = vmatpush1.msra.mxu0 0.0
  %2163 = vmatprep.mubr.f32.mxu0 0.0
  %2164 = vmatmul.mubr.f32.gmra.mrb[0].mxu0 %v1963
  %v2165 = vpop.f32.mrb[0].mxu0
  %v2166 = vadd.f32 0.0, %v2165
  %v2167 = vpop.f32.mrb[0].mxu0
  %v2168 = vadd.f32 0.0, %v2167
  %2169 = vdwg.mxu0
  %2170 = vmatprep.subr.mxu0 %v1900
  %2171 = vmatpush1.msra.mxu0 %v1899
  %2172 = vmatprep.subr.mxu0 %v1904
  %2173 = vmatpush1.msra.mxu0 %v1903
  %2174 = vmatprep.subr.mxu0 %v1908
  %2175 = vmatpush1.msra.mxu0 %v1907
  %2176 = vmatprep.subr.mxu0 %v1912
  %2177 = vmatpush1.msra.mxu0 %v1911
  %2178 = vmatprep.subr.mxu0 %v1916
  %2179 = vmatpush1.msra.mxu0 %v1915
  %2180 = vmatprep.subr.mxu0 %v1920
  %2181 = vmatpush1.msra.mxu0 %v1919
  %2182 = vmatprep.subr.mxu0 %v1924
  %2183 = vmatpush1.msra.mxu0 %v1923
  %2184 = vmatprep.subr.mxu0 %v1928
  %2185 = vmatpush1.msra.mxu0 %v1927
  %2186 = vmatprep.subr.mxu0 %v1932
  %2187 = vmatpush1.msra.mxu0 %v1931
  %2188 = vmatprep.subr.mxu0 %v1936
  %2189 = vmatpush1.msra.mxu0 %v1935
  %2190 = vmatprep.subr.mxu0 %v1940
  %2191 = vmatpush1.msra.mxu0 %v1939
  %2192 = vmatprep.subr.mxu0 %v1944
  %2193 = vmatpush1.msra.mxu0 %v1943
  %2194 = vmatprep.subr.mxu0 %v1948
  %2195 = vmatpush1.msra.mxu0 %v1947
  %2196 = vmatprep.subr.mxu0 %v1952
  %2197 = vmatpush1.msra.mxu0 %v1951
  %2198 = vmatprep.subr.mxu0 %v1956
  %2199 = vmatpush1.msra.mxu0 %v1955
  %2200 = vmatprep.subr.mxu0 %v1960
  %2201 = vmatpush1.msra.mxu0 %v1959
  %2202 = vmatprep.subr.mxu0 0.0
  %2203 = vmatpush1.msra.mxu0 0.0
  %2204 = vmatprep.subr.mxu0 0.0
  %2205 = vmatpush1.msra.mxu0 0.0
  %2206 = vmatprep.subr.mxu0 0.0
  %2207 = vmatpush1.msra.mxu0 0.0
  %2208 = vmatprep.subr.mxu0 0.0
  %2209 = vmatpush1.msra.mxu0 0.0
  %2210 = vmatprep.subr.mxu0 0.0
  %2211 = vmatpush1.msra.mxu0 0.0
  %2212 = vmatprep.subr.mxu0 0.0
  %2213 = vmatpush1.msra.mxu0 0.0
  %2214 = vmatprep.subr.mxu0 0.0
  %2215 = vmatpush1.msra.mxu0 0.0
  %2216 = vmatprep.subr.mxu0 0.0
  %2217 = vmatpush1.msra.mxu0 0.0
  %2218 = vmatprep.subr.mxu0 0.0
  %2219 = vmatpush1.msra.mxu0 0.0
  %2220 = vmatprep.subr.mxu0 0.0
  %2221 = vmatpush1.msra.mxu0 0.0
  %2222 = vmatprep.subr.mxu0 0.0
  %2223 = vmatpush1.msra.mxu0 0.0
  %2224 = vmatprep.subr.mxu0 0.0
  %2225 = vmatpush1.msra.mxu0 0.0
  %2226 = vmatprep.subr.mxu0 0.0
  %2227 = vmatpush1.msra.mxu0 0.0
  %2228 = vmatprep.subr.mxu0 0.0
  %2229 = vmatpush1.msra.mxu0 0.0
  %2230 = vmatprep.subr.mxu0 0.0
  %2231 = vmatpush1.msra.mxu0 0.0
  %2232 = vmatprep.subr.mxu0 0.0
  %2233 = vmatpush1.msra.mxu0 0.0
  %2234 = vmatprep.mubr.f32.mxu0 0.0
  %2235 = vmatmul.mubr.f32.gmra.mrb[0].mxu0 %v1898
  %v2236 = vpop.f32.mrb[0].mxu0
  %v2237 = vadd.f32 %v2095, %v2236
  %v2238 = vpop.f32.mrb[0].mxu0
  %v2239 = vadd.f32 %v2097, %v2238
  %2240 = vdwg.mxu0
  %2241 = vmatprep.subr.mxu0 %v1902
  %2242 = vmatpush1.msra.mxu0 %v1901
  %2243 = vmatprep.subr.mxu0 %v1906
  %2244 = vmatpush1.msra.mxu0 %v1905
  %2245 = vmatprep.subr.mxu0 %v1910
  %2246 = vmatpush1.msra.mxu0 %v1909
  %2247 = vmatprep.subr.mxu0 %v1914
  %2248 = vmatpush1.msra.mxu0 %v1913
  %2249 = vmatprep.subr.mxu0 %v1918
  %2250 = vmatpush1.msra.mxu0 %v1917
  %2251 = vmatprep.subr.mxu0 %v1922
  %2252 = vmatpush1.msra.mxu0 %v1921
  %2253 = vmatprep.subr.mxu0 %v1926
  %2254 = vmatpush1.msra.mxu0 %v1925
  %2255 = vmatprep.subr.mxu0 %v1930
  %2256 = vmatpush1.msra.mxu0 %v1929
  %2257 = vmatprep.subr.mxu0 %v1934
  %2258 = vmatpush1.msra.mxu0 %v1933
  %2259 = vmatprep.subr.mxu0 %v1938
  %2260 = vmatpush1.msra.mxu0 %v1937
  %2261 = vmatprep.subr.mxu0 %v1942
  %2262 = vmatpush1.msra.mxu0 %v1941
  %2263 = vmatprep.subr.mxu0 %v1946
  %2264 = vmatpush1.msra.mxu0 %v1945
  %2265 = vmatprep.subr.mxu0 %v1950
  %2266 = vmatpush1.msra.mxu0 %v1949
  %2267 = vmatprep.subr.mxu0 %v1954
  %2268 = vmatpush1.msra.mxu0 %v1953
  %2269 = vmatprep.subr.mxu0 %v1958
  %2270 = vmatpush1.msra.mxu0 %v1957
  %2271 = vmatprep.subr.mxu0 %v1962
  %2272 = vmatpush1.msra.mxu0 %v1961
  %2273 = vmatprep.subr.mxu0 0.0
  %2274 = vmatpush1.msra.mxu0 0.0
  %2275 = vmatprep.subr.mxu0 0.0
  %2276 = vmatpush1.msra.mxu0 0.0
  %2277 = vmatprep.subr.mxu0 0.0
  %2278 = vmatpush1.msra.mxu0 0.0
  %2279 = vmatprep.subr.mxu0 0.0
  %2280 = vmatpush1.msra.mxu0 0.0
  %2281 = vmatprep.subr.mxu0 0.0
  %2282 = vmatpush1.msra.mxu0 0.0
  %2283 = vmatprep.subr.mxu0 0.0
  %2284 = vmatpush1.msra.mxu0 0.0
  %2285 = vmatprep.subr.mxu0 0.0
  %2286 = vmatpush1.msra.mxu0 0.0
  %2287 = vmatprep.subr.mxu0 0.0
  %2288 = vmatpush1.msra.mxu0 0.0
  %2289 = vmatprep.subr.mxu0 0.0
  %2290 = vmatpush1.msra.mxu0 0.0
  %2291 = vmatprep.subr.mxu0 0.0
  %2292 = vmatpush1.msra.mxu0 0.0
  %2293 = vmatprep.subr.mxu0 0.0
  %2294 = vmatpush1.msra.mxu0 0.0
  %2295 = vmatprep.subr.mxu0 0.0
  %2296 = vmatpush1.msra.mxu0 0.0
  %2297 = vmatprep.subr.mxu0 0.0
  %2298 = vmatpush1.msra.mxu0 0.0
  %2299 = vmatprep.subr.mxu0 0.0
  %2300 = vmatpush1.msra.mxu0 0.0
  %2301 = vmatprep.subr.mxu0 0.0
  %2302 = vmatpush1.msra.mxu0 0.0
  %2303 = vmatprep.subr.mxu0 0.0
  %2304 = vmatpush1.msra.mxu0 0.0
  %2305 = vmatprep.mubr.f32.mxu0 0.0
  %2306 = vmatmul.mubr.f32.gmra.mrb[0].mxu0 %v1898
  %v2307 = vpop.f32.mrb[0].mxu0
  %v2308 = vadd.f32 %v2166, %v2307
  %v2309 = vpop.f32.mrb[0].mxu0
  %v2310 = vadd.f32 %v2168, %v2309
  %2311 = vdwg.mxu0
  %v2312 = vld [vmem:[%s3] sm:$0xf]
  %v2314 = vlaneseq
  %v2315 = vshrl.u32 %v2314, 7
  %v2316 = vsub.s32 0, %v2315
  %v2317 = vrot.slane %v2312, %v2316
  %v2318 = vlaneseq
  %v2319 = vshrl.u32 %v2318, 7
  %v2320 = vsub.s32 1, %v2319
  %v2321 = vrot.slane %v2312, %v2320
  %v2322 = vlaneseq
  %v2323 = vshrl.u32 %v2322, 7
  %v2324 = vsub.s32 2, %v2323
  %v2325 = vrot.slane %v2312, %v2324
  %v2326 = vlaneseq
  %v2327 = vshrl.u32 %v2326, 7
  %v2328 = vsub.s32 3, %v2327
  %v2329 = vrot.slane %v2312, %v2328
  %v2334 = vadd.f32 %v2237, %v2317
  %v2335 = vadd.f32 %v2239, %v2321
  %v2336 = vadd.f32 %v2308, %v2325
  %v2337 = vadd.f32 %v2310, %v2329
  %v2338 = vxor.u32 %v2334, 2147483648
  %v2339 = vmul.f32 %v2338, 1.442695
  %v2340 = vpow.pop %v2339
  %v2341 = vadd.f32 %v2340, 1.0
  %v2342 = vrcp.pop %v2341
  %v2343 = vmul.f32 1.0, %v2342
  %v2344 = vxor.u32 %v2335, 2147483648
  %v2345 = vmul.f32 %v2344, 1.442695
  %v2346 = vpow.pop %v2345
  %v2347 = vadd.f32 %v2346, 1.0
  %v2348 = vrcp.pop %v2347
  %v2349 = vmul.f32 1.0, %v2348
  %v2350 = vtanh.pop %v2336
  %v2351 = vxor.u32 %v2337, 2147483648
  %v2352 = vmul.f32 %v2351, 1.442695
  %v2353 = vpow.pop %v2352
  %v2354 = vadd.f32 %v2353, 1.0
  %v2355 = vrcp.pop %v2354
  %v2356 = vmul.f32 1.0, %v2355
  %v2357 = vld [vmem:[#allocation3] sm:$0x3]
  %v2358 = vmul.f32 %v2349, %v2357
  %v2359 = vmul.f32 %v2343, %v2350
  %v2360 = vadd.f32 %v2358, %v2359
  %v2361 = vtanh.pop %v2360
  %v2362 = vmul.f32 %v2356, %v2361
  %2363 = vst [vmem:[#allocation3] sm:$0x3] %v2360
  %2364 = vst [vmem:[#allocation2] sm:$0x3] %v2362
  %s2365 = scalar_lea.vmem %s4, 8
  %2366 = vst [vmem:[%s2365] sm:$0x3] %v2362
  %s2367 = scalar_lea.vmem %s0, 10
  %v2368 = vld [vmem:[%s2367] sm:$0x3]
  %v2369 = vld [vmem:[%s1] sm:$0xff]
  %v2370 = vld [vmem:[%s1 + $0x8] sm:$0xff]
  %v2371 = vld [vmem:[%s1 + $0x10] sm:$0xff]
  %v2372 = vld [vmem:[%s1 + $0x18] sm:$0xff]
  %v2373 = vld [vmem:[%s1 + $0x20] sm:$0xff]
  %v2374 = vld [vmem:[%s1 + $0x28] sm:$0xff]
  %v2375 = vld [vmem:[%s1 + $0x30] sm:$0xff]
  %v2376 = vld [vmem:[%s1 + $0x38] sm:$0xff]
  %v2377 = vld [vmem:[%s1 + $0x40] sm:$0xff]
  %v2378 = vld [vmem:[%s1 + $0x48] sm:$0xff]
  %v2379 = vld [vmem:[%s1 + $0x50] sm:$0xff]
  %v2380 = vld [vmem:[%s1 + $0x58] sm:$0xff]
  %v2381 = vld [vmem:[%s1 + $0x60] sm:$0xff]
  %v2382 = vld [vmem:[%s1 + $0x68] sm:$0xff]
  %v2383 = vld [vmem:[%s1 + $0x70] sm:$0xff]
  %v2384 = vld [vmem:[%s1 + $0x78] sm:$0xff]
  %v2385 = vld [vmem:[%s1 + $0x80] sm:$0xff]
  %v2386 = vld [vmem:[%s1 + $0x88] sm:$0xff]
  %v2387 = vld [vmem:[%s1 + $0x90] sm:$0xff]
  %v2388 = vld [vmem:[%s1 + $0x98] sm:$0xff]
  %v2389 = vld [vmem:[%s1 + $0xa0] sm:$0xff]
  %v2390 = vld [vmem:[%s1 + $0xa8] sm:$0xff]
  %v2391 = vld [vmem:[%s1 + $0xb0] sm:$0xff]
  %v2392 = vld [vmem:[%s1 + $0xb8] sm:$0xff]
  %v2393 = vld [vmem:[%s1 + $0xc0] sm:$0xff]
  %v2394 = vld [vmem:[%s1 + $0xc8] sm:$0xff]
  %v2395 = vld [vmem:[%s1 + $0xd0] sm:$0xff]
  %v2396 = vld [vmem:[%s1 + $0xd8] sm:$0xff]
  %v2397 = vld [vmem:[%s1 + $0xe0] sm:$0xff]
  %v2398 = vld [vmem:[%s1 + $0xe8] sm:$0xff]
  %v2399 = vld [vmem:[%s1 + $0xf0] sm:$0xff]
  %v2400 = vld [vmem:[%s1 + $0xf8] sm:$0xff]
  %v2401 = vld [vmem:[%s1 + $0x100] sm:$0xff]
  %v2402 = vld [vmem:[%s1 + $0x108] sm:$0xff]
  %v2403 = vld [vmem:[%s1 + $0x110] sm:$0xff]
  %v2404 = vld [vmem:[%s1 + $0x118] sm:$0xff]
  %v2405 = vld [vmem:[%s1 + $0x120] sm:$0xff]
  %v2406 = vld [vmem:[%s1 + $0x128] sm:$0xff]
  %v2407 = vld [vmem:[%s1 + $0x130] sm:$0xff]
  %v2408 = vld [vmem:[%s1 + $0x138] sm:$0xff]
  %v2409 = vld [vmem:[%s1 + $0x140] sm:$0xff]
  %v2410 = vld [vmem:[%s1 + $0x148] sm:$0xff]
  %v2411 = vld [vmem:[%s1 + $0x150] sm:$0xff]
  %v2412 = vld [vmem:[%s1 + $0x158] sm:$0xff]
  %v2413 = vld [vmem:[%s1 + $0x160] sm:$0xff]
  %v2414 = vld [vmem:[%s1 + $0x168] sm:$0xff]
  %v2415 = vld [vmem:[%s1 + $0x170] sm:$0xff]
  %v2416 = vld [vmem:[%s1 + $0x178] sm:$0xff]
  %v2417 = vld [vmem:[%s1 + $0x180] sm:$0xff]
  %v2418 = vld [vmem:[%s1 + $0x188] sm:$0xff]
  %v2419 = vld [vmem:[%s1 + $0x190] sm:$0xff]
  %v2420 = vld [vmem:[%s1 + $0x198] sm:$0xff]
  %v2421 = vld [vmem:[%s1 + $0x1a0] sm:$0xff]
  %v2422 = vld [vmem:[%s1 + $0x1a8] sm:$0xff]
  %v2423 = vld [vmem:[%s1 + $0x1b0] sm:$0xff]
  %v2424 = vld [vmem:[%s1 + $0x1b8] sm:$0xff]
  %v2425 = vld [vmem:[%s1 + $0x1c0] sm:$0xff]
  %v2426 = vld [vmem:[%s1 + $0x1c8] sm:$0xff]
  %v2427 = vld [vmem:[%s1 + $0x1d0] sm:$0xff]
  %v2428 = vld [vmem:[%s1 + $0x1d8] sm:$0xff]
  %v2429 = vld [vmem:[%s1 + $0x1e0] sm:$0xff]
  %v2430 = vld [vmem:[%s1 + $0x1e8] sm:$0xff]
  %v2431 = vld [vmem:[%s1 + $0x1f0] sm:$0xff]
  %v2432 = vld [vmem:[%s1 + $0x1f8] sm:$0xff]
  %v2433 = vld [vmem:[#allocation2] sm:$0x3]
  %v2434 = vld [vmem:[%s2] sm:$0xff]
  %v2435 = vld [vmem:[%s2 + $0x8] sm:$0xff]
  %v2436 = vld [vmem:[%s2 + $0x10] sm:$0xff]
  %v2437 = vld [vmem:[%s2 + $0x18] sm:$0xff]
  %v2438 = vld [vmem:[%s2 + $0x20] sm:$0xff]
  %v2439 = vld [vmem:[%s2 + $0x28] sm:$0xff]
  %v2440 = vld [vmem:[%s2 + $0x30] sm:$0xff]
  %v2441 = vld [vmem:[%s2 + $0x38] sm:$0xff]
  %v2442 = vld [vmem:[%s2 + $0x40] sm:$0xff]
  %v2443 = vld [vmem:[%s2 + $0x48] sm:$0xff]
  %v2444 = vld [vmem:[%s2 + $0x50] sm:$0xff]
  %v2445 = vld [vmem:[%s2 + $0x58] sm:$0xff]
  %v2446 = vld [vmem:[%s2 + $0x60] sm:$0xff]
  %v2447 = vld [vmem:[%s2 + $0x68] sm:$0xff]
  %v2448 = vld [vmem:[%s2 + $0x70] sm:$0xff]
  %v2449 = vld [vmem:[%s2 + $0x78] sm:$0xff]
  %v2450 = vld [vmem:[%s2 + $0x80] sm:$0xff]
  %v2451 = vld [vmem:[%s2 + $0x88] sm:$0xff]
  %v2452 = vld [vmem:[%s2 + $0x90] sm:$0xff]
  %v2453 = vld [vmem:[%s2 + $0x98] sm:$0xff]
  %v2454 = vld [vmem:[%s2 + $0xa0] sm:$0xff]
  %v2455 = vld [vmem:[%s2 + $0xa8] sm:$0xff]
  %v2456 = vld [vmem:[%s2 + $0xb0] sm:$0xff]
  %v2457 = vld [vmem:[%s2 + $0xb8] sm:$0xff]
  %v2458 = vld [vmem:[%s2 + $0xc0] sm:$0xff]
  %v2459 = vld [vmem:[%s2 + $0xc8] sm:$0xff]
  %v2460 = vld [vmem:[%s2 + $0xd0] sm:$0xff]
  %v2461 = vld [vmem:[%s2 + $0xd8] sm:$0xff]
  %v2462 = vld [vmem:[%s2 + $0xe0] sm:$0xff]
  %v2463 = vld [vmem:[%s2 + $0xe8] sm:$0xff]
  %v2464 = vld [vmem:[%s2 + $0xf0] sm:$0xff]
  %v2465 = vld [vmem:[%s2 + $0xf8] sm:$0xff]
  %v2466 = vld [vmem:[%s2 + $0x100] sm:$0xff]
  %v2467 = vld [vmem:[%s2 + $0x108] sm:$0xff]
  %v2468 = vld [vmem:[%s2 + $0x110] sm:$0xff]
  %v2469 = vld [vmem:[%s2 + $0x118] sm:$0xff]
  %v2470 = vld [vmem:[%s2 + $0x120] sm:$0xff]
  %v2471 = vld [vmem:[%s2 + $0x128] sm:$0xff]
  %v2472 = vld [vmem:[%s2 + $0x130] sm:$0xff]
  %v2473 = vld [vmem:[%s2 + $0x138] sm:$0xff]
  %v2474 = vld [vmem:[%s2 + $0x140] sm:$0xff]
  %v2475 = vld [vmem:[%s2 + $0x148] sm:$0xff]
  %v2476 = vld [vmem:[%s2 + $0x150] sm:$0xff]
  %v2477 = vld [vmem:[%s2 + $0x158] sm:$0xff]
  %v2478 = vld [vmem:[%s2 + $0x160] sm:$0xff]
  %v2479 = vld [vmem:[%s2 + $0x168] sm:$0xff]
  %v2480 = vld [vmem:[%s2 + $0x170] sm:$0xff]
  %v2481 = vld [vmem:[%s2 + $0x178] sm:$0xff]
  %v2482 = vld [vmem:[%s2 + $0x180] sm:$0xff]
  %v2483 = vld [vmem:[%s2 + $0x188] sm:$0xff]
  %v2484 = vld [vmem:[%s2 + $0x190] sm:$0xff]
  %v2485 = vld [vmem:[%s2 + $0x198] sm:$0xff]
  %v2486 = vld [vmem:[%s2 + $0x1a0] sm:$0xff]
  %v2487 = vld [vmem:[%s2 + $0x1a8] sm:$0xff]
  %v2488 = vld [vmem:[%s2 + $0x1b0] sm:$0xff]
  %v2489 = vld [vmem:[%s2 + $0x1b8] sm:$0xff]
  %v2490 = vld [vmem:[%s2 + $0x1c0] sm:$0xff]
  %v2491 = vld [vmem:[%s2 + $0x1c8] sm:$0xff]
  %v2492 = vld [vmem:[%s2 + $0x1d0] sm:$0xff]
  %v2493 = vld [vmem:[%s2 + $0x1d8] sm:$0xff]
  %v2494 = vld [vmem:[%s2 + $0x1e0] sm:$0xff]
  %v2495 = vld [vmem:[%s2 + $0x1e8] sm:$0xff]
  %v2496 = vld [vmem:[%s2 + $0x1f0] sm:$0xff]
  %v2497 = vld [vmem:[%s2 + $0x1f8] sm:$0xff]
  %2498 = vmatprep.subr.mxu0 %v2435
  %2499 = vmatpush1.msra.mxu0 %v2434
  %2500 = vmatprep.subr.mxu0 %v2439
  %2501 = vmatpush1.msra.mxu0 %v2438
  %2502 = vmatprep.subr.mxu0 %v2443
  %2503 = vmatpush1.msra.mxu0 %v2442
  %2504 = vmatprep.subr.mxu0 %v2447
  %2505 = vmatpush1.msra.mxu0 %v2446
  %2506 = vmatprep.subr.mxu0 %v2451
  %2507 = vmatpush1.msra.mxu0 %v2450
  %2508 = vmatprep.subr.mxu0 %v2455
  %2509 = vmatpush1.msra.mxu0 %v2454
  %2510 = vmatprep.subr.mxu0 %v2459
  %2511 = vmatpush1.msra.mxu0 %v2458
  %2512 = vmatprep.subr.mxu0 %v2463
  %2513 = vmatpush1.msra.mxu0 %v2462
  %2514 = vmatprep.subr.mxu0 %v2467
  %2515 = vmatpush1.msra.mxu0 %v2466
  %2516 = vmatprep.subr.mxu0 %v2471
  %2517 = vmatpush1.msra.mxu0 %v2470
  %2518 = vmatprep.subr.mxu0 %v2475
  %2519 = vmatpush1.msra.mxu0 %v2474
  %2520 = vmatprep.subr.mxu0 %v2479
  %2521 = vmatpush1.msra.mxu0 %v2478
  %2522 = vmatprep.subr.mxu0 %v2483
  %2523 = vmatpush1.msra.mxu0 %v2482
  %2524 = vmatprep.subr.mxu0 %v2487
  %2525 = vmatpush1.msra.mxu0 %v2486
  %2526 = vmatprep.subr.mxu0 %v2491
  %2527 = vmatpush1.msra.mxu0 %v2490
  %2528 = vmatprep.subr.mxu0 %v2495
  %2529 = vmatpush1.msra.mxu0 %v2494
  %2530 = vmatprep.subr.mxu0 0.0
  %2531 = vmatpush1.msra.mxu0 0.0
  %2532 = vmatprep.subr.mxu0 0.0
  %2533 = vmatpush1.msra.mxu0 0.0
  %2534 = vmatprep.subr.mxu0 0.0
  %2535 = vmatpush1.msra.mxu0 0.0
  %2536 = vmatprep.subr.mxu0 0.0
  %2537 = vmatpush1.msra.mxu0 0.0
  %2538 = vmatprep.subr.mxu0 0.0
  %2539 = vmatpush1.msra.mxu0 0.0
  %2540 = vmatprep.subr.mxu0 0.0
  %2541 = vmatpush1.msra.mxu0 0.0
  %2542 = vmatprep.subr.mxu0 0.0
  %2543 = vmatpush1.msra.mxu0 0.0
  %2544 = vmatprep.subr.mxu0 0.0
  %2545 = vmatpush1.msra.mxu0 0.0
  %2546 = vmatprep.subr.mxu0 0.0
  %2547 = vmatpush1.msra.mxu0 0.0
  %2548 = vmatprep.subr.mxu0 0.0
  %2549 = vmatpush1.msra.mxu0 0.0
  %2550 = vmatprep.subr.mxu0 0.0
  %2551 = vmatpush1.msra.mxu0 0.0
  %2552 = vmatprep.subr.mxu0 0.0
  %2553 = vmatpush1.msra.mxu0 0.0
  %2554 = vmatprep.subr.mxu0 0.0
  %2555 = vmatpush1.msra.mxu0 0.0
  %2556 = vmatprep.subr.mxu0 0.0
  %2557 = vmatpush1.msra.mxu0 0.0
  %2558 = vmatprep.subr.mxu0 0.0
  %2559 = vmatpush1.msra.mxu0 0.0
  %2560 = vmatprep.subr.mxu0 0.0
  %2561 = vmatpush1.msra.mxu0 0.0
  %2562 = vmatprep.mubr.f32.mxu0 0.0
  %2563 = vmatmul.mubr.f32.gmra.mrb[0].mxu0 %v2433
  %v2564 = vpop.f32.mrb[0].mxu0
  %v2565 = vadd.f32 0.0, %v2564
  %v2566 = vpop.f32.mrb[0].mxu0
  %v2567 = vadd.f32 0.0, %v2566
  %2568 = vdwg.mxu0
  %2569 = vmatprep.subr.mxu0 %v2437
  %2570 = vmatpush1.msra.mxu0 %v2436
  %2571 = vmatprep.subr.mxu0 %v2441
  %2572 = vmatpush1.msra.mxu0 %v2440
  %2573 = vmatprep.subr.mxu0 %v2445
  %2574 = vmatpush1.msra.mxu0 %v2444
  %2575 = vmatprep.subr.mxu0 %v2449
  %2576 = vmatpush1.msra.mxu0 %v2448
  %2577 = vmatprep.subr.mxu0 %v2453
  %2578 = vmatpush1.msra.mxu0 %v2452
  %2579 = vmatprep.subr.mxu0 %v2457
  %2580 = vmatpush1.msra.mxu0 %v2456
  %2581 = vmatprep.subr.mxu0 %v2461
  %2582 = vmatpush1.msra.mxu0 %v2460
  %2583 = vmatprep.subr.mxu0 %v2465
  %2584 = vmatpush1.msra.mxu0 %v2464
  %2585 = vmatprep.subr.mxu0 %v2469
  %2586 = vmatpush1.msra.mxu0 %v2468
  %2587 = vmatprep.subr.mxu0 %v2473
  %2588 = vmatpush1.msra.mxu0 %v2472
  %2589 = vmatprep.subr.mxu0 %v2477
  %2590 = vmatpush1.msra.mxu0 %v2476
  %2591 = vmatprep.subr.mxu0 %v2481
  %2592 = vmatpush1.msra.mxu0 %v2480
  %2593 = vmatprep.subr.mxu0 %v2485
  %2594 = vmatpush1.msra.mxu0 %v2484
  %2595 = vmatprep.subr.mxu0 %v2489
  %2596 = vmatpush1.msra.mxu0 %v2488
  %2597 = vmatprep.subr.mxu0 %v2493
  %2598 = vmatpush1.msra.mxu0 %v2492
  %2599 = vmatprep.subr.mxu0 %v2497
  %2600 = vmatpush1.msra.mxu0 %v2496
  %2601 = vmatprep.subr.mxu0 0.0
  %2602 = vmatpush1.msra.mxu0 0.0
  %2603 = vmatprep.subr.mxu0 0.0
  %2604 = vmatpush1.msra.mxu0 0.0
  %2605 = vmatprep.subr.mxu0 0.0
  %2606 = vmatpush1.msra.mxu0 0.0
  %2607 = vmatprep.subr.mxu0 0.0
  %2608 = vmatpush1.msra.mxu0 0.0
  %2609 = vmatprep.subr.mxu0 0.0
  %2610 = vmatpush1.msra.mxu0 0.0
  %2611 = vmatprep.subr.mxu0 0.0
  %2612 = vmatpush1.msra.mxu0 0.0
  %2613 = vmatprep.subr.mxu0 0.0
  %2614 = vmatpush1.msra.mxu0 0.0
  %2615 = vmatprep.subr.mxu0 0.0
  %2616 = vmatpush1.msra.mxu0 0.0
  %2617 = vmatprep.subr.mxu0 0.0
  %2618 = vmatpush1.msra.mxu0 0.0
  %2619 = vmatprep.subr.mxu0 0.0
  %2620 = vmatpush1.msra.mxu0 0.0
  %2621 = vmatprep.subr.mxu0 0.0
  %2622 = vmatpush1.msra.mxu0 0.0
  %2623 = vmatprep.subr.mxu0 0.0
  %2624 = vmatpush1.msra.mxu0 0.0
  %2625 = vmatprep.subr.mxu0 0.0
  %2626 = vmatpush1.msra.mxu0 0.0
  %2627 = vmatprep.subr.mxu0 0.0
  %2628 = vmatpush1.msra.mxu0 0.0
  %2629 = vmatprep.subr.mxu0 0.0
  %2630 = vmatpush1.msra.mxu0 0.0
  %2631 = vmatprep.subr.mxu0 0.0
  %2632 = vmatpush1.msra.mxu0 0.0
  %2633 = vmatprep.mubr.f32.mxu0 0.0
  %2634 = vmatmul.mubr.f32.gmra.mrb[0].mxu0 %v2433
  %v2635 = vpop.f32.mrb[0].mxu0
  %v2636 = vadd.f32 0.0, %v2635
  %v2637 = vpop.f32.mrb[0].mxu0
  %v2638 = vadd.f32 0.0, %v2637
  %2639 = vdwg.mxu0
  %2640 = vmatprep.subr.mxu0 %v2370
  %2641 = vmatpush1.msra.mxu0 %v2369
  %2642 = vmatprep.subr.mxu0 %v2374
  %2643 = vmatpush1.msra.mxu0 %v2373
  %2644 = vmatprep.subr.mxu0 %v2378
  %2645 = vmatpush1.msra.mxu0 %v2377
  %2646 = vmatprep.subr.mxu0 %v2382
  %2647 = vmatpush1.msra.mxu0 %v2381
  %2648 = vmatprep.subr.mxu0 %v2386
  %2649 = vmatpush1.msra.mxu0 %v2385
  %2650 = vmatprep.subr.mxu0 %v2390
  %2651 = vmatpush1.msra.mxu0 %v2389
  %2652 = vmatprep.subr.mxu0 %v2394
  %2653 = vmatpush1.msra.mxu0 %v2393
  %2654 = vmatprep.subr.mxu0 %v2398
  %2655 = vmatpush1.msra.mxu0 %v2397
  %2656 = vmatprep.subr.mxu0 %v2402
  %2657 = vmatpush1.msra.mxu0 %v2401
  %2658 = vmatprep.subr.mxu0 %v2406
  %2659 = vmatpush1.msra.mxu0 %v2405
  %2660 = vmatprep.subr.mxu0 %v2410
  %2661 = vmatpush1.msra.mxu0 %v2409
  %2662 = vmatprep.subr.mxu0 %v2414
  %2663 = vmatpush1.msra.mxu0 %v2413
  %2664 = vmatprep.subr.mxu0 %v2418
  %2665 = vmatpush1.msra.mxu0 %v2417
  %2666 = vmatprep.subr.mxu0 %v2422
  %2667 = vmatpush1.msra.mxu0 %v2421
  %2668 = vmatprep.subr.mxu0 %v2426
  %2669 = vmatpush1.msra.mxu0 %v2425
  %2670 = vmatprep.subr.mxu0 %v2430
  %2671 = vmatpush1.msra.mxu0 %v2429
  %2672 = vmatprep.subr.mxu0 0.0
  %2673 = vmatpush1.msra.mxu0 0.0
  %2674 = vmatprep.subr.mxu0 0.0
  %2675 = vmatpush1.msra.mxu0 0.0
  %2676 = vmatprep.subr.mxu0 0.0
  %2677 = vmatpush1.msra.mxu0 0.0
  %2678 = vmatprep.subr.mxu0 0.0
  %2679 = vmatpush1.msra.mxu0 0.0
  %2680 = vmatprep.subr.mxu0 0.0
  %2681 = vmatpush1.msra.mxu0 0.0
  %2682 = vmatprep.subr.mxu0 0.0
  %2683 = vmatpush1.msra.mxu0 0.0
  %2684 = vmatprep.subr.mxu0 0.0
  %2685 = vmatpush1.msra.mxu0 0.0
  %2686 = vmatprep.subr.mxu0 0.0
  %2687 = vmatpush1.msra.mxu0 0.0
  %2688 = vmatprep.subr.mxu0 0.0
  %2689 = vmatpush1.msra.mxu0 0.0
  %2690 = vmatprep.subr.mxu0 0.0
  %2691 = vmatpush1.msra.mxu0 0.0
  %2692 = vmatprep.subr.mxu0 0.0
  %2693 = vmatpush1.msra.mxu0 0.0
  %2694 = vmatprep.subr.mxu0 0.0
  %2695 = vmatpush1.msra.mxu0 0.0
  %2696 = vmatprep.subr.mxu0 0.0
  %2697 = vmatpush1.msra.mxu0 0.0
  %2698 = vmatprep.subr.mxu0 0.0
  %2699 = vmatpush1.msra.mxu0 0.0
  %2700 = vmatprep.subr.mxu0 0.0
  %2701 = vmatpush1.msra.mxu0 0.0
  %2702 = vmatprep.subr.mxu0 0.0
  %2703 = vmatpush1.msra.mxu0 0.0
  %2704 = vmatprep.mubr.f32.mxu0 0.0
  %2705 = vmatmul.mubr.f32.gmra.mrb[0].mxu0 %v2368
  %v2706 = vpop.f32.mrb[0].mxu0
  %v2707 = vadd.f32 %v2565, %v2706
  %v2708 = vpop.f32.mrb[0].mxu0
  %v2709 = vadd.f32 %v2567, %v2708
  %2710 = vdwg.mxu0
  %2711 = vmatprep.subr.mxu0 %v2372
  %2712 = vmatpush1.msra.mxu0 %v2371
  %2713 = vmatprep.subr.mxu0 %v2376
  %2714 = vmatpush1.msra.mxu0 %v2375
  %2715 = vmatprep.subr.mxu0 %v2380
  %2716 = vmatpush1.msra.mxu0 %v2379
  %2717 = vmatprep.subr.mxu0 %v2384
  %2718 = vmatpush1.msra.mxu0 %v2383
  %2719 = vmatprep.subr.mxu0 %v2388
  %2720 = vmatpush1.msra.mxu0 %v2387
  %2721 = vmatprep.subr.mxu0 %v2392
  %2722 = vmatpush1.msra.mxu0 %v2391
  %2723 = vmatprep.subr.mxu0 %v2396
  %2724 = vmatpush1.msra.mxu0 %v2395
  %2725 = vmatprep.subr.mxu0 %v2400
  %2726 = vmatpush1.msra.mxu0 %v2399
  %2727 = vmatprep.subr.mxu0 %v2404
  %2728 = vmatpush1.msra.mxu0 %v2403
  %2729 = vmatprep.subr.mxu0 %v2408
  %2730 = vmatpush1.msra.mxu0 %v2407
  %2731 = vmatprep.subr.mxu0 %v2412
  %2732 = vmatpush1.msra.mxu0 %v2411
  %2733 = vmatprep.subr.mxu0 %v2416
  %2734 = vmatpush1.msra.mxu0 %v2415
  %2735 = vmatprep.subr.mxu0 %v2420
  %2736 = vmatpush1.msra.mxu0 %v2419
  %2737 = vmatprep.subr.mxu0 %v2424
  %2738 = vmatpush1.msra.mxu0 %v2423
  %2739 = vmatprep.subr.mxu0 %v2428
  %2740 = vmatpush1.msra.mxu0 %v2427
  %2741 = vmatprep.subr.mxu0 %v2432
  %2742 = vmatpush1.msra.mxu0 %v2431
  %2743 = vmatprep.subr.mxu0 0.0
  %2744 = vmatpush1.msra.mxu0 0.0
  %2745 = vmatprep.subr.mxu0 0.0
  %2746 = vmatpush1.msra.mxu0 0.0
  %2747 = vmatprep.subr.mxu0 0.0
  %2748 = vmatpush1.msra.mxu0 0.0
  %2749 = vmatprep.subr.mxu0 0.0
  %2750 = vmatpush1.msra.mxu0 0.0
  %2751 = vmatprep.subr.mxu0 0.0
  %2752 = vmatpush1.msra.mxu0 0.0
  %2753 = vmatprep.subr.mxu0 0.0
  %2754 = vmatpush1.msra.mxu0 0.0
  %2755 = vmatprep.subr.mxu0 0.0
  %2756 = vmatpush1.msra.mxu0 0.0
  %2757 = vmatprep.subr.mxu0 0.0
  %2758 = vmatpush1.msra.mxu0 0.0
  %2759 = vmatprep.subr.mxu0 0.0
  %2760 = vmatpush1.msra.mxu0 0.0
  %2761 = vmatprep.subr.mxu0 0.0
  %2762 = vmatpush1.msra.mxu0 0.0
  %2763 = vmatprep.subr.mxu0 0.0
  %2764 = vmatpush1.msra.mxu0 0.0
  %2765 = vmatprep.subr.mxu0 0.0
  %2766 = vmatpush1.msra.mxu0 0.0
  %2767 = vmatprep.subr.mxu0 0.0
  %2768 = vmatpush1.msra.mxu0 0.0
  %2769 = vmatprep.subr.mxu0 0.0
  %2770 = vmatpush1.msra.mxu0 0.0
  %2771 = vmatprep.subr.mxu0 0.0
  %2772 = vmatpush1.msra.mxu0 0.0
  %2773 = vmatprep.subr.mxu0 0.0
  %2774 = vmatpush1.msra.mxu0 0.0
  %2775 = vmatprep.mubr.f32.mxu0 0.0
  %2776 = vmatmul.mubr.f32.gmra.mrb[0].mxu0 %v2368
  %v2777 = vpop.f32.mrb[0].mxu0
  %v2778 = vadd.f32 %v2636, %v2777
  %v2779 = vpop.f32.mrb[0].mxu0
  %v2780 = vadd.f32 %v2638, %v2779
  %2781 = vdwg.mxu0
  %v2782 = vld [vmem:[%s3] sm:$0xf]
  %v2784 = vlaneseq
  %v2785 = vshrl.u32 %v2784, 7
  %v2786 = vsub.s32 0, %v2785
  %v2787 = vrot.slane %v2782, %v2786
  %v2788 = vlaneseq
  %v2789 = vshrl.u32 %v2788, 7
  %v2790 = vsub.s32 1, %v2789
  %v2791 = vrot.slane %v2782, %v2790
  %v2792 = vlaneseq
  %v2793 = vshrl.u32 %v2792, 7
  %v2794 = vsub.s32 2, %v2793
  %v2795 = vrot.slane %v2782, %v2794
  %v2796 = vlaneseq
  %v2797 = vshrl.u32 %v2796, 7
  %v2798 = vsub.s32 3, %v2797
  %v2799 = vrot.slane %v2782, %v2798
  %v2804 = vadd.f32 %v2707, %v2787
  %v2805 = vadd.f32 %v2709, %v2791
  %v2806 = vadd.f32 %v2778, %v2795
  %v2807 = vadd.f32 %v2780, %v2799
  %v2808 = vxor.u32 %v2804, 2147483648
  %v2809 = vmul.f32 %v2808, 1.442695
  %v2810 = vpow.pop %v2809
  %v2811 = vadd.f32 %v2810, 1.0
  %v2812 = vrcp.pop %v2811
  %v2813 = vmul.f32 1.0, %v2812
  %v2814 = vxor.u32 %v2805, 2147483648
  %v2815 = vmul.f32 %v2814, 1.442695
  %v2816 = vpow.pop %v2815
  %v2817 = vadd.f32 %v2816, 1.0
  %v2818 = vrcp.pop %v2817
  %v2819 = vmul.f32 1.0, %v2818
  %v2820 = vtanh.pop %v2806
  %v2821 = vxor.u32 %v2807, 2147483648
  %v2822 = vmul.f32 %v2821, 1.442695
  %v2823 = vpow.pop %v2822
  %v2824 = vadd.f32 %v2823, 1.0
  %v2825 = vrcp.pop %v2824
  %v2826 = vmul.f32 1.0, %v2825
  %v2827 = vld [vmem:[#allocation3] sm:$0x3]
  %v2828 = vmul.f32 %v2819, %v2827
  %v2829 = vmul.f32 %v2813, %v2820
  %v2830 = vadd.f32 %v2828, %v2829
  %v2831 = vtanh.pop %v2830
  %v2832 = vmul.f32 %v2826, %v2831
  %2833 = vst [vmem:[#allocation3] sm:$0x3] %v2830
  %2834 = vst [vmem:[#allocation2] sm:$0x3] %v2832
  %s2835 = scalar_lea.vmem %s4, 10
  %2836 = vst [vmem:[%s2835] sm:$0x3] %v2832
  %s2837 = scalar_lea.vmem %s0, 12
  %v2838 = vld [vmem:[%s2837] sm:$0x3]
  %v2839 = vld [vmem:[%s1] sm:$0xff]
  %v2840 = vld [vmem:[%s1 + $0x8] sm:$0xff]
  %v2841 = vld [vmem:[%s1 + $0x10] sm:$0xff]
  %v2842 = vld [vmem:[%s1 + $0x18] sm:$0xff]
  %v2843 = vld [vmem:[%s1 + $0x20] sm:$0xff]
  %v2844 = vld [vmem:[%s1 + $0x28] sm:$0xff]
  %v2845 = vld [vmem:[%s1 + $0x30] sm:$0xff]
  %v2846 = vld [vmem:[%s1 + $0x38] sm:$0xff]
  %v2847 = vld [vmem:[%s1 + $0x40] sm:$0xff]
  %v2848 = vld [vmem:[%s1 + $0x48] sm:$0xff]
  %v2849 = vld [vmem:[%s1 + $0x50] sm:$0xff]
  %v2850 = vld [vmem:[%s1 + $0x58] sm:$0xff]
  %v2851 = vld [vmem:[%s1 + $0x60] sm:$0xff]
  %v2852 = vld [vmem:[%s1 + $0x68] sm:$0xff]
  %v2853 = vld [vmem:[%s1 + $0x70] sm:$0xff]
  %v2854 = vld [vmem:[%s1 + $0x78] sm:$0xff]
  %v2855 = vld [vmem:[%s1 + $0x80] sm:$0xff]
  %v2856 = vld [vmem:[%s1 + $0x88] sm:$0xff]
  %v2857 = vld [vmem:[%s1 + $0x90] sm:$0xff]
  %v2858 = vld [vmem:[%s1 + $0x98] sm:$0xff]
  %v2859 = vld [vmem:[%s1 + $0xa0] sm:$0xff]
  %v2860 = vld [vmem:[%s1 + $0xa8] sm:$0xff]
  %v2861 = vld [vmem:[%s1 + $0xb0] sm:$0xff]
  %v2862 = vld [vmem:[%s1 + $0xb8] sm:$0xff]
  %v2863 = vld [vmem:[%s1 + $0xc0] sm:$0xff]
  %v2864 = vld [vmem:[%s1 + $0xc8] sm:$0xff]
  %v2865 = vld [vmem:[%s1 + $0xd0] sm:$0xff]
  %v2866 = vld [vmem:[%s1 + $0xd8] sm:$0xff]
  %v2867 = vld [vmem:[%s1 + $0xe0] sm:$0xff]
  %v2868 = vld [vmem:[%s1 + $0xe8] sm:$0xff]
  %v2869 = vld [vmem:[%s1 + $0xf0] sm:$0xff]
  %v2870 = vld [vmem:[%s1 + $0xf8] sm:$0xff]
  %v2871 = vld [vmem:[%s1 + $0x100] sm:$0xff]
  %v2872 = vld [vmem:[%s1 + $0x108] sm:$0xff]
  %v2873 = vld [vmem:[%s1 + $0x110] sm:$0xff]
  %v2874 = vld [vmem:[%s1 + $0x118] sm:$0xff]
  %v2875 = vld [vmem:[%s1 + $0x120] sm:$0xff]
  %v2876 = vld [vmem:[%s1 + $0x128] sm:$0xff]
  %v2877 = vld [vmem:[%s1 + $0x130] sm:$0xff]
  %v2878 = vld [vmem:[%s1 + $0x138] sm:$0xff]
  %v2879 = vld [vmem:[%s1 + $0x140] sm:$0xff]
  %v2880 = vld [vmem:[%s1 + $0x148] sm:$0xff]
  %v2881 = vld [vmem:[%s1 + $0x150] sm:$0xff]
  %v2882 = vld [vmem:[%s1 + $0x158] sm:$0xff]
  %v2883 = vld [vmem:[%s1 + $0x160] sm:$0xff]
  %v2884 = vld [vmem:[%s1 + $0x168] sm:$0xff]
  %v2885 = vld [vmem:[%s1 + $0x170] sm:$0xff]
  %v2886 = vld [vmem:[%s1 + $0x178] sm:$0xff]
  %v2887 = vld [vmem:[%s1 + $0x180] sm:$0xff]
  %v2888 = vld [vmem:[%s1 + $0x188] sm:$0xff]
  %v2889 = vld [vmem:[%s1 + $0x190] sm:$0xff]
  %v2890 = vld [vmem:[%s1 + $0x198] sm:$0xff]
  %v2891 = vld [vmem:[%s1 + $0x1a0] sm:$0xff]
  %v2892 = vld [vmem:[%s1 + $0x1a8] sm:$0xff]
  %v2893 = vld [vmem:[%s1 + $0x1b0] sm:$0xff]
  %v2894 = vld [vmem:[%s1 + $0x1b8] sm:$0xff]
  %v2895 = vld [vmem:[%s1 + $0x1c0] sm:$0xff]
  %v2896 = vld [vmem:[%s1 + $0x1c8] sm:$0xff]
  %v2897 = vld [vmem:[%s1 + $0x1d0] sm:$0xff]
  %v2898 = vld [vmem:[%s1 + $0x1d8] sm:$0xff]
  %v2899 = vld [vmem:[%s1 + $0x1e0] sm:$0xff]
  %v2900 = vld [vmem:[%s1 + $0x1e8] sm:$0xff]
  %v2901 = vld [vmem:[%s1 + $0x1f0] sm:$0xff]
  %v2902 = vld [vmem:[%s1 + $0x1f8] sm:$0xff]
  %v2903 = vld [vmem:[#allocation2] sm:$0x3]
  %v2904 = vld [vmem:[%s2] sm:$0xff]
  %v2905 = vld [vmem:[%s2 + $0x8] sm:$0xff]
  %v2906 = vld [vmem:[%s2 + $0x10] sm:$0xff]
  %v2907 = vld [vmem:[%s2 + $0x18] sm:$0xff]
  %v2908 = vld [vmem:[%s2 + $0x20] sm:$0xff]
  %v2909 = vld [vmem:[%s2 + $0x28] sm:$0xff]
  %v2910 = vld [vmem:[%s2 + $0x30] sm:$0xff]
  %v2911 = vld [vmem:[%s2 + $0x38] sm:$0xff]
  %v2912 = vld [vmem:[%s2 + $0x40] sm:$0xff]
  %v2913 = vld [vmem:[%s2 + $0x48] sm:$0xff]
  %v2914 = vld [vmem:[%s2 + $0x50] sm:$0xff]
  %v2915 = vld [vmem:[%s2 + $0x58] sm:$0xff]
  %v2916 = vld [vmem:[%s2 + $0x60] sm:$0xff]
  %v2917 = vld [vmem:[%s2 + $0x68] sm:$0xff]
  %v2918 = vld [vmem:[%s2 + $0x70] sm:$0xff]
  %v2919 = vld [vmem:[%s2 + $0x78] sm:$0xff]
  %v2920 = vld [vmem:[%s2 + $0x80] sm:$0xff]
  %v2921 = vld [vmem:[%s2 + $0x88] sm:$0xff]
  %v2922 = vld [vmem:[%s2 + $0x90] sm:$0xff]
  %v2923 = vld [vmem:[%s2 + $0x98] sm:$0xff]
  %v2924 = vld [vmem:[%s2 + $0xa0] sm:$0xff]
  %v2925 = vld [vmem:[%s2 + $0xa8] sm:$0xff]
  %v2926 = vld [vmem:[%s2 + $0xb0] sm:$0xff]
  %v2927 = vld [vmem:[%s2 + $0xb8] sm:$0xff]
  %v2928 = vld [vmem:[%s2 + $0xc0] sm:$0xff]
  %v2929 = vld [vmem:[%s2 + $0xc8] sm:$0xff]
  %v2930 = vld [vmem:[%s2 + $0xd0] sm:$0xff]
  %v2931 = vld [vmem:[%s2 + $0xd8] sm:$0xff]
  %v2932 = vld [vmem:[%s2 + $0xe0] sm:$0xff]
  %v2933 = vld [vmem:[%s2 + $0xe8] sm:$0xff]
  %v2934 = vld [vmem:[%s2 + $0xf0] sm:$0xff]
  %v2935 = vld [vmem:[%s2 + $0xf8] sm:$0xff]
  %v2936 = vld [vmem:[%s2 + $0x100] sm:$0xff]
  %v2937 = vld [vmem:[%s2 + $0x108] sm:$0xff]
  %v2938 = vld [vmem:[%s2 + $0x110] sm:$0xff]
  %v2939 = vld [vmem:[%s2 + $0x118] sm:$0xff]
  %v2940 = vld [vmem:[%s2 + $0x120] sm:$0xff]
  %v2941 = vld [vmem:[%s2 + $0x128] sm:$0xff]
  %v2942 = vld [vmem:[%s2 + $0x130] sm:$0xff]
  %v2943 = vld [vmem:[%s2 + $0x138] sm:$0xff]
  %v2944 = vld [vmem:[%s2 + $0x140] sm:$0xff]
  %v2945 = vld [vmem:[%s2 + $0x148] sm:$0xff]
  %v2946 = vld [vmem:[%s2 + $0x150] sm:$0xff]
  %v2947 = vld [vmem:[%s2 + $0x158] sm:$0xff]
  %v2948 = vld [vmem:[%s2 + $0x160] sm:$0xff]
  %v2949 = vld [vmem:[%s2 + $0x168] sm:$0xff]
  %v2950 = vld [vmem:[%s2 + $0x170] sm:$0xff]
  %v2951 = vld [vmem:[%s2 + $0x178] sm:$0xff]
  %v2952 = vld [vmem:[%s2 + $0x180] sm:$0xff]
  %v2953 = vld [vmem:[%s2 + $0x188] sm:$0xff]
  %v2954 = vld [vmem:[%s2 + $0x190] sm:$0xff]
  %v2955 = vld [vmem:[%s2 + $0x198] sm:$0xff]
  %v2956 = vld [vmem:[%s2 + $0x1a0] sm:$0xff]
  %v2957 = vld [vmem:[%s2 + $0x1a8] sm:$0xff]
  %v2958 = vld [vmem:[%s2 + $0x1b0] sm:$0xff]
  %v2959 = vld [vmem:[%s2 + $0x1b8] sm:$0xff]
  %v2960 = vld [vmem:[%s2 + $0x1c0] sm:$0xff]
  %v2961 = vld [vmem:[%s2 + $0x1c8] sm:$0xff]
  %v2962 = vld [vmem:[%s2 + $0x1d0] sm:$0xff]
  %v2963 = vld [vmem:[%s2 + $0x1d8] sm:$0xff]
  %v2964 = vld [vmem:[%s2 + $0x1e0] sm:$0xff]
  %v2965 = vld [vmem:[%s2 + $0x1e8] sm:$0xff]
  %v2966 = vld [vmem:[%s2 + $0x1f0] sm:$0xff]
  %v2967 = vld [vmem:[%s2 + $0x1f8] sm:$0xff]
  %2968 = vmatprep.subr.mxu0 %v2905
  %2969 = vmatpush1.msra.mxu0 %v2904
  %2970 = vmatprep.subr.mxu0 %v2909
  %2971 = vmatpush1.msra.mxu0 %v2908
  %2972 = vmatprep.subr.mxu0 %v2913
  %2973 = vmatpush1.msra.mxu0 %v2912
  %2974 = vmatprep.subr.mxu0 %v2917
  %2975 = vmatpush1.msra.mxu0 %v2916
  %2976 = vmatprep.subr.mxu0 %v2921
  %2977 = vmatpush1.msra.mxu0 %v2920
  %2978 = vmatprep.subr.mxu0 %v2925
  %2979 = vmatpush1.msra.mxu0 %v2924
  %2980 = vmatprep.subr.mxu0 %v2929
  %2981 = vmatpush1.msra.mxu0 %v2928
  %2982 = vmatprep.subr.mxu0 %v2933
  %2983 = vmatpush1.msra.mxu0 %v2932
  %2984 = vmatprep.subr.mxu0 %v2937
  %2985 = vmatpush1.msra.mxu0 %v2936
  %2986 = vmatprep.subr.mxu0 %v2941
  %2987 = vmatpush1.msra.mxu0 %v2940
  %2988 = vmatprep.subr.mxu0 %v2945
  %2989 = vmatpush1.msra.mxu0 %v2944
  %2990 = vmatprep.subr.mxu0 %v2949
  %2991 = vmatpush1.msra.mxu0 %v2948
  %2992 = vmatprep.subr.mxu0 %v2953
  %2993 = vmatpush1.msra.mxu0 %v2952
  %2994 = vmatprep.subr.mxu0 %v2957
  %2995 = vmatpush1.msra.mxu0 %v2956
  %2996 = vmatprep.subr.mxu0 %v2961
  %2997 = vmatpush1.msra.mxu0 %v2960
  %2998 = vmatprep.subr.mxu0 %v2965
  %2999 = vmatpush1.msra.mxu0 %v2964
  %3000 = vmatprep.subr.mxu0 0.0
  %3001 = vmatpush1.msra.mxu0 0.0
  %3002 = vmatprep.subr.mxu0 0.0
  %3003 = vmatpush1.msra.mxu0 0.0
  %3004 = vmatprep.subr.mxu0 0.0
  %3005 = vmatpush1.msra.mxu0 0.0
  %3006 = vmatprep.subr.mxu0 0.0
  %3007 = vmatpush1.msra.mxu0 0.0
  %3008 = vmatprep.subr.mxu0 0.0
  %3009 = vmatpush1.msra.mxu0 0.0
  %3010 = vmatprep.subr.mxu0 0.0
  %3011 = vmatpush1.msra.mxu0 0.0
  %3012 = vmatprep.subr.mxu0 0.0
  %3013 = vmatpush1.msra.mxu0 0.0
  %3014 = vmatprep.subr.mxu0 0.0
  %3015 = vmatpush1.msra.mxu0 0.0
  %3016 = vmatprep.subr.mxu0 0.0
  %3017 = vmatpush1.msra.mxu0 0.0
  %3018 = vmatprep.subr.mxu0 0.0
  %3019 = vmatpush1.msra.mxu0 0.0
  %3020 = vmatprep.subr.mxu0 0.0
  %3021 = vmatpush1.msra.mxu0 0.0
  %3022 = vmatprep.subr.mxu0 0.0
  %3023 = vmatpush1.msra.mxu0 0.0
  %3024 = vmatprep.subr.mxu0 0.0
  %3025 = vmatpush1.msra.mxu0 0.0
  %3026 = vmatprep.subr.mxu0 0.0
  %3027 = vmatpush1.msra.mxu0 0.0
  %3028 = vmatprep.subr.mxu0 0.0
  %3029 = vmatpush1.msra.mxu0 0.0
  %3030 = vmatprep.subr.mxu0 0.0
  %3031 = vmatpush1.msra.mxu0 0.0
  %3032 = vmatprep.mubr.f32.mxu0 0.0
  %3033 = vmatmul.mubr.f32.gmra.mrb[0].mxu0 %v2903
  %v3034 = vpop.f32.mrb[0].mxu0
  %v3035 = vadd.f32 0.0, %v3034
  %v3036 = vpop.f32.mrb[0].mxu0
  %v3037 = vadd.f32 0.0, %v3036
  %3038 = vdwg.mxu0
  %3039 = vmatprep.subr.mxu0 %v2907
  %3040 = vmatpush1.msra.mxu0 %v2906
  %3041 = vmatprep.subr.mxu0 %v2911
  %3042 = vmatpush1.msra.mxu0 %v2910
  %3043 = vmatprep.subr.mxu0 %v2915
  %3044 = vmatpush1.msra.mxu0 %v2914
  %3045 = vmatprep.subr.mxu0 %v2919
  %3046 = vmatpush1.msra.mxu0 %v2918
  %3047 = vmatprep.subr.mxu0 %v2923
  %3048 = vmatpush1.msra.mxu0 %v2922
  %3049 = vmatprep.subr.mxu0 %v2927
  %3050 = vmatpush1.msra.mxu0 %v2926
  %3051 = vmatprep.subr.mxu0 %v2931
  %3052 = vmatpush1.msra.mxu0 %v2930
  %3053 = vmatprep.subr.mxu0 %v2935
  %3054 = vmatpush1.msra.mxu0 %v2934
  %3055 = vmatprep.subr.mxu0 %v2939
  %3056 = vmatpush1.msra.mxu0 %v2938
  %3057 = vmatprep.subr.mxu0 %v2943
  %3058 = vmatpush1.msra.mxu0 %v2942
  %3059 = vmatprep.subr.mxu0 %v2947
  %3060 = vmatpush1.msra.mxu0 %v2946
  %3061 = vmatprep.subr.mxu0 %v2951
  %3062 = vmatpush1.msra.mxu0 %v2950
  %3063 = vmatprep.subr.mxu0 %v2955
  %3064 = vmatpush1.msra.mxu0 %v2954
  %3065 = vmatprep.subr.mxu0 %v2959
  %3066 = vmatpush1.msra.mxu0 %v2958
  %3067 = vmatprep.subr.mxu0 %v2963
  %3068 = vmatpush1.msra.mxu0 %v2962
  %3069 = vmatprep.subr.mxu0 %v2967
  %3070 = vmatpush1.msra.mxu0 %v2966
  %3071 = vmatprep.subr.mxu0 0.0
  %3072 = vmatpush1.msra.mxu0 0.0
  %3073 = vmatprep.subr.mxu0 0.0
  %3074 = vmatpush1.msra.mxu0 0.0
  %3075 = vmatprep.subr.mxu0 0.0
  %3076 = vmatpush1.msra.mxu0 0.0
  %3077 = vmatprep.subr.mxu0 0.0
  %3078 = vmatpush1.msra.mxu0 0.0
  %3079 = vmatprep.subr.mxu0 0.0
  %3080 = vmatpush1.msra.mxu0 0.0
  %3081 = vmatprep.subr.mxu0 0.0
  %3082 = vmatpush1.msra.mxu0 0.0
  %3083 = vmatprep.subr.mxu0 0.0
  %3084 = vmatpush1.msra.mxu0 0.0
  %3085 = vmatprep.subr.mxu0 0.0
  %3086 = vmatpush1.msra.mxu0 0.0
  %3087 = vmatprep.subr.mxu0 0.0
  %3088 = vmatpush1.msra.mxu0 0.0
  %3089 = vmatprep.subr.mxu0 0.0
  %3090 = vmatpush1.msra.mxu0 0.0
  %3091 = vmatprep.subr.mxu0 0.0
  %3092 = vmatpush1.msra.mxu0 0.0
  %3093 = vmatprep.subr.mxu0 0.0
  %3094 = vmatpush1.msra.mxu0 0.0
  %3095 = vmatprep.subr.mxu0 0.0
  %3096 = vmatpush1.msra.mxu0 0.0
  %3097 = vmatprep.subr.mxu0 0.0
  %3098 = vmatpush1.msra.mxu0 0.0
  %3099 = vmatprep.subr.mxu0 0.0
  %3100 = vmatpush1.msra.mxu0 0.0
  %3101 = vmatprep.subr.mxu0 0.0
  %3102 = vmatpush1.msra.mxu0 0.0
  %3103 = vmatprep.mubr.f32.mxu0 0.0
  %3104 = vmatmul.mubr.f32.gmra.mrb[0].mxu0 %v2903
  %v3105 = vpop.f32.mrb[0].mxu0
  %v3106 = vadd.f32 0.0, %v3105
  %v3107 = vpop.f32.mrb[0].mxu0
  %v3108 = vadd.f32 0.0, %v3107
  %3109 = vdwg.mxu0
  %3110 = vmatprep.subr.mxu0 %v2840
  %3111 = vmatpush1.msra.mxu0 %v2839
  %3112 = vmatprep.subr.mxu0 %v2844
  %3113 = vmatpush1.msra.mxu0 %v2843
  %3114 = vmatprep.subr.mxu0 %v2848
  %3115 = vmatpush1.msra.mxu0 %v2847
  %3116 = vmatprep.subr.mxu0 %v2852
  %3117 = vmatpush1.msra.mxu0 %v2851
  %3118 = vmatprep.subr.mxu0 %v2856
  %3119 = vmatpush1.msra.mxu0 %v2855
  %3120 = vmatprep.subr.mxu0 %v2860
  %3121 = vmatpush1.msra.mxu0 %v2859
  %3122 = vmatprep.subr.mxu0 %v2864
  %3123 = vmatpush1.msra.mxu0 %v2863
  %3124 = vmatprep.subr.mxu0 %v2868
  %3125 = vmatpush1.msra.mxu0 %v2867
  %3126 = vmatprep.subr.mxu0 %v2872
  %3127 = vmatpush1.msra.mxu0 %v2871
  %3128 = vmatprep.subr.mxu0 %v2876
  %3129 = vmatpush1.msra.mxu0 %v2875
  %3130 = vmatprep.subr.mxu0 %v2880
  %3131 = vmatpush1.msra.mxu0 %v2879
  %3132 = vmatprep.subr.mxu0 %v2884
  %3133 = vmatpush1.msra.mxu0 %v2883
  %3134 = vmatprep.subr.mxu0 %v2888
  %3135 = vmatpush1.msra.mxu0 %v2887
  %3136 = vmatprep.subr.mxu0 %v2892
  %3137 = vmatpush1.msra.mxu0 %v2891
  %3138 = vmatprep.subr.mxu0 %v2896
  %3139 = vmatpush1.msra.mxu0 %v2895
  %3140 = vmatprep.subr.mxu0 %v2900
  %3141 = vmatpush1.msra.mxu0 %v2899
  %3142 = vmatprep.subr.mxu0 0.0
  %3143 = vmatpush1.msra.mxu0 0.0
  %3144 = vmatprep.subr.mxu0 0.0
  %3145 = vmatpush1.msra.mxu0 0.0
  %3146 = vmatprep.subr.mxu0 0.0
  %3147 = vmatpush1.msra.mxu0 0.0
  %3148 = vmatprep.subr.mxu0 0.0
  %3149 = vmatpush1.msra.mxu0 0.0
  %3150 = vmatprep.subr.mxu0 0.0
  %3151 = vmatpush1.msra.mxu0 0.0
  %3152 = vmatprep.subr.mxu0 0.0
  %3153 = vmatpush1.msra.mxu0 0.0
  %3154 = vmatprep.subr.mxu0 0.0
  %3155 = vmatpush1.msra.mxu0 0.0
  %3156 = vmatprep.subr.mxu0 0.0
  %3157 = vmatpush1.msra.mxu0 0.0
  %3158 = vmatprep.subr.mxu0 0.0
  %3159 = vmatpush1.msra.mxu0 0.0
  %3160 = vmatprep.subr.mxu0 0.0
  %3161 = vmatpush1.msra.mxu0 0.0
  %3162 = vmatprep.subr.mxu0 0.0
  %3163 = vmatpush1.msra.mxu0 0.0
  %3164 = vmatprep.subr.mxu0 0.0
  %3165 = vmatpush1.msra.mxu0 0.0
  %3166 = vmatprep.subr.mxu0 0.0
  %3167 = vmatpush1.msra.mxu0 0.0
  %3168 = vmatprep.subr.mxu0 0.0
  %3169 = vmatpush1.msra.mxu0 0.0
  %3170 = vmatprep.subr.mxu0 0.0
  %3171 = vmatpush1.msra.mxu0 0.0
  %3172 = vmatprep.subr.mxu0 0.0
  %3173 = vmatpush1.msra.mxu0 0.0
  %3174 = vmatprep.mubr.f32.mxu0 0.0
  %3175 = vmatmul.mubr.f32.gmra.mrb[0].mxu0 %v2838
  %v3176 = vpop.f32.mrb[0].mxu0
  %v3177 = vadd.f32 %v3035, %v3176
  %v3178 = vpop.f32.mrb[0].mxu0
  %v3179 = vadd.f32 %v3037, %v3178
  %3180 = vdwg.mxu0
  %3181 = vmatprep.subr.mxu0 %v2842
  %3182 = vmatpush1.msra.mxu0 %v2841
  %3183 = vmatprep.subr.mxu0 %v2846
  %3184 = vmatpush1.msra.mxu0 %v2845
  %3185 = vmatprep.subr.mxu0 %v2850
  %3186 = vmatpush1.msra.mxu0 %v2849
  %3187 = vmatprep.subr.mxu0 %v2854
  %3188 = vmatpush1.msra.mxu0 %v2853
  %3189 = vmatprep.subr.mxu0 %v2858
  %3190 = vmatpush1.msra.mxu0 %v2857
  %3191 = vmatprep.subr.mxu0 %v2862
  %3192 = vmatpush1.msra.mxu0 %v2861
  %3193 = vmatprep.subr.mxu0 %v2866
  %3194 = vmatpush1.msra.mxu0 %v2865
  %3195 = vmatprep.subr.mxu0 %v2870
  %3196 = vmatpush1.msra.mxu0 %v2869
  %3197 = vmatprep.subr.mxu0 %v2874
  %3198 = vmatpush1.msra.mxu0 %v2873
  %3199 = vmatprep.subr.mxu0 %v2878
  %3200 = vmatpush1.msra.mxu0 %v2877
  %3201 = vmatprep.subr.mxu0 %v2882
  %3202 = vmatpush1.msra.mxu0 %v2881
  %3203 = vmatprep.subr.mxu0 %v2886
  %3204 = vmatpush1.msra.mxu0 %v2885
  %3205 = vmatprep.subr.mxu0 %v2890
  %3206 = vmatpush1.msra.mxu0 %v2889
  %3207 = vmatprep.subr.mxu0 %v2894
  %3208 = vmatpush1.msra.mxu0 %v2893
  %3209 = vmatprep.subr.mxu0 %v2898
  %3210 = vmatpush1.msra.mxu0 %v2897
  %3211 = vmatprep.subr.mxu0 %v2902
  %3212 = vmatpush1.msra.mxu0 %v2901
  %3213 = vmatprep.subr.mxu0 0.0
  %3214 = vmatpush1.msra.mxu0 0.0
  %3215 = vmatprep.subr.mxu0 0.0
  %3216 = vmatpush1.msra.mxu0 0.0
  %3217 = vmatprep.subr.mxu0 0.0
  %3218 = vmatpush1.msra.mxu0 0.0
  %3219 = vmatprep.subr.mxu0 0.0
  %3220 = vmatpush1.msra.mxu0 0.0
  %3221 = vmatprep.subr.mxu0 0.0
  %3222 = vmatpush1.msra.mxu0 0.0
  %3223 = vmatprep.subr.mxu0 0.0
  %3224 = vmatpush1.msra.mxu0 0.0
  %3225 = vmatprep.subr.mxu0 0.0
  %3226 = vmatpush1.msra.mxu0 0.0
  %3227 = vmatprep.subr.mxu0 0.0
  %3228 = vmatpush1.msra.mxu0 0.0
  %3229 = vmatprep.subr.mxu0 0.0
  %3230 = vmatpush1.msra.mxu0 0.0
  %3231 = vmatprep.subr.mxu0 0.0
  %3232 = vmatpush1.msra.mxu0 0.0
  %3233 = vmatprep.subr.mxu0 0.0
  %3234 = vmatpush1.msra.mxu0 0.0
  %3235 = vmatprep.subr.mxu0 0.0
  %3236 = vmatpush1.msra.mxu0 0.0
  %3237 = vmatprep.subr.mxu0 0.0
  %3238 = vmatpush1.msra.mxu0 0.0
  %3239 = vmatprep.subr.mxu0 0.0
  %3240 = vmatpush1.msra.mxu0 0.0
  %3241 = vmatprep.subr.mxu0 0.0
  %3242 = vmatpush1.msra.mxu0 0.0
  %3243 = vmatprep.subr.mxu0 0.0
  %3244 = vmatpush1.msra.mxu0 0.0
  %3245 = vmatprep.mubr.f32.mxu0 0.0
  %3246 = vmatmul.mubr.f32.gmra.mrb[0].mxu0 %v2838
  %v3247 = vpop.f32.mrb[0].mxu0
  %v3248 = vadd.f32 %v3106, %v3247
  %v3249 = vpop.f32.mrb[0].mxu0
  %v3250 = vadd.f32 %v3108, %v3249
  %3251 = vdwg.mxu0
  %v3252 = vld [vmem:[%s3] sm:$0xf]
  %v3254 = vlaneseq
  %v3255 = vshrl.u32 %v3254, 7
  %v3256 = vsub.s32 0, %v3255
  %v3257 = vrot.slane %v3252, %v3256
  %v3258 = vlaneseq
  %v3259 = vshrl.u32 %v3258, 7
  %v3260 = vsub.s32 1, %v3259
  %v3261 = vrot.slane %v3252, %v3260
  %v3262 = vlaneseq
  %v3263 = vshrl.u32 %v3262, 7
  %v3264 = vsub.s32 2, %v3263
  %v3265 = vrot.slane %v3252, %v3264
  %v3266 = vlaneseq
  %v3267 = vshrl.u32 %v3266, 7
  %v3268 = vsub.s32 3, %v3267
  %v3269 = vrot.slane %v3252, %v3268
  %v3274 = vadd.f32 %v3177, %v3257
  %v3275 = vadd.f32 %v3179, %v3261
  %v3276 = vadd.f32 %v3248, %v3265
  %v3277 = vadd.f32 %v3250, %v3269
  %v3278 = vxor.u32 %v3274, 2147483648
  %v3279 = vmul.f32 %v3278, 1.442695
  %v3280 = vpow.pop %v3279
  %v3281 = vadd.f32 %v3280, 1.0
  %v3282 = vrcp.pop %v3281
  %v3283 = vmul.f32 1.0, %v3282
  %v3284 = vxor.u32 %v3275, 2147483648
  %v3285 = vmul.f32 %v3284, 1.442695
  %v3286 = vpow.pop %v3285
  %v3287 = vadd.f32 %v3286, 1.0
  %v3288 = vrcp.pop %v3287
  %v3289 = vmul.f32 1.0, %v3288
  %v3290 = vtanh.pop %v3276
  %v3291 = vxor.u32 %v3277, 2147483648
  %v3292 = vmul.f32 %v3291, 1.442695
  %v3293 = vpow.pop %v3292
  %v3294 = vadd.f32 %v3293, 1.0
  %v3295 = vrcp.pop %v3294
  %v3296 = vmul.f32 1.0, %v3295
  %v3297 = vld [vmem:[#allocation3] sm:$0x3]
  %v3298 = vmul.f32 %v3289, %v3297
  %v3299 = vmul.f32 %v3283, %v3290
  %v3300 = vadd.f32 %v3298, %v3299
  %v3301 = vtanh.pop %v3300
  %v3302 = vmul.f32 %v3296, %v3301
  %3303 = vst [vmem:[#allocation3] sm:$0x3] %v3300
  %3304 = vst [vmem:[#allocation2] sm:$0x3] %v3302
  %s3305 = scalar_lea.vmem %s4, 12
  %3306 = vst [vmem:[%s3305] sm:$0x3] %v3302
  %s3307 = scalar_lea.vmem %s0, 14
  %v3308 = vld [vmem:[%s3307] sm:$0x3]
  %v3309 = vld [vmem:[%s1] sm:$0xff]
  %v3310 = vld [vmem:[%s1 + $0x8] sm:$0xff]
  %v3311 = vld [vmem:[%s1 + $0x10] sm:$0xff]
  %v3312 = vld [vmem:[%s1 + $0x18] sm:$0xff]
  %v3313 = vld [vmem:[%s1 + $0x20] sm:$0xff]
  %v3314 = vld [vmem:[%s1 + $0x28] sm:$0xff]
  %v3315 = vld [vmem:[%s1 + $0x30] sm:$0xff]
  %v3316 = vld [vmem:[%s1 + $0x38] sm:$0xff]
  %v3317 = vld [vmem:[%s1 + $0x40] sm:$0xff]
  %v3318 = vld [vmem:[%s1 + $0x48] sm:$0xff]
  %v3319 = vld [vmem:[%s1 + $0x50] sm:$0xff]
  %v3320 = vld [vmem:[%s1 + $0x58] sm:$0xff]
  %v3321 = vld [vmem:[%s1 + $0x60] sm:$0xff]
  %v3322 = vld [vmem:[%s1 + $0x68] sm:$0xff]
  %v3323 = vld [vmem:[%s1 + $0x70] sm:$0xff]
  %v3324 = vld [vmem:[%s1 + $0x78] sm:$0xff]
  %v3325 = vld [vmem:[%s1 + $0x80] sm:$0xff]
  %v3326 = vld [vmem:[%s1 + $0x88] sm:$0xff]
  %v3327 = vld [vmem:[%s1 + $0x90] sm:$0xff]
  %v3328 = vld [vmem:[%s1 + $0x98] sm:$0xff]
  %v3329 = vld [vmem:[%s1 + $0xa0] sm:$0xff]
  %v3330 = vld [vmem:[%s1 + $0xa8] sm:$0xff]
  %v3331 = vld [vmem:[%s1 + $0xb0] sm:$0xff]
  %v3332 = vld [vmem:[%s1 + $0xb8] sm:$0xff]
  %v3333 = vld [vmem:[%s1 + $0xc0] sm:$0xff]
  %v3334 = vld [vmem:[%s1 + $0xc8] sm:$0xff]
  %v3335 = vld [vmem:[%s1 + $0xd0] sm:$0xff]
  %v3336 = vld [vmem:[%s1 + $0xd8] sm:$0xff]
  %v3337 = vld [vmem:[%s1 + $0xe0] sm:$0xff]
  %v3338 = vld [vmem:[%s1 + $0xe8] sm:$0xff]
  %v3339 = vld [vmem:[%s1 + $0xf0] sm:$0xff]
  %v3340 = vld [vmem:[%s1 + $0xf8] sm:$0xff]
  %v3341 = vld [vmem:[%s1 + $0x100] sm:$0xff]
  %v3342 = vld [vmem:[%s1 + $0x108] sm:$0xff]
  %v3343 = vld [vmem:[%s1 + $0x110] sm:$0xff]
  %v3344 = vld [vmem:[%s1 + $0x118] sm:$0xff]
  %v3345 = vld [vmem:[%s1 + $0x120] sm:$0xff]
  %v3346 = vld [vmem:[%s1 + $0x128] sm:$0xff]
  %v3347 = vld [vmem:[%s1 + $0x130] sm:$0xff]
  %v3348 = vld [vmem:[%s1 + $0x138] sm:$0xff]
  %v3349 = vld [vmem:[%s1 + $0x140] sm:$0xff]
  %v3350 = vld [vmem:[%s1 + $0x148] sm:$0xff]
  %v3351 = vld [vmem:[%s1 + $0x150] sm:$0xff]
  %v3352 = vld [vmem:[%s1 + $0x158] sm:$0xff]
  %v3353 = vld [vmem:[%s1 + $0x160] sm:$0xff]
  %v3354 = vld [vmem:[%s1 + $0x168] sm:$0xff]
  %v3355 = vld [vmem:[%s1 + $0x170] sm:$0xff]
  %v3356 = vld [vmem:[%s1 + $0x178] sm:$0xff]
  %v3357 = vld [vmem:[%s1 + $0x180] sm:$0xff]
  %v3358 = vld [vmem:[%s1 + $0x188] sm:$0xff]
  %v3359 = vld [vmem:[%s1 + $0x190] sm:$0xff]
  %v3360 = vld [vmem:[%s1 + $0x198] sm:$0xff]
  %v3361 = vld [vmem:[%s1 + $0x1a0] sm:$0xff]
  %v3362 = vld [vmem:[%s1 + $0x1a8] sm:$0xff]
  %v3363 = vld [vmem:[%s1 + $0x1b0] sm:$0xff]
  %v3364 = vld [vmem:[%s1 + $0x1b8] sm:$0xff]
  %v3365 = vld [vmem:[%s1 + $0x1c0] sm:$0xff]
  %v3366 = vld [vmem:[%s1 + $0x1c8] sm:$0xff]
  %v3367 = vld [vmem:[%s1 + $0x1d0] sm:$0xff]
  %v3368 = vld [vmem:[%s1 + $0x1d8] sm:$0xff]
  %v3369 = vld [vmem:[%s1 + $0x1e0] sm:$0xff]
  %v3370 = vld [vmem:[%s1 + $0x1e8] sm:$0xff]
  %v3371 = vld [vmem:[%s1 + $0x1f0] sm:$0xff]
  %v3372 = vld [vmem:[%s1 + $0x1f8] sm:$0xff]
  %v3373 = vld [vmem:[#allocation2] sm:$0x3]
  %v3374 = vld [vmem:[%s2] sm:$0xff]
  %v3375 = vld [vmem:[%s2 + $0x8] sm:$0xff]
  %v3376 = vld [vmem:[%s2 + $0x10] sm:$0xff]
  %v3377 = vld [vmem:[%s2 + $0x18] sm:$0xff]
  %v3378 = vld [vmem:[%s2 + $0x20] sm:$0xff]
  %v3379 = vld [vmem:[%s2 + $0x28] sm:$0xff]
  %v3380 = vld [vmem:[%s2 + $0x30] sm:$0xff]
  %v3381 = vld [vmem:[%s2 + $0x38] sm:$0xff]
  %v3382 = vld [vmem:[%s2 + $0x40] sm:$0xff]
  %v3383 = vld [vmem:[%s2 + $0x48] sm:$0xff]
  %v3384 = vld [vmem:[%s2 + $0x50] sm:$0xff]
  %v3385 = vld [vmem:[%s2 + $0x58] sm:$0xff]
  %v3386 = vld [vmem:[%s2 + $0x60] sm:$0xff]
  %v3387 = vld [vmem:[%s2 + $0x68] sm:$0xff]
  %v3388 = vld [vmem:[%s2 + $0x70] sm:$0xff]
  %v3389 = vld [vmem:[%s2 + $0x78] sm:$0xff]
  %v3390 = vld [vmem:[%s2 + $0x80] sm:$0xff]
  %v3391 = vld [vmem:[%s2 + $0x88] sm:$0xff]
  %v3392 = vld [vmem:[%s2 + $0x90] sm:$0xff]
  %v3393 = vld [vmem:[%s2 + $0x98] sm:$0xff]
  %v3394 = vld [vmem:[%s2 + $0xa0] sm:$0xff]
  %v3395 = vld [vmem:[%s2 + $0xa8] sm:$0xff]
  %v3396 = vld [vmem:[%s2 + $0xb0] sm:$0xff]
  %v3397 = vld [vmem:[%s2 + $0xb8] sm:$0xff]
  %v3398 = vld [vmem:[%s2 + $0xc0] sm:$0xff]
  %v3399 = vld [vmem:[%s2 + $0xc8] sm:$0xff]
  %v3400 = vld [vmem:[%s2 + $0xd0] sm:$0xff]
  %v3401 = vld [vmem:[%s2 + $0xd8] sm:$0xff]
  %v3402 = vld [vmem:[%s2 + $0xe0] sm:$0xff]
  %v3403 = vld [vmem:[%s2 + $0xe8] sm:$0xff]
  %v3404 = vld [vmem:[%s2 + $0xf0] sm:$0xff]
  %v3405 = vld [vmem:[%s2 + $0xf8] sm:$0xff]
  %v3406 = vld [vmem:[%s2 + $0x100] sm:$0xff]
  %v3407 = vld [vmem:[%s2 + $0x108] sm:$0xff]
  %v3408 = vld [vmem:[%s2 + $0x110] sm:$0xff]
  %v3409 = vld [vmem:[%s2 + $0x118] sm:$0xff]
  %v3410 = vld [vmem:[%s2 + $0x120] sm:$0xff]
  %v3411 = vld [vmem:[%s2 + $0x128] sm:$0xff]
  %v3412 = vld [vmem:[%s2 + $0x130] sm:$0xff]
  %v3413 = vld [vmem:[%s2 + $0x138] sm:$0xff]
  %v3414 = vld [vmem:[%s2 + $0x140] sm:$0xff]
  %v3415 = vld [vmem:[%s2 + $0x148] sm:$0xff]
  %v3416 = vld [vmem:[%s2 + $0x150] sm:$0xff]
  %v3417 = vld [vmem:[%s2 + $0x158] sm:$0xff]
  %v3418 = vld [vmem:[%s2 + $0x160] sm:$0xff]
  %v3419 = vld [vmem:[%s2 + $0x168] sm:$0xff]
  %v3420 = vld [vmem:[%s2 + $0x170] sm:$0xff]
  %v3421 = vld [vmem:[%s2 + $0x178] sm:$0xff]
  %v3422 = vld [vmem:[%s2 + $0x180] sm:$0xff]
  %v3423 = vld [vmem:[%s2 + $0x188] sm:$0xff]
  %v3424 = vld [vmem:[%s2 + $0x190] sm:$0xff]
  %v3425 = vld [vmem:[%s2 + $0x198] sm:$0xff]
  %v3426 = vld [vmem:[%s2 + $0x1a0] sm:$0xff]
  %v3427 = vld [vmem:[%s2 + $0x1a8] sm:$0xff]
  %v3428 = vld [vmem:[%s2 + $0x1b0] sm:$0xff]
  %v3429 = vld [vmem:[%s2 + $0x1b8] sm:$0xff]
  %v3430 = vld [vmem:[%s2 + $0x1c0] sm:$0xff]
  %v3431 = vld [vmem:[%s2 + $0x1c8] sm:$0xff]
  %v3432 = vld [vmem:[%s2 + $0x1d0] sm:$0xff]
  %v3433 = vld [vmem:[%s2 + $0x1d8] sm:$0xff]
  %v3434 = vld [vmem:[%s2 + $0x1e0] sm:$0xff]
  %v3435 = vld [vmem:[%s2 + $0x1e8] sm:$0xff]
  %v3436 = vld [vmem:[%s2 + $0x1f0] sm:$0xff]
  %v3437 = vld [vmem:[%s2 + $0x1f8] sm:$0xff]
  %3438 = vmatprep.subr.mxu0 %v3375
  %3439 = vmatpush1.msra.mxu0 %v3374
  %3440 = vmatprep.subr.mxu0 %v3379
  %3441 = vmatpush1.msra.mxu0 %v3378
  %3442 = vmatprep.subr.mxu0 %v3383
  %3443 = vmatpush1.msra.mxu0 %v3382
  %3444 = vmatprep.subr.mxu0 %v3387
  %3445 = vmatpush1.msra.mxu0 %v3386
  %3446 = vmatprep.subr.mxu0 %v3391
  %3447 = vmatpush1.msra.mxu0 %v3390
  %3448 = vmatprep.subr.mxu0 %v3395
  %3449 = vmatpush1.msra.mxu0 %v3394
  %3450 = vmatprep.subr.mxu0 %v3399
  %3451 = vmatpush1.msra.mxu0 %v3398
  %3452 = vmatprep.subr.mxu0 %v3403
  %3453 = vmatpush1.msra.mxu0 %v3402
  %3454 = vmatprep.subr.mxu0 %v3407
  %3455 = vmatpush1.msra.mxu0 %v3406
  %3456 = vmatprep.subr.mxu0 %v3411
  %3457 = vmatpush1.msra.mxu0 %v3410
  %3458 = vmatprep.subr.mxu0 %v3415
  %3459 = vmatpush1.msra.mxu0 %v3414
  %3460 = vmatprep.subr.mxu0 %v3419
  %3461 = vmatpush1.msra.mxu0 %v3418
  %3462 = vmatprep.subr.mxu0 %v3423
  %3463 = vmatpush1.msra.mxu0 %v3422
  %3464 = vmatprep.subr.mxu0 %v3427
  %3465 = vmatpush1.msra.mxu0 %v3426
  %3466 = vmatprep.subr.mxu0 %v3431
  %3467 = vmatpush1.msra.mxu0 %v3430
  %3468 = vmatprep.subr.mxu0 %v3435
  %3469 = vmatpush1.msra.mxu0 %v3434
  %3470 = vmatprep.subr.mxu0 0.0
  %3471 = vmatpush1.msra.mxu0 0.0
  %3472 = vmatprep.subr.mxu0 0.0
  %3473 = vmatpush1.msra.mxu0 0.0
  %3474 = vmatprep.subr.mxu0 0.0
  %3475 = vmatpush1.msra.mxu0 0.0
  %3476 = vmatprep.subr.mxu0 0.0
  %3477 = vmatpush1.msra.mxu0 0.0
  %3478 = vmatprep.subr.mxu0 0.0
  %3479 = vmatpush1.msra.mxu0 0.0
  %3480 = vmatprep.subr.mxu0 0.0
  %3481 = vmatpush1.msra.mxu0 0.0
  %3482 = vmatprep.subr.mxu0 0.0
  %3483 = vmatpush1.msra.mxu0 0.0
  %3484 = vmatprep.subr.mxu0 0.0
  %3485 = vmatpush1.msra.mxu0 0.0
  %3486 = vmatprep.subr.mxu0 0.0
  %3487 = vmatpush1.msra.mxu0 0.0
  %3488 = vmatprep.subr.mxu0 0.0
  %3489 = vmatpush1.msra.mxu0 0.0
  %3490 = vmatprep.subr.mxu0 0.0
  %3491 = vmatpush1.msra.mxu0 0.0
  %3492 = vmatprep.subr.mxu0 0.0
  %3493 = vmatpush1.msra.mxu0 0.0
  %3494 = vmatprep.subr.mxu0 0.0
  %3495 = vmatpush1.msra.mxu0 0.0
  %3496 = vmatprep.subr.mxu0 0.0
  %3497 = vmatpush1.msra.mxu0 0.0
  %3498 = vmatprep.subr.mxu0 0.0
  %3499 = vmatpush1.msra.mxu0 0.0
  %3500 = vmatprep.subr.mxu0 0.0
  %3501 = vmatpush1.msra.mxu0 0.0
  %3502 = vmatprep.mubr.f32.mxu0 0.0
  %3503 = vmatmul.mubr.f32.gmra.mrb[0].mxu0 %v3373
  %v3504 = vpop.f32.mrb[0].mxu0
  %v3505 = vadd.f32 0.0, %v3504
  %v3506 = vpop.f32.mrb[0].mxu0
  %v3507 = vadd.f32 0.0, %v3506
  %3508 = vdwg.mxu0
  %3509 = vmatprep.subr.mxu0 %v3377
  %3510 = vmatpush1.msra.mxu0 %v3376
  %3511 = vmatprep.subr.mxu0 %v3381
  %3512 = vmatpush1.msra.mxu0 %v3380
  %3513 = vmatprep.subr.mxu0 %v3385
  %3514 = vmatpush1.msra.mxu0 %v3384
  %3515 = vmatprep.subr.mxu0 %v3389
  %3516 = vmatpush1.msra.mxu0 %v3388
  %3517 = vmatprep.subr.mxu0 %v3393
  %3518 = vmatpush1.msra.mxu0 %v3392
  %3519 = vmatprep.subr.mxu0 %v3397
  %3520 = vmatpush1.msra.mxu0 %v3396
  %3521 = vmatprep.subr.mxu0 %v3401
  %3522 = vmatpush1.msra.mxu0 %v3400
  %3523 = vmatprep.subr.mxu0 %v3405
  %3524 = vmatpush1.msra.mxu0 %v3404
  %3525 = vmatprep.subr.mxu0 %v3409
  %3526 = vmatpush1.msra.mxu0 %v3408
  %3527 = vmatprep.subr.mxu0 %v3413
  %3528 = vmatpush1.msra.mxu0 %v3412
  %3529 = vmatprep.subr.mxu0 %v3417
  %3530 = vmatpush1.msra.mxu0 %v3416
  %3531 = vmatprep.subr.mxu0 %v3421
  %3532 = vmatpush1.msra.mxu0 %v3420
  %3533 = vmatprep.subr.mxu0 %v3425
  %3534 = vmatpush1.msra.mxu0 %v3424
  %3535 = vmatprep.subr.mxu0 %v3429
  %3536 = vmatpush1.msra.mxu0 %v3428
  %3537 = vmatprep.subr.mxu0 %v3433
  %3538 = vmatpush1.msra.mxu0 %v3432
  %3539 = vmatprep.subr.mxu0 %v3437
  %3540 = vmatpush1.msra.mxu0 %v3436
  %3541 = vmatprep.subr.mxu0 0.0
  %3542 = vmatpush1.msra.mxu0 0.0
  %3543 = vmatprep.subr.mxu0 0.0
  %3544 = vmatpush1.msra.mxu0 0.0
  %3545 = vmatprep.subr.mxu0 0.0
  %3546 = vmatpush1.msra.mxu0 0.0
  %3547 = vmatprep.subr.mxu0 0.0
  %3548 = vmatpush1.msra.mxu0 0.0
  %3549 = vmatprep.subr.mxu0 0.0
  %3550 = vmatpush1.msra.mxu0 0.0
  %3551 = vmatprep.subr.mxu0 0.0
  %3552 = vmatpush1.msra.mxu0 0.0
  %3553 = vmatprep.subr.mxu0 0.0
  %3554 = vmatpush1.msra.mxu0 0.0
  %3555 = vmatprep.subr.mxu0 0.0
  %3556 = vmatpush1.msra.mxu0 0.0
  %3557 = vmatprep.subr.mxu0 0.0
  %3558 = vmatpush1.msra.mxu0 0.0
  %3559 = vmatprep.subr.mxu0 0.0
  %3560 = vmatpush1.msra.mxu0 0.0
  %3561 = vmatprep.subr.mxu0 0.0
  %3562 = vmatpush1.msra.mxu0 0.0
  %3563 = vmatprep.subr.mxu0 0.0
  %3564 = vmatpush1.msra.mxu0 0.0
  %3565 = vmatprep.subr.mxu0 0.0
  %3566 = vmatpush1.msra.mxu0 0.0
  %3567 = vmatprep.subr.mxu0 0.0
  %3568 = vmatpush1.msra.mxu0 0.0
  %3569 = vmatprep.subr.mxu0 0.0
  %3570 = vmatpush1.msra.mxu0 0.0
  %3571 = vmatprep.subr.mxu0 0.0
  %3572 = vmatpush1.msra.mxu0 0.0
  %3573 = vmatprep.mubr.f32.mxu0 0.0
  %3574 = vmatmul.mubr.f32.gmra.mrb[0].mxu0 %v3373
  %v3575 = vpop.f32.mrb[0].mxu0
  %v3576 = vadd.f32 0.0, %v3575
  %v3577 = vpop.f32.mrb[0].mxu0
  %v3578 = vadd.f32 0.0, %v3577
  %3579 = vdwg.mxu0
  %3580 = vmatprep.subr.mxu0 %v3310
  %3581 = vmatpush1.msra.mxu0 %v3309
  %3582 = vmatprep.subr.mxu0 %v3314
  %3583 = vmatpush1.msra.mxu0 %v3313
  %3584 = vmatprep.subr.mxu0 %v3318
  %3585 = vmatpush1.msra.mxu0 %v3317
  %3586 = vmatprep.subr.mxu0 %v3322
  %3587 = vmatpush1.msra.mxu0 %v3321
  %3588 = vmatprep.subr.mxu0 %v3326
  %3589 = vmatpush1.msra.mxu0 %v3325
  %3590 = vmatprep.subr.mxu0 %v3330
  %3591 = vmatpush1.msra.mxu0 %v3329
  %3592 = vmatprep.subr.mxu0 %v3334
  %3593 = vmatpush1.msra.mxu0 %v3333
  %3594 = vmatprep.subr.mxu0 %v3338
  %3595 = vmatpush1.msra.mxu0 %v3337
  %3596 = vmatprep.subr.mxu0 %v3342
  %3597 = vmatpush1.msra.mxu0 %v3341
  %3598 = vmatprep.subr.mxu0 %v3346
  %3599 = vmatpush1.msra.mxu0 %v3345
  %3600 = vmatprep.subr.mxu0 %v3350
  %3601 = vmatpush1.msra.mxu0 %v3349
  %3602 = vmatprep.subr.mxu0 %v3354
  %3603 = vmatpush1.msra.mxu0 %v3353
  %3604 = vmatprep.subr.mxu0 %v3358
  %3605 = vmatpush1.msra.mxu0 %v3357
  %3606 = vmatprep.subr.mxu0 %v3362
  %3607 = vmatpush1.msra.mxu0 %v3361
  %3608 = vmatprep.subr.mxu0 %v3366
  %3609 = vmatpush1.msra.mxu0 %v3365
  %3610 = vmatprep.subr.mxu0 %v3370
  %3611 = vmatpush1.msra.mxu0 %v3369
  %3612 = vmatprep.subr.mxu0 0.0
  %3613 = vmatpush1.msra.mxu0 0.0
  %3614 = vmatprep.subr.mxu0 0.0
  %3615 = vmatpush1.msra.mxu0 0.0
  %3616 = vmatprep.subr.mxu0 0.0
  %3617 = vmatpush1.msra.mxu0 0.0
  %3618 = vmatprep.subr.mxu0 0.0
  %3619 = vmatpush1.msra.mxu0 0.0
  %3620 = vmatprep.subr.mxu0 0.0
  %3621 = vmatpush1.msra.mxu0 0.0
  %3622 = vmatprep.subr.mxu0 0.0
  %3623 = vmatpush1.msra.mxu0 0.0
  %3624 = vmatprep.subr.mxu0 0.0
  %3625 = vmatpush1.msra.mxu0 0.0
  %3626 = vmatprep.subr.mxu0 0.0
  %3627 = vmatpush1.msra.mxu0 0.0
  %3628 = vmatprep.subr.mxu0 0.0
  %3629 = vmatpush1.msra.mxu0 0.0
  %3630 = vmatprep.subr.mxu0 0.0
  %3631 = vmatpush1.msra.mxu0 0.0
  %3632 = vmatprep.subr.mxu0 0.0
  %3633 = vmatpush1.msra.mxu0 0.0
  %3634 = vmatprep.subr.mxu0 0.0
  %3635 = vmatpush1.msra.mxu0 0.0
  %3636 = vmatprep.subr.mxu0 0.0
  %3637 = vmatpush1.msra.mxu0 0.0
  %3638 = vmatprep.subr.mxu0 0.0
  %3639 = vmatpush1.msra.mxu0 0.0
  %3640 = vmatprep.subr.mxu0 0.0
  %3641 = vmatpush1.msra.mxu0 0.0
  %3642 = vmatprep.subr.mxu0 0.0
  %3643 = vmatpush1.msra.mxu0 0.0
  %3644 = vmatprep.mubr.f32.mxu0 0.0
  %3645 = vmatmul.mubr.f32.gmra.mrb[0].mxu0 %v3308
  %v3646 = vpop.f32.mrb[0].mxu0
  %v3647 = vadd.f32 %v3505, %v3646
  %v3648 = vpop.f32.mrb[0].mxu0
  %v3649 = vadd.f32 %v3507, %v3648
  %3650 = vdwg.mxu0
  %3651 = vmatprep.subr.mxu0 %v3312
  %3652 = vmatpush1.msra.mxu0 %v3311
  %3653 = vmatprep.subr.mxu0 %v3316
  %3654 = vmatpush1.msra.mxu0 %v3315
  %3655 = vmatprep.subr.mxu0 %v3320
  %3656 = vmatpush1.msra.mxu0 %v3319
  %3657 = vmatprep.subr.mxu0 %v3324
  %3658 = vmatpush1.msra.mxu0 %v3323
  %3659 = vmatprep.subr.mxu0 %v3328
  %3660 = vmatpush1.msra.mxu0 %v3327
  %3661 = vmatprep.subr.mxu0 %v3332
  %3662 = vmatpush1.msra.mxu0 %v3331
  %3663 = vmatprep.subr.mxu0 %v3336
  %3664 = vmatpush1.msra.mxu0 %v3335
  %3665 = vmatprep.subr.mxu0 %v3340
  %3666 = vmatpush1.msra.mxu0 %v3339
  %3667 = vmatprep.subr.mxu0 %v3344
  %3668 = vmatpush1.msra.mxu0 %v3343
  %3669 = vmatprep.subr.mxu0 %v3348
  %3670 = vmatpush1.msra.mxu0 %v3347
  %3671 = vmatprep.subr.mxu0 %v3352
  %3672 = vmatpush1.msra.mxu0 %v3351
  %3673 = vmatprep.subr.mxu0 %v3356
  %3674 = vmatpush1.msra.mxu0 %v3355
  %3675 = vmatprep.subr.mxu0 %v3360
  %3676 = vmatpush1.msra.mxu0 %v3359
  %3677 = vmatprep.subr.mxu0 %v3364
  %3678 = vmatpush1.msra.mxu0 %v3363
  %3679 = vmatprep.subr.mxu0 %v3368
  %3680 = vmatpush1.msra.mxu0 %v3367
  %3681 = vmatprep.subr.mxu0 %v3372
  %3682 = vmatpush1.msra.mxu0 %v3371
  %3683 = vmatprep.subr.mxu0 0.0
  %3684 = vmatpush1.msra.mxu0 0.0
  %3685 = vmatprep.subr.mxu0 0.0
  %3686 = vmatpush1.msra.mxu0 0.0
  %3687 = vmatprep.subr.mxu0 0.0
  %3688 = vmatpush1.msra.mxu0 0.0
  %3689 = vmatprep.subr.mxu0 0.0
  %3690 = vmatpush1.msra.mxu0 0.0
  %3691 = vmatprep.subr.mxu0 0.0
  %3692 = vmatpush1.msra.mxu0 0.0
  %3693 = vmatprep.subr.mxu0 0.0
  %3694 = vmatpush1.msra.mxu0 0.0
  %3695 = vmatprep.subr.mxu0 0.0
  %3696 = vmatpush1.msra.mxu0 0.0
  %3697 = vmatprep.subr.mxu0 0.0
  %3698 = vmatpush1.msra.mxu0 0.0
  %3699 = vmatprep.subr.mxu0 0.0
  %3700 = vmatpush1.msra.mxu0 0.0
  %3701 = vmatprep.subr.mxu0 0.0
  %3702 = vmatpush1.msra.mxu0 0.0
  %3703 = vmatprep.subr.mxu0 0.0
  %3704 = vmatpush1.msra.mxu0 0.0
  %3705 = vmatprep.subr.mxu0 0.0
  %3706 = vmatpush1.msra.mxu0 0.0
  %3707 = vmatprep.subr.mxu0 0.0
  %3708 = vmatpush1.msra.mxu0 0.0
  %3709 = vmatprep.subr.mxu0 0.0
  %3710 = vmatpush1.msra.mxu0 0.0
  %3711 = vmatprep.subr.mxu0 0.0
  %3712 = vmatpush1.msra.mxu0 0.0
  %3713 = vmatprep.subr.mxu0 0.0
  %3714 = vmatpush1.msra.mxu0 0.0
  %3715 = vmatprep.mubr.f32.mxu0 0.0
  %3716 = vmatmul.mubr.f32.gmra.mrb[0].mxu0 %v3308
  %v3717 = vpop.f32.mrb[0].mxu0
  %v3718 = vadd.f32 %v3576, %v3717
  %v3719 = vpop.f32.mrb[0].mxu0
  %v3720 = vadd.f32 %v3578, %v3719
  %3721 = vdwg.mxu0
  %v3722 = vld [vmem:[%s3] sm:$0xf]
  %v3724 = vlaneseq
  %v3725 = vshrl.u32 %v3724, 7
  %v3726 = vsub.s32 0, %v3725
  %v3727 = vrot.slane %v3722, %v3726
  %v3728 = vlaneseq
  %v3729 = vshrl.u32 %v3728, 7
  %v3730 = vsub.s32 1, %v3729
  %v3731 = vrot.slane %v3722, %v3730
  %v3732 = vlaneseq
  %v3733 = vshrl.u32 %v3732, 7
  %v3734 = vsub.s32 2, %v3733
  %v3735 = vrot.slane %v3722, %v3734
  %v3736 = vlaneseq
  %v3737 = vshrl.u32 %v3736, 7
  %v3738 = vsub.s32 3, %v3737
  %v3739 = vrot.slane %v3722, %v3738
  %v3744 = vadd.f32 %v3647, %v3727
  %v3745 = vadd.f32 %v3649, %v3731
  %v3746 = vadd.f32 %v3718, %v3735
  %v3747 = vadd.f32 %v3720, %v3739
  %v3748 = vxor.u32 %v3744, 2147483648
  %v3749 = vmul.f32 %v3748, 1.442695
  %v3750 = vpow.pop %v3749
  %v3751 = vadd.f32 %v3750, 1.0
  %v3752 = vrcp.pop %v3751
  %v3753 = vmul.f32 1.0, %v3752
  %v3754 = vxor.u32 %v3745, 2147483648
  %v3755 = vmul.f32 %v3754, 1.442695
  %v3756 = vpow.pop %v3755
  %v3757 = vadd.f32 %v3756, 1.0
  %v3758 = vrcp.pop %v3757
  %v3759 = vmul.f32 1.0, %v3758
  %v3760 = vtanh.pop %v3746
  %v3761 = vxor.u32 %v3747, 2147483648
  %v3762 = vmul.f32 %v3761, 1.442695
  %v3763 = vpow.pop %v3762
  %v3764 = vadd.f32 %v3763, 1.0
  %v3765 = vrcp.pop %v3764
  %v3766 = vmul.f32 1.0, %v3765
  %v3767 = vld [vmem:[#allocation3] sm:$0x3]
  %v3768 = vmul.f32 %v3759, %v3767
  %v3769 = vmul.f32 %v3753, %v3760
  %v3770 = vadd.f32 %v3768, %v3769
  %v3771 = vtanh.pop %v3770
  %v3772 = vmul.f32 %v3766, %v3771
  %3773 = vst [vmem:[#allocation3] sm:$0x3] %v3770
  %3774 = vst [vmem:[#allocation2] sm:$0x3] %v3772
  %s3775 = scalar_lea.vmem %s4, 14
  %3776 = vst [vmem:[%s3775] sm:$0x3] %v3772
  // Predicated region
  $region18: #{coattention_forward.5} parent=0 // pred_check
    _
  $region19: #{coattention_forward.5} parent=0 // pred_check_branch
    %3778 = sbr.rel (0) target = $region21
  $region20: #{coattention_forward.5} parent=0 // pred_region
    _
  $region21: #{coattention_forward.5} parent=0 // pred_fallthru
    _
  // Predicated region
  $region22: #{coattention_forward.5} parent=0 // pred_check
    _
  $region23: #{coattention_forward.5} parent=0 // pred_check_branch
    %3780 = sbr.rel (0) target = $region25
  $region24: #{coattention_forward.5} parent=0 // pred_region
    _
  $region25: #{coattention_forward.5} parent=0 // pred_fallthru
    _

</llo_original>
